<compile_context>
chip_gen: v5e
topology: v5e:2x2
jax: 0.10.0
libtpu: 0.0.40
codegen_flags: <defaults>
</compile_context>

<pallas_src>
import functools

import jax
import jax.numpy as jnp
from jax import lax
from jax.experimental import pallas as pl
from jax.experimental.pallas import tpu as pltpu


def _round_up(x, m):
    return (x + m - 1) // m * m


def _pick_batch_block(B, HW, target_rows=512):
    """Largest divisor of B with bblk*HW <= target_rows, keeping >=2 grid steps when B >= 2
    (so megacore / both v7x TensorCores still get work)."""
    best = 1
    for cand in range(1, B + 1):
        if cand * HW > target_rows:
            break
        if B % cand != 0:
            continue
        if B >= 2 and B // cand < 2:
            continue
        best = cand
    return best


def _fused_regression_kernel(x_ref, hh_ref, ww_ref,
                             w0, w1, w2, w3, w4,
                             b0, b1, b2, b3, b4,
                             o_ref, act_ref,
                             *, H, W, bblk, pad, cins):
    """One batch-block per grid step.

    x_ref:   (bblk, H*W, Cin0) bf16        input activation (NHWC rows)
    hh_ref:  (M, 1) int32                  per-row image-row coordinate   (M = bblk*H*W)
    ww_ref:  (M, 1) int32                  per-row image-col coordinate
    w_l:     (9, Cin_l, Cout_l) bf16       tap-major HWIO conv weights
    b_l:     (1, Cout_l) f32               biases
    o_ref:   (bblk, H*W, A*4) f32          true-width output
    act_ref: (2*pad + M, Cmax) bf16 VMEM   flattened-row activation scratch with halo strips
    """
    HW = H * W
    M = bblk * HW
    ws = (w0, w1, w2, w3, w4)
    bs = (b0, b1, b2, b3, b4)

    # Zero only the small halo strips; the interior is fully overwritten every layer and
    # out-of-image rows are masked before every matmul anyway.
    act_ref[:pad, :] = jnp.zeros((pad, act_ref.shape[1]), act_ref.dtype)
    act_ref[pad + M:, :] = jnp.zeros((pad, act_ref.shape[1]), act_ref.dtype)

    # 3x3-tap border-validity masks are layer-independent: build them once.
    hh = hh_ref[...]                                   # (M, 1) int32
    ww = ww_ref[...]
    h_ok = (hh >= 1, None, hh <= H - 2)                # tap row offset -1 / 0 / +1
    w_ok = (ww >= 1, None, ww <= W - 2)                # tap col offset -1 / 0 / +1
    masks = []
    for dh in range(3):
        for dw in range(3):
            m = h_ok[dh]
            if w_ok[dw] is not None:
                m = w_ok[dw] if m is None else (m & w_ok[dw])
            masks.append(m)

    cur = x_ref[...].reshape(M, cins[0])               # (M, Cin0) bf16

    for layer in range(5):
        cin = cins[layer]
        w_ref = ws[layer]
        b_ref = bs[layer]

        # Sublane-aligned store of this layer's input; the 9 tap windows below are then plain
        # statically-shifted ref slices -- no im2col matrix, no whole-buffer value load.
        act_ref[pad:pad + M, :cin] = cur

        acc = None
        for dh in range(3):
            for dw in range(3):
                t = dh * 3 + dw
                s = (dh - 1) * W + (dw - 1)            # flattened-row shift of this tap
                if s == 0:
                    win = cur
                else:
                    win = act_ref[pad + s:pad + s + M, :cin]
                m = masks[t]
                if m is not None:
                    win = jnp.where(m, win, jnp.zeros_like(win))   # zero out-of-image rows
                contrib = jnp.dot(win, w_ref[t], preferred_element_type=jnp.float32)
                acc = contrib if acc is None else acc + contrib

        acc = acc + b_ref[...]                         # bias add in f32

        if layer < 4:
            cur = jnp.maximum(acc, 0.0).astype(jnp.bfloat16)   # ReLU, bf16 for next MXU matmul
        else:
            # Final regression layer: no activation; true-width f32 store.
            o_ref[...] = acc.reshape(o_ref.shape).astype(o_ref.dtype)


def regression_model(x_nchw, params, num_anchors):
    """Forward pass of RegressionModel.

    x_nchw: (B, Cin, H, W) f32, as in PyTorch.
    params: list of 5 tuples (w (3,3,Cin,Cout) f32 HWIO, b (Cout,) f32).
    Returns (B, H*W*num_anchors, 4), matching out.permute(0,2,3,1).contiguous().view(B, -1, 4).
    """
    B, Cin, H, W = x_nchw.shape
    HW = H * W
    cout_true = params[-1][0].shape[-1]                # num_anchors * 4

    # NCHW -> NHWC -> (B, H*W, Cin); bf16 matmul operands, f32 accumulation inside the kernel.
    x = jnp.transpose(x_nchw, (0, 2, 3, 1)).reshape(B, HW, Cin).astype(jnp.bfloat16)

    cins, couts, ws, bs = [], [], [], []
    for (w, b) in params:
        cin, cout = w.shape[2], w.shape[3]
        ws.append(w.reshape(9, cin, cout).astype(jnp.bfloat16))   # tap-major HWIO weights
        bs.append(b.reshape(1, cout).astype(jnp.float32))
        cins.append(cin)
        couts.append(cout)
    cmax = max(cins)

    bblk = _pick_batch_block(B, HW)
    grid = B // bblk
    M = bblk * HW
    pad = _round_up(W + 1, 8)                          # sublane-aligned halo depth (>= one row + 1)

    # Per-row image coordinates (identical for every grid step -> grid-invariant inputs).
    r = jnp.arange(M, dtype=jnp.int32) % HW
    hh = (r // W).astype(jnp.int32).reshape(M, 1)
    ww = (r % W).astype(jnp.int32).reshape(M, 1)

    kern = functools.partial(_fused_regression_kernel, H=H, W=W, bblk=bblk, pad=pad,
                             cins=tuple(cins))

    in_specs = [pl.BlockSpec((bblk, HW, Cin), lambda i: (i, 0, 0)),
                pl.BlockSpec((M, 1), lambda i: (0, 0)),
                pl.BlockSpec((M, 1), lambda i: (0, 0))]
    for wi in ws:
        in_specs.append(pl.BlockSpec(wi.shape, lambda i: (0, 0, 0)))
    for bi in bs:
        in_specs.append(pl.BlockSpec(bi.shape, lambda i: (0, 0)))

    flops = 2 * B * HW * sum(9 * ci * co for ci, co in zip(cins, couts))
    w_bytes = sum(int(w.size) * 2 for w in ws) + sum(int(b.size) * 4 for b in bs)
    bytes_accessed = int(x.size) * 2 + w_bytes + B * HW * cout_true * 4 + 2 * M * 4

    # VMEM budget from the actual buffers (double-buffered I/O blocks, resident weights,
    # activation halo scratch, live f32 accumulator), with headroom; capped so the request is
    # valid on v7x's 64 MiB VMEM as well as v5e/v6e's 128 MiB.
    est = (2 * M * Cin * 2                             # input block (double-buffered, bf16)
           + w_bytes                                   # weights + biases (resident)
           + 2 * M * cout_true * 4                     # output block (double-buffered, f32)
           + (2 * pad + M) * cmax * 2                  # activation halo scratch (bf16)
           + 4 * M * cmax * 2                          # live bf16 activation / shifted windows
           + 2 * M * max(couts) * 4)                   # f32 accumulator + epilogue temporaries
    vmem_limit = int(min(max(2 * est, 8 << 20), 48 << 20))

    out = pl.pallas_call(
        kern,
        out_shape=jax.ShapeDtypeStruct((B, HW, cout_true), jnp.float32),
        grid_spec=pltpu.PrefetchScalarGridSpec(
            num_scalar_prefetch=0,
            grid=(grid,),
            in_specs=in_specs,
            out_specs=pl.BlockSpec((bblk, HW, cout_true), lambda i: (i, 0, 0)),
            scratch_shapes=[pltpu.VMEM((2 * pad + M, cmax), jnp.bfloat16)],
        ),
        compiler_params=pltpu.CompilerParams(
            dimension_semantics=("parallel",),
            vmem_limit_bytes=vmem_limit,
        ),
        cost_estimate=pl.CostEstimate(flops=flops, transcendentals=0,
                                      bytes_accessed=bytes_accessed),
    )(x, hh, ww, *ws, *bs)

    # TODO(synk): for B == 1 single-image calls on v7x, add a second "parallel" spatial grid axis
    # (row blocks with a 1-row halo) so both TensorCores get work.

    # (B, H*W, A*4) -> (B, H*W*A, 4), exactly torch's permute(0,2,3,1).contiguous().view(B,-1,4).
    return out.reshape(B, HW * num_anchors, 4)


def init_params(key, num_features_in, feature_size, num_anchors):
    """Deterministic init mimicking PyTorch Conv2d default (uniform +-1/sqrt(fan_in))."""
    dims = ([(num_features_in, feature_size)]
            + [(feature_size, feature_size)] * 3
            + [(feature_size, num_anchors * 4)])
    params = []
    for cin, cout in dims:
        key, k1, k2 = jax.random.split(key, 3)
        bound = 1.0 / float((cin * 9) ** 0.5)
        w = jax.random.uniform(k1, (3, 3, cin, cout), jnp.float32, -bound, bound)
        b = jax.random.uniform(k2, (cout,), jnp.float32, -bound, bound)
        params.append((w, b))
    return params


def _reference_forward(x_nchw, params, num_anchors):
    """Pure-JAX (XLA conv) reference in f32 for correctness checking."""
    x = jnp.transpose(x_nchw, (0, 2, 3, 1))
    for li, (w, b) in enumerate(params):
        x = lax.conv_general_dilated(
            x, w, window_strides=(1, 1), padding="SAME",
            dimension_numbers=("NHWC", "HWIO", "NHWC")) + b
        if li < 4:
            x = jnp.maximum(x, 0.0)
    B, H, W, _ = x.shape
    return x.reshape(B, H * W * num_anchors, 4)


if __name__ == "__main__":
    batch = 2
    num_features_in = 32
    feature_size = 64
    num_anchors = 9
    H = W = 8

    key = jax.random.PRNGKey(0)
    key, kx = jax.random.split(key)
    x = jax.random.normal(kx, (batch, num_features_in, H, W), jnp.float32)

    params = init_params(key, num_features_in, feature_size, num_anchors)

    out = regression_model(x, params, num_anchors)
    out = jax.block_until_ready(out)

    assert out.shape == (batch, H * W * num_anchors, 4), out.shape

    ref = _reference_forward(x, params, num_anchors)
    max_err = float(jnp.max(jnp.abs(out - ref)))
    assert max_err < 5e-2, f"max abs error vs f32 reference too large: {max_err}"

    print("KERNEL_OK")
</pallas_src>

<mosaic_0001>
module attributes {stable_mosaic.version = 11 : i64} {
  func.func @_fused_regression_kernel(%arg0: i32, %arg1: memref<1x64x32xbf16, #tpu.memory_space<vmem>>, %arg2: memref<64x1xi32, #tpu.memory_space<vmem>>, %arg3: memref<64x1xi32, #tpu.memory_space<vmem>>, %arg4: memref<9x32x64xbf16, #tpu.memory_space<vmem>>, %arg5: memref<9x64x64xbf16, #tpu.memory_space<vmem>>, %arg6: memref<9x64x64xbf16, #tpu.memory_space<vmem>>, %arg7: memref<9x64x64xbf16, #tpu.memory_space<vmem>>, %arg8: memref<9x64x36xbf16, #tpu.memory_space<vmem>>, %arg9: memref<1x64xf32, #tpu.memory_space<vmem>>, %arg10: memref<1x64xf32, #tpu.memory_space<vmem>>, %arg11: memref<1x64xf32, #tpu.memory_space<vmem>>, %arg12: memref<1x64xf32, #tpu.memory_space<vmem>>, %arg13: memref<1x36xf32, #tpu.memory_space<vmem>>, %arg14: memref<1x64x36xf32, #tpu.memory_space<vmem>>, %arg15: memref<96x64xbf16, #tpu.memory_space<vmem>>) attributes {dimension_semantics = [#tpu.dimension_semantics<parallel>], iteration_bounds = array<i64: 2>, scalar_prefetch = 0 : i64, scratch_operands = 1 : i64, tpu.core_type = #tpu.core_type<tc>, window_params = [{transform_indices = @transform_0, window_bounds = array<i64: 1, 64, 32>}, {pipeline_mode = #tpu.pipeline_mode<synchronous>, transform_indices = @transform_1, window_bounds = array<i64: 64, 1>}, {pipeline_mode = #tpu.pipeline_mode<synchronous>, transform_indices = @transform_2, window_bounds = array<i64: 64, 1>}, {pipeline_mode = #tpu.pipeline_mode<synchronous>, transform_indices = @transform_3, window_bounds = array<i64: 9, 32, 64>}, {pipeline_mode = #tpu.pipeline_mode<synchronous>, transform_indices = @transform_4, window_bounds = array<i64: 9, 64, 64>}, {pipeline_mode = #tpu.pipeline_mode<synchronous>, transform_indices = @transform_5, window_bounds = array<i64: 9, 64, 64>}, {pipeline_mode = #tpu.pipeline_mode<synchronous>, transform_indices = @transform_6, window_bounds = array<i64: 9, 64, 64>}, {pipeline_mode = #tpu.pipeline_mode<synchronous>, transform_indices = @transform_7, window_bounds = array<i64: 9, 64, 36>}, {pipeline_mode = #tpu.pipeline_mode<synchronous>, transform_indices = @transform_8, window_bounds = array<i64: 1, 64>}, {pipeline_mode = #tpu.pipeline_mode<synchronous>, transform_indices = @transform_9, window_bounds = array<i64: 1, 64>}, {pipeline_mode = #tpu.pipeline_mode<synchronous>, transform_indices = @transform_10, window_bounds = array<i64: 1, 64>}, {pipeline_mode = #tpu.pipeline_mode<synchronous>, transform_indices = @transform_11, window_bounds = array<i64: 1, 64>}, {pipeline_mode = #tpu.pipeline_mode<synchronous>, transform_indices = @transform_12, window_bounds = array<i64: 1, 36>}, {transform_indices = @transform_13, window_bounds = array<i64: 1, 64, 36>}]} {
    %cst = arith.constant 0.000000e+00 : bf16
    %0 = vector.broadcast %cst : bf16 to vector<16x64xbf16>
    %c0 = arith.constant 0 : index
    %c0_0 = arith.constant 0 : index
    %1 = vector.load %arg15[%c0, %c0_0] : memref<96x64xbf16, #tpu.memory_space<vmem>>, vector<16x64xbf16>
    tpu.vector_store %arg15[%c0, %c0_0], %0 {strides = array<i32>} : memref<96x64xbf16, #tpu.memory_space<vmem>>, vector<16x64xbf16>,
    %cst_1 = arith.constant 0.000000e+00 : bf16
    %2 = vector.broadcast %cst_1 : bf16 to vector<16x64xbf16>
    %c80 = arith.constant 80 : index
    %c0_2 = arith.constant 0 : index
    %3 = vector.load %arg15[%c80, %c0_2] : memref<96x64xbf16, #tpu.memory_space<vmem>>, vector<16x64xbf16>
    tpu.vector_store %arg15[%c80, %c0_2], %2 {strides = array<i32>} : memref<96x64xbf16, #tpu.memory_space<vmem>>, vector<16x64xbf16>,
    %c0_3 = arith.constant 0 : index
    %c0_4 = arith.constant 0 : index
    %4 = vector.load %arg2[%c0_3, %c0_4] : memref<64x1xi32, #tpu.memory_space<vmem>>, vector<64x1xi32>
    %c0_5 = arith.constant 0 : index
    %c0_6 = arith.constant 0 : index
    %5 = vector.load %arg3[%c0_5, %c0_6] : memref<64x1xi32, #tpu.memory_space<vmem>>, vector<64x1xi32>
    %c1_i32 = arith.constant 1 : i32
    %6 = vector.broadcast %c1_i32 : i32 to vector<64x1xi32>
    %7 = arith.cmpi sge, %4, %6 : vector<64x1xi32>
    %c6_i32 = arith.constant 6 : i32
    %8 = vector.broadcast %c6_i32 : i32 to vector<64x1xi32>
    %9 = arith.cmpi sle, %4, %8 : vector<64x1xi32>
    %c1_i32_7 = arith.constant 1 : i32
    %10 = vector.broadcast %c1_i32_7 : i32 to vector<64x1xi32>
    %11 = arith.cmpi sge, %5, %10 : vector<64x1xi32>
    %c6_i32_8 = arith.constant 6 : i32
    %12 = vector.broadcast %c6_i32_8 : i32 to vector<64x1xi32>
    %13 = arith.cmpi sle, %5, %12 : vector<64x1xi32>
    %14 = arith.andi %7, %11 : vector<64x1xi1>
    %15 = arith.andi %7, %13 : vector<64x1xi1>
    %16 = arith.andi %9, %11 : vector<64x1xi1>
    %17 = arith.andi %9, %13 : vector<64x1xi1>
    %c0_9 = arith.constant 0 : index
    %c0_10 = arith.constant 0 : index
    %c0_11 = arith.constant 0 : index
    %18 = vector.load %arg1[%c0_9, %c0_10, %c0_11] : memref<1x64x32xbf16, #tpu.memory_space<vmem>>, vector<1x64x32xbf16>
    %19 = vector.shape_cast %18 : vector<1x64x32xbf16> to vector<64x32xbf16>
    %c16 = arith.constant 16 : index
    %c0_12 = arith.constant 0 : index
    %20 = vector.load %arg15[%c16, %c0_12] : memref<96x64xbf16, #tpu.memory_space<vmem>>, vector<64x32xbf16>
    tpu.vector_store %arg15[%c16, %c0_12], %19 {strides = array<i32>} : memref<96x64xbf16, #tpu.memory_space<vmem>>, vector<64x32xbf16>,
    %c7 = arith.constant 7 : index
    %c0_13 = arith.constant 0 : index
    %21 = vector.load %arg15[%c7, %c0_13] : memref<96x64xbf16, #tpu.memory_space<vmem>>, vector<64x32xbf16>
    %cst_14 = arith.constant 0.000000e+00 : bf16
    %22 = vector.broadcast %cst_14 : bf16 to vector<64x32xbf16>
    %23 = vector.shape_cast %14 : vector<64x1xi1> to vector<64x1xi1>
    %24 = vector.broadcast %23 : vector<64x1xi1> to vector<64x32xi1>
    %25 = arith.select %24, %21, %22 : vector<64x32xi1>, vector<64x32xbf16>
    %c0_15 = arith.constant 0 : index
    %c0_16 = arith.constant 0 : index
    %c0_17 = arith.constant 0 : index
    %26 = vector.load %arg4[%c0_15, %c0_16, %c0_17] : memref<9x32x64xbf16, #tpu.memory_space<vmem>>, vector<1x32x64xbf16>
    %27 = vector.shape_cast %26 : vector<1x32x64xbf16> to vector<32x64xbf16>
    %cst_18 = arith.constant dense<0.000000e+00> : vector<64x64xf32>
    %28 = tpu.matmul %25, %27, %cst_18 {dimension_numbers = #tpu.dot_dimension_numbers<[1], [0], [0], [1], [0, 0, 1, 1], [], []>} : vector<64x32xbf16>, vector<32x64xbf16>, vector<64x64xf32> -> vector<64x64xf32>
    %c8 = arith.constant 8 : index
    %c0_19 = arith.constant 0 : index
    %29 = vector.load %arg15[%c8, %c0_19] : memref<96x64xbf16, #tpu.memory_space<vmem>>, vector<64x32xbf16>
    %cst_20 = arith.constant 0.000000e+00 : bf16
    %30 = vector.broadcast %cst_20 : bf16 to vector<64x32xbf16>
    %31 = vector.shape_cast %7 : vector<64x1xi1> to vector<64x1xi1>
    %32 = vector.broadcast %31 : vector<64x1xi1> to vector<64x32xi1>
    %33 = arith.select %32, %29, %30 : vector<64x32xi1>, vector<64x32xbf16>
    %c1 = arith.constant 1 : index
    %c0_21 = arith.constant 0 : index
    %c0_22 = arith.constant 0 : index
    %34 = vector.load %arg4[%c1, %c0_21, %c0_22] : memref<9x32x64xbf16, #tpu.memory_space<vmem>>, vector<1x32x64xbf16>
    %35 = vector.shape_cast %34 : vector<1x32x64xbf16> to vector<32x64xbf16>
    %cst_23 = arith.constant dense<0.000000e+00> : vector<64x64xf32>
    %36 = tpu.matmul %33, %35, %cst_23 {dimension_numbers = #tpu.dot_dimension_numbers<[1], [0], [0], [1], [0, 0, 1, 1], [], []>} : vector<64x32xbf16>, vector<32x64xbf16>, vector<64x64xf32> -> vector<64x64xf32>
    %37 = arith.addf %28, %36 : vector<64x64xf32>
    %c9 = arith.constant 9 : index
    %c0_24 = arith.constant 0 : index
    %38 = vector.load %arg15[%c9, %c0_24] : memref<96x64xbf16, #tpu.memory_space<vmem>>, vector<64x32xbf16>
    %cst_25 = arith.constant 0.000000e+00 : bf16
    %39 = vector.broadcast %cst_25 : bf16 to vector<64x32xbf16>
    %40 = vector.shape_cast %15 : vector<64x1xi1> to vector<64x1xi1>
    %41 = vector.broadcast %40 : vector<64x1xi1> to vector<64x32xi1>
    %42 = arith.select %41, %38, %39 : vector<64x32xi1>, vector<64x32xbf16>
    %c2 = arith.constant 2 : index
    %c0_26 = arith.constant 0 : index
    %c0_27 = arith.constant 0 : index
    %43 = vector.load %arg4[%c2, %c0_26, %c0_27] : memref<9x32x64xbf16, #tpu.memory_space<vmem>>, vector<1x32x64xbf16>
    %44 = vector.shape_cast %43 : vector<1x32x64xbf16> to vector<32x64xbf16>
    %cst_28 = arith.constant dense<0.000000e+00> : vector<64x64xf32>
    %45 = tpu.matmul %42, %44, %cst_28 {dimension_numbers = #tpu.dot_dimension_numbers<[1], [0], [0], [1], [0, 0, 1, 1], [], []>} : vector<64x32xbf16>, vector<32x64xbf16>, vector<64x64xf32> -> vector<64x64xf32>
    %46 = arith.addf %37, %45 : vector<64x64xf32>
    %c15 = arith.constant 15 : index
    %c0_29 = arith.constant 0 : index
    %47 = vector.load %arg15[%c15, %c0_29] : memref<96x64xbf16, #tpu.memory_space<vmem>>, vector<64x32xbf16>
    %cst_30 = arith.constant 0.000000e+00 : bf16
    %48 = vector.broadcast %cst_30 : bf16 to vector<64x32xbf16>
    %49 = vector.shape_cast %11 : vector<64x1xi1> to vector<64x1xi1>
    %50 = vector.broadcast %49 : vector<64x1xi1> to vector<64x32xi1>
    %51 = arith.select %50, %47, %48 : vector<64x32xi1>, vector<64x32xbf16>
    %c3 = arith.constant 3 : index
    %c0_31 = arith.constant 0 : index
    %c0_32 = arith.constant 0 : index
    %52 = vector.load %arg4[%c3, %c0_31, %c0_32] : memref<9x32x64xbf16, #tpu.memory_space<vmem>>, vector<1x32x64xbf16>
    %53 = vector.shape_cast %52 : vector<1x32x64xbf16> to vector<32x64xbf16>
    %cst_33 = arith.constant dense<0.000000e+00> : vector<64x64xf32>
    %54 = tpu.matmul %51, %53, %cst_33 {dimension_numbers = #tpu.dot_dimension_numbers<[1], [0], [0], [1], [0, 0, 1, 1], [], []>} : vector<64x32xbf16>, vector<32x64xbf16>, vector<64x64xf32> -> vector<64x64xf32>
    %55 = arith.addf %46, %54 : vector<64x64xf32>
    %c4 = arith.constant 4 : index
    %c0_34 = arith.constant 0 : index
    %c0_35 = arith.constant 0 : index
    %56 = vector.load %arg4[%c4, %c0_34, %c0_35] : memref<9x32x64xbf16, #tpu.memory_space<vmem>>, vector<1x32x64xbf16>
    %57 = vector.shape_cast %56 : vector<1x32x64xbf16> to vector<32x64xbf16>
    %cst_36 = arith.constant dense<0.000000e+00> : vector<64x64xf32>
    %58 = tpu.matmul %19, %57, %cst_36 {dimension_numbers = #tpu.dot_dimension_numbers<[1], [0], [0], [1], [0, 0, 1, 1], [], []>} : vector<64x32xbf16>, vector<32x64xbf16>, vector<64x64xf32> -> vector<64x64xf32>
    %59 = arith.addf %55, %58 : vector<64x64xf32>
    %c17 = arith.constant 17 : index
    %c0_37 = arith.constant 0 : index
    %60 = vector.load %arg15[%c17, %c0_37] : memref<96x64xbf16, #tpu.memory_space<vmem>>, vector<64x32xbf16>
    %cst_38 = arith.constant 0.000000e+00 : bf16
    %61 = vector.broadcast %cst_38 : bf16 to vector<64x32xbf16>
    %62 = vector.shape_cast %13 : vector<64x1xi1> to vector<64x1xi1>
    %63 = vector.broadcast %62 : vector<64x1xi1> to vector<64x32xi1>
    %64 = arith.select %63, %60, %61 : vector<64x32xi1>, vector<64x32xbf16>
    %c5 = arith.constant 5 : index
    %c0_39 = arith.constant 0 : index
    %c0_40 = arith.constant 0 : index
    %65 = vector.load %arg4[%c5, %c0_39, %c0_40] : memref<9x32x64xbf16, #tpu.memory_space<vmem>>, vector<1x32x64xbf16>
    %66 = vector.shape_cast %65 : vector<1x32x64xbf16> to vector<32x64xbf16>
    %cst_41 = arith.constant dense<0.000000e+00> : vector<64x64xf32>
    %67 = tpu.matmul %64, %66, %cst_41 {dimension_numbers = #tpu.dot_dimension_numbers<[1], [0], [0], [1], [0, 0, 1, 1], [], []>} : vector<64x32xbf16>, vector<32x64xbf16>, vector<64x64xf32> -> vector<64x64xf32>
    %68 = arith.addf %59, %67 : vector<64x64xf32>
    %c23 = arith.constant 23 : index
    %c0_42 = arith.constant 0 : index
    %69 = vector.load %arg15[%c23, %c0_42] : memref<96x64xbf16, #tpu.memory_space<vmem>>, vector<64x32xbf16>
    %cst_43 = arith.constant 0.000000e+00 : bf16
    %70 = vector.broadcast %cst_43 : bf16 to vector<64x32xbf16>
    %71 = vector.shape_cast %16 : vector<64x1xi1> to vector<64x1xi1>
    %72 = vector.broadcast %71 : vector<64x1xi1> to vector<64x32xi1>
    %73 = arith.select %72, %69, %70 : vector<64x32xi1>, vector<64x32xbf16>
    %c6 = arith.constant 6 : index
    %c0_44 = arith.constant 0 : index
    %c0_45 = arith.constant 0 : index
    %74 = vector.load %arg4[%c6, %c0_44, %c0_45] : memref<9x32x64xbf16, #tpu.memory_space<vmem>>, vector<1x32x64xbf16>
    %75 = vector.shape_cast %74 : vector<1x32x64xbf16> to vector<32x64xbf16>
    %cst_46 = arith.constant dense<0.000000e+00> : vector<64x64xf32>
    %76 = tpu.matmul %73, %75, %cst_46 {dimension_numbers = #tpu.dot_dimension_numbers<[1], [0], [0], [1], [0, 0, 1, 1], [], []>} : vector<64x32xbf16>, vector<32x64xbf16>, vector<64x64xf32> -> vector<64x64xf32>
    %77 = arith.addf %68, %76 : vector<64x64xf32>
    %c24 = arith.constant 24 : index
    %c0_47 = arith.constant 0 : index
    %78 = vector.load %arg15[%c24, %c0_47] : memref<96x64xbf16, #tpu.memory_space<vmem>>, vector<64x32xbf16>
    %cst_48 = arith.constant 0.000000e+00 : bf16
    %79 = vector.broadcast %cst_48 : bf16 to vector<64x32xbf16>
    %80 = vector.shape_cast %9 : vector<64x1xi1> to vector<64x1xi1>
    %81 = vector.broadcast %80 : vector<64x1xi1> to vector<64x32xi1>
    %82 = arith.select %81, %78, %79 : vector<64x32xi1>, vector<64x32xbf16>
    %c7_49 = arith.constant 7 : index
    %c0_50 = arith.constant 0 : index
    %c0_51 = arith.constant 0 : index
    %83 = vector.load %arg4[%c7_49, %c0_50, %c0_51] : memref<9x32x64xbf16, #tpu.memory_space<vmem>>, vector<1x32x64xbf16>
    %84 = vector.shape_cast %83 : vector<1x32x64xbf16> to vector<32x64xbf16>
    %cst_52 = arith.constant dense<0.000000e+00> : vector<64x64xf32>
    %85 = tpu.matmul %82, %84, %cst_52 {dimension_numbers = #tpu.dot_dimension_numbers<[1], [0], [0], [1], [0, 0, 1, 1], [], []>} : vector<64x32xbf16>, vector<32x64xbf16>, vector<64x64xf32> -> vector<64x64xf32>
    %86 = arith.addf %77, %85 : vector<64x64xf32>
    %c25 = arith.constant 25 : index
    %c0_53 = arith.constant 0 : index
    %87 = vector.load %arg15[%c25, %c0_53] : memref<96x64xbf16, #tpu.memory_space<vmem>>, vector<64x32xbf16>
    %cst_54 = arith.constant 0.000000e+00 : bf16
    %88 = vector.broadcast %cst_54 : bf16 to vector<64x32xbf16>
    %89 = vector.shape_cast %17 : vector<64x1xi1> to vector<64x1xi1>
    %90 = vector.broadcast %89 : vector<64x1xi1> to vector<64x32xi1>
    %91 = arith.select %90, %87, %88 : vector<64x32xi1>, vector<64x32xbf16>
    %c8_55 = arith.constant 8 : index
    %c0_56 = arith.constant 0 : index
    %c0_57 = arith.constant 0 : index
    %92 = vector.load %arg4[%c8_55, %c0_56, %c0_57] : memref<9x32x64xbf16, #tpu.memory_space<vmem>>, vector<1x32x64xbf16>
    %93 = vector.shape_cast %92 : vector<1x32x64xbf16> to vector<32x64xbf16>
    %cst_58 = arith.constant dense<0.000000e+00> : vector<64x64xf32>
    %94 = tpu.matmul %91, %93, %cst_58 {dimension_numbers = #tpu.dot_dimension_numbers<[1], [0], [0], [1], [0, 0, 1, 1], [], []>} : vector<64x32xbf16>, vector<32x64xbf16>, vector<64x64xf32> -> vector<64x64xf32>
    %95 = arith.addf %86, %94 : vector<64x64xf32>
    %c0_59 = arith.constant 0 : index
    %c0_60 = arith.constant 0 : index
    %96 = vector.load %arg9[%c0_59, %c0_60] : memref<1x64xf32, #tpu.memory_space<vmem>>, vector<1x64xf32>
    %97 = vector.broadcast %96 : vector<1x64xf32> to vector<64x64xf32>
    %98 = arith.addf %95, %97 : vector<64x64xf32>
    %cst_61 = arith.constant 0.000000e+00 : f32
    %99 = vector.broadcast %cst_61 : f32 to vector<64x64xf32>
    %100 = arith.maximumf %98, %99 : vector<64x64xf32>
    %101 = arith.truncf %100 : vector<64x64xf32> to vector<64x64xbf16>
    %c16_62 = arith.constant 16 : index
    %c0_63 = arith.constant 0 : index
    %102 = vector.load %arg15[%c16_62, %c0_63] : memref<96x64xbf16, #tpu.memory_space<vmem>>, vector<64x64xbf16>
    tpu.vector_store %arg15[%c16_62, %c0_63], %101 {strides = array<i32>} : memref<96x64xbf16, #tpu.memory_space<vmem>>, vector<64x64xbf16>,
    %c7_64 = arith.constant 7 : index
    %c0_65 = arith.constant 0 : index
    %103 = vector.load %arg15[%c7_64, %c0_65] : memref<96x64xbf16, #tpu.memory_space<vmem>>, vector<64x64xbf16>
    %cst_66 = arith.constant 0.000000e+00 : bf16
    %104 = vector.broadcast %cst_66 : bf16 to vector<64x64xbf16>
    %105 = vector.shape_cast %14 : vector<64x1xi1> to vector<64x1xi1>
    %106 = vector.broadcast %105 : vector<64x1xi1> to vector<64x64xi1>
    %107 = arith.select %106, %103, %104 : vector<64x64xi1>, vector<64x64xbf16>
    %c0_67 = arith.constant 0 : index
    %c0_68 = arith.constant 0 : index
    %c0_69 = arith.constant 0 : index
    %108 = vector.load %arg5[%c0_67, %c0_68, %c0_69] : memref<9x64x64xbf16, #tpu.memory_space<vmem>>, vector<1x64x64xbf16>
    %109 = vector.shape_cast %108 : vector<1x64x64xbf16> to vector<64x64xbf16>
    %cst_70 = arith.constant dense<0.000000e+00> : vector<64x64xf32>
    %110 = tpu.matmul %107, %109, %cst_70 {dimension_numbers = #tpu.dot_dimension_numbers<[1], [0], [0], [1], [0, 0, 1, 1], [], []>} : vector<64x64xbf16>, vector<64x64xbf16>, vector<64x64xf32> -> vector<64x64xf32>
    %c8_71 = arith.constant 8 : index
    %c0_72 = arith.constant 0 : index
    %111 = vector.load %arg15[%c8_71, %c0_72] : memref<96x64xbf16, #tpu.memory_space<vmem>>, vector<64x64xbf16>
    %cst_73 = arith.constant 0.000000e+00 : bf16
    %112 = vector.broadcast %cst_73 : bf16 to vector<64x64xbf16>
    %113 = vector.shape_cast %7 : vector<64x1xi1> to vector<64x1xi1>
    %114 = vector.broadcast %113 : vector<64x1xi1> to vector<64x64xi1>
    %115 = arith.select %114, %111, %112 : vector<64x64xi1>, vector<64x64xbf16>
    %c1_74 = arith.constant 1 : index
    %c0_75 = arith.constant 0 : index
    %c0_76 = arith.constant 0 : index
    %116 = vector.load %arg5[%c1_74, %c0_75, %c0_76] : memref<9x64x64xbf16, #tpu.memory_space<vmem>>, vector<1x64x64xbf16>
    %117 = vector.shape_cast %116 : vector<1x64x64xbf16> to vector<64x64xbf16>
    %cst_77 = arith.constant dense<0.000000e+00> : vector<64x64xf32>
    %118 = tpu.matmul %115, %117, %cst_77 {dimension_numbers = #tpu.dot_dimension_numbers<[1], [0], [0], [1], [0, 0, 1, 1], [], []>} : vector<64x64xbf16>, vector<64x64xbf16>, vector<64x64xf32> -> vector<64x64xf32>
    %119 = arith.addf %110, %118 : vector<64x64xf32>
    %c9_78 = arith.constant 9 : index
    %c0_79 = arith.constant 0 : index
    %120 = vector.load %arg15[%c9_78, %c0_79] : memref<96x64xbf16, #tpu.memory_space<vmem>>, vector<64x64xbf16>
    %cst_80 = arith.constant 0.000000e+00 : bf16
    %121 = vector.broadcast %cst_80 : bf16 to vector<64x64xbf16>
    %122 = vector.shape_cast %15 : vector<64x1xi1> to vector<64x1xi1>
    %123 = vector.broadcast %122 : vector<64x1xi1> to vector<64x64xi1>
    %124 = arith.select %123, %120, %121 : vector<64x64xi1>, vector<64x64xbf16>
    %c2_81 = arith.constant 2 : index
    %c0_82 = arith.constant 0 : index
    %c0_83 = arith.constant 0 : index
    %125 = vector.load %arg5[%c2_81, %c0_82, %c0_83] : memref<9x64x64xbf16, #tpu.memory_space<vmem>>, vector<1x64x64xbf16>
    %126 = vector.shape_cast %125 : vector<1x64x64xbf16> to vector<64x64xbf16>
    %cst_84 = arith.constant dense<0.000000e+00> : vector<64x64xf32>
    %127 = tpu.matmul %124, %126, %cst_84 {dimension_numbers = #tpu.dot_dimension_numbers<[1], [0], [0], [1], [0, 0, 1, 1], [], []>} : vector<64x64xbf16>, vector<64x64xbf16>, vector<64x64xf32> -> vector<64x64xf32>
    %128 = arith.addf %119, %127 : vector<64x64xf32>
    %c15_85 = arith.constant 15 : index
    %c0_86 = arith.constant 0 : index
    %129 = vector.load %arg15[%c15_85, %c0_86] : memref<96x64xbf16, #tpu.memory_space<vmem>>, vector<64x64xbf16>
    %cst_87 = arith.constant 0.000000e+00 : bf16
    %130 = vector.broadcast %cst_87 : bf16 to vector<64x64xbf16>
    %131 = vector.shape_cast %11 : vector<64x1xi1> to vector<64x1xi1>
    %132 = vector.broadcast %131 : vector<64x1xi1> to vector<64x64xi1>
    %133 = arith.select %132, %129, %130 : vector<64x64xi1>, vector<64x64xbf16>
    %c3_88 = arith.constant 3 : index
    %c0_89 = arith.constant 0 : index
    %c0_90 = arith.constant 0 : index
    %134 = vector.load %arg5[%c3_88, %c0_89, %c0_90] : memref<9x64x64xbf16, #tpu.memory_space<vmem>>, vector<1x64x64xbf16>
    %135 = vector.shape_cast %134 : vector<1x64x64xbf16> to vector<64x64xbf16>
    %cst_91 = arith.constant dense<0.000000e+00> : vector<64x64xf32>
    %136 = tpu.matmul %133, %135, %cst_91 {dimension_numbers = #tpu.dot_dimension_numbers<[1], [0], [0], [1], [0, 0, 1, 1], [], []>} : vector<64x64xbf16>, vector<64x64xbf16>, vector<64x64xf32> -> vector<64x64xf32>
    %137 = arith.addf %128, %136 : vector<64x64xf32>
    %c4_92 = arith.constant 4 : index
    %c0_93 = arith.constant 0 : index
    %c0_94 = arith.constant 0 : index
    %138 = vector.load %arg5[%c4_92, %c0_93, %c0_94] : memref<9x64x64xbf16, #tpu.memory_space<vmem>>, vector<1x64x64xbf16>
    %139 = vector.shape_cast %138 : vector<1x64x64xbf16> to vector<64x64xbf16>
    %cst_95 = arith.constant dense<0.000000e+00> : vector<64x64xf32>
    %140 = tpu.matmul %101, %139, %cst_95 {dimension_numbers = #tpu.dot_dimension_numbers<[1], [0], [0], [1], [0, 0, 1, 1], [], []>} : vector<64x64xbf16>, vector<64x64xbf16>, vector<64x64xf32> -> vector<64x64xf32>
    %141 = arith.addf %137, %140 : vector<64x64xf32>
    %c17_96 = arith.constant 17 : index
    %c0_97 = arith.constant 0 : index
    %142 = vector.load %arg15[%c17_96, %c0_97] : memref<96x64xbf16, #tpu.memory_space<vmem>>, vector<64x64xbf16>
    %cst_98 = arith.constant 0.000000e+00 : bf16
    %143 = vector.broadcast %cst_98 : bf16 to vector<64x64xbf16>
    %144 = vector.shape_cast %13 : vector<64x1xi1> to vector<64x1xi1>
    %145 = vector.broadcast %144 : vector<64x1xi1> to vector<64x64xi1>
    %146 = arith.select %145, %142, %143 : vector<64x64xi1>, vector<64x64xbf16>
    %c5_99 = arith.constant 5 : index
    %c0_100 = arith.constant 0 : index
    %c0_101 = arith.constant 0 : index
    %147 = vector.load %arg5[%c5_99, %c0_100, %c0_101] : memref<9x64x64xbf16, #tpu.memory_space<vmem>>, vector<1x64x64xbf16>
    %148 = vector.shape_cast %147 : vector<1x64x64xbf16> to vector<64x64xbf16>
    %cst_102 = arith.constant dense<0.000000e+00> : vector<64x64xf32>
    %149 = tpu.matmul %146, %148, %cst_102 {dimension_numbers = #tpu.dot_dimension_numbers<[1], [0], [0], [1], [0, 0, 1, 1], [], []>} : vector<64x64xbf16>, vector<64x64xbf16>, vector<64x64xf32> -> vector<64x64xf32>
    %150 = arith.addf %141, %149 : vector<64x64xf32>
    %c23_103 = arith.constant 23 : index
    %c0_104 = arith.constant 0 : index
    %151 = vector.load %arg15[%c23_103, %c0_104] : memref<96x64xbf16, #tpu.memory_space<vmem>>, vector<64x64xbf16>
    %cst_105 = arith.constant 0.000000e+00 : bf16
    %152 = vector.broadcast %cst_105 : bf16 to vector<64x64xbf16>
    %153 = vector.shape_cast %16 : vector<64x1xi1> to vector<64x1xi1>
    %154 = vector.broadcast %153 : vector<64x1xi1> to vector<64x64xi1>
    %155 = arith.select %154, %151, %152 : vector<64x64xi1>, vector<64x64xbf16>
    %c6_106 = arith.constant 6 : index
    %c0_107 = arith.constant 0 : index
    %c0_108 = arith.constant 0 : index
    %156 = vector.load %arg5[%c6_106, %c0_107, %c0_108] : memref<9x64x64xbf16, #tpu.memory_space<vmem>>, vector<1x64x64xbf16>
    %157 = vector.shape_cast %156 : vector<1x64x64xbf16> to vector<64x64xbf16>
    %cst_109 = arith.constant dense<0.000000e+00> : vector<64x64xf32>
    %158 = tpu.matmul %155, %157, %cst_109 {dimension_numbers = #tpu.dot_dimension_numbers<[1], [0], [0], [1], [0, 0, 1, 1], [], []>} : vector<64x64xbf16>, vector<64x64xbf16>, vector<64x64xf32> -> vector<64x64xf32>
    %159 = arith.addf %150, %158 : vector<64x64xf32>
    %c24_110 = arith.constant 24 : index
    %c0_111 = arith.constant 0 : index
    %160 = vector.load %arg15[%c24_110, %c0_111] : memref<96x64xbf16, #tpu.memory_space<vmem>>, vector<64x64xbf16>
    %cst_112 = arith.constant 0.000000e+00 : bf16
    %161 = vector.broadcast %cst_112 : bf16 to vector<64x64xbf16>
    %162 = vector.shape_cast %9 : vector<64x1xi1> to vector<64x1xi1>
    %163 = vector.broadcast %162 : vector<64x1xi1> to vector<64x64xi1>
    %164 = arith.select %163, %160, %161 : vector<64x64xi1>, vector<64x64xbf16>
    %c7_113 = arith.constant 7 : index
    %c0_114 = arith.constant 0 : index
    %c0_115 = arith.constant 0 : index
    %165 = vector.load %arg5[%c7_113, %c0_114, %c0_115] : memref<9x64x64xbf16, #tpu.memory_space<vmem>>, vector<1x64x64xbf16>
    %166 = vector.shape_cast %165 : vector<1x64x64xbf16> to vector<64x64xbf16>
    %cst_116 = arith.constant dense<0.000000e+00> : vector<64x64xf32>
    %167 = tpu.matmul %164, %166, %cst_116 {dimension_numbers = #tpu.dot_dimension_numbers<[1], [0], [0], [1], [0, 0, 1, 1], [], []>} : vector<64x64xbf16>, vector<64x64xbf16>, vector<64x64xf32> -> vector<64x64xf32>
    %168 = arith.addf %159, %167 : vector<64x64xf32>
    %c25_117 = arith.constant 25 : index
    %c0_118 = arith.constant 0 : index
    %169 = vector.load %arg15[%c25_117, %c0_118] : memref<96x64xbf16, #tpu.memory_space<vmem>>, vector<64x64xbf16>
    %cst_119 = arith.constant 0.000000e+00 : bf16
    %170 = vector.broadcast %cst_119 : bf16 to vector<64x64xbf16>
    %171 = vector.shape_cast %17 : vector<64x1xi1> to vector<64x1xi1>
    %172 = vector.broadcast %171 : vector<64x1xi1> to vector<64x64xi1>
    %173 = arith.select %172, %169, %170 : vector<64x64xi1>, vector<64x64xbf16>
    %c8_120 = arith.constant 8 : index
    %c0_121 = arith.constant 0 : index
    %c0_122 = arith.constant 0 : index
    %174 = vector.load %arg5[%c8_120, %c0_121, %c0_122] : memref<9x64x64xbf16, #tpu.memory_space<vmem>>, vector<1x64x64xbf16>
    %175 = vector.shape_cast %174 : vector<1x64x64xbf16> to vector<64x64xbf16>
    %cst_123 = arith.constant dense<0.000000e+00> : vector<64x64xf32>
    %176 = tpu.matmul %173, %175, %cst_123 {dimension_numbers = #tpu.dot_dimension_numbers<[1], [0], [0], [1], [0, 0, 1, 1], [], []>} : vector<64x64xbf16>, vector<64x64xbf16>, vector<64x64xf32> -> vector<64x64xf32>
    %177 = arith.addf %168, %176 : vector<64x64xf32>
    %c0_124 = arith.constant 0 : index
    %c0_125 = arith.constant 0 : index
    %178 = vector.load %arg10[%c0_124, %c0_125] : memref<1x64xf32, #tpu.memory_space<vmem>>, vector<1x64xf32>
    %179 = vector.broadcast %178 : vector<1x64xf32> to vector<64x64xf32>
    %180 = arith.addf %177, %179 : vector<64x64xf32>
    %cst_126 = arith.constant 0.000000e+00 : f32
    %181 = vector.broadcast %cst_126 : f32 to vector<64x64xf32>
    %182 = arith.maximumf %180, %181 : vector<64x64xf32>
    %183 = arith.truncf %182 : vector<64x64xf32> to vector<64x64xbf16>
    %c16_127 = arith.constant 16 : index
    %c0_128 = arith.constant 0 : index
    %184 = vector.load %arg15[%c16_127, %c0_128] : memref<96x64xbf16, #tpu.memory_space<vmem>>, vector<64x64xbf16>
    tpu.vector_store %arg15[%c16_127, %c0_128], %183 {strides = array<i32>} : memref<96x64xbf16, #tpu.memory_space<vmem>>, vector<64x64xbf16>,
    %c7_129 = arith.constant 7 : index
    %c0_130 = arith.constant 0 : index
    %185 = vector.load %arg15[%c7_129, %c0_130] : memref<96x64xbf16, #tpu.memory_space<vmem>>, vector<64x64xbf16>
    %cst_131 = arith.constant 0.000000e+00 : bf16
    %186 = vector.broadcast %cst_131 : bf16 to vector<64x64xbf16>
    %187 = vector.shape_cast %14 : vector<64x1xi1> to vector<64x1xi1>
    %188 = vector.broadcast %187 : vector<64x1xi1> to vector<64x64xi1>
    %189 = arith.select %188, %185, %186 : vector<64x64xi1>, vector<64x64xbf16>
    %c0_132 = arith.constant 0 : index
    %c0_133 = arith.constant 0 : index
    %c0_134 = arith.constant 0 : index
    %190 = vector.load %arg6[%c0_132, %c0_133, %c0_134] : memref<9x64x64xbf16, #tpu.memory_space<vmem>>, vector<1x64x64xbf16>
    %191 = vector.shape_cast %190 : vector<1x64x64xbf16> to vector<64x64xbf16>
    %cst_135 = arith.constant dense<0.000000e+00> : vector<64x64xf32>
    %192 = tpu.matmul %189, %191, %cst_135 {dimension_numbers = #tpu.dot_dimension_numbers<[1], [0], [0], [1], [0, 0, 1, 1], [], []>} : vector<64x64xbf16>, vector<64x64xbf16>, vector<64x64xf32> -> vector<64x64xf32>
    %c8_136 = arith.constant 8 : index
    %c0_137 = arith.constant 0 : index
    %193 = vector.load %arg15[%c8_136, %c0_137] : memref<96x64xbf16, #tpu.memory_space<vmem>>, vector<64x64xbf16>
    %cst_138 = arith.constant 0.000000e+00 : bf16
    %194 = vector.broadcast %cst_138 : bf16 to vector<64x64xbf16>
    %195 = vector.shape_cast %7 : vector<64x1xi1> to vector<64x1xi1>
    %196 = vector.broadcast %195 : vector<64x1xi1> to vector<64x64xi1>
    %197 = arith.select %196, %193, %194 : vector<64x64xi1>, vector<64x64xbf16>
    %c1_139 = arith.constant 1 : index
    %c0_140 = arith.constant 0 : index
    %c0_141 = arith.constant 0 : index
    %198 = vector.load %arg6[%c1_139, %c0_140, %c0_141] : memref<9x64x64xbf16, #tpu.memory_space<vmem>>, vector<1x64x64xbf16>
    %199 = vector.shape_cast %198 : vector<1x64x64xbf16> to vector<64x64xbf16>
    %cst_142 = arith.constant dense<0.000000e+00> : vector<64x64xf32>
    %200 = tpu.matmul %197, %199, %cst_142 {dimension_numbers = #tpu.dot_dimension_numbers<[1], [0], [0], [1], [0, 0, 1, 1], [], []>} : vector<64x64xbf16>, vector<64x64xbf16>, vector<64x64xf32> -> vector<64x64xf32>
    %201 = arith.addf %192, %200 : vector<64x64xf32>
    %c9_143 = arith.constant 9 : index
    %c0_144 = arith.constant 0 : index
    %202 = vector.load %arg15[%c9_143, %c0_144] : memref<96x64xbf16, #tpu.memory_space<vmem>>, vector<64x64xbf16>
    %cst_145 = arith.constant 0.000000e+00 : bf16
    %203 = vector.broadcast %cst_145 : bf16 to vector<64x64xbf16>
    %204 = vector.shape_cast %15 : vector<64x1xi1> to vector<64x1xi1>
    %205 = vector.broadcast %204 : vector<64x1xi1> to vector<64x64xi1>
    %206 = arith.select %205, %202, %203 : vector<64x64xi1>, vector<64x64xbf16>
    %c2_146 = arith.constant 2 : index
    %c0_147 = arith.constant 0 : index
    %c0_148 = arith.constant 0 : index
    %207 = vector.load %arg6[%c2_146, %c0_147, %c0_148] : memref<9x64x64xbf16, #tpu.memory_space<vmem>>, vector<1x64x64xbf16>
    %208 = vector.shape_cast %207 : vector<1x64x64xbf16> to vector<64x64xbf16>
    %cst_149 = arith.constant dense<0.000000e+00> : vector<64x64xf32>
    %209 = tpu.matmul %206, %208, %cst_149 {dimension_numbers = #tpu.dot_dimension_numbers<[1], [0], [0], [1], [0, 0, 1, 1], [], []>} : vector<64x64xbf16>, vector<64x64xbf16>, vector<64x64xf32> -> vector<64x64xf32>
    %210 = arith.addf %201, %209 : vector<64x64xf32>
    %c15_150 = arith.constant 15 : index
    %c0_151 = arith.constant 0 : index
    %211 = vector.load %arg15[%c15_150, %c0_151] : memref<96x64xbf16, #tpu.memory_space<vmem>>, vector<64x64xbf16>
    %cst_152 = arith.constant 0.000000e+00 : bf16
    %212 = vector.broadcast %cst_152 : bf16 to vector<64x64xbf16>
    %213 = vector.shape_cast %11 : vector<64x1xi1> to vector<64x1xi1>
    %214 = vector.broadcast %213 : vector<64x1xi1> to vector<64x64xi1>
    %215 = arith.select %214, %211, %212 : vector<64x64xi1>, vector<64x64xbf16>
    %c3_153 = arith.constant 3 : index
    %c0_154 = arith.constant 0 : index
    %c0_155 = arith.constant 0 : index
    %216 = vector.load %arg6[%c3_153, %c0_154, %c0_155] : memref<9x64x64xbf16, #tpu.memory_space<vmem>>, vector<1x64x64xbf16>
    %217 = vector.shape_cast %216 : vector<1x64x64xbf16> to vector<64x64xbf16>
    %cst_156 = arith.constant dense<0.000000e+00> : vector<64x64xf32>
    %218 = tpu.matmul %215, %217, %cst_156 {dimension_numbers = #tpu.dot_dimension_numbers<[1], [0], [0], [1], [0, 0, 1, 1], [], []>} : vector<64x64xbf16>, vector<64x64xbf16>, vector<64x64xf32> -> vector<64x64xf32>
    %219 = arith.addf %210, %218 : vector<64x64xf32>
    %c4_157 = arith.constant 4 : index
    %c0_158 = arith.constant 0 : index
    %c0_159 = arith.constant 0 : index
    %220 = vector.load %arg6[%c4_157, %c0_158, %c0_159] : memref<9x64x64xbf16, #tpu.memory_space<vmem>>, vector<1x64x64xbf16>
    %221 = vector.shape_cast %220 : vector<1x64x64xbf16> to vector<64x64xbf16>
    %cst_160 = arith.constant dense<0.000000e+00> : vector<64x64xf32>
    %222 = tpu.matmul %183, %221, %cst_160 {dimension_numbers = #tpu.dot_dimension_numbers<[1], [0], [0], [1], [0, 0, 1, 1], [], []>} : vector<64x64xbf16>, vector<64x64xbf16>, vector<64x64xf32> -> vector<64x64xf32>
    %223 = arith.addf %219, %222 : vector<64x64xf32>
    %c17_161 = arith.constant 17 : index
    %c0_162 = arith.constant 0 : index
    %224 = vector.load %arg15[%c17_161, %c0_162] : memref<96x64xbf16, #tpu.memory_space<vmem>>, vector<64x64xbf16>
    %cst_163 = arith.constant 0.000000e+00 : bf16
    %225 = vector.broadcast %cst_163 : bf16 to vector<64x64xbf16>
    %226 = vector.shape_cast %13 : vector<64x1xi1> to vector<64x1xi1>
    %227 = vector.broadcast %226 : vector<64x1xi1> to vector<64x64xi1>
    %228 = arith.select %227, %224, %225 : vector<64x64xi1>, vector<64x64xbf16>
    %c5_164 = arith.constant 5 : index
    %c0_165 = arith.constant 0 : index
    %c0_166 = arith.constant 0 : index
    %229 = vector.load %arg6[%c5_164, %c0_165, %c0_166] : memref<9x64x64xbf16, #tpu.memory_space<vmem>>, vector<1x64x64xbf16>
    %230 = vector.shape_cast %229 : vector<1x64x64xbf16> to vector<64x64xbf16>
    %cst_167 = arith.constant dense<0.000000e+00> : vector<64x64xf32>
    %231 = tpu.matmul %228, %230, %cst_167 {dimension_numbers = #tpu.dot_dimension_numbers<[1], [0], [0], [1], [0, 0, 1, 1], [], []>} : vector<64x64xbf16>, vector<64x64xbf16>, vector<64x64xf32> -> vector<64x64xf32>
    %232 = arith.addf %223, %231 : vector<64x64xf32>
    %c23_168 = arith.constant 23 : index
    %c0_169 = arith.constant 0 : index
    %233 = vector.load %arg15[%c23_168, %c0_169] : memref<96x64xbf16, #tpu.memory_space<vmem>>, vector<64x64xbf16>
    %cst_170 = arith.constant 0.000000e+00 : bf16
    %234 = vector.broadcast %cst_170 : bf16 to vector<64x64xbf16>
    %235 = vector.shape_cast %16 : vector<64x1xi1> to vector<64x1xi1>
    %236 = vector.broadcast %235 : vector<64x1xi1> to vector<64x64xi1>
    %237 = arith.select %236, %233, %234 : vector<64x64xi1>, vector<64x64xbf16>
    %c6_171 = arith.constant 6 : index
    %c0_172 = arith.constant 0 : index
    %c0_173 = arith.constant 0 : index
    %238 = vector.load %arg6[%c6_171, %c0_172, %c0_173] : memref<9x64x64xbf16, #tpu.memory_space<vmem>>, vector<1x64x64xbf16>
    %239 = vector.shape_cast %238 : vector<1x64x64xbf16> to vector<64x64xbf16>
    %cst_174 = arith.constant dense<0.000000e+00> : vector<64x64xf32>
    %240 = tpu.matmul %237, %239, %cst_174 {dimension_numbers = #tpu.dot_dimension_numbers<[1], [0], [0], [1], [0, 0, 1, 1], [], []>} : vector<64x64xbf16>, vector<64x64xbf16>, vector<64x64xf32> -> vector<64x64xf32>
    %241 = arith.addf %232, %240 : vector<64x64xf32>
    %c24_175 = arith.constant 24 : index
    %c0_176 = arith.constant 0 : index
    %242 = vector.load %arg15[%c24_175, %c0_176] : memref<96x64xbf16, #tpu.memory_space<vmem>>, vector<64x64xbf16>
    %cst_177 = arith.constant 0.000000e+00 : bf16
    %243 = vector.broadcast %cst_177 : bf16 to vector<64x64xbf16>
    %244 = vector.shape_cast %9 : vector<64x1xi1> to vector<64x1xi1>
    %245 = vector.broadcast %244 : vector<64x1xi1> to vector<64x64xi1>
    %246 = arith.select %245, %242, %243 : vector<64x64xi1>, vector<64x64xbf16>
    %c7_178 = arith.constant 7 : index
    %c0_179 = arith.constant 0 : index
    %c0_180 = arith.constant 0 : index
    %247 = vector.load %arg6[%c7_178, %c0_179, %c0_180] : memref<9x64x64xbf16, #tpu.memory_space<vmem>>, vector<1x64x64xbf16>
    %248 = vector.shape_cast %247 : vector<1x64x64xbf16> to vector<64x64xbf16>
    %cst_181 = arith.constant dense<0.000000e+00> : vector<64x64xf32>
    %249 = tpu.matmul %246, %248, %cst_181 {dimension_numbers = #tpu.dot_dimension_numbers<[1], [0], [0], [1], [0, 0, 1, 1], [], []>} : vector<64x64xbf16>, vector<64x64xbf16>, vector<64x64xf32> -> vector<64x64xf32>
    %250 = arith.addf %241, %249 : vector<64x64xf32>
    %c25_182 = arith.constant 25 : index
    %c0_183 = arith.constant 0 : index
    %251 = vector.load %arg15[%c25_182, %c0_183] : memref<96x64xbf16, #tpu.memory_space<vmem>>, vector<64x64xbf16>
    %cst_184 = arith.constant 0.000000e+00 : bf16
    %252 = vector.broadcast %cst_184 : bf16 to vector<64x64xbf16>
    %253 = vector.shape_cast %17 : vector<64x1xi1> to vector<64x1xi1>
    %254 = vector.broadcast %253 : vector<64x1xi1> to vector<64x64xi1>
    %255 = arith.select %254, %251, %252 : vector<64x64xi1>, vector<64x64xbf16>
    %c8_185 = arith.constant 8 : index
    %c0_186 = arith.constant 0 : index
    %c0_187 = arith.constant 0 : index
    %256 = vector.load %arg6[%c8_185, %c0_186, %c0_187] : memref<9x64x64xbf16, #tpu.memory_space<vmem>>, vector<1x64x64xbf16>
    %257 = vector.shape_cast %256 : vector<1x64x64xbf16> to vector<64x64xbf16>
    %cst_188 = arith.constant dense<0.000000e+00> : vector<64x64xf32>
    %258 = tpu.matmul %255, %257, %cst_188 {dimension_numbers = #tpu.dot_dimension_numbers<[1], [0], [0], [1], [0, 0, 1, 1], [], []>} : vector<64x64xbf16>, vector<64x64xbf16>, vector<64x64xf32> -> vector<64x64xf32>
    %259 = arith.addf %250, %258 : vector<64x64xf32>
    %c0_189 = arith.constant 0 : index
    %c0_190 = arith.constant 0 : index
    %260 = vector.load %arg11[%c0_189, %c0_190] : memref<1x64xf32, #tpu.memory_space<vmem>>, vector<1x64xf32>
    %261 = vector.broadcast %260 : vector<1x64xf32> to vector<64x64xf32>
    %262 = arith.addf %259, %261 : vector<64x64xf32>
    %cst_191 = arith.constant 0.000000e+00 : f32
    %263 = vector.broadcast %cst_191 : f32 to vector<64x64xf32>
    %264 = arith.maximumf %262, %263 : vector<64x64xf32>
    %265 = arith.truncf %264 : vector<64x64xf32> to vector<64x64xbf16>
    %c16_192 = arith.constant 16 : index
    %c0_193 = arith.constant 0 : index
    %266 = vector.load %arg15[%c16_192, %c0_193] : memref<96x64xbf16, #tpu.memory_space<vmem>>, vector<64x64xbf16>
    tpu.vector_store %arg15[%c16_192, %c0_193], %265 {strides = array<i32>} : memref<96x64xbf16, #tpu.memory_space<vmem>>, vector<64x64xbf16>,
    %c7_194 = arith.constant 7 : index
    %c0_195 = arith.constant 0 : index
    %267 = vector.load %arg15[%c7_194, %c0_195] : memref<96x64xbf16, #tpu.memory_space<vmem>>, vector<64x64xbf16>
    %cst_196 = arith.constant 0.000000e+00 : bf16
    %268 = vector.broadcast %cst_196 : bf16 to vector<64x64xbf16>
    %269 = vector.shape_cast %14 : vector<64x1xi1> to vector<64x1xi1>
    %270 = vector.broadcast %269 : vector<64x1xi1> to vector<64x64xi1>
    %271 = arith.select %270, %267, %268 : vector<64x64xi1>, vector<64x64xbf16>
    %c0_197 = arith.constant 0 : index
    %c0_198 = arith.constant 0 : index
    %c0_199 = arith.constant 0 : index
    %272 = vector.load %arg7[%c0_197, %c0_198, %c0_199] : memref<9x64x64xbf16, #tpu.memory_space<vmem>>, vector<1x64x64xbf16>
    %273 = vector.shape_cast %272 : vector<1x64x64xbf16> to vector<64x64xbf16>
    %cst_200 = arith.constant dense<0.000000e+00> : vector<64x64xf32>
    %274 = tpu.matmul %271, %273, %cst_200 {dimension_numbers = #tpu.dot_dimension_numbers<[1], [0], [0], [1], [0, 0, 1, 1], [], []>} : vector<64x64xbf16>, vector<64x64xbf16>, vector<64x64xf32> -> vector<64x64xf32>
    %c8_201 = arith.constant 8 : index
    %c0_202 = arith.constant 0 : index
    %275 = vector.load %arg15[%c8_201, %c0_202] : memref<96x64xbf16, #tpu.memory_space<vmem>>, vector<64x64xbf16>
    %cst_203 = arith.constant 0.000000e+00 : bf16
    %276 = vector.broadcast %cst_203 : bf16 to vector<64x64xbf16>
    %277 = vector.shape_cast %7 : vector<64x1xi1> to vector<64x1xi1>
    %278 = vector.broadcast %277 : vector<64x1xi1> to vector<64x64xi1>
    %279 = arith.select %278, %275, %276 : vector<64x64xi1>, vector<64x64xbf16>
    %c1_204 = arith.constant 1 : index
    %c0_205 = arith.constant 0 : index
    %c0_206 = arith.constant 0 : index
    %280 = vector.load %arg7[%c1_204, %c0_205, %c0_206] : memref<9x64x64xbf16, #tpu.memory_space<vmem>>, vector<1x64x64xbf16>
    %281 = vector.shape_cast %280 : vector<1x64x64xbf16> to vector<64x64xbf16>
    %cst_207 = arith.constant dense<0.000000e+00> : vector<64x64xf32>
    %282 = tpu.matmul %279, %281, %cst_207 {dimension_numbers = #tpu.dot_dimension_numbers<[1], [0], [0], [1], [0, 0, 1, 1], [], []>} : vector<64x64xbf16>, vector<64x64xbf16>, vector<64x64xf32> -> vector<64x64xf32>
    %283 = arith.addf %274, %282 : vector<64x64xf32>
    %c9_208 = arith.constant 9 : index
    %c0_209 = arith.constant 0 : index
    %284 = vector.load %arg15[%c9_208, %c0_209] : memref<96x64xbf16, #tpu.memory_space<vmem>>, vector<64x64xbf16>
    %cst_210 = arith.constant 0.000000e+00 : bf16
    %285 = vector.broadcast %cst_210 : bf16 to vector<64x64xbf16>
    %286 = vector.shape_cast %15 : vector<64x1xi1> to vector<64x1xi1>
    %287 = vector.broadcast %286 : vector<64x1xi1> to vector<64x64xi1>
    %288 = arith.select %287, %284, %285 : vector<64x64xi1>, vector<64x64xbf16>
    %c2_211 = arith.constant 2 : index
    %c0_212 = arith.constant 0 : index
    %c0_213 = arith.constant 0 : index
    %289 = vector.load %arg7[%c2_211, %c0_212, %c0_213] : memref<9x64x64xbf16, #tpu.memory_space<vmem>>, vector<1x64x64xbf16>
    %290 = vector.shape_cast %289 : vector<1x64x64xbf16> to vector<64x64xbf16>
    %cst_214 = arith.constant dense<0.000000e+00> : vector<64x64xf32>
    %291 = tpu.matmul %288, %290, %cst_214 {dimension_numbers = #tpu.dot_dimension_numbers<[1], [0], [0], [1], [0, 0, 1, 1], [], []>} : vector<64x64xbf16>, vector<64x64xbf16>, vector<64x64xf32> -> vector<64x64xf32>
    %292 = arith.addf %283, %291 : vector<64x64xf32>
    %c15_215 = arith.constant 15 : index
    %c0_216 = arith.constant 0 : index
    %293 = vector.load %arg15[%c15_215, %c0_216] : memref<96x64xbf16, #tpu.memory_space<vmem>>, vector<64x64xbf16>
    %cst_217 = arith.constant 0.000000e+00 : bf16
    %294 = vector.broadcast %cst_217 : bf16 to vector<64x64xbf16>
    %295 = vector.shape_cast %11 : vector<64x1xi1> to vector<64x1xi1>
    %296 = vector.broadcast %295 : vector<64x1xi1> to vector<64x64xi1>
    %297 = arith.select %296, %293, %294 : vector<64x64xi1>, vector<64x64xbf16>
    %c3_218 = arith.constant 3 : index
    %c0_219 = arith.constant 0 : index
    %c0_220 = arith.constant 0 : index
    %298 = vector.load %arg7[%c3_218, %c0_219, %c0_220] : memref<9x64x64xbf16, #tpu.memory_space<vmem>>, vector<1x64x64xbf16>
    %299 = vector.shape_cast %298 : vector<1x64x64xbf16> to vector<64x64xbf16>
    %cst_221 = arith.constant dense<0.000000e+00> : vector<64x64xf32>
    %300 = tpu.matmul %297, %299, %cst_221 {dimension_numbers = #tpu.dot_dimension_numbers<[1], [0], [0], [1], [0, 0, 1, 1], [], []>} : vector<64x64xbf16>, vector<64x64xbf16>, vector<64x64xf32> -> vector<64x64xf32>
    %301 = arith.addf %292, %300 : vector<64x64xf32>
    %c4_222 = arith.constant 4 : index
    %c0_223 = arith.constant 0 : index
    %c0_224 = arith.constant 0 : index
    %302 = vector.load %arg7[%c4_222, %c0_223, %c0_224] : memref<9x64x64xbf16, #tpu.memory_space<vmem>>, vector<1x64x64xbf16>
    %303 = vector.shape_cast %302 : vector<1x64x64xbf16> to vector<64x64xbf16>
    %cst_225 = arith.constant dense<0.000000e+00> : vector<64x64xf32>
    %304 = tpu.matmul %265, %303, %cst_225 {dimension_numbers = #tpu.dot_dimension_numbers<[1], [0], [0], [1], [0, 0, 1, 1], [], []>} : vector<64x64xbf16>, vector<64x64xbf16>, vector<64x64xf32> -> vector<64x64xf32>
    %305 = arith.addf %301, %304 : vector<64x64xf32>
    %c17_226 = arith.constant 17 : index
    %c0_227 = arith.constant 0 : index
    %306 = vector.load %arg15[%c17_226, %c0_227] : memref<96x64xbf16, #tpu.memory_space<vmem>>, vector<64x64xbf16>
    %cst_228 = arith.constant 0.000000e+00 : bf16
    %307 = vector.broadcast %cst_228 : bf16 to vector<64x64xbf16>
    %308 = vector.shape_cast %13 : vector<64x1xi1> to vector<64x1xi1>
    %309 = vector.broadcast %308 : vector<64x1xi1> to vector<64x64xi1>
    %310 = arith.select %309, %306, %307 : vector<64x64xi1>, vector<64x64xbf16>
    %c5_229 = arith.constant 5 : index
    %c0_230 = arith.constant 0 : index
    %c0_231 = arith.constant 0 : index
    %311 = vector.load %arg7[%c5_229, %c0_230, %c0_231] : memref<9x64x64xbf16, #tpu.memory_space<vmem>>, vector<1x64x64xbf16>
    %312 = vector.shape_cast %311 : vector<1x64x64xbf16> to vector<64x64xbf16>
    %cst_232 = arith.constant dense<0.000000e+00> : vector<64x64xf32>
    %313 = tpu.matmul %310, %312, %cst_232 {dimension_numbers = #tpu.dot_dimension_numbers<[1], [0], [0], [1], [0, 0, 1, 1], [], []>} : vector<64x64xbf16>, vector<64x64xbf16>, vector<64x64xf32> -> vector<64x64xf32>
    %314 = arith.addf %305, %313 : vector<64x64xf32>
    %c23_233 = arith.constant 23 : index
    %c0_234 = arith.constant 0 : index
    %315 = vector.load %arg15[%c23_233, %c0_234] : memref<96x64xbf16, #tpu.memory_space<vmem>>, vector<64x64xbf16>
    %cst_235 = arith.constant 0.000000e+00 : bf16
    %316 = vector.broadcast %cst_235 : bf16 to vector<64x64xbf16>
    %317 = vector.shape_cast %16 : vector<64x1xi1> to vector<64x1xi1>
    %318 = vector.broadcast %317 : vector<64x1xi1> to vector<64x64xi1>
    %319 = arith.select %318, %315, %316 : vector<64x64xi1>, vector<64x64xbf16>
    %c6_236 = arith.constant 6 : index
    %c0_237 = arith.constant 0 : index
    %c0_238 = arith.constant 0 : index
    %320 = vector.load %arg7[%c6_236, %c0_237, %c0_238] : memref<9x64x64xbf16, #tpu.memory_space<vmem>>, vector<1x64x64xbf16>
    %321 = vector.shape_cast %320 : vector<1x64x64xbf16> to vector<64x64xbf16>
    %cst_239 = arith.constant dense<0.000000e+00> : vector<64x64xf32>
    %322 = tpu.matmul %319, %321, %cst_239 {dimension_numbers = #tpu.dot_dimension_numbers<[1], [0], [0], [1], [0, 0, 1, 1], [], []>} : vector<64x64xbf16>, vector<64x64xbf16>, vector<64x64xf32> -> vector<64x64xf32>
    %323 = arith.addf %314, %322 : vector<64x64xf32>
    %c24_240 = arith.constant 24 : index
    %c0_241 = arith.constant 0 : index
    %324 = vector.load %arg15[%c24_240, %c0_241] : memref<96x64xbf16, #tpu.memory_space<vmem>>, vector<64x64xbf16>
    %cst_242 = arith.constant 0.000000e+00 : bf16
    %325 = vector.broadcast %cst_242 : bf16 to vector<64x64xbf16>
    %326 = vector.shape_cast %9 : vector<64x1xi1> to vector<64x1xi1>
    %327 = vector.broadcast %326 : vector<64x1xi1> to vector<64x64xi1>
    %328 = arith.select %327, %324, %325 : vector<64x64xi1>, vector<64x64xbf16>
    %c7_243 = arith.constant 7 : index
    %c0_244 = arith.constant 0 : index
    %c0_245 = arith.constant 0 : index
    %329 = vector.load %arg7[%c7_243, %c0_244, %c0_245] : memref<9x64x64xbf16, #tpu.memory_space<vmem>>, vector<1x64x64xbf16>
    %330 = vector.shape_cast %329 : vector<1x64x64xbf16> to vector<64x64xbf16>
    %cst_246 = arith.constant dense<0.000000e+00> : vector<64x64xf32>
    %331 = tpu.matmul %328, %330, %cst_246 {dimension_numbers = #tpu.dot_dimension_numbers<[1], [0], [0], [1], [0, 0, 1, 1], [], []>} : vector<64x64xbf16>, vector<64x64xbf16>, vector<64x64xf32> -> vector<64x64xf32>
    %332 = arith.addf %323, %331 : vector<64x64xf32>
    %c25_247 = arith.constant 25 : index
    %c0_248 = arith.constant 0 : index
    %333 = vector.load %arg15[%c25_247, %c0_248] : memref<96x64xbf16, #tpu.memory_space<vmem>>, vector<64x64xbf16>
    %cst_249 = arith.constant 0.000000e+00 : bf16
    %334 = vector.broadcast %cst_249 : bf16 to vector<64x64xbf16>
    %335 = vector.shape_cast %17 : vector<64x1xi1> to vector<64x1xi1>
    %336 = vector.broadcast %335 : vector<64x1xi1> to vector<64x64xi1>
    %337 = arith.select %336, %333, %334 : vector<64x64xi1>, vector<64x64xbf16>
    %c8_250 = arith.constant 8 : index
    %c0_251 = arith.constant 0 : index
    %c0_252 = arith.constant 0 : index
    %338 = vector.load %arg7[%c8_250, %c0_251, %c0_252] : memref<9x64x64xbf16, #tpu.memory_space<vmem>>, vector<1x64x64xbf16>
    %339 = vector.shape_cast %338 : vector<1x64x64xbf16> to vector<64x64xbf16>
    %cst_253 = arith.constant dense<0.000000e+00> : vector<64x64xf32>
    %340 = tpu.matmul %337, %339, %cst_253 {dimension_numbers = #tpu.dot_dimension_numbers<[1], [0], [0], [1], [0, 0, 1, 1], [], []>} : vector<64x64xbf16>, vector<64x64xbf16>, vector<64x64xf32> -> vector<64x64xf32>
    %341 = arith.addf %332, %340 : vector<64x64xf32>
    %c0_254 = arith.constant 0 : index
    %c0_255 = arith.constant 0 : index
    %342 = vector.load %arg12[%c0_254, %c0_255] : memref<1x64xf32, #tpu.memory_space<vmem>>, vector<1x64xf32>
    %343 = vector.broadcast %342 : vector<1x64xf32> to vector<64x64xf32>
    %344 = arith.addf %341, %343 : vector<64x64xf32>
    %cst_256 = arith.constant 0.000000e+00 : f32
    %345 = vector.broadcast %cst_256 : f32 to vector<64x64xf32>
    %346 = arith.maximumf %344, %345 : vector<64x64xf32>
    %347 = arith.truncf %346 : vector<64x64xf32> to vector<64x64xbf16>
    %c16_257 = arith.constant 16 : index
    %c0_258 = arith.constant 0 : index
    %348 = vector.load %arg15[%c16_257, %c0_258] : memref<96x64xbf16, #tpu.memory_space<vmem>>, vector<64x64xbf16>
    tpu.vector_store %arg15[%c16_257, %c0_258], %347 {strides = array<i32>} : memref<96x64xbf16, #tpu.memory_space<vmem>>, vector<64x64xbf16>,
    %c7_259 = arith.constant 7 : index
    %c0_260 = arith.constant 0 : index
    %349 = vector.load %arg15[%c7_259, %c0_260] : memref<96x64xbf16, #tpu.memory_space<vmem>>, vector<64x64xbf16>
    %cst_261 = arith.constant 0.000000e+00 : bf16
    %350 = vector.broadcast %cst_261 : bf16 to vector<64x64xbf16>
    %351 = vector.shape_cast %14 : vector<64x1xi1> to vector<64x1xi1>
    %352 = vector.broadcast %351 : vector<64x1xi1> to vector<64x64xi1>
    %353 = arith.select %352, %349, %350 : vector<64x64xi1>, vector<64x64xbf16>
    %c0_262 = arith.constant 0 : index
    %c0_263 = arith.constant 0 : index
    %c0_264 = arith.constant 0 : index
    %354 = vector.load %arg8[%c0_262, %c0_263, %c0_264] : memref<9x64x36xbf16, #tpu.memory_space<vmem>>, vector<1x64x36xbf16>
    %355 = vector.shape_cast %354 : vector<1x64x36xbf16> to vector<64x36xbf16>
    %cst_265 = arith.constant dense<0.000000e+00> : vector<64x36xf32>
    %356 = tpu.matmul %353, %355, %cst_265 {dimension_numbers = #tpu.dot_dimension_numbers<[1], [0], [0], [1], [0, 0, 1, 1], [], []>} : vector<64x64xbf16>, vector<64x36xbf16>, vector<64x36xf32> -> vector<64x36xf32>
    %c8_266 = arith.constant 8 : index
    %c0_267 = arith.constant 0 : index
    %357 = vector.load %arg15[%c8_266, %c0_267] : memref<96x64xbf16, #tpu.memory_space<vmem>>, vector<64x64xbf16>
    %cst_268 = arith.constant 0.000000e+00 : bf16
    %358 = vector.broadcast %cst_268 : bf16 to vector<64x64xbf16>
    %359 = vector.shape_cast %7 : vector<64x1xi1> to vector<64x1xi1>
    %360 = vector.broadcast %359 : vector<64x1xi1> to vector<64x64xi1>
    %361 = arith.select %360, %357, %358 : vector<64x64xi1>, vector<64x64xbf16>
    %c1_269 = arith.constant 1 : index
    %c0_270 = arith.constant 0 : index
    %c0_271 = arith.constant 0 : index
    %362 = vector.load %arg8[%c1_269, %c0_270, %c0_271] : memref<9x64x36xbf16, #tpu.memory_space<vmem>>, vector<1x64x36xbf16>
    %363 = vector.shape_cast %362 : vector<1x64x36xbf16> to vector<64x36xbf16>
    %cst_272 = arith.constant dense<0.000000e+00> : vector<64x36xf32>
    %364 = tpu.matmul %361, %363, %cst_272 {dimension_numbers = #tpu.dot_dimension_numbers<[1], [0], [0], [1], [0, 0, 1, 1], [], []>} : vector<64x64xbf16>, vector<64x36xbf16>, vector<64x36xf32> -> vector<64x36xf32>
    %365 = arith.addf %356, %364 : vector<64x36xf32>
    %c9_273 = arith.constant 9 : index
    %c0_274 = arith.constant 0 : index
    %366 = vector.load %arg15[%c9_273, %c0_274] : memref<96x64xbf16, #tpu.memory_space<vmem>>, vector<64x64xbf16>
    %cst_275 = arith.constant 0.000000e+00 : bf16
    %367 = vector.broadcast %cst_275 : bf16 to vector<64x64xbf16>
    %368 = vector.shape_cast %15 : vector<64x1xi1> to vector<64x1xi1>
    %369 = vector.broadcast %368 : vector<64x1xi1> to vector<64x64xi1>
    %370 = arith.select %369, %366, %367 : vector<64x64xi1>, vector<64x64xbf16>
    %c2_276 = arith.constant 2 : index
    %c0_277 = arith.constant 0 : index
    %c0_278 = arith.constant 0 : index
    %371 = vector.load %arg8[%c2_276, %c0_277, %c0_278] : memref<9x64x36xbf16, #tpu.memory_space<vmem>>, vector<1x64x36xbf16>
    %372 = vector.shape_cast %371 : vector<1x64x36xbf16> to vector<64x36xbf16>
    %cst_279 = arith.constant dense<0.000000e+00> : vector<64x36xf32>
    %373 = tpu.matmul %370, %372, %cst_279 {dimension_numbers = #tpu.dot_dimension_numbers<[1], [0], [0], [1], [0, 0, 1, 1], [], []>} : vector<64x64xbf16>, vector<64x36xbf16>, vector<64x36xf32> -> vector<64x36xf32>
    %374 = arith.addf %365, %373 : vector<64x36xf32>
    %c15_280 = arith.constant 15 : index
    %c0_281 = arith.constant 0 : index
    %375 = vector.load %arg15[%c15_280, %c0_281] : memref<96x64xbf16, #tpu.memory_space<vmem>>, vector<64x64xbf16>
    %cst_282 = arith.constant 0.000000e+00 : bf16
    %376 = vector.broadcast %cst_282 : bf16 to vector<64x64xbf16>
    %377 = vector.shape_cast %11 : vector<64x1xi1> to vector<64x1xi1>
    %378 = vector.broadcast %377 : vector<64x1xi1> to vector<64x64xi1>
    %379 = arith.select %378, %375, %376 : vector<64x64xi1>, vector<64x64xbf16>
    %c3_283 = arith.constant 3 : index
    %c0_284 = arith.constant 0 : index
    %c0_285 = arith.constant 0 : index
    %380 = vector.load %arg8[%c3_283, %c0_284, %c0_285] : memref<9x64x36xbf16, #tpu.memory_space<vmem>>, vector<1x64x36xbf16>
    %381 = vector.shape_cast %380 : vector<1x64x36xbf16> to vector<64x36xbf16>
    %cst_286 = arith.constant dense<0.000000e+00> : vector<64x36xf32>
    %382 = tpu.matmul %379, %381, %cst_286 {dimension_numbers = #tpu.dot_dimension_numbers<[1], [0], [0], [1], [0, 0, 1, 1], [], []>} : vector<64x64xbf16>, vector<64x36xbf16>, vector<64x36xf32> -> vector<64x36xf32>
    %383 = arith.addf %374, %382 : vector<64x36xf32>
    %c4_287 = arith.constant 4 : index
    %c0_288 = arith.constant 0 : index
    %c0_289 = arith.constant 0 : index
    %384 = vector.load %arg8[%c4_287, %c0_288, %c0_289] : memref<9x64x36xbf16, #tpu.memory_space<vmem>>, vector<1x64x36xbf16>
    %385 = vector.shape_cast %384 : vector<1x64x36xbf16> to vector<64x36xbf16>
    %cst_290 = arith.constant dense<0.000000e+00> : vector<64x36xf32>
    %386 = tpu.matmul %347, %385, %cst_290 {dimension_numbers = #tpu.dot_dimension_numbers<[1], [0], [0], [1], [0, 0, 1, 1], [], []>} : vector<64x64xbf16>, vector<64x36xbf16>, vector<64x36xf32> -> vector<64x36xf32>
    %387 = arith.addf %383, %386 : vector<64x36xf32>
    %c17_291 = arith.constant 17 : index
    %c0_292 = arith.constant 0 : index
    %388 = vector.load %arg15[%c17_291, %c0_292] : memref<96x64xbf16, #tpu.memory_space<vmem>>, vector<64x64xbf16>
    %cst_293 = arith.constant 0.000000e+00 : bf16
    %389 = vector.broadcast %cst_293 : bf16 to vector<64x64xbf16>
    %390 = vector.shape_cast %13 : vector<64x1xi1> to vector<64x1xi1>
    %391 = vector.broadcast %390 : vector<64x1xi1> to vector<64x64xi1>
    %392 = arith.select %391, %388, %389 : vector<64x64xi1>, vector<64x64xbf16>
    %c5_294 = arith.constant 5 : index
    %c0_295 = arith.constant 0 : index
    %c0_296 = arith.constant 0 : index
    %393 = vector.load %arg8[%c5_294, %c0_295, %c0_296] : memref<9x64x36xbf16, #tpu.memory_space<vmem>>, vector<1x64x36xbf16>
    %394 = vector.shape_cast %393 : vector<1x64x36xbf16> to vector<64x36xbf16>
    %cst_297 = arith.constant dense<0.000000e+00> : vector<64x36xf32>
    %395 = tpu.matmul %392, %394, %cst_297 {dimension_numbers = #tpu.dot_dimension_numbers<[1], [0], [0], [1], [0, 0, 1, 1], [], []>} : vector<64x64xbf16>, vector<64x36xbf16>, vector<64x36xf32> -> vector<64x36xf32>
    %396 = arith.addf %387, %395 : vector<64x36xf32>
    %c23_298 = arith.constant 23 : index
    %c0_299 = arith.constant 0 : index
    %397 = vector.load %arg15[%c23_298, %c0_299] : memref<96x64xbf16, #tpu.memory_space<vmem>>, vector<64x64xbf16>
    %cst_300 = arith.constant 0.000000e+00 : bf16
    %398 = vector.broadcast %cst_300 : bf16 to vector<64x64xbf16>
    %399 = vector.shape_cast %16 : vector<64x1xi1> to vector<64x1xi1>
    %400 = vector.broadcast %399 : vector<64x1xi1> to vector<64x64xi1>
    %401 = arith.select %400, %397, %398 : vector<64x64xi1>, vector<64x64xbf16>
    %c6_301 = arith.constant 6 : index
    %c0_302 = arith.constant 0 : index
    %c0_303 = arith.constant 0 : index
    %402 = vector.load %arg8[%c6_301, %c0_302, %c0_303] : memref<9x64x36xbf16, #tpu.memory_space<vmem>>, vector<1x64x36xbf16>
    %403 = vector.shape_cast %402 : vector<1x64x36xbf16> to vector<64x36xbf16>
    %cst_304 = arith.constant dense<0.000000e+00> : vector<64x36xf32>
    %404 = tpu.matmul %401, %403, %cst_304 {dimension_numbers = #tpu.dot_dimension_numbers<[1], [0], [0], [1], [0, 0, 1, 1], [], []>} : vector<64x64xbf16>, vector<64x36xbf16>, vector<64x36xf32> -> vector<64x36xf32>
    %405 = arith.addf %396, %404 : vector<64x36xf32>
    %c24_305 = arith.constant 24 : index
    %c0_306 = arith.constant 0 : index
    %406 = vector.load %arg15[%c24_305, %c0_306] : memref<96x64xbf16, #tpu.memory_space<vmem>>, vector<64x64xbf16>
    %cst_307 = arith.constant 0.000000e+00 : bf16
    %407 = vector.broadcast %cst_307 : bf16 to vector<64x64xbf16>
    %408 = vector.shape_cast %9 : vector<64x1xi1> to vector<64x1xi1>
    %409 = vector.broadcast %408 : vector<64x1xi1> to vector<64x64xi1>
    %410 = arith.select %409, %406, %407 : vector<64x64xi1>, vector<64x64xbf16>
    %c7_308 = arith.constant 7 : index
    %c0_309 = arith.constant 0 : index
    %c0_310 = arith.constant 0 : index
    %411 = vector.load %arg8[%c7_308, %c0_309, %c0_310] : memref<9x64x36xbf16, #tpu.memory_space<vmem>>, vector<1x64x36xbf16>
    %412 = vector.shape_cast %411 : vector<1x64x36xbf16> to vector<64x36xbf16>
    %cst_311 = arith.constant dense<0.000000e+00> : vector<64x36xf32>
    %413 = tpu.matmul %410, %412, %cst_311 {dimension_numbers = #tpu.dot_dimension_numbers<[1], [0], [0], [1], [0, 0, 1, 1], [], []>} : vector<64x64xbf16>, vector<64x36xbf16>, vector<64x36xf32> -> vector<64x36xf32>
    %414 = arith.addf %405, %413 : vector<64x36xf32>
    %c25_312 = arith.constant 25 : index
    %c0_313 = arith.constant 0 : index
    %415 = vector.load %arg15[%c25_312, %c0_313] : memref<96x64xbf16, #tpu.memory_space<vmem>>, vector<64x64xbf16>
    %cst_314 = arith.constant 0.000000e+00 : bf16
    %416 = vector.broadcast %cst_314 : bf16 to vector<64x64xbf16>
    %417 = vector.shape_cast %17 : vector<64x1xi1> to vector<64x1xi1>
    %418 = vector.broadcast %417 : vector<64x1xi1> to vector<64x64xi1>
    %419 = arith.select %418, %415, %416 : vector<64x64xi1>, vector<64x64xbf16>
    %c8_315 = arith.constant 8 : index
    %c0_316 = arith.constant 0 : index
    %c0_317 = arith.constant 0 : index
    %420 = vector.load %arg8[%c8_315, %c0_316, %c0_317] : memref<9x64x36xbf16, #tpu.memory_space<vmem>>, vector<1x64x36xbf16>
    %421 = vector.shape_cast %420 : vector<1x64x36xbf16> to vector<64x36xbf16>
    %cst_318 = arith.constant dense<0.000000e+00> : vector<64x36xf32>
    %422 = tpu.matmul %419, %421, %cst_318 {dimension_numbers = #tpu.dot_dimension_numbers<[1], [0], [0], [1], [0, 0, 1, 1], [], []>} : vector<64x64xbf16>, vector<64x36xbf16>, vector<64x36xf32> -> vector<64x36xf32>
    %423 = arith.addf %414, %422 : vector<64x36xf32>
    %c0_319 = arith.constant 0 : index
    %c0_320 = arith.constant 0 : index
    %424 = vector.load %arg13[%c0_319, %c0_320] : memref<1x36xf32, #tpu.memory_space<vmem>>, vector<1x36xf32>
    %425 = vector.broadcast %424 : vector<1x36xf32> to vector<64x36xf32>
    %426 = arith.addf %423, %425 : vector<64x36xf32>
    %427 = vector.shape_cast %426 : vector<64x36xf32> to vector<1x64x36xf32>
    %c0_321 = arith.constant 0 : index
    %c0_322 = arith.constant 0 : index
    %c0_323 = arith.constant 0 : index
    %428 = vector.load %arg14[%c0_321, %c0_322, %c0_323] : memref<1x64x36xf32, #tpu.memory_space<vmem>>, vector<1x64x36xf32>
    tpu.vector_store %arg14[%c0_321, %c0_322, %c0_323], %427 {strides = array<i32>} : memref<1x64x36xf32, #tpu.memory_space<vmem>>, vector<1x64x36xf32>,
    return
  }
  func.func @transform_0(%arg0: i32) -> (i32, i32, i32) {
    %c0_i32 = arith.constant 0 : i32
    %c0_i32_0 = arith.constant 0 : i32
    %c0_i32_1 = arith.constant 0 : i32
    return %arg0, %c0_i32, %c0_i32_0 : i32, i32, i32
  }
  func.func @transform_1(%arg0: i32) -> (i32, i32) {
    %c0_i32 = arith.constant 0 : i32
    %c0_i32_0 = arith.constant 0 : i32
    %c0_i32_1 = arith.constant 0 : i32
    return %c0_i32, %c0_i32_0 : i32, i32
  }
  func.func @transform_2(%arg0: i32) -> (i32, i32) {
    %c0_i32 = arith.constant 0 : i32
    %c0_i32_0 = arith.constant 0 : i32
    %c0_i32_1 = arith.constant 0 : i32
    return %c0_i32, %c0_i32_0 : i32, i32
  }
  func.func @transform_3(%arg0: i32) -> (i32, i32, i32) {
    %c0_i32 = arith.constant 0 : i32
    %c0_i32_0 = arith.constant 0 : i32
    %c0_i32_1 = arith.constant 0 : i32
    %c0_i32_2 = arith.constant 0 : i32
    return %c0_i32, %c0_i32_0, %c0_i32_1 : i32, i32, i32
  }
  func.func @transform_4(%arg0: i32) -> (i32, i32, i32) {
    %c0_i32 = arith.constant 0 : i32
    %c0_i32_0 = arith.constant 0 : i32
    %c0_i32_1 = arith.constant 0 : i32
    %c0_i32_2 = arith.constant 0 : i32
    return %c0_i32, %c0_i32_0, %c0_i32_1 : i32, i32, i32
  }
  func.func @transform_5(%arg0: i32) -> (i32, i32, i32) {
    %c0_i32 = arith.constant 0 : i32
    %c0_i32_0 = arith.constant 0 : i32
    %c0_i32_1 = arith.constant 0 : i32
    %c0_i32_2 = arith.constant 0 : i32
    return %c0_i32, %c0_i32_0, %c0_i32_1 : i32, i32, i32
  }
  func.func @transform_6(%arg0: i32) -> (i32, i32, i32) {
    %c0_i32 = arith.constant 0 : i32
    %c0_i32_0 = arith.constant 0 : i32
    %c0_i32_1 = arith.constant 0 : i32
    %c0_i32_2 = arith.constant 0 : i32
    return %c0_i32, %c0_i32_0, %c0_i32_1 : i32, i32, i32
  }
  func.func @transform_7(%arg0: i32) -> (i32, i32, i32) {
    %c0_i32 = arith.constant 0 : i32
    %c0_i32_0 = arith.constant 0 : i32
    %c0_i32_1 = arith.constant 0 : i32
    %c0_i32_2 = arith.constant 0 : i32
    return %c0_i32, %c0_i32_0, %c0_i32_1 : i32, i32, i32
  }
  func.func @transform_8(%arg0: i32) -> (i32, i32) {
    %c0_i32 = arith.constant 0 : i32
    %c0_i32_0 = arith.constant 0 : i32
    %c0_i32_1 = arith.constant 0 : i32
    return %c0_i32, %c0_i32_0 : i32, i32
  }
  func.func @transform_9(%arg0: i32) -> (i32, i32) {
    %c0_i32 = arith.constant 0 : i32
    %c0_i32_0 = arith.constant 0 : i32
    %c0_i32_1 = arith.constant 0 : i32
    return %c0_i32, %c0_i32_0 : i32, i32
  }
  func.func @transform_10(%arg0: i32) -> (i32, i32) {
    %c0_i32 = arith.constant 0 : i32
    %c0_i32_0 = arith.constant 0 : i32
    %c0_i32_1 = arith.constant 0 : i32
    return %c0_i32, %c0_i32_0 : i32, i32
  }
  func.func @transform_11(%arg0: i32) -> (i32, i32) {
    %c0_i32 = arith.constant 0 : i32
    %c0_i32_0 = arith.constant 0 : i32
    %c0_i32_1 = arith.constant 0 : i32
    return %c0_i32, %c0_i32_0 : i32, i32
  }
  func.func @transform_12(%arg0: i32) -> (i32, i32) {
    %c0_i32 = arith.constant 0 : i32
    %c0_i32_0 = arith.constant 0 : i32
    %c0_i32_1 = arith.constant 0 : i32
    return %c0_i32, %c0_i32_0 : i32, i32
  }
  func.func @transform_13(%arg0: i32) -> (i32, i32, i32) {
    %c0_i32 = arith.constant 0 : i32
    %c0_i32_0 = arith.constant 0 : i32
    %c0_i32_1 = arith.constant 0 : i32
    return %arg0, %c0_i32, %c0_i32_0 : i32, i32, i32
  }
}

</mosaic_0001>

<llo_original>
// kernel: tpu_custom_call.1
$region0: #{tpu_custom_call.1}
  #allocation0 [shape = 'u32[]', space=smem, size = 0x4, offset = 0x4, fixed_abs, tag = 'smem constant byte address 0x4 - core index']
  #allocation1 [shape = 'u32[72,128]{1,0:T(1,128)}', space=vmem, size = 0x9000, scoped, tag = 'internal scratch']
  #allocation2 [shape = 'bf16[96,64]{1,0:T(8,128)(2,1)}', space=vmem, size = 0x6000, scoped, tag = 'scratch operand']
  %s0 = inlined_call_operand.vmem [shape: bf16[2,64,32], index: 0, kind: input, shape index: {}]
  %s1 = inlined_call_operand.vmem [shape: s32[64,1], index: 1, kind: input, shape index: {}]
  %s2 = inlined_call_operand.vmem [shape: s32[64,1], index: 2, kind: input, shape index: {}]
  %s3 = inlined_call_operand.hbm [shape: bf16[9,32,64], index: 3, kind: input, shape index: {}]
  %s4 = inlined_call_operand.vmem [shape: bf16[9,64,64], index: 4, kind: input, shape index: {}]
  %s5 = inlined_call_operand.vmem [shape: bf16[9,64,64], index: 5, kind: input, shape index: {}]
  %s6 = inlined_call_operand.hbm [shape: bf16[9,64,64], index: 6, kind: input, shape index: {}]
  %s7 = inlined_call_operand.vmem [shape: bf16[9,64,36], index: 7, kind: input, shape index: {}]
  %s8 = inlined_call_operand.vmem [shape: f32[1,64], index: 8, kind: input, shape index: {}]
  %s9 = inlined_call_operand.vmem [shape: f32[1,64], index: 9, kind: input, shape index: {}]
  %s10 = inlined_call_operand.vmem [shape: f32[1,64], index: 10, kind: input, shape index: {}]
  %s11 = inlined_call_operand.vmem [shape: f32[1,64], index: 11, kind: input, shape index: {}]
  %s12 = inlined_call_operand.vmem [shape: f32[1,36], index: 12, kind: input, shape index: {}]
  %s13 = inlined_call_operand.vmem [shape: f32[2,64,36], index: 13, kind: output, shape index: {}]
  %s14 = sld [smem:[#allocation0]]
  $region93: #{tpu_custom_call.1} parent=0
    _
  %s16 = ssub.s32 1, %s14
  %s17 = scalar_select 0, %s16, %s14
  $region1: #{tpu_custom_call.1} parent=0
    #allocation3 [shape = 'u8[73728]{0}', space=vmem, size = 0x12000, scoped, tag = 'input window, operand 3, single buffered']
    #allocation4 [shape = 's32[2]{0}', space=sflag, size = 0x8, scoped, tag = 'scoped memory for tpu_custom_call.1']
    #allocation5 [shape = 'u8[147456]{0}', space=vmem, size = 0x24000, scoped, tag = 'input window, operand 6, single buffered']
    #allocation6 [shape = 's32[1]{0}', space=sflag, size = 0x4, scoped, tag = 'scoped memory for tpu_custom_call.1']
    %18 = vsyncpa [#allocation4], 0
    %19 = vsyncpa [#allocation6], 0
    loop: start=0, step=1, limit=4
    $region2: #{tpu_custom_call.1} parent=1 // loop_pre_header
      _
    $region3: #{tpu_custom_call.1} parent=1 // loop_header
      %s21 = sphi 0, %s25
      %p22 = scmp.ge.s32.totalorder %s21, 4
      %s31 = sphi 0, %s33
      %s34 = sphi 0, %s31
      %s35 = sphi 0, %s34
      %s51 = sphi 0, %s35
      %s55 = sphi 0, %s55
      %s57 = sphi 0, %s55
      %s58 = sphi 0, %s57
      %s72 = sphi 0, %s58
      %s76 = sphi 0, %s76
      %s78 = sphi 0, %s76
      %s79 = sphi 0, %s78
      %s93 = sphi 0, %s79
      %s97 = sphi 0, %s97
      %s99 = sphi 0, %s97
      %s100 = sphi 0, %s99
      %s114 = sphi 0, %s100
      %s118 = sphi 0, %s118
      %s120 = sphi 0, %s118
      %s121 = sphi 0, %s120
      %s135 = sphi 0, %s121
      %s139 = sphi 0, %s139
      %s141 = sphi 0, %s139
      %s142 = sphi 0, %s141
      %s156 = sphi 0, %s142
      %s160 = sphi 0, %s160
      %s162 = sphi 0, %s160
      %s163 = sphi 0, %s162
      %s177 = sphi 0, %s163
      %s181 = sphi 0, %s181
      %s183 = sphi 0, %s181
      %s184 = sphi 0, %s183
      %s198 = sphi 0, %s184
      %s202 = sphi 0, %s202
      %s204 = sphi 0, %s202
      %s205 = sphi 0, %s204
      %s219 = sphi 0, %s205
      %s223 = sphi 0, %s223
      %s225 = sphi 0, %s223
      %s226 = sphi 0, %s225
      %s240 = sphi 0, %s226
      %s244 = sphi 0, %s244
      %s246 = sphi 0, %s244
      %s247 = sphi 0, %s246
      %s261 = sphi 0, %s247
      %s265 = sphi 0, %s265
      %s267 = sphi 0, %s265
      %s268 = sphi 0, %s267
      %s282 = sphi 0, %s268
      %s286 = sphi 0, %s286
      %s288 = sphi 0, %s286
      %s289 = sphi 0, %s288
      %s303 = sphi 0, %s289
      %s309 = sphi 0, %s311
      %s312 = sphi 0, %s309
      %s313 = sphi 0, %s312
      %s329 = sphi 0, %s313
    $region4: #{tpu_custom_call.1} parent=1 // loop_header_branch
      %24 = sbr.rel (%p22) target = $region8
    $region5: #{tpu_custom_call.1} parent=1 // loop_body
      %s26 = ssub.s32 %s21, 1
      %s27 = ssub.s32 %s21, 2
      %s28 = sadd.s32 %s21, 1
      %s29 = ssub.s32 %s21, %s28
      %p30 = scmp.eq.s32.totalorder %s29, 0
      %s32 = sadd.s32 %s31, 1
      %s33 = scalar_select %p30, %s31, %s32
      %p36 = pneg %p30
      %p37 = scmp.eq.s32.totalorder %s21, 1
      %p38 = por %p36, %p37
      %p39 = scmp.ne.s32.totalorder %s31, %s34
      %p40 = scmp.eq.s32.totalorder %s21, 0
      %p41 = por %p39, %p40
      %p42 = scmp.ne.s32.totalorder %s31, %s34
      %p43 = scmp.eq.s32.totalorder %s26, 1
      %p44 = por %p42, %p43
      %p45 = scmp.ne.s32.totalorder %s34, %s35
      %p46 = scmp.eq.s32.totalorder %s26, 0
      %p47 = por %p45, %p46
      %p48 = scmp.ne.s32.totalorder %s34, %s35
      %p49 = scmp.eq.s32.totalorder %s27, 1
      %p50 = por %p48, %p49
      %p52 = scmp.ne.s32.totalorder %s35, %s51
      %p53 = scmp.eq.s32.totalorder %s27, 0
      %p54 = por %p52, %p53
      %s56 = sadd.s32 %s55, 1
      %p59 = scmp.eq.s32.totalorder %s21, 1
      %p60 = scmp.ne.s32.totalorder %s55, %s57
      %p61 = scmp.eq.s32.totalorder %s21, 0
      %p62 = por %p60, %p61
      %p63 = scmp.ne.s32.totalorder %s55, %s57
      %p64 = scmp.eq.s32.totalorder %s26, 1
      %p65 = por %p63, %p64
      %p66 = scmp.ne.s32.totalorder %s57, %s58
      %p67 = scmp.eq.s32.totalorder %s26, 0
      %p68 = por %p66, %p67
      %p69 = scmp.ne.s32.totalorder %s57, %s58
      %p70 = scmp.eq.s32.totalorder %s27, 1
      %p71 = por %p69, %p70
      %p73 = scmp.ne.s32.totalorder %s58, %s72
      %p74 = scmp.eq.s32.totalorder %s27, 0
      %p75 = por %p73, %p74
      %s77 = sadd.s32 %s76, 1
      %p80 = scmp.eq.s32.totalorder %s21, 1
      %p81 = scmp.ne.s32.totalorder %s76, %s78
      %p82 = scmp.eq.s32.totalorder %s21, 0
      %p83 = por %p81, %p82
      %p84 = scmp.ne.s32.totalorder %s76, %s78
      %p85 = scmp.eq.s32.totalorder %s26, 1
      %p86 = por %p84, %p85
      %p87 = scmp.ne.s32.totalorder %s78, %s79
      %p88 = scmp.eq.s32.totalorder %s26, 0
      %p89 = por %p87, %p88
      %p90 = scmp.ne.s32.totalorder %s78, %s79
      %p91 = scmp.eq.s32.totalorder %s27, 1
      %p92 = por %p90, %p91
      %p94 = scmp.ne.s32.totalorder %s79, %s93
      %p95 = scmp.eq.s32.totalorder %s27, 0
      %p96 = por %p94, %p95
      %s98 = sadd.s32 %s97, 1
      %p101 = scmp.eq.s32.totalorder %s21, 1
      %p102 = scmp.ne.s32.totalorder %s97, %s99
      %p103 = scmp.eq.s32.totalorder %s21, 0
      %p104 = por %p102, %p103
      %p105 = scmp.ne.s32.totalorder %s97, %s99
      %p106 = scmp.eq.s32.totalorder %s26, 1
      %p107 = por %p105, %p106
      %p108 = scmp.ne.s32.totalorder %s99, %s100
      %p109 = scmp.eq.s32.totalorder %s26, 0
      %p110 = por %p108, %p109
      %p111 = scmp.ne.s32.totalorder %s99, %s100
      %p112 = scmp.eq.s32.totalorder %s27, 1
      %p113 = por %p111, %p112
      %p115 = scmp.ne.s32.totalorder %s100, %s114
      %p116 = scmp.eq.s32.totalorder %s27, 0
      %p117 = por %p115, %p116
      %s119 = sadd.s32 %s118, 1
      %p122 = scmp.eq.s32.totalorder %s21, 1
      %p123 = scmp.ne.s32.totalorder %s118, %s120
      %p124 = scmp.eq.s32.totalorder %s21, 0
      %p125 = por %p123, %p124
      %p126 = scmp.ne.s32.totalorder %s118, %s120
      %p127 = scmp.eq.s32.totalorder %s26, 1
      %p128 = por %p126, %p127
      %p129 = scmp.ne.s32.totalorder %s120, %s121
      %p130 = scmp.eq.s32.totalorder %s26, 0
      %p131 = por %p129, %p130
      %p132 = scmp.ne.s32.totalorder %s120, %s121
      %p133 = scmp.eq.s32.totalorder %s27, 1
      %p134 = por %p132, %p133
      %p136 = scmp.ne.s32.totalorder %s121, %s135
      %p137 = scmp.eq.s32.totalorder %s27, 0
      %p138 = por %p136, %p137
      %s140 = sadd.s32 %s139, 1
      %p143 = scmp.eq.s32.totalorder %s21, 1
      %p144 = scmp.ne.s32.totalorder %s139, %s141
      %p145 = scmp.eq.s32.totalorder %s21, 0
      %p146 = por %p144, %p145
      %p147 = scmp.ne.s32.totalorder %s139, %s141
      %p148 = scmp.eq.s32.totalorder %s26, 1
      %p149 = por %p147, %p148
      %p150 = scmp.ne.s32.totalorder %s141, %s142
      %p151 = scmp.eq.s32.totalorder %s26, 0
      %p152 = por %p150, %p151
      %p153 = scmp.ne.s32.totalorder %s141, %s142
      %p154 = scmp.eq.s32.totalorder %s27, 1
      %p155 = por %p153, %p154
      %p157 = scmp.ne.s32.totalorder %s142, %s156
      %p158 = scmp.eq.s32.totalorder %s27, 0
      %p159 = por %p157, %p158
      %s161 = sadd.s32 %s160, 1
      %p164 = scmp.eq.s32.totalorder %s21, 1
      %p165 = scmp.ne.s32.totalorder %s160, %s162
      %p166 = scmp.eq.s32.totalorder %s21, 0
      %p167 = por %p165, %p166
      %p168 = scmp.ne.s32.totalorder %s160, %s162
      %p169 = scmp.eq.s32.totalorder %s26, 1
      %p170 = por %p168, %p169
      %p171 = scmp.ne.s32.totalorder %s162, %s163
      %p172 = scmp.eq.s32.totalorder %s26, 0
      %p173 = por %p171, %p172
      %p174 = scmp.ne.s32.totalorder %s162, %s163
      %p175 = scmp.eq.s32.totalorder %s27, 1
      %p176 = por %p174, %p175
      %p178 = scmp.ne.s32.totalorder %s163, %s177
      %p179 = scmp.eq.s32.totalorder %s27, 0
      %p180 = por %p178, %p179
      %s182 = sadd.s32 %s181, 1
      %p185 = scmp.eq.s32.totalorder %s21, 1
      %p186 = scmp.ne.s32.totalorder %s181, %s183
      %p187 = scmp.eq.s32.totalorder %s21, 0
      %p188 = por %p186, %p187
      %p189 = scmp.ne.s32.totalorder %s181, %s183
      %p190 = scmp.eq.s32.totalorder %s26, 1
      %p191 = por %p189, %p190
      %p192 = scmp.ne.s32.totalorder %s183, %s184
      %p193 = scmp.eq.s32.totalorder %s26, 0
      %p194 = por %p192, %p193
      %p195 = scmp.ne.s32.totalorder %s183, %s184
      %p196 = scmp.eq.s32.totalorder %s27, 1
      %p197 = por %p195, %p196
      %p199 = scmp.ne.s32.totalorder %s184, %s198
      %p200 = scmp.eq.s32.totalorder %s27, 0
      %p201 = por %p199, %p200
      %s203 = sadd.s32 %s202, 1
      %p206 = scmp.eq.s32.totalorder %s21, 1
      %p207 = scmp.ne.s32.totalorder %s202, %s204
      %p208 = scmp.eq.s32.totalorder %s21, 0
      %p209 = por %p207, %p208
      %p210 = scmp.ne.s32.totalorder %s202, %s204
      %p211 = scmp.eq.s32.totalorder %s26, 1
      %p212 = por %p210, %p211
      %p213 = scmp.ne.s32.totalorder %s204, %s205
      %p214 = scmp.eq.s32.totalorder %s26, 0
      %p215 = por %p213, %p214
      %p216 = scmp.ne.s32.totalorder %s204, %s205
      %p217 = scmp.eq.s32.totalorder %s27, 1
      %p218 = por %p216, %p217
      %p220 = scmp.ne.s32.totalorder %s205, %s219
      %p221 = scmp.eq.s32.totalorder %s27, 0
      %p222 = por %p220, %p221
      %s224 = sadd.s32 %s223, 1
      %p227 = scmp.eq.s32.totalorder %s21, 1
      %p228 = scmp.ne.s32.totalorder %s223, %s225
      %p229 = scmp.eq.s32.totalorder %s21, 0
      %p230 = por %p228, %p229
      %p231 = scmp.ne.s32.totalorder %s223, %s225
      %p232 = scmp.eq.s32.totalorder %s26, 1
      %p233 = por %p231, %p232
      %p234 = scmp.ne.s32.totalorder %s225, %s226
      %p235 = scmp.eq.s32.totalorder %s26, 0
      %p236 = por %p234, %p235
      %p237 = scmp.ne.s32.totalorder %s225, %s226
      %p238 = scmp.eq.s32.totalorder %s27, 1
      %p239 = por %p237, %p238
      %p241 = scmp.ne.s32.totalorder %s226, %s240
      %p242 = scmp.eq.s32.totalorder %s27, 0
      %p243 = por %p241, %p242
      %s245 = sadd.s32 %s244, 1
      %p248 = scmp.eq.s32.totalorder %s21, 1
      %p249 = scmp.ne.s32.totalorder %s244, %s246
      %p250 = scmp.eq.s32.totalorder %s21, 0
      %p251 = por %p249, %p250
      %p252 = scmp.ne.s32.totalorder %s244, %s246
      %p253 = scmp.eq.s32.totalorder %s26, 1
      %p254 = por %p252, %p253
      %p255 = scmp.ne.s32.totalorder %s246, %s247
      %p256 = scmp.eq.s32.totalorder %s26, 0
      %p257 = por %p255, %p256
      %p258 = scmp.ne.s32.totalorder %s246, %s247
      %p259 = scmp.eq.s32.totalorder %s27, 1
      %p260 = por %p258, %p259
      %p262 = scmp.ne.s32.totalorder %s247, %s261
      %p263 = scmp.eq.s32.totalorder %s27, 0
      %p264 = por %p262, %p263
      %s266 = sadd.s32 %s265, 1
      %p269 = scmp.eq.s32.totalorder %s21, 1
      %p270 = scmp.ne.s32.totalorder %s265, %s267
      %p271 = scmp.eq.s32.totalorder %s21, 0
      %p272 = por %p270, %p271
      %p273 = scmp.ne.s32.totalorder %s265, %s267
      %p274 = scmp.eq.s32.totalorder %s26, 1
      %p275 = por %p273, %p274
      %p276 = scmp.ne.s32.totalorder %s267, %s268
      %p277 = scmp.eq.s32.totalorder %s26, 0
      %p278 = por %p276, %p277
      %p279 = scmp.ne.s32.totalorder %s267, %s268
      %p280 = scmp.eq.s32.totalorder %s27, 1
      %p281 = por %p279, %p280
      %p283 = scmp.ne.s32.totalorder %s268, %s282
      %p284 = scmp.eq.s32.totalorder %s27, 0
      %p285 = por %p283, %p284
      %s287 = sadd.s32 %s286, 1
      %p290 = scmp.eq.s32.totalorder %s21, 1
      %p291 = scmp.ne.s32.totalorder %s286, %s288
      %p292 = scmp.eq.s32.totalorder %s21, 0
      %p293 = por %p291, %p292
      %p294 = scmp.ne.s32.totalorder %s286, %s288
      %p295 = scmp.eq.s32.totalorder %s26, 1
      %p296 = por %p294, %p295
      %p297 = scmp.ne.s32.totalorder %s288, %s289
      %p298 = scmp.eq.s32.totalorder %s26, 0
      %p299 = por %p297, %p298
      %p300 = scmp.ne.s32.totalorder %s288, %s289
      %p301 = scmp.eq.s32.totalorder %s27, 1
      %p302 = por %p300, %p301
      %p304 = scmp.ne.s32.totalorder %s289, %s303
      %p305 = scmp.eq.s32.totalorder %s27, 0
      %p306 = por %p304, %p305
      %s307 = ssub.s32 %s21, %s28
      %p308 = scmp.eq.s32.totalorder %s307, 0
      %s310 = sadd.s32 %s309, 1
      %s311 = scalar_select %p308, %s309, %s310
      %p314 = pneg %p308
      %p315 = scmp.eq.s32.totalorder %s21, 1
      %p316 = por %p314, %p315
      %p317 = scmp.ne.s32.totalorder %s309, %s312
      %p318 = scmp.eq.s32.totalorder %s21, 0
      %p319 = por %p317, %p318
      %p320 = scmp.ne.s32.totalorder %s309, %s312
      %p321 = scmp.eq.s32.totalorder %s26, 1
      %p322 = por %p320, %p321
      %p323 = scmp.ne.s32.totalorder %s312, %s313
      %p324 = scmp.eq.s32.totalorder %s26, 0
      %p325 = por %p323, %p324
      %p326 = scmp.ne.s32.totalorder %s312, %s313
      %p327 = scmp.eq.s32.totalorder %s27, 1
      %p328 = por %p326, %p327
      %p330 = scmp.ne.s32.totalorder %s313, %s329
      %p331 = scmp.eq.s32.totalorder %s27, 0
      %p332 = por %p330, %p331
      %p333 = scmp.le.s32.totalorder 1, %s21
      %p334 = scmp.lt.s32.totalorder %s21, 3
      %p335 = pnand %p333, %p334
      %p336 = pneg %p335
      // Predicated region
      $region9: #{tpu_custom_call.1} parent=5 // pred_check
        _
      $region10: #{tpu_custom_call.1} parent=5 // pred_check_branch
        %338 = sbr.rel (%p335) target = $region12
      $region11: #{tpu_custom_call.1} parent=5 // pred_region
        %s339 = ssub.s32 %s21, 1
        // Predicated region
        $region13: #{tpu_custom_call.1} parent=11 // pred_check
          %p340 = pneg %p68
        $region14: #{tpu_custom_call.1} parent=11 // pred_check_branch
          %342 = sbr.rel (%p340) target = $region16
        $region15: #{tpu_custom_call.1} parent=11 // pred_region
          _
        $region16: #{tpu_custom_call.1} parent=11 // pred_fallthru
          _
        // Predicated region
        $region17: #{tpu_custom_call.1} parent=11 // pred_check
          %p343 = pneg %p89
        $region18: #{tpu_custom_call.1} parent=11 // pred_check_branch
          %345 = sbr.rel (%p343) target = $region20
        $region19: #{tpu_custom_call.1} parent=11 // pred_region
          _
        $region20: #{tpu_custom_call.1} parent=11 // pred_fallthru
          _
        // Predicated region
        $region21: #{tpu_custom_call.1} parent=11 // pred_check
          %p346 = pneg %p110
        $region22: #{tpu_custom_call.1} parent=11 // pred_check_branch
          %348 = sbr.rel (%p346) target = $region24
        $region23: #{tpu_custom_call.1} parent=11 // pred_region
          %350 = vsyncadd [#allocation4], 0
          %s351 = sshll.u32 %s3, 4
          %s352 = int_to_ptr.hbm [resolvable:$true] %s351
          %s353 = sshll.u32 [#allocation3], 4
          %s354 = int_to_ptr.vmem [resolvable:$true] %s353
          %359 = dma.hbm_to_vmem [thread:$0]  %s352, 2304, %s354, [#allocation4], 64, 64, 4
        $region24: #{tpu_custom_call.1} parent=11 // pred_fallthru
          _
        // Predicated region
        $region25: #{tpu_custom_call.1} parent=11 // pred_check
          %p360 = pneg %p131
        $region26: #{tpu_custom_call.1} parent=11 // pred_check_branch
          %362 = sbr.rel (%p360) target = $region28
        $region27: #{tpu_custom_call.1} parent=11 // pred_region
          _
        $region28: #{tpu_custom_call.1} parent=11 // pred_fallthru
          _
        // Predicated region
        $region29: #{tpu_custom_call.1} parent=11 // pred_check
          %p363 = pneg %p152
        $region30: #{tpu_custom_call.1} parent=11 // pred_check_branch
          %365 = sbr.rel (%p363) target = $region32
        $region31: #{tpu_custom_call.1} parent=11 // pred_region
          _
        $region32: #{tpu_custom_call.1} parent=11 // pred_fallthru
          _
        // Predicated region
        $region33: #{tpu_custom_call.1} parent=11 // pred_check
          %p366 = pneg %p173
        $region34: #{tpu_custom_call.1} parent=11 // pred_check_branch
          %368 = sbr.rel (%p366) target = $region36
        $region35: #{tpu_custom_call.1} parent=11 // pred_region
          %370 = vsyncadd [#allocation6], 0
          %s371 = sshll.u32 %s6, 4
          %s372 = int_to_ptr.hbm [resolvable:$true] %s371
          %s373 = sshll.u32 [#allocation5], 4
          %s374 = int_to_ptr.vmem [resolvable:$true] %s373
          %379 = dma.hbm_to_vmem [thread:$0]  %s372, 4608, %s374, [#allocation6], 64, 64, 4
        $region36: #{tpu_custom_call.1} parent=11 // pred_fallthru
          _
        // Predicated region
        $region37: #{tpu_custom_call.1} parent=11 // pred_check
          %p380 = pneg %p194
        $region38: #{tpu_custom_call.1} parent=11 // pred_check_branch
          %382 = sbr.rel (%p380) target = $region40
        $region39: #{tpu_custom_call.1} parent=11 // pred_region
          _
        $region40: #{tpu_custom_call.1} parent=11 // pred_fallthru
          _
        // Predicated region
        $region41: #{tpu_custom_call.1} parent=11 // pred_check
          %p383 = pneg %p215
        $region42: #{tpu_custom_call.1} parent=11 // pred_check_branch
          %385 = sbr.rel (%p383) target = $region44
        $region43: #{tpu_custom_call.1} parent=11 // pred_region
          _
        $region44: #{tpu_custom_call.1} parent=11 // pred_fallthru
          _
        // Predicated region
        $region45: #{tpu_custom_call.1} parent=11 // pred_check
          %p386 = pneg %p236
        $region46: #{tpu_custom_call.1} parent=11 // pred_check_branch
          %388 = sbr.rel (%p386) target = $region48
        $region47: #{tpu_custom_call.1} parent=11 // pred_region
          _
        $region48: #{tpu_custom_call.1} parent=11 // pred_fallthru
          _
        // Predicated region
        $region49: #{tpu_custom_call.1} parent=11 // pred_check
          %p389 = pneg %p257
        $region50: #{tpu_custom_call.1} parent=11 // pred_check_branch
          %391 = sbr.rel (%p389) target = $region52
        $region51: #{tpu_custom_call.1} parent=11 // pred_region
          _
        $region52: #{tpu_custom_call.1} parent=11 // pred_fallthru
          _
        // Predicated region
        $region53: #{tpu_custom_call.1} parent=11 // pred_check
          %p392 = pneg %p278
        $region54: #{tpu_custom_call.1} parent=11 // pred_check_branch
          %394 = sbr.rel (%p392) target = $region56
        $region55: #{tpu_custom_call.1} parent=11 // pred_region
          _
        $region56: #{tpu_custom_call.1} parent=11 // pred_fallthru
          _
        // Predicated region
        $region57: #{tpu_custom_call.1} parent=11 // pred_check
          %p395 = pneg %p299
        $region58: #{tpu_custom_call.1} parent=11 // pred_check_branch
          %397 = sbr.rel (%p395) target = $region60
        $region59: #{tpu_custom_call.1} parent=11 // pred_region
          _
        $region60: #{tpu_custom_call.1} parent=11 // pred_fallthru
          _
      $region12: #{tpu_custom_call.1} parent=5 // pred_fallthru
        _
      %p398 = scmp.lt.s32.totalorder %s21, 2
      // Predicated region
      $region61: #{tpu_custom_call.1} parent=5 // pred_check
        %p399 = pneg %p398
      $region62: #{tpu_custom_call.1} parent=5 // pred_check_branch
        %401 = sbr.rel (%p399) target = $region64
      $region63: #{tpu_custom_call.1} parent=5 // pred_region
        // Predicated region
        $region65: #{tpu_custom_call.1} parent=63 // pred_check
          %p402 = pneg %p41
        $region66: #{tpu_custom_call.1} parent=63 // pred_check_branch
          %404 = sbr.rel (%p402) target = $region68
        $region67: #{tpu_custom_call.1} parent=63 // pred_region
          %p405 = scmp.lt.s32.totalorder %s21, 1
          %s406 = scalar_select %p405, %s21, 1
          %s407 = smul.addr %s406, 8
          %s408 = smul.addr %s407, 4
          %s409 = scalar_lea.vmem %s0, %s408
        $region68: #{tpu_custom_call.1} parent=63 // pred_fallthru
          _
      $region64: #{tpu_custom_call.1} parent=5 // pred_fallthru
        _
      %p410 = scmp.le.s32.totalorder 1, %s21
      %p411 = scmp.lt.s32.totalorder %s21, 3
      %p412 = pnand %p410, %p411
      %p413 = pneg %p412
      // Predicated region
      $region69: #{tpu_custom_call.1} parent=5 // pred_check
        _
      $region70: #{tpu_custom_call.1} parent=5 // pred_check_branch
        %415 = sbr.rel (%p412) target = $region72
      $region71: #{tpu_custom_call.1} parent=5 // pred_region
        %s416 = ssub.s32 %s21, 1
        // Predicated region
        $region73: #{tpu_custom_call.1} parent=71 // pred_check
          %p417 = pneg %p110
        $region74: #{tpu_custom_call.1} parent=71 // pred_check_branch
          %419 = sbr.rel (%p417) target = $region76
        $region75: #{tpu_custom_call.1} parent=71 // pred_region
          %421 = dma.done [#allocation4], 2304
        $region76: #{tpu_custom_call.1} parent=71 // pred_fallthru
          _
        // Predicated region
        $region77: #{tpu_custom_call.1} parent=71 // pred_check
          %p422 = pneg %p173
        $region78: #{tpu_custom_call.1} parent=71 // pred_check_branch
          %424 = sbr.rel (%p422) target = $region80
        $region79: #{tpu_custom_call.1} parent=71 // pred_region
          %426 = dma.done [#allocation6], 4608
        $region80: #{tpu_custom_call.1} parent=71 // pred_fallthru
          _
        %p427 = scmp.lt.s32.totalorder %s26, 1
        %s428 = scalar_select %p427, %s26, 1
        %s429 = smul.addr %s428, 8
        %s430 = smul.addr %s429, 4
        %s431 = scalar_lea.vmem %s0, %s430
        %p432 = pneg %p47
        %p433 = pneg %p44
        %p434 = pneg %p68
        %p435 = pneg %p65
        %p436 = pneg %p89
        %p437 = pneg %p86
        %p438 = pneg %p110
        %p439 = pneg %p107
        %p440 = pneg %p131
        %p441 = pneg %p128
        %p442 = pneg %p152
        %p443 = pneg %p149
        %p444 = pneg %p173
        %p445 = pneg %p170
        %p446 = pneg %p194
        %p447 = pneg %p191
        %p448 = pneg %p215
        %p449 = pneg %p212
        %p450 = pneg %p236
        %p451 = pneg %p233
        %p452 = pneg %p257
        %p453 = pneg %p254
        %p454 = pneg %p278
        %p455 = pneg %p275
        %p456 = pneg %p299
        %p457 = pneg %p296
        %p458 = pneg %p325
        %p459 = pneg %p322
        %p460 = scmp.lt.s32.totalorder %s26, 1
        %s461 = scalar_select %p460, %s26, 1
        %s462 = smul.addr %s461, 8
        %s463 = smul.addr %s462, 8
        %s464 = scalar_lea.vmem %s13, %s463
        %p465 = scmp.lt.s32.totalorder %s26, 1
        %s466 = scalar_select %p465, %s26, 1
        %s467 = smul.addr %s466, 8
        %s468 = smul.addr %s467, 4
        %s469 = scalar_lea.vmem %s0, %s468
        %p470 = scmp.lt.s32.totalorder %s26, 1
        %s471 = scalar_select %p470, %s26, 1
        %s472 = smul.addr %s471, 8
        %s473 = smul.addr %s472, 8
        %s474 = scalar_lea.vmem %s13, %s473
        %vm478 = vcmask 519168
        %479 = vst.msk [vmem:[#allocation2] sm:$0xf] %vm478, 0
        %480 = vst.msk [vmem:[#allocation2 + $0x4] sm:$0xf] %vm478, 0
        %481 = vst.msk [vmem:[#allocation2 + $0x28] sm:$0xf] %vm478, 0
        %482 = vst.msk [vmem:[#allocation2 + $0x2c] sm:$0xf] %vm478, 0
        %v483 = vld [vmem:[%s1] sm:$0xff]
        %v484 = vld [vmem:[%s1 + $0x8] sm:$0xff]
        %v485 = vld [vmem:[%s1 + $0x10] sm:$0xff]
        %v486 = vld [vmem:[%s1 + $0x18] sm:$0xff]
        %v487 = vld [vmem:[%s1 + $0x20] sm:$0xff]
        %v488 = vld [vmem:[%s1 + $0x28] sm:$0xff]
        %v489 = vld [vmem:[%s1 + $0x30] sm:$0xff]
        %v490 = vld [vmem:[%s1 + $0x38] sm:$0xff]
        %v491 = vld [vmem:[%s2] sm:$0xff]
        %v492 = vld [vmem:[%s2 + $0x8] sm:$0xff]
        %v493 = vld [vmem:[%s2 + $0x10] sm:$0xff]
        %v494 = vld [vmem:[%s2 + $0x18] sm:$0xff]
        %v495 = vld [vmem:[%s2 + $0x20] sm:$0xff]
        %v496 = vld [vmem:[%s2 + $0x28] sm:$0xff]
        %v497 = vld [vmem:[%s2 + $0x30] sm:$0xff]
        %v498 = vld [vmem:[%s2 + $0x38] sm:$0xff]
        %vm499 = vcmp.ge.s32.totalorder %v483, 1
        %vm500 = vcmp.ge.s32.totalorder %v484, 1
        %vm501 = vcmp.ge.s32.totalorder %v485, 1
        %vm502 = vcmp.ge.s32.totalorder %v486, 1
        %vm503 = vcmp.ge.s32.totalorder %v487, 1
        %vm504 = vcmp.ge.s32.totalorder %v488, 1
        %vm505 = vcmp.ge.s32.totalorder %v489, 1
        %vm506 = vcmp.ge.s32.totalorder %v490, 1
        %vm507 = vcmp.le.s32.totalorder %v483, 6
        %vm508 = vcmp.le.s32.totalorder %v484, 6
        %vm509 = vcmp.le.s32.totalorder %v485, 6
        %vm510 = vcmp.le.s32.totalorder %v486, 6
        %vm511 = vcmp.le.s32.totalorder %v487, 6
        %vm512 = vcmp.le.s32.totalorder %v488, 6
        %vm513 = vcmp.le.s32.totalorder %v489, 6
        %vm514 = vcmp.le.s32.totalorder %v490, 6
        %vm515 = vcmp.ge.s32.totalorder %v491, 1
        %vm516 = vcmp.ge.s32.totalorder %v492, 1
        %vm517 = vcmp.ge.s32.totalorder %v493, 1
        %vm518 = vcmp.ge.s32.totalorder %v494, 1
        %vm519 = vcmp.ge.s32.totalorder %v495, 1
        %vm520 = vcmp.ge.s32.totalorder %v496, 1
        %vm521 = vcmp.ge.s32.totalorder %v497, 1
        %vm522 = vcmp.ge.s32.totalorder %v498, 1
        %vm523 = vcmp.le.s32.totalorder %v491, 6
        %vm524 = vcmp.le.s32.totalorder %v492, 6
        %vm525 = vcmp.le.s32.totalorder %v493, 6
        %vm526 = vcmp.le.s32.totalorder %v494, 6
        %vm527 = vcmp.le.s32.totalorder %v495, 6
        %vm528 = vcmp.le.s32.totalorder %v496, 6
        %vm529 = vcmp.le.s32.totalorder %v497, 6
        %vm530 = vcmp.le.s32.totalorder %v498, 6
        %vm531 = vmand %vm499, %vm515
        %vm532 = vmand %vm500, %vm516
        %vm533 = vmand %vm501, %vm517
        %vm534 = vmand %vm502, %vm518
        %vm535 = vmand %vm503, %vm519
        %vm536 = vmand %vm504, %vm520
        %vm537 = vmand %vm505, %vm521
        %vm538 = vmand %vm506, %vm522
        %vm539 = vmand %vm499, %vm523
        %vm540 = vmand %vm500, %vm524
        %vm541 = vmand %vm501, %vm525
        %vm542 = vmand %vm502, %vm526
        %vm543 = vmand %vm503, %vm527
        %vm544 = vmand %vm504, %vm528
        %vm545 = vmand %vm505, %vm529
        %vm546 = vmand %vm506, %vm530
        %vm547 = vmand %vm507, %vm515
        %vm548 = vmand %vm508, %vm516
        %vm549 = vmand %vm509, %vm517
        %vm550 = vmand %vm510, %vm518
        %vm551 = vmand %vm511, %vm519
        %vm552 = vmand %vm512, %vm520
        %vm553 = vmand %vm513, %vm521
        %vm554 = vmand %vm514, %vm522
        %vm555 = vmand %vm507, %vm523
        %vm556 = vmand %vm508, %vm524
        %vm557 = vmand %vm509, %vm525
        %vm558 = vmand %vm510, %vm526
        %vm559 = vmand %vm511, %vm527
        %vm560 = vmand %vm512, %vm528
        %vm561 = vmand %vm513, %vm529
        %vm562 = vmand %vm514, %vm530
        %v563 = vld [vmem:[%s469] sm:$0xf]
        %v564 = vld [vmem:[%s469 + $0x4] sm:$0xf]
        %v565 = vld [vmem:[%s469 + $0x8] sm:$0xf]
        %v566 = vld [vmem:[%s469 + $0xc] sm:$0xf]
        %v567 = vld [vmem:[%s469 + $0x10] sm:$0xf]
        %v568 = vld [vmem:[%s469 + $0x14] sm:$0xf]
        %v569 = vld [vmem:[%s469 + $0x18] sm:$0xf]
        %v570 = vld [vmem:[%s469 + $0x1c] sm:$0xf]
        %vm571 = vcmask 257024
        %572 = vst.msk [vmem:[#allocation2 + $0x8] sm:$0xf] %vm571, %v563
        %573 = vst.msk [vmem:[#allocation2 + $0xc] sm:$0xf] %vm571, %v564
        %574 = vst.msk [vmem:[#allocation2 + $0x10] sm:$0xf] %vm571, %v565
        %575 = vst.msk [vmem:[#allocation2 + $0x14] sm:$0xf] %vm571, %v566
        %576 = vst.msk [vmem:[#allocation2 + $0x18] sm:$0xf] %vm571, %v567
        %577 = vst.msk [vmem:[#allocation2 + $0x1c] sm:$0xf] %vm571, %v568
        %578 = vst.msk [vmem:[#allocation2 + $0x20] sm:$0xf] %vm571, %v569
        %579 = vst.msk [vmem:[#allocation2 + $0x24] sm:$0xf] %vm571, %v570
        %v580 = vld [vmem:[#allocation2] sm:$0x8]
        %v581 = vld [vmem:[#allocation2 + $0x4] sm:$0xf]
        %v582 = vld [vmem:[#allocation2 + $0x8] sm:$0xf]
        %v583 = vld [vmem:[#allocation2 + $0xc] sm:$0xf]
        %v584 = vld [vmem:[#allocation2 + $0x10] sm:$0xf]
        %v585 = vld [vmem:[#allocation2 + $0x14] sm:$0xf]
        %v586 = vld [vmem:[#allocation2 + $0x18] sm:$0xf]
        %v587 = vld [vmem:[#allocation2 + $0x1c] sm:$0xf]
        %v588 = vld [vmem:[#allocation2 + $0x20] sm:$0xf]
        %v589 = vsel %vm531, 1, 0
        %v590 = vsel %vm532, 1, 0
        %v591 = vsel %vm533, 1, 0
        %v592 = vsel %vm534, 1, 0
        %v593 = vsel %vm535, 1, 0
        %v594 = vsel %vm536, 1, 0
        %v595 = vsel %vm537, 1, 0
        %v596 = vsel %vm538, 1, 0
        %597 = vset.pattern.permute.xlu0 0
        %598 = vperm.xlu0 %597, %v589
        %v599 = vpop.permute.xlu0 %598
        %600 = vset.pattern.permute.xlu0 0
        %601 = vperm.xlu0 %600, %v590
        %v602 = vpop.permute.xlu0 %601
        %603 = vset.pattern.permute.xlu0 0
        %604 = vperm.xlu0 %603, %v591
        %v605 = vpop.permute.xlu0 %604
        %606 = vset.pattern.permute.xlu0 0
        %607 = vperm.xlu0 %606, %v592
        %v608 = vpop.permute.xlu0 %607
        %609 = vset.pattern.permute.xlu0 0
        %610 = vperm.xlu0 %609, %v593
        %v611 = vpop.permute.xlu0 %610
        %612 = vset.pattern.permute.xlu0 0
        %613 = vperm.xlu0 %612, %v594
        %v614 = vpop.permute.xlu0 %613
        %615 = vset.pattern.permute.xlu0 0
        %616 = vperm.xlu0 %615, %v595
        %v617 = vpop.permute.xlu0 %616
        %618 = vset.pattern.permute.xlu0 0
        %619 = vperm.xlu0 %618, %v596
        %v620 = vpop.permute.xlu0 %619
        %vm621 = vcmp.eq.s32.totalorder %v599, 1
        %vm622 = vcmp.eq.s32.totalorder %v602, 1
        %vm623 = vcmp.eq.s32.totalorder %v605, 1
        %vm624 = vcmp.eq.s32.totalorder %v608, 1
        %vm625 = vcmp.eq.s32.totalorder %v611, 1
        %vm626 = vcmp.eq.s32.totalorder %v614, 1
        %vm627 = vcmp.eq.s32.totalorder %v617, 1
        %vm628 = vcmp.eq.s32.totalorder %v620, 1
        %vm629 = vmpackc.low %vm621, %vm621
        %vm630 = vmpackc.low %vm622, %vm622
        %vm631 = vmpackc.low %vm623, %vm623
        %vm632 = vmpackc.low %vm624, %vm624
        %vm633 = vmpackc.low %vm625, %vm625
        %vm634 = vmpackc.low %vm626, %vm626
        %vm635 = vmpackc.low %vm627, %vm627
        %vm636 = vmpackc.low %vm628, %vm628
        %v637 = vsel %vm629, 65537, 0
        %v638 = vsel %vm630, 65537, 0
        %v639 = vsel %vm631, 65537, 0
        %v640 = vsel %vm632, 65537, 0
        %v641 = vsel %vm633, 65537, 0
        %v642 = vsel %vm634, 65537, 0
        %v643 = vsel %vm635, 65537, 0
        %v644 = vsel %vm636, 65537, 0
        %vm645 = vsmask.f32 3328
        %vm646 = vsmask.f32 7440
        %vm647 = vmor %vm645, %vm646
        %v649 = vshll.u32 %v637, 16
        %v651 = vrot.slane %v649, 5
        %v652 = vshrl.u32 %v637, 16
        %v654 = vrot.slane %v652, 4
        %v655 = vor.u32 %v654, %v651
        %v656 = vrot.slane %v655, 4
        %v658 = vshll.u32 %v638, 16
        %v660 = vrot.slane %v658, 5
        %v661 = vsel %vm647, %v656, %v660
        %v662 = vshrl.u32 %v638, 16
        %v664 = vrot.slane %v662, 4
        %v665 = vor.u32 %v664, %v660
        %v666 = vrot.slane %v665, 4
        %v668 = vshll.u32 %v639, 16
        %v670 = vrot.slane %v668, 5
        %v671 = vsel %vm647, %v666, %v670
        %v672 = vshrl.u32 %v639, 16
        %v674 = vrot.slane %v672, 4
        %v675 = vor.u32 %v674, %v670
        %v676 = vrot.slane %v675, 4
        %v678 = vshll.u32 %v640, 16
        %v680 = vrot.slane %v678, 5
        %v681 = vsel %vm647, %v676, %v680
        %v682 = vshrl.u32 %v640, 16
        %v684 = vrot.slane %v682, 4
        %v685 = vor.u32 %v684, %v680
        %v686 = vrot.slane %v685, 4
        %v688 = vshll.u32 %v641, 16
        %v690 = vrot.slane %v688, 5
        %v691 = vsel %vm647, %v686, %v690
        %v692 = vshrl.u32 %v641, 16
        %v694 = vrot.slane %v692, 4
        %v695 = vor.u32 %v694, %v690
        %v696 = vrot.slane %v695, 4
        %v698 = vshll.u32 %v642, 16
        %v700 = vrot.slane %v698, 5
        %v701 = vsel %vm647, %v696, %v700
        %v702 = vshrl.u32 %v642, 16
        %v704 = vrot.slane %v702, 4
        %v705 = vor.u32 %v704, %v700
        %v706 = vrot.slane %v705, 4
        %v708 = vshll.u32 %v643, 16
        %v710 = vrot.slane %v708, 5
        %v711 = vsel %vm647, %v706, %v710
        %v712 = vshrl.u32 %v643, 16
        %v714 = vrot.slane %v712, 4
        %v715 = vor.u32 %v714, %v710
        %v716 = vrot.slane %v715, 4
        %v718 = vshll.u32 %v644, 16
        %v720 = vrot.slane %v718, 5
        %v721 = vsel %vm647, %v716, %v720
        %v722 = vshrl.u32 %v644, 16
        %v724 = vrot.slane %v722, 4
        %v725 = vor.u32 %v724, %v720
        %v726 = vrot.slane %v725, 4
        %v727 = vunpack.c.l.b16 %v651
        %v728 = vunpack.c.h.b16 %v651
        %v729 = vunpack.c.l.b16 0
        %v730 = vunpack.c.h.b16 0
        %vm731 = vcmp.ne.s32.totalorder %v727, %v729
        %vm732 = vcmp.ne.s32.totalorder %v728, %v730
        %vm733 = vmpackc.low %vm732, %vm731
        %v734 = vunpack.c.l.b16 %v661
        %v735 = vunpack.c.h.b16 %v661
        %v736 = vunpack.c.l.b16 0
        %v737 = vunpack.c.h.b16 0
        %vm738 = vcmp.ne.s32.totalorder %v734, %v736
        %vm739 = vcmp.ne.s32.totalorder %v735, %v737
        %vm740 = vmpackc.low %vm739, %vm738
        %v741 = vunpack.c.l.b16 %v671
        %v742 = vunpack.c.h.b16 %v671
        %v743 = vunpack.c.l.b16 0
        %v744 = vunpack.c.h.b16 0
        %vm745 = vcmp.ne.s32.totalorder %v741, %v743
        %vm746 = vcmp.ne.s32.totalorder %v742, %v744
        %vm747 = vmpackc.low %vm746, %vm745
        %v748 = vunpack.c.l.b16 %v681
        %v749 = vunpack.c.h.b16 %v681
        %v750 = vunpack.c.l.b16 0
        %v751 = vunpack.c.h.b16 0
        %vm752 = vcmp.ne.s32.totalorder %v748, %v750
        %vm753 = vcmp.ne.s32.totalorder %v749, %v751
        %vm754 = vmpackc.low %vm753, %vm752
        %v755 = vunpack.c.l.b16 %v691
        %v756 = vunpack.c.h.b16 %v691
        %v757 = vunpack.c.l.b16 0
        %v758 = vunpack.c.h.b16 0
        %vm759 = vcmp.ne.s32.totalorder %v755, %v757
        %vm760 = vcmp.ne.s32.totalorder %v756, %v758
        %vm761 = vmpackc.low %vm760, %vm759
        %v762 = vunpack.c.l.b16 %v701
        %v763 = vunpack.c.h.b16 %v701
        %v764 = vunpack.c.l.b16 0
        %v765 = vunpack.c.h.b16 0
        %vm766 = vcmp.ne.s32.totalorder %v762, %v764
        %vm767 = vcmp.ne.s32.totalorder %v763, %v765
        %vm768 = vmpackc.low %vm767, %vm766
        %v769 = vunpack.c.l.b16 %v711
        %v770 = vunpack.c.h.b16 %v711
        %v771 = vunpack.c.l.b16 0
        %v772 = vunpack.c.h.b16 0
        %vm773 = vcmp.ne.s32.totalorder %v769, %v771
        %vm774 = vcmp.ne.s32.totalorder %v770, %v772
        %vm775 = vmpackc.low %vm774, %vm773
        %v776 = vunpack.c.l.b16 %v721
        %v777 = vunpack.c.h.b16 %v721
        %v778 = vunpack.c.l.b16 0
        %v779 = vunpack.c.h.b16 0
        %vm780 = vcmp.ne.s32.totalorder %v776, %v778
        %vm781 = vcmp.ne.s32.totalorder %v777, %v779
        %vm782 = vmpackc.low %vm781, %vm780
        %v783 = vunpack.c.l.b16 %v726
        %v784 = vunpack.c.h.b16 %v726
        %v785 = vunpack.c.l.b16 0
        %v786 = vunpack.c.h.b16 0
        %vm787 = vcmp.ne.s32.totalorder %v783, %v785
        %vm788 = vcmp.ne.s32.totalorder %v784, %v786
        %vm789 = vmpackc.low %vm788, %vm787
        %v790 = vsel %vm733, %v580, 0
        %v791 = vsel %vm740, %v581, 0
        %v792 = vsel %vm747, %v582, 0
        %v793 = vsel %vm754, %v583, 0
        %v794 = vsel %vm761, %v584, 0
        %v795 = vsel %vm768, %v585, 0
        %v796 = vsel %vm775, %v586, 0
        %v797 = vsel %vm782, %v587, 0
        %v798 = vsel %vm789, %v588, 0
        %v799 = vld [vmem:[#allocation3] sm:$0xf]
        %v800 = vld [vmem:[#allocation3 + $0x4] sm:$0xf]
        %v801 = vld [vmem:[#allocation3 + $0x8] sm:$0xf]
        %v802 = vld [vmem:[#allocation3 + $0xc] sm:$0xf]
        %v803 = vsel %vm499, 1, 0
        %v804 = vsel %vm500, 1, 0
        %v805 = vsel %vm501, 1, 0
        %v806 = vsel %vm502, 1, 0
        %v807 = vsel %vm503, 1, 0
        %v808 = vsel %vm504, 1, 0
        %v809 = vsel %vm505, 1, 0
        %v810 = vsel %vm506, 1, 0
        %811 = vset.pattern.permute.xlu0 0
        %812 = vperm.xlu0 %811, %v803
        %v813 = vpop.permute.xlu0 %812
        %814 = vset.pattern.permute.xlu0 0
        %815 = vperm.xlu0 %814, %v804
        %v816 = vpop.permute.xlu0 %815
        %817 = vset.pattern.permute.xlu0 0
        %818 = vperm.xlu0 %817, %v805
        %v819 = vpop.permute.xlu0 %818
        %820 = vset.pattern.permute.xlu0 0
        %821 = vperm.xlu0 %820, %v806
        %v822 = vpop.permute.xlu0 %821
        %823 = vset.pattern.permute.xlu0 0
        %824 = vperm.xlu0 %823, %v807
        %v825 = vpop.permute.xlu0 %824
        %826 = vset.pattern.permute.xlu0 0
        %827 = vperm.xlu0 %826, %v808
        %v828 = vpop.permute.xlu0 %827
        %829 = vset.pattern.permute.xlu0 0
        %830 = vperm.xlu0 %829, %v809
        %v831 = vpop.permute.xlu0 %830
        %832 = vset.pattern.permute.xlu0 0
        %833 = vperm.xlu0 %832, %v810
        %v834 = vpop.permute.xlu0 %833
        %vm835 = vcmp.eq.s32.totalorder %v813, 1
        %vm836 = vcmp.eq.s32.totalorder %v816, 1
        %vm837 = vcmp.eq.s32.totalorder %v819, 1
        %vm838 = vcmp.eq.s32.totalorder %v822, 1
        %vm839 = vcmp.eq.s32.totalorder %v825, 1
        %vm840 = vcmp.eq.s32.totalorder %v828, 1
        %vm841 = vcmp.eq.s32.totalorder %v831, 1
        %vm842 = vcmp.eq.s32.totalorder %v834, 1
        %vm843 = vmpackc.low %vm835, %vm835
        %vm844 = vmpackc.low %vm836, %vm836
        %vm845 = vmpackc.low %vm837, %vm837
        %vm846 = vmpackc.low %vm838, %vm838
        %vm847 = vmpackc.low %vm839, %vm839
        %vm848 = vmpackc.low %vm840, %vm840
        %vm849 = vmpackc.low %vm841, %vm841
        %vm850 = vmpackc.low %vm842, %vm842
        %v851 = vsel %vm843, %v581, 0
        %v852 = vsel %vm844, %v582, 0
        %v853 = vsel %vm845, %v583, 0
        %v854 = vsel %vm846, %v584, 0
        %v855 = vsel %vm847, %v585, 0
        %v856 = vsel %vm848, %v586, 0
        %v857 = vsel %vm849, %v587, 0
        %v858 = vsel %vm850, %v588, 0
        %s859 = scalar_lea.vmem [#allocation3], 16
        %v860 = vld [vmem:[%s859] sm:$0xf]
        %v861 = vld [vmem:[%s859 + $0x4] sm:$0xf]
        %v862 = vld [vmem:[%s859 + $0x8] sm:$0xf]
        %v863 = vld [vmem:[%s859 + $0xc] sm:$0xf]
        %v872 = vunpack.c.l.b16 %v851
        %v873 = vunpack.c.l.b16 %v852
        %v874 = vunpack.c.l.b16 %v853
        %v875 = vunpack.c.l.b16 %v854
        %v876 = vunpack.c.l.b16 %v855
        %v877 = vunpack.c.l.b16 %v856
        %v878 = vunpack.c.l.b16 %v857
        %v879 = vunpack.c.l.b16 %v858
        %v880 = vpack.c.b16 %v873, %v872
        %v881 = vpack.c.b16 %v875, %v874
        %v882 = vpack.c.b16 %v877, %v876
        %v883 = vpack.c.b16 %v879, %v878
        %v888 = vunpack.c.l.b16 %v860
        %v889 = vunpack.c.l.b16 %v861
        %v890 = vunpack.c.l.b16 %v862
        %v891 = vunpack.c.l.b16 %v863
        %v892 = vpack.c.b16 %v889, %v888
        %v893 = vpack.c.b16 %v891, %v890
        %vm896 = vcmask 261120
        %v898 = vsel %vm896, %v880, 0
        %v901 = vsel %vm896, %v881, 0
        %v904 = vsel %vm896, %v882, 0
        %v907 = vsel %vm896, %v883, 0
        %909 = vmatpush.bf16.msra.mxu0 0
        %910 = vmatpush.bf16.msra.mxu0 0
        %911 = vmatpush.bf16.msra.mxu0 0
        %912 = vmatpush.bf16.msra.mxu0 0
        %913 = vmatpush.bf16.msra.mxu0 0
        %914 = vmatpush.bf16.msra.mxu0 0
        %915 = vmatpush.bf16.msra.mxu0 %v893
        %916 = vmatpush.bf16.msra.mxu0 %v892
        %917 = vmatmul.bf16.gmra.mxu0 %v898
        %v918 = vpop.f32.mrf.mxu0
        %v919 = vadd.f32 0.0, %v918
        %v920 = vpop.f32.mrf.mxu0
        %v921 = vadd.f32 0.0, %v920
        %922 = vmatmul.bf16.gmra.mxu0 %v901
        %v923 = vpop.f32.mrf.mxu0
        %v924 = vadd.f32 0.0, %v923
        %v925 = vpop.f32.mrf.mxu0
        %v926 = vadd.f32 0.0, %v925
        %927 = vmatmul.bf16.gmra.mxu0 %v904
        %v928 = vpop.f32.mrf.mxu0
        %v929 = vadd.f32 0.0, %v928
        %v930 = vpop.f32.mrf.mxu0
        %v931 = vadd.f32 0.0, %v930
        %932 = vmatmul.bf16.gmra.mxu0 %v907
        %v933 = vpop.f32.mrf.mxu0
        %v934 = vadd.f32 0.0, %v933
        %v935 = vpop.f32.mrf.mxu0
        %v936 = vadd.f32 0.0, %v935
        %937 = vdwg.mxu0
        %v947 = vunpack.c.l.b16 %v790
        %v948 = vunpack.c.l.b16 %v791
        %v949 = vunpack.c.l.b16 %v792
        %v950 = vunpack.c.l.b16 %v793
        %v951 = vunpack.c.l.b16 %v794
        %v952 = vunpack.c.l.b16 %v795
        %v953 = vunpack.c.l.b16 %v796
        %v954 = vunpack.c.l.b16 %v797
        %v955 = vunpack.c.l.b16 %v798
        %v956 = vpack.c.b16 %v948, %v947
        %v957 = vpack.c.b16 %v950, %v949
        %v958 = vpack.c.b16 %v952, %v951
        %v959 = vpack.c.b16 %v954, %v953
        %v960 = vpack.c.b16 %v955, %v955
        %vm961 = vsmask.f32 4352
        %v963 = vshrl.u32 %v956, 16
        %v965 = vrot.slane %v963, 3
        %v966 = vshll.u32 %v956, 16
        %v968 = vrot.slane %v966, 4
        %v969 = vor.u32 %v965, %v968
        %v971 = vshrl.u32 %v957, 16
        %v973 = vrot.slane %v971, 3
        %v974 = vshll.u32 %v957, 16
        %v976 = vrot.slane %v974, 4
        %v977 = vor.u32 %v973, %v976
        %v978 = vsel %vm961, %v969, %v977
        %v980 = vshrl.u32 %v958, 16
        %v982 = vrot.slane %v980, 3
        %v983 = vshll.u32 %v958, 16
        %v985 = vrot.slane %v983, 4
        %v986 = vor.u32 %v982, %v985
        %v987 = vsel %vm961, %v977, %v986
        %v989 = vshrl.u32 %v959, 16
        %v991 = vrot.slane %v989, 3
        %v992 = vshll.u32 %v959, 16
        %v994 = vrot.slane %v992, 4
        %v995 = vor.u32 %v991, %v994
        %v996 = vsel %vm961, %v986, %v995
        %v998 = vshrl.u32 %v960, 16
        %v1000 = vrot.slane %v998, 3
        %v1001 = vshll.u32 %v960, 16
        %v1003 = vrot.slane %v1001, 4
        %v1004 = vor.u32 %v1000, %v1003
        %v1005 = vsel %vm961, %v995, %v1004
        %v1010 = vunpack.c.l.b16 %v799
        %v1011 = vunpack.c.l.b16 %v800
        %v1012 = vunpack.c.l.b16 %v801
        %v1013 = vunpack.c.l.b16 %v802
        %v1014 = vpack.c.b16 %v1011, %v1010
        %v1015 = vpack.c.b16 %v1013, %v1012
        %v1019 = vsel %vm896, %v978, 0
        %v1022 = vsel %vm896, %v987, 0
        %v1025 = vsel %vm896, %v996, 0
        %v1028 = vsel %vm896, %v1005, 0
        %1030 = vmatpush.bf16.msra.mxu0 0
        %1031 = vmatpush.bf16.msra.mxu0 0
        %1032 = vmatpush.bf16.msra.mxu0 0
        %1033 = vmatpush.bf16.msra.mxu0 0
        %1034 = vmatpush.bf16.msra.mxu0 0
        %1035 = vmatpush.bf16.msra.mxu0 0
        %1036 = vmatpush.bf16.msra.mxu0 %v1015
        %1037 = vmatpush.bf16.msra.mxu0 %v1014
        %1038 = vmatmul.bf16.gmra.mxu0 %v1019
        %v1039 = vpop.f32.mrf.mxu0
        %v1040 = vadd.f32 %v919, %v1039
        %v1041 = vpop.f32.mrf.mxu0
        %v1042 = vadd.f32 %v921, %v1041
        %1043 = vmatmul.bf16.gmra.mxu0 %v1022
        %v1044 = vpop.f32.mrf.mxu0
        %v1045 = vadd.f32 %v924, %v1044
        %v1046 = vpop.f32.mrf.mxu0
        %v1047 = vadd.f32 %v926, %v1046
        %1048 = vmatmul.bf16.gmra.mxu0 %v1025
        %v1049 = vpop.f32.mrf.mxu0
        %v1050 = vadd.f32 %v929, %v1049
        %v1051 = vpop.f32.mrf.mxu0
        %v1052 = vadd.f32 %v931, %v1051
        %1053 = vmatmul.bf16.gmra.mxu0 %v1028
        %v1054 = vpop.f32.mrf.mxu0
        %v1055 = vadd.f32 %v934, %v1054
        %v1056 = vpop.f32.mrf.mxu0
        %v1057 = vadd.f32 %v936, %v1056
        %1058 = vdwg.mxu0
        %v1059 = vld [vmem:[#allocation2 + $0x4] sm:$0xf]
        %v1060 = vld [vmem:[#allocation2 + $0x8] sm:$0xf]
        %v1061 = vld [vmem:[#allocation2 + $0xc] sm:$0xf]
        %v1062 = vld [vmem:[#allocation2 + $0x10] sm:$0xf]
        %v1063 = vld [vmem:[#allocation2 + $0x14] sm:$0xf]
        %v1064 = vld [vmem:[#allocation2 + $0x18] sm:$0xf]
        %v1065 = vld [vmem:[#allocation2 + $0x1c] sm:$0xf]
        %v1066 = vld [vmem:[#allocation2 + $0x20] sm:$0xf]
        %v1067 = vld [vmem:[#allocation2 + $0x24] sm:$0x1]
        %v1068 = vsel %vm539, 1, 0
        %v1069 = vsel %vm540, 1, 0
        %v1070 = vsel %vm541, 1, 0
        %v1071 = vsel %vm542, 1, 0
        %v1072 = vsel %vm543, 1, 0
        %v1073 = vsel %vm544, 1, 0
        %v1074 = vsel %vm545, 1, 0
        %v1075 = vsel %vm546, 1, 0
        %1076 = vset.pattern.permute.xlu0 0
        %1077 = vperm.xlu0 %1076, %v1068
        %v1078 = vpop.permute.xlu0 %1077
        %1079 = vset.pattern.permute.xlu0 0
        %1080 = vperm.xlu0 %1079, %v1069
        %v1081 = vpop.permute.xlu0 %1080
        %1082 = vset.pattern.permute.xlu0 0
        %1083 = vperm.xlu0 %1082, %v1070
        %v1084 = vpop.permute.xlu0 %1083
        %1085 = vset.pattern.permute.xlu0 0
        %1086 = vperm.xlu0 %1085, %v1071
        %v1087 = vpop.permute.xlu0 %1086
        %1088 = vset.pattern.permute.xlu0 0
        %1089 = vperm.xlu0 %1088, %v1072
        %v1090 = vpop.permute.xlu0 %1089
        %1091 = vset.pattern.permute.xlu0 0
        %1092 = vperm.xlu0 %1091, %v1073
        %v1093 = vpop.permute.xlu0 %1092
        %1094 = vset.pattern.permute.xlu0 0
        %1095 = vperm.xlu0 %1094, %v1074
        %v1096 = vpop.permute.xlu0 %1095
        %1097 = vset.pattern.permute.xlu0 0
        %1098 = vperm.xlu0 %1097, %v1075
        %v1099 = vpop.permute.xlu0 %1098
        %vm1100 = vcmp.eq.s32.totalorder %v1078, 1
        %vm1101 = vcmp.eq.s32.totalorder %v1081, 1
        %vm1102 = vcmp.eq.s32.totalorder %v1084, 1
        %vm1103 = vcmp.eq.s32.totalorder %v1087, 1
        %vm1104 = vcmp.eq.s32.totalorder %v1090, 1
        %vm1105 = vcmp.eq.s32.totalorder %v1093, 1
        %vm1106 = vcmp.eq.s32.totalorder %v1096, 1
        %vm1107 = vcmp.eq.s32.totalorder %v1099, 1
        %vm1108 = vmpackc.low %vm1100, %vm1100
        %vm1109 = vmpackc.low %vm1101, %vm1101
        %vm1110 = vmpackc.low %vm1102, %vm1102
        %vm1111 = vmpackc.low %vm1103, %vm1103
        %vm1112 = vmpackc.low %vm1104, %vm1104
        %vm1113 = vmpackc.low %vm1105, %vm1105
        %vm1114 = vmpackc.low %vm1106, %vm1106
        %vm1115 = vmpackc.low %vm1107, %vm1107
        %v1116 = vsel %vm1108, 65537, 0
        %v1117 = vsel %vm1109, 65537, 0
        %v1118 = vsel %vm1110, 65537, 0
        %v1119 = vsel %vm1111, 65537, 0
        %v1120 = vsel %vm1112, 65537, 0
        %v1121 = vsel %vm1113, 65537, 0
        %v1122 = vsel %vm1114, 65537, 0
        %v1123 = vsel %vm1115, 65537, 0
        %vm1124 = vsmask.f32 256
        %vm1125 = vsmask.f32 4368
        %vm1126 = vmor %vm1124, %vm1125
        %v1128 = vshrl.u32 %v1116, 16
        %v1130 = vrot.slane %v1128, 7
        %v1131 = vshll.u32 %v1116, 16
        %v1133 = vor.u32 %v1130, %v1131
        %v1134 = vrot.slane %v1130, 4
        %v1136 = vshrl.u32 %v1117, 16
        %v1138 = vrot.slane %v1136, 7
        %v1139 = vshll.u32 %v1117, 16
        %v1141 = vor.u32 %v1138, %v1139
        %v1142 = vsel %vm1126, %v1134, %v1141
        %v1143 = vrot.slane %v1138, 4
        %v1145 = vshrl.u32 %v1118, 16
        %v1147 = vrot.slane %v1145, 7
        %v1148 = vshll.u32 %v1118, 16
        %v1150 = vor.u32 %v1147, %v1148
        %v1151 = vsel %vm1126, %v1143, %v1150
        %v1152 = vrot.slane %v1147, 4
        %v1154 = vshrl.u32 %v1119, 16
        %v1156 = vrot.slane %v1154, 7
        %v1157 = vshll.u32 %v1119, 16
        %v1159 = vor.u32 %v1156, %v1157
        %v1160 = vsel %vm1126, %v1152, %v1159
        %v1161 = vrot.slane %v1156, 4
        %v1163 = vshrl.u32 %v1120, 16
        %v1165 = vrot.slane %v1163, 7
        %v1166 = vshll.u32 %v1120, 16
        %v1168 = vor.u32 %v1165, %v1166
        %v1169 = vsel %vm1126, %v1161, %v1168
        %v1170 = vrot.slane %v1165, 4
        %v1172 = vshrl.u32 %v1121, 16
        %v1174 = vrot.slane %v1172, 7
        %v1175 = vshll.u32 %v1121, 16
        %v1177 = vor.u32 %v1174, %v1175
        %v1178 = vsel %vm1126, %v1170, %v1177
        %v1179 = vrot.slane %v1174, 4
        %v1181 = vshrl.u32 %v1122, 16
        %v1183 = vrot.slane %v1181, 7
        %v1184 = vshll.u32 %v1122, 16
        %v1186 = vor.u32 %v1183, %v1184
        %v1187 = vsel %vm1126, %v1179, %v1186
        %v1188 = vrot.slane %v1183, 4
        %v1190 = vshrl.u32 %v1123, 16
        %v1192 = vrot.slane %v1190, 7
        %v1193 = vshll.u32 %v1123, 16
        %v1195 = vor.u32 %v1192, %v1193
        %v1196 = vsel %vm1126, %v1188, %v1195
        %v1197 = vrot.slane %v1192, 4
        %v1198 = vunpack.c.l.b16 %v1133
        %v1199 = vunpack.c.h.b16 %v1133
        %v1200 = vunpack.c.l.b16 0
        %v1201 = vunpack.c.h.b16 0
        %vm1202 = vcmp.ne.s32.totalorder %v1198, %v1200
        %vm1203 = vcmp.ne.s32.totalorder %v1199, %v1201
        %vm1204 = vmpackc.low %vm1203, %vm1202
        %v1205 = vunpack.c.l.b16 %v1142
        %v1206 = vunpack.c.h.b16 %v1142
        %v1207 = vunpack.c.l.b16 0
        %v1208 = vunpack.c.h.b16 0
        %vm1209 = vcmp.ne.s32.totalorder %v1205, %v1207
        %vm1210 = vcmp.ne.s32.totalorder %v1206, %v1208
        %vm1211 = vmpackc.low %vm1210, %vm1209
        %v1212 = vunpack.c.l.b16 %v1151
        %v1213 = vunpack.c.h.b16 %v1151
        %v1214 = vunpack.c.l.b16 0
        %v1215 = vunpack.c.h.b16 0
        %vm1216 = vcmp.ne.s32.totalorder %v1212, %v1214
        %vm1217 = vcmp.ne.s32.totalorder %v1213, %v1215
        %vm1218 = vmpackc.low %vm1217, %vm1216
        %v1219 = vunpack.c.l.b16 %v1160
        %v1220 = vunpack.c.h.b16 %v1160
        %v1221 = vunpack.c.l.b16 0
        %v1222 = vunpack.c.h.b16 0
        %vm1223 = vcmp.ne.s32.totalorder %v1219, %v1221
        %vm1224 = vcmp.ne.s32.totalorder %v1220, %v1222
        %vm1225 = vmpackc.low %vm1224, %vm1223
        %v1226 = vunpack.c.l.b16 %v1169
        %v1227 = vunpack.c.h.b16 %v1169
        %v1228 = vunpack.c.l.b16 0
        %v1229 = vunpack.c.h.b16 0
        %vm1230 = vcmp.ne.s32.totalorder %v1226, %v1228
        %vm1231 = vcmp.ne.s32.totalorder %v1227, %v1229
        %vm1232 = vmpackc.low %vm1231, %vm1230
        %v1233 = vunpack.c.l.b16 %v1178
        %v1234 = vunpack.c.h.b16 %v1178
        %v1235 = vunpack.c.l.b16 0
        %v1236 = vunpack.c.h.b16 0
        %vm1237 = vcmp.ne.s32.totalorder %v1233, %v1235
        %vm1238 = vcmp.ne.s32.totalorder %v1234, %v1236
        %vm1239 = vmpackc.low %vm1238, %vm1237
        %v1240 = vunpack.c.l.b16 %v1187
        %v1241 = vunpack.c.h.b16 %v1187
        %v1242 = vunpack.c.l.b16 0
        %v1243 = vunpack.c.h.b16 0
        %vm1244 = vcmp.ne.s32.totalorder %v1240, %v1242
        %vm1245 = vcmp.ne.s32.totalorder %v1241, %v1243
        %vm1246 = vmpackc.low %vm1245, %vm1244
        %v1247 = vunpack.c.l.b16 %v1196
        %v1248 = vunpack.c.h.b16 %v1196
        %v1249 = vunpack.c.l.b16 0
        %v1250 = vunpack.c.h.b16 0
        %vm1251 = vcmp.ne.s32.totalorder %v1247, %v1249
        %vm1252 = vcmp.ne.s32.totalorder %v1248, %v1250
        %vm1253 = vmpackc.low %vm1252, %vm1251
        %v1254 = vunpack.c.l.b16 %v1197
        %v1255 = vunpack.c.h.b16 %v1197
        %v1256 = vunpack.c.l.b16 0
        %v1257 = vunpack.c.h.b16 0
        %vm1258 = vcmp.ne.s32.totalorder %v1254, %v1256
        %vm1259 = vcmp.ne.s32.totalorder %v1255, %v1257
        %vm1260 = vmpackc.low %vm1259, %vm1258
        %v1261 = vsel %vm1204, %v1059, 0
        %v1262 = vsel %vm1211, %v1060, 0
        %v1263 = vsel %vm1218, %v1061, 0
        %v1264 = vsel %vm1225, %v1062, 0
        %v1265 = vsel %vm1232, %v1063, 0
        %v1266 = vsel %vm1239, %v1064, 0
        %v1267 = vsel %vm1246, %v1065, 0
        %v1268 = vsel %vm1253, %v1066, 0
        %v1269 = vsel %vm1260, %v1067, 0
        %s1270 = scalar_lea.vmem [#allocation3], 32
        %v1271 = vld [vmem:[%s1270] sm:$0xf]
        %v1272 = vld [vmem:[%s1270 + $0x4] sm:$0xf]
        %v1273 = vld [vmem:[%s1270 + $0x8] sm:$0xf]
        %v1274 = vld [vmem:[%s1270 + $0xc] sm:$0xf]
        %v1284 = vunpack.c.l.b16 %v1261
        %v1285 = vunpack.c.l.b16 %v1262
        %v1286 = vunpack.c.l.b16 %v1263
        %v1287 = vunpack.c.l.b16 %v1264
        %v1288 = vunpack.c.l.b16 %v1265
        %v1289 = vunpack.c.l.b16 %v1266
        %v1290 = vunpack.c.l.b16 %v1267
        %v1291 = vunpack.c.l.b16 %v1268
        %v1292 = vunpack.c.l.b16 %v1269
        %v1293 = vpack.c.b16 %v1285, %v1284
        %v1294 = vpack.c.b16 %v1287, %v1286
        %v1295 = vpack.c.b16 %v1289, %v1288
        %v1296 = vpack.c.b16 %v1291, %v1290
        %v1297 = vpack.c.b16 %v1292, %v1292
        %vm1298 = vsmask.f32 7424
        %v1300 = vshrl.u32 %v1293, 16
        %v1302 = vshll.u32 %v1293, 16
        %v1304 = vrot.slane %v1302, 1
        %v1305 = vor.u32 %v1300, %v1304
        %v1307 = vshll.u32 %v1294, 16
        %v1309 = vrot.slane %v1307, 1
        %v1310 = vsel %vm1298, %v1305, %v1309
        %v1311 = vshrl.u32 %v1294, 16
        %v1313 = vor.u32 %v1311, %v1309
        %v1315 = vshll.u32 %v1295, 16
        %v1317 = vrot.slane %v1315, 1
        %v1318 = vsel %vm1298, %v1313, %v1317
        %v1319 = vshrl.u32 %v1295, 16
        %v1321 = vor.u32 %v1319, %v1317
        %v1323 = vshll.u32 %v1296, 16
        %v1325 = vrot.slane %v1323, 1
        %v1326 = vsel %vm1298, %v1321, %v1325
        %v1327 = vshrl.u32 %v1296, 16
        %v1329 = vor.u32 %v1327, %v1325
        %v1331 = vshll.u32 %v1297, 16
        %v1333 = vrot.slane %v1331, 1
        %v1334 = vsel %vm1298, %v1329, %v1333
        %v1339 = vunpack.c.l.b16 %v1271
        %v1340 = vunpack.c.l.b16 %v1272
        %v1341 = vunpack.c.l.b16 %v1273
        %v1342 = vunpack.c.l.b16 %v1274
        %v1343 = vpack.c.b16 %v1340, %v1339
        %v1344 = vpack.c.b16 %v1342, %v1341
        %v1348 = vsel %vm896, %v1310, 0
        %v1351 = vsel %vm896, %v1318, 0
        %v1354 = vsel %vm896, %v1326, 0
        %v1357 = vsel %vm896, %v1334, 0
        %1359 = vmatpush.bf16.msra.mxu0 0
        %1360 = vmatpush.bf16.msra.mxu0 0
        %1361 = vmatpush.bf16.msra.mxu0 0
        %1362 = vmatpush.bf16.msra.mxu0 0
        %1363 = vmatpush.bf16.msra.mxu0 0
        %1364 = vmatpush.bf16.msra.mxu0 0
        %1365 = vmatpush.bf16.msra.mxu0 %v1344
        %1366 = vmatpush.bf16.msra.mxu0 %v1343
        %1367 = vmatmul.bf16.gmra.mxu0 %v1348
        %v1368 = vpop.f32.mrf.mxu0
        %v1369 = vadd.f32 0.0, %v1368
        %v1370 = vpop.f32.mrf.mxu0
        %v1371 = vadd.f32 0.0, %v1370
        %1372 = vmatmul.bf16.gmra.mxu0 %v1351
        %v1373 = vpop.f32.mrf.mxu0
        %v1374 = vadd.f32 0.0, %v1373
        %v1375 = vpop.f32.mrf.mxu0
        %v1376 = vadd.f32 0.0, %v1375
        %1377 = vmatmul.bf16.gmra.mxu0 %v1354
        %v1378 = vpop.f32.mrf.mxu0
        %v1379 = vadd.f32 0.0, %v1378
        %v1380 = vpop.f32.mrf.mxu0
        %v1381 = vadd.f32 0.0, %v1380
        %1382 = vmatmul.bf16.gmra.mxu0 %v1357
        %v1383 = vpop.f32.mrf.mxu0
        %v1384 = vadd.f32 0.0, %v1383
        %v1385 = vpop.f32.mrf.mxu0
        %v1386 = vadd.f32 0.0, %v1385
        %1387 = vdwg.mxu0
        %v1388 = vadd.f32 %v1040, %v1369
        %v1389 = vadd.f32 %v1042, %v1371
        %v1390 = vadd.f32 %v1045, %v1374
        %v1391 = vadd.f32 %v1047, %v1376
        %v1392 = vadd.f32 %v1050, %v1379
        %v1393 = vadd.f32 %v1052, %v1381
        %v1394 = vadd.f32 %v1055, %v1384
        %v1395 = vadd.f32 %v1057, %v1386
        %v1396 = vld [vmem:[#allocation2 + $0x4] sm:$0x8]
        %v1397 = vld [vmem:[#allocation2 + $0x24] sm:$0xf]
        %v1398 = vsel %vm515, 1, 0
        %v1399 = vsel %vm516, 1, 0
        %v1400 = vsel %vm517, 1, 0
        %v1401 = vsel %vm518, 1, 0
        %v1402 = vsel %vm519, 1, 0
        %v1403 = vsel %vm520, 1, 0
        %v1404 = vsel %vm521, 1, 0
        %v1405 = vsel %vm522, 1, 0
        %1406 = vset.pattern.permute.xlu0 0
        %1407 = vperm.xlu0 %1406, %v1398
        %v1408 = vpop.permute.xlu0 %1407
        %1409 = vset.pattern.permute.xlu0 0
        %1410 = vperm.xlu0 %1409, %v1399
        %v1411 = vpop.permute.xlu0 %1410
        %1412 = vset.pattern.permute.xlu0 0
        %1413 = vperm.xlu0 %1412, %v1400
        %v1414 = vpop.permute.xlu0 %1413
        %1415 = vset.pattern.permute.xlu0 0
        %1416 = vperm.xlu0 %1415, %v1401
        %v1417 = vpop.permute.xlu0 %1416
        %1418 = vset.pattern.permute.xlu0 0
        %1419 = vperm.xlu0 %1418, %v1402
        %v1420 = vpop.permute.xlu0 %1419
        %1421 = vset.pattern.permute.xlu0 0
        %1422 = vperm.xlu0 %1421, %v1403
        %v1423 = vpop.permute.xlu0 %1422
        %1424 = vset.pattern.permute.xlu0 0
        %1425 = vperm.xlu0 %1424, %v1404
        %v1426 = vpop.permute.xlu0 %1425
        %1427 = vset.pattern.permute.xlu0 0
        %1428 = vperm.xlu0 %1427, %v1405
        %v1429 = vpop.permute.xlu0 %1428
        %vm1430 = vcmp.eq.s32.totalorder %v1408, 1
        %vm1431 = vcmp.eq.s32.totalorder %v1411, 1
        %vm1432 = vcmp.eq.s32.totalorder %v1414, 1
        %vm1433 = vcmp.eq.s32.totalorder %v1417, 1
        %vm1434 = vcmp.eq.s32.totalorder %v1420, 1
        %vm1435 = vcmp.eq.s32.totalorder %v1423, 1
        %vm1436 = vcmp.eq.s32.totalorder %v1426, 1
        %vm1437 = vcmp.eq.s32.totalorder %v1429, 1
        %vm1438 = vmpackc.low %vm1430, %vm1430
        %vm1439 = vmpackc.low %vm1431, %vm1431
        %vm1440 = vmpackc.low %vm1432, %vm1432
        %vm1441 = vmpackc.low %vm1433, %vm1433
        %vm1442 = vmpackc.low %vm1434, %vm1434
        %vm1443 = vmpackc.low %vm1435, %vm1435
        %vm1444 = vmpackc.low %vm1436, %vm1436
        %vm1445 = vmpackc.low %vm1437, %vm1437
        %v1446 = vsel %vm1438, 65537, 0
        %v1447 = vsel %vm1439, 65537, 0
        %v1448 = vsel %vm1440, 65537, 0
        %v1449 = vsel %vm1441, 65537, 0
        %v1450 = vsel %vm1442, 65537, 0
        %v1451 = vsel %vm1443, 65537, 0
        %v1452 = vsel %vm1444, 65537, 0
        %v1453 = vsel %vm1445, 65537, 0
        %v1455 = vshll.u32 %v1446, 16
        %v1457 = vrot.slane %v1455, 5
        %v1458 = vshrl.u32 %v1446, 16
        %v1460 = vrot.slane %v1458, 4
        %v1461 = vor.u32 %v1460, %v1457
        %v1462 = vrot.slane %v1461, 4
        %v1464 = vshll.u32 %v1447, 16
        %v1466 = vrot.slane %v1464, 5
        %v1467 = vsel %vm647, %v1462, %v1466
        %v1468 = vshrl.u32 %v1447, 16
        %v1470 = vrot.slane %v1468, 4
        %v1471 = vor.u32 %v1470, %v1466
        %v1472 = vrot.slane %v1471, 4
        %v1474 = vshll.u32 %v1448, 16
        %v1476 = vrot.slane %v1474, 5
        %v1477 = vsel %vm647, %v1472, %v1476
        %v1478 = vshrl.u32 %v1448, 16
        %v1480 = vrot.slane %v1478, 4
        %v1481 = vor.u32 %v1480, %v1476
        %v1482 = vrot.slane %v1481, 4
        %v1484 = vshll.u32 %v1449, 16
        %v1486 = vrot.slane %v1484, 5
        %v1487 = vsel %vm647, %v1482, %v1486
        %v1488 = vshrl.u32 %v1449, 16
        %v1490 = vrot.slane %v1488, 4
        %v1491 = vor.u32 %v1490, %v1486
        %v1492 = vrot.slane %v1491, 4
        %v1494 = vshll.u32 %v1450, 16
        %v1496 = vrot.slane %v1494, 5
        %v1497 = vsel %vm647, %v1492, %v1496
        %v1498 = vshrl.u32 %v1450, 16
        %v1500 = vrot.slane %v1498, 4
        %v1501 = vor.u32 %v1500, %v1496
        %v1502 = vrot.slane %v1501, 4
        %v1504 = vshll.u32 %v1451, 16
        %v1506 = vrot.slane %v1504, 5
        %v1507 = vsel %vm647, %v1502, %v1506
        %v1508 = vshrl.u32 %v1451, 16
        %v1510 = vrot.slane %v1508, 4
        %v1511 = vor.u32 %v1510, %v1506
        %v1512 = vrot.slane %v1511, 4
        %v1514 = vshll.u32 %v1452, 16
        %v1516 = vrot.slane %v1514, 5
        %v1517 = vsel %vm647, %v1512, %v1516
        %v1518 = vshrl.u32 %v1452, 16
        %v1520 = vrot.slane %v1518, 4
        %v1521 = vor.u32 %v1520, %v1516
        %v1522 = vrot.slane %v1521, 4
        %v1524 = vshll.u32 %v1453, 16
        %v1526 = vrot.slane %v1524, 5
        %v1527 = vsel %vm647, %v1522, %v1526
        %v1528 = vshrl.u32 %v1453, 16
        %v1530 = vrot.slane %v1528, 4
        %v1531 = vor.u32 %v1530, %v1526
        %v1532 = vrot.slane %v1531, 4
        %v1533 = vunpack.c.l.b16 %v1457
        %v1534 = vunpack.c.h.b16 %v1457
        %v1535 = vunpack.c.l.b16 0
        %v1536 = vunpack.c.h.b16 0
        %vm1537 = vcmp.ne.s32.totalorder %v1533, %v1535
        %vm1538 = vcmp.ne.s32.totalorder %v1534, %v1536
        %vm1539 = vmpackc.low %vm1538, %vm1537
        %v1540 = vunpack.c.l.b16 %v1467
        %v1541 = vunpack.c.h.b16 %v1467
        %v1542 = vunpack.c.l.b16 0
        %v1543 = vunpack.c.h.b16 0
        %vm1544 = vcmp.ne.s32.totalorder %v1540, %v1542
        %vm1545 = vcmp.ne.s32.totalorder %v1541, %v1543
        %vm1546 = vmpackc.low %vm1545, %vm1544
        %v1547 = vunpack.c.l.b16 %v1477
        %v1548 = vunpack.c.h.b16 %v1477
        %v1549 = vunpack.c.l.b16 0
        %v1550 = vunpack.c.h.b16 0
        %vm1551 = vcmp.ne.s32.totalorder %v1547, %v1549
        %vm1552 = vcmp.ne.s32.totalorder %v1548, %v1550
        %vm1553 = vmpackc.low %vm1552, %vm1551
        %v1554 = vunpack.c.l.b16 %v1487
        %v1555 = vunpack.c.h.b16 %v1487
        %v1556 = vunpack.c.l.b16 0
        %v1557 = vunpack.c.h.b16 0
        %vm1558 = vcmp.ne.s32.totalorder %v1554, %v1556
        %vm1559 = vcmp.ne.s32.totalorder %v1555, %v1557
        %vm1560 = vmpackc.low %vm1559, %vm1558
        %v1561 = vunpack.c.l.b16 %v1497
        %v1562 = vunpack.c.h.b16 %v1497
        %v1563 = vunpack.c.l.b16 0
        %v1564 = vunpack.c.h.b16 0
        %vm1565 = vcmp.ne.s32.totalorder %v1561, %v1563
        %vm1566 = vcmp.ne.s32.totalorder %v1562, %v1564
        %vm1567 = vmpackc.low %vm1566, %vm1565
        %v1568 = vunpack.c.l.b16 %v1507
        %v1569 = vunpack.c.h.b16 %v1507
        %v1570 = vunpack.c.l.b16 0
        %v1571 = vunpack.c.h.b16 0
        %vm1572 = vcmp.ne.s32.totalorder %v1568, %v1570
        %vm1573 = vcmp.ne.s32.totalorder %v1569, %v1571
        %vm1574 = vmpackc.low %vm1573, %vm1572
        %v1575 = vunpack.c.l.b16 %v1517
        %v1576 = vunpack.c.h.b16 %v1517
        %v1577 = vunpack.c.l.b16 0
        %v1578 = vunpack.c.h.b16 0
        %vm1579 = vcmp.ne.s32.totalorder %v1575, %v1577
        %vm1580 = vcmp.ne.s32.totalorder %v1576, %v1578
        %vm1581 = vmpackc.low %vm1580, %vm1579
        %v1582 = vunpack.c.l.b16 %v1527
        %v1583 = vunpack.c.h.b16 %v1527
        %v1584 = vunpack.c.l.b16 0
        %v1585 = vunpack.c.h.b16 0
        %vm1586 = vcmp.ne.s32.totalorder %v1582, %v1584
        %vm1587 = vcmp.ne.s32.totalorder %v1583, %v1585
        %vm1588 = vmpackc.low %vm1587, %vm1586
        %v1589 = vunpack.c.l.b16 %v1532
        %v1590 = vunpack.c.h.b16 %v1532
        %v1591 = vunpack.c.l.b16 0
        %v1592 = vunpack.c.h.b16 0
        %vm1593 = vcmp.ne.s32.totalorder %v1589, %v1591
        %vm1594 = vcmp.ne.s32.totalorder %v1590, %v1592
        %vm1595 = vmpackc.low %vm1594, %vm1593
        %v1596 = vsel %vm1539, %v1396, 0
        %v1597 = vsel %vm1546, %v1060, 0
        %v1598 = vsel %vm1553, %v1061, 0
        %v1599 = vsel %vm1560, %v1062, 0
        %v1600 = vsel %vm1567, %v1063, 0
        %v1601 = vsel %vm1574, %v1064, 0
        %v1602 = vsel %vm1581, %v1065, 0
        %v1603 = vsel %vm1588, %v1066, 0
        %v1604 = vsel %vm1595, %v1397, 0
        %s1605 = scalar_lea.vmem [#allocation3], 48
        %v1606 = vld [vmem:[%s1605] sm:$0xf]
        %v1607 = vld [vmem:[%s1605 + $0x4] sm:$0xf]
        %v1608 = vld [vmem:[%s1605 + $0x8] sm:$0xf]
        %v1609 = vld [vmem:[%s1605 + $0xc] sm:$0xf]
        %v1619 = vunpack.c.l.b16 %v1596
        %v1620 = vunpack.c.l.b16 %v1597
        %v1621 = vunpack.c.l.b16 %v1598
        %v1622 = vunpack.c.l.b16 %v1599
        %v1623 = vunpack.c.l.b16 %v1600
        %v1624 = vunpack.c.l.b16 %v1601
        %v1625 = vunpack.c.l.b16 %v1602
        %v1626 = vunpack.c.l.b16 %v1603
        %v1627 = vunpack.c.l.b16 %v1604
        %v1628 = vpack.c.b16 %v1620, %v1619
        %v1629 = vpack.c.b16 %v1622, %v1621
        %v1630 = vpack.c.b16 %v1624, %v1623
        %v1631 = vpack.c.b16 %v1626, %v1625
        %v1632 = vpack.c.b16 %v1627, %v1627
        %v1634 = vshrl.u32 %v1628, 16
        %v1636 = vrot.slane %v1634, 3
        %v1637 = vshll.u32 %v1628, 16
        %v1639 = vrot.slane %v1637, 4
        %v1640 = vor.u32 %v1636, %v1639
        %v1642 = vshrl.u32 %v1629, 16
        %v1644 = vrot.slane %v1642, 3
        %v1645 = vshll.u32 %v1629, 16
        %v1647 = vrot.slane %v1645, 4
        %v1648 = vor.u32 %v1644, %v1647
        %v1649 = vsel %vm961, %v1640, %v1648
        %v1651 = vshrl.u32 %v1630, 16
        %v1653 = vrot.slane %v1651, 3
        %v1654 = vshll.u32 %v1630, 16
        %v1656 = vrot.slane %v1654, 4
        %v1657 = vor.u32 %v1653, %v1656
        %v1658 = vsel %vm961, %v1648, %v1657
        %v1660 = vshrl.u32 %v1631, 16
        %v1662 = vrot.slane %v1660, 3
        %v1663 = vshll.u32 %v1631, 16
        %v1665 = vrot.slane %v1663, 4
        %v1666 = vor.u32 %v1662, %v1665
        %v1667 = vsel %vm961, %v1657, %v1666
        %v1669 = vshrl.u32 %v1632, 16
        %v1671 = vrot.slane %v1669, 3
        %v1672 = vshll.u32 %v1632, 16
        %v1674 = vrot.slane %v1672, 4
        %v1675 = vor.u32 %v1671, %v1674
        %v1676 = vsel %vm961, %v1666, %v1675
        %v1681 = vunpack.c.l.b16 %v1606
        %v1682 = vunpack.c.l.b16 %v1607
        %v1683 = vunpack.c.l.b16 %v1608
        %v1684 = vunpack.c.l.b16 %v1609
        %v1685 = vpack.c.b16 %v1682, %v1681
        %v1686 = vpack.c.b16 %v1684, %v1683
        %v1690 = vsel %vm896, %v1649, 0
        %v1693 = vsel %vm896, %v1658, 0
        %v1696 = vsel %vm896, %v1667, 0
        %v1699 = vsel %vm896, %v1676, 0
        %1701 = vmatpush.bf16.msra.mxu0 0
        %1702 = vmatpush.bf16.msra.mxu0 0
        %1703 = vmatpush.bf16.msra.mxu0 0
        %1704 = vmatpush.bf16.msra.mxu0 0
        %1705 = vmatpush.bf16.msra.mxu0 0
        %1706 = vmatpush.bf16.msra.mxu0 0
        %1707 = vmatpush.bf16.msra.mxu0 %v1686
        %1708 = vmatpush.bf16.msra.mxu0 %v1685
        %1709 = vmatmul.bf16.gmra.mxu0 %v1690
        %v1710 = vpop.f32.mrf.mxu0
        %v1711 = vadd.f32 0.0, %v1710
        %v1712 = vpop.f32.mrf.mxu0
        %v1713 = vadd.f32 0.0, %v1712
        %1714 = vmatmul.bf16.gmra.mxu0 %v1693
        %v1715 = vpop.f32.mrf.mxu0
        %v1716 = vadd.f32 0.0, %v1715
        %v1717 = vpop.f32.mrf.mxu0
        %v1718 = vadd.f32 0.0, %v1717
        %1719 = vmatmul.bf16.gmra.mxu0 %v1696
        %v1720 = vpop.f32.mrf.mxu0
        %v1721 = vadd.f32 0.0, %v1720
        %v1722 = vpop.f32.mrf.mxu0
        %v1723 = vadd.f32 0.0, %v1722
        %1724 = vmatmul.bf16.gmra.mxu0 %v1699
        %v1725 = vpop.f32.mrf.mxu0
        %v1726 = vadd.f32 0.0, %v1725
        %v1727 = vpop.f32.mrf.mxu0
        %v1728 = vadd.f32 0.0, %v1727
        %1729 = vdwg.mxu0
        %v1730 = vadd.f32 %v1388, %v1711
        %v1731 = vadd.f32 %v1389, %v1713
        %v1732 = vadd.f32 %v1390, %v1716
        %v1733 = vadd.f32 %v1391, %v1718
        %v1734 = vadd.f32 %v1392, %v1721
        %v1735 = vadd.f32 %v1393, %v1723
        %v1736 = vadd.f32 %v1394, %v1726
        %v1737 = vadd.f32 %v1395, %v1728
        %s1738 = scalar_lea.vmem [#allocation3], 64
        %v1739 = vld [vmem:[%s1738] sm:$0xf]
        %v1740 = vld [vmem:[%s1738 + $0x4] sm:$0xf]
        %v1741 = vld [vmem:[%s1738 + $0x8] sm:$0xf]
        %v1742 = vld [vmem:[%s1738 + $0xc] sm:$0xf]
        %v1751 = vunpack.c.l.b16 %v563
        %v1752 = vunpack.c.l.b16 %v564
        %v1753 = vunpack.c.l.b16 %v565
        %v1754 = vunpack.c.l.b16 %v566
        %v1755 = vunpack.c.l.b16 %v567
        %v1756 = vunpack.c.l.b16 %v568
        %v1757 = vunpack.c.l.b16 %v569
        %v1758 = vunpack.c.l.b16 %v570
        %v1759 = vpack.c.b16 %v1752, %v1751
        %v1760 = vpack.c.b16 %v1754, %v1753
        %v1761 = vpack.c.b16 %v1756, %v1755
        %v1762 = vpack.c.b16 %v1758, %v1757
        %v1767 = vunpack.c.l.b16 %v1739
        %v1768 = vunpack.c.l.b16 %v1740
        %v1769 = vunpack.c.l.b16 %v1741
        %v1770 = vunpack.c.l.b16 %v1742
        %v1771 = vpack.c.b16 %v1768, %v1767
        %v1772 = vpack.c.b16 %v1770, %v1769
        %v1776 = vsel %vm896, %v1759, 0
        %v1779 = vsel %vm896, %v1760, 0
        %v1782 = vsel %vm896, %v1761, 0
        %v1785 = vsel %vm896, %v1762, 0
        %1787 = vmatpush.bf16.msra.mxu0 0
        %1788 = vmatpush.bf16.msra.mxu0 0
        %1789 = vmatpush.bf16.msra.mxu0 0
        %1790 = vmatpush.bf16.msra.mxu0 0
        %1791 = vmatpush.bf16.msra.mxu0 0
        %1792 = vmatpush.bf16.msra.mxu0 0
        %1793 = vmatpush.bf16.msra.mxu0 %v1772
        %1794 = vmatpush.bf16.msra.mxu0 %v1771
        %1795 = vmatmul.bf16.gmra.mxu0 %v1776
        %v1796 = vpop.f32.mrf.mxu0
        %v1797 = vadd.f32 0.0, %v1796
        %v1798 = vpop.f32.mrf.mxu0
        %v1799 = vadd.f32 0.0, %v1798
        %1800 = vmatmul.bf16.gmra.mxu0 %v1779
        %v1801 = vpop.f32.mrf.mxu0
        %v1802 = vadd.f32 0.0, %v1801
        %v1803 = vpop.f32.mrf.mxu0
        %v1804 = vadd.f32 0.0, %v1803
        %1805 = vmatmul.bf16.gmra.mxu0 %v1782
        %v1806 = vpop.f32.mrf.mxu0
        %v1807 = vadd.f32 0.0, %v1806
        %v1808 = vpop.f32.mrf.mxu0
        %v1809 = vadd.f32 0.0, %v1808
        %1810 = vmatmul.bf16.gmra.mxu0 %v1785
        %v1811 = vpop.f32.mrf.mxu0
        %v1812 = vadd.f32 0.0, %v1811
        %v1813 = vpop.f32.mrf.mxu0
        %v1814 = vadd.f32 0.0, %v1813
        %1815 = vdwg.mxu0
        %v1816 = vadd.f32 %v1730, %v1797
        %v1817 = vadd.f32 %v1731, %v1799
        %v1818 = vadd.f32 %v1732, %v1802
        %v1819 = vadd.f32 %v1733, %v1804
        %v1820 = vadd.f32 %v1734, %v1807
        %v1821 = vadd.f32 %v1735, %v1809
        %v1822 = vadd.f32 %v1736, %v1812
        %v1823 = vadd.f32 %v1737, %v1814
        %v1824 = vld [vmem:[#allocation2 + $0x8] sm:$0xf]
        %v1825 = vld [vmem:[#allocation2 + $0xc] sm:$0xf]
        %v1826 = vld [vmem:[#allocation2 + $0x10] sm:$0xf]
        %v1827 = vld [vmem:[#allocation2 + $0x14] sm:$0xf]
        %v1828 = vld [vmem:[#allocation2 + $0x18] sm:$0xf]
        %v1829 = vld [vmem:[#allocation2 + $0x1c] sm:$0xf]
        %v1830 = vld [vmem:[#allocation2 + $0x20] sm:$0xf]
        %v1831 = vld [vmem:[#allocation2 + $0x24] sm:$0xf]
        %v1832 = vld [vmem:[#allocation2 + $0x28] sm:$0x1]
        %v1833 = vsel %vm523, 1, 0
        %v1834 = vsel %vm524, 1, 0
        %v1835 = vsel %vm525, 1, 0
        %v1836 = vsel %vm526, 1, 0
        %v1837 = vsel %vm527, 1, 0
        %v1838 = vsel %vm528, 1, 0
        %v1839 = vsel %vm529, 1, 0
        %v1840 = vsel %vm530, 1, 0
        %1841 = vset.pattern.permute.xlu0 0
        %1842 = vperm.xlu0 %1841, %v1833
        %v1843 = vpop.permute.xlu0 %1842
        %1844 = vset.pattern.permute.xlu0 0
        %1845 = vperm.xlu0 %1844, %v1834
        %v1846 = vpop.permute.xlu0 %1845
        %1847 = vset.pattern.permute.xlu0 0
        %1848 = vperm.xlu0 %1847, %v1835
        %v1849 = vpop.permute.xlu0 %1848
        %1850 = vset.pattern.permute.xlu0 0
        %1851 = vperm.xlu0 %1850, %v1836
        %v1852 = vpop.permute.xlu0 %1851
        %1853 = vset.pattern.permute.xlu0 0
        %1854 = vperm.xlu0 %1853, %v1837
        %v1855 = vpop.permute.xlu0 %1854
        %1856 = vset.pattern.permute.xlu0 0
        %1857 = vperm.xlu0 %1856, %v1838
        %v1858 = vpop.permute.xlu0 %1857
        %1859 = vset.pattern.permute.xlu0 0
        %1860 = vperm.xlu0 %1859, %v1839
        %v1861 = vpop.permute.xlu0 %1860
        %1862 = vset.pattern.permute.xlu0 0
        %1863 = vperm.xlu0 %1862, %v1840
        %v1864 = vpop.permute.xlu0 %1863
        %vm1865 = vcmp.eq.s32.totalorder %v1843, 1
        %vm1866 = vcmp.eq.s32.totalorder %v1846, 1
        %vm1867 = vcmp.eq.s32.totalorder %v1849, 1
        %vm1868 = vcmp.eq.s32.totalorder %v1852, 1
        %vm1869 = vcmp.eq.s32.totalorder %v1855, 1
        %vm1870 = vcmp.eq.s32.totalorder %v1858, 1
        %vm1871 = vcmp.eq.s32.totalorder %v1861, 1
        %vm1872 = vcmp.eq.s32.totalorder %v1864, 1
        %vm1873 = vmpackc.low %vm1865, %vm1865
        %vm1874 = vmpackc.low %vm1866, %vm1866
        %vm1875 = vmpackc.low %vm1867, %vm1867
        %vm1876 = vmpackc.low %vm1868, %vm1868
        %vm1877 = vmpackc.low %vm1869, %vm1869
        %vm1878 = vmpackc.low %vm1870, %vm1870
        %vm1879 = vmpackc.low %vm1871, %vm1871
        %vm1880 = vmpackc.low %vm1872, %vm1872
        %v1881 = vsel %vm1873, 65537, 0
        %v1882 = vsel %vm1874, 65537, 0
        %v1883 = vsel %vm1875, 65537, 0
        %v1884 = vsel %vm1876, 65537, 0
        %v1885 = vsel %vm1877, 65537, 0
        %v1886 = vsel %vm1878, 65537, 0
        %v1887 = vsel %vm1879, 65537, 0
        %v1888 = vsel %vm1880, 65537, 0
        %v1890 = vshrl.u32 %v1881, 16
        %v1892 = vrot.slane %v1890, 7
        %v1893 = vshll.u32 %v1881, 16
        %v1895 = vor.u32 %v1892, %v1893
        %v1896 = vrot.slane %v1892, 4
        %v1898 = vshrl.u32 %v1882, 16
        %v1900 = vrot.slane %v1898, 7
        %v1901 = vshll.u32 %v1882, 16
        %v1903 = vor.u32 %v1900, %v1901
        %v1904 = vsel %vm1126, %v1896, %v1903
        %v1905 = vrot.slane %v1900, 4
        %v1907 = vshrl.u32 %v1883, 16
        %v1909 = vrot.slane %v1907, 7
        %v1910 = vshll.u32 %v1883, 16
        %v1912 = vor.u32 %v1909, %v1910
        %v1913 = vsel %vm1126, %v1905, %v1912
        %v1914 = vrot.slane %v1909, 4
        %v1916 = vshrl.u32 %v1884, 16
        %v1918 = vrot.slane %v1916, 7
        %v1919 = vshll.u32 %v1884, 16
        %v1921 = vor.u32 %v1918, %v1919
        %v1922 = vsel %vm1126, %v1914, %v1921
        %v1923 = vrot.slane %v1918, 4
        %v1925 = vshrl.u32 %v1885, 16
        %v1927 = vrot.slane %v1925, 7
        %v1928 = vshll.u32 %v1885, 16
        %v1930 = vor.u32 %v1927, %v1928
        %v1931 = vsel %vm1126, %v1923, %v1930
        %v1932 = vrot.slane %v1927, 4
        %v1934 = vshrl.u32 %v1886, 16
        %v1936 = vrot.slane %v1934, 7
        %v1937 = vshll.u32 %v1886, 16
        %v1939 = vor.u32 %v1936, %v1937
        %v1940 = vsel %vm1126, %v1932, %v1939
        %v1941 = vrot.slane %v1936, 4
        %v1943 = vshrl.u32 %v1887, 16
        %v1945 = vrot.slane %v1943, 7
        %v1946 = vshll.u32 %v1887, 16
        %v1948 = vor.u32 %v1945, %v1946
        %v1949 = vsel %vm1126, %v1941, %v1948
        %v1950 = vrot.slane %v1945, 4
        %v1952 = vshrl.u32 %v1888, 16
        %v1954 = vrot.slane %v1952, 7
        %v1955 = vshll.u32 %v1888, 16
        %v1957 = vor.u32 %v1954, %v1955
        %v1958 = vsel %vm1126, %v1950, %v1957
        %v1959 = vrot.slane %v1954, 4
        %v1960 = vunpack.c.l.b16 %v1895
        %v1961 = vunpack.c.h.b16 %v1895
        %v1962 = vunpack.c.l.b16 0
        %v1963 = vunpack.c.h.b16 0
        %vm1964 = vcmp.ne.s32.totalorder %v1960, %v1962
        %vm1965 = vcmp.ne.s32.totalorder %v1961, %v1963
        %vm1966 = vmpackc.low %vm1965, %vm1964
        %v1967 = vunpack.c.l.b16 %v1904
        %v1968 = vunpack.c.h.b16 %v1904
        %v1969 = vunpack.c.l.b16 0
        %v1970 = vunpack.c.h.b16 0
        %vm1971 = vcmp.ne.s32.totalorder %v1967, %v1969
        %vm1972 = vcmp.ne.s32.totalorder %v1968, %v1970
        %vm1973 = vmpackc.low %vm1972, %vm1971
        %v1974 = vunpack.c.l.b16 %v1913
        %v1975 = vunpack.c.h.b16 %v1913
        %v1976 = vunpack.c.l.b16 0
        %v1977 = vunpack.c.h.b16 0
        %vm1978 = vcmp.ne.s32.totalorder %v1974, %v1976
        %vm1979 = vcmp.ne.s32.totalorder %v1975, %v1977
        %vm1980 = vmpackc.low %vm1979, %vm1978
        %v1981 = vunpack.c.l.b16 %v1922
        %v1982 = vunpack.c.h.b16 %v1922
        %v1983 = vunpack.c.l.b16 0
        %v1984 = vunpack.c.h.b16 0
        %vm1985 = vcmp.ne.s32.totalorder %v1981, %v1983
        %vm1986 = vcmp.ne.s32.totalorder %v1982, %v1984
        %vm1987 = vmpackc.low %vm1986, %vm1985
        %v1988 = vunpack.c.l.b16 %v1931
        %v1989 = vunpack.c.h.b16 %v1931
        %v1990 = vunpack.c.l.b16 0
        %v1991 = vunpack.c.h.b16 0
        %vm1992 = vcmp.ne.s32.totalorder %v1988, %v1990
        %vm1993 = vcmp.ne.s32.totalorder %v1989, %v1991
        %vm1994 = vmpackc.low %vm1993, %vm1992
        %v1995 = vunpack.c.l.b16 %v1940
        %v1996 = vunpack.c.h.b16 %v1940
        %v1997 = vunpack.c.l.b16 0
        %v1998 = vunpack.c.h.b16 0
        %vm1999 = vcmp.ne.s32.totalorder %v1995, %v1997
        %vm2000 = vcmp.ne.s32.totalorder %v1996, %v1998
        %vm2001 = vmpackc.low %vm2000, %vm1999
        %v2002 = vunpack.c.l.b16 %v1949
        %v2003 = vunpack.c.h.b16 %v1949
        %v2004 = vunpack.c.l.b16 0
        %v2005 = vunpack.c.h.b16 0
        %vm2006 = vcmp.ne.s32.totalorder %v2002, %v2004
        %vm2007 = vcmp.ne.s32.totalorder %v2003, %v2005
        %vm2008 = vmpackc.low %vm2007, %vm2006
        %v2009 = vunpack.c.l.b16 %v1958
        %v2010 = vunpack.c.h.b16 %v1958
        %v2011 = vunpack.c.l.b16 0
        %v2012 = vunpack.c.h.b16 0
        %vm2013 = vcmp.ne.s32.totalorder %v2009, %v2011
        %vm2014 = vcmp.ne.s32.totalorder %v2010, %v2012
        %vm2015 = vmpackc.low %vm2014, %vm2013
        %v2016 = vunpack.c.l.b16 %v1959
        %v2017 = vunpack.c.h.b16 %v1959
        %v2018 = vunpack.c.l.b16 0
        %v2019 = vunpack.c.h.b16 0
        %vm2020 = vcmp.ne.s32.totalorder %v2016, %v2018
        %vm2021 = vcmp.ne.s32.totalorder %v2017, %v2019
        %vm2022 = vmpackc.low %vm2021, %vm2020
        %v2023 = vsel %vm1966, %v1824, 0
        %v2024 = vsel %vm1973, %v1825, 0
        %v2025 = vsel %vm1980, %v1826, 0
        %v2026 = vsel %vm1987, %v1827, 0
        %v2027 = vsel %vm1994, %v1828, 0
        %v2028 = vsel %vm2001, %v1829, 0
        %v2029 = vsel %vm2008, %v1830, 0
        %v2030 = vsel %vm2015, %v1831, 0
        %v2031 = vsel %vm2022, %v1832, 0
        %s2032 = scalar_lea.vmem [#allocation3], 80
        %v2033 = vld [vmem:[%s2032] sm:$0xf]
        %v2034 = vld [vmem:[%s2032 + $0x4] sm:$0xf]
        %v2035 = vld [vmem:[%s2032 + $0x8] sm:$0xf]
        %v2036 = vld [vmem:[%s2032 + $0xc] sm:$0xf]
        %v2046 = vunpack.c.l.b16 %v2023
        %v2047 = vunpack.c.l.b16 %v2024
        %v2048 = vunpack.c.l.b16 %v2025
        %v2049 = vunpack.c.l.b16 %v2026
        %v2050 = vunpack.c.l.b16 %v2027
        %v2051 = vunpack.c.l.b16 %v2028
        %v2052 = vunpack.c.l.b16 %v2029
        %v2053 = vunpack.c.l.b16 %v2030
        %v2054 = vunpack.c.l.b16 %v2031
        %v2055 = vpack.c.b16 %v2047, %v2046
        %v2056 = vpack.c.b16 %v2049, %v2048
        %v2057 = vpack.c.b16 %v2051, %v2050
        %v2058 = vpack.c.b16 %v2053, %v2052
        %v2059 = vpack.c.b16 %v2054, %v2054
        %v2061 = vshrl.u32 %v2055, 16
        %v2063 = vshll.u32 %v2055, 16
        %v2065 = vrot.slane %v2063, 1
        %v2066 = vor.u32 %v2061, %v2065
        %v2068 = vshll.u32 %v2056, 16
        %v2070 = vrot.slane %v2068, 1
        %v2071 = vsel %vm1298, %v2066, %v2070
        %v2072 = vshrl.u32 %v2056, 16
        %v2074 = vor.u32 %v2072, %v2070
        %v2076 = vshll.u32 %v2057, 16
        %v2078 = vrot.slane %v2076, 1
        %v2079 = vsel %vm1298, %v2074, %v2078
        %v2080 = vshrl.u32 %v2057, 16
        %v2082 = vor.u32 %v2080, %v2078
        %v2084 = vshll.u32 %v2058, 16
        %v2086 = vrot.slane %v2084, 1
        %v2087 = vsel %vm1298, %v2082, %v2086
        %v2088 = vshrl.u32 %v2058, 16
        %v2090 = vor.u32 %v2088, %v2086
        %v2092 = vshll.u32 %v2059, 16
        %v2094 = vrot.slane %v2092, 1
        %v2095 = vsel %vm1298, %v2090, %v2094
        %v2100 = vunpack.c.l.b16 %v2033
        %v2101 = vunpack.c.l.b16 %v2034
        %v2102 = vunpack.c.l.b16 %v2035
        %v2103 = vunpack.c.l.b16 %v2036
        %v2104 = vpack.c.b16 %v2101, %v2100
        %v2105 = vpack.c.b16 %v2103, %v2102
        %v2109 = vsel %vm896, %v2071, 0
        %v2112 = vsel %vm896, %v2079, 0
        %v2115 = vsel %vm896, %v2087, 0
        %v2118 = vsel %vm896, %v2095, 0
        %2120 = vmatpush.bf16.msra.mxu0 0
        %2121 = vmatpush.bf16.msra.mxu0 0
        %2122 = vmatpush.bf16.msra.mxu0 0
        %2123 = vmatpush.bf16.msra.mxu0 0
        %2124 = vmatpush.bf16.msra.mxu0 0
        %2125 = vmatpush.bf16.msra.mxu0 0
        %2126 = vmatpush.bf16.msra.mxu0 %v2105
        %2127 = vmatpush.bf16.msra.mxu0 %v2104
        %2128 = vmatmul.bf16.gmra.mxu0 %v2109
        %v2129 = vpop.f32.mrf.mxu0
        %v2130 = vadd.f32 0.0, %v2129
        %v2131 = vpop.f32.mrf.mxu0
        %v2132 = vadd.f32 0.0, %v2131
        %2133 = vmatmul.bf16.gmra.mxu0 %v2112
        %v2134 = vpop.f32.mrf.mxu0
        %v2135 = vadd.f32 0.0, %v2134
        %v2136 = vpop.f32.mrf.mxu0
        %v2137 = vadd.f32 0.0, %v2136
        %2138 = vmatmul.bf16.gmra.mxu0 %v2115
        %v2139 = vpop.f32.mrf.mxu0
        %v2140 = vadd.f32 0.0, %v2139
        %v2141 = vpop.f32.mrf.mxu0
        %v2142 = vadd.f32 0.0, %v2141
        %2143 = vmatmul.bf16.gmra.mxu0 %v2118
        %v2144 = vpop.f32.mrf.mxu0
        %v2145 = vadd.f32 0.0, %v2144
        %v2146 = vpop.f32.mrf.mxu0
        %v2147 = vadd.f32 0.0, %v2146
        %2148 = vdwg.mxu0
        %v2149 = vadd.f32 %v1816, %v2130
        %v2150 = vadd.f32 %v1817, %v2132
        %v2151 = vadd.f32 %v1818, %v2135
        %v2152 = vadd.f32 %v1819, %v2137
        %v2153 = vadd.f32 %v1820, %v2140
        %v2154 = vadd.f32 %v1821, %v2142
        %v2155 = vadd.f32 %v1822, %v2145
        %v2156 = vadd.f32 %v1823, %v2147
        %v2157 = vld [vmem:[#allocation2 + $0x8] sm:$0x8]
        %v2158 = vld [vmem:[#allocation2 + $0x28] sm:$0xf]
        %v2159 = vsel %vm547, 1, 0
        %v2160 = vsel %vm548, 1, 0
        %v2161 = vsel %vm549, 1, 0
        %v2162 = vsel %vm550, 1, 0
        %v2163 = vsel %vm551, 1, 0
        %v2164 = vsel %vm552, 1, 0
        %v2165 = vsel %vm553, 1, 0
        %v2166 = vsel %vm554, 1, 0
        %2167 = vset.pattern.permute.xlu0 0
        %2168 = vperm.xlu0 %2167, %v2159
        %v2169 = vpop.permute.xlu0 %2168
        %2170 = vset.pattern.permute.xlu0 0
        %2171 = vperm.xlu0 %2170, %v2160
        %v2172 = vpop.permute.xlu0 %2171
        %2173 = vset.pattern.permute.xlu0 0
        %2174 = vperm.xlu0 %2173, %v2161
        %v2175 = vpop.permute.xlu0 %2174
        %2176 = vset.pattern.permute.xlu0 0
        %2177 = vperm.xlu0 %2176, %v2162
        %v2178 = vpop.permute.xlu0 %2177
        %2179 = vset.pattern.permute.xlu0 0
        %2180 = vperm.xlu0 %2179, %v2163
        %v2181 = vpop.permute.xlu0 %2180
        %2182 = vset.pattern.permute.xlu0 0
        %2183 = vperm.xlu0 %2182, %v2164
        %v2184 = vpop.permute.xlu0 %2183
        %2185 = vset.pattern.permute.xlu0 0
        %2186 = vperm.xlu0 %2185, %v2165
        %v2187 = vpop.permute.xlu0 %2186
        %2188 = vset.pattern.permute.xlu0 0
        %2189 = vperm.xlu0 %2188, %v2166
        %v2190 = vpop.permute.xlu0 %2189
        %vm2191 = vcmp.eq.s32.totalorder %v2169, 1
        %vm2192 = vcmp.eq.s32.totalorder %v2172, 1
        %vm2193 = vcmp.eq.s32.totalorder %v2175, 1
        %vm2194 = vcmp.eq.s32.totalorder %v2178, 1
        %vm2195 = vcmp.eq.s32.totalorder %v2181, 1
        %vm2196 = vcmp.eq.s32.totalorder %v2184, 1
        %vm2197 = vcmp.eq.s32.totalorder %v2187, 1
        %vm2198 = vcmp.eq.s32.totalorder %v2190, 1
        %vm2199 = vmpackc.low %vm2191, %vm2191
        %vm2200 = vmpackc.low %vm2192, %vm2192
        %vm2201 = vmpackc.low %vm2193, %vm2193
        %vm2202 = vmpackc.low %vm2194, %vm2194
        %vm2203 = vmpackc.low %vm2195, %vm2195
        %vm2204 = vmpackc.low %vm2196, %vm2196
        %vm2205 = vmpackc.low %vm2197, %vm2197
        %vm2206 = vmpackc.low %vm2198, %vm2198
        %v2207 = vsel %vm2199, 65537, 0
        %v2208 = vsel %vm2200, 65537, 0
        %v2209 = vsel %vm2201, 65537, 0
        %v2210 = vsel %vm2202, 65537, 0
        %v2211 = vsel %vm2203, 65537, 0
        %v2212 = vsel %vm2204, 65537, 0
        %v2213 = vsel %vm2205, 65537, 0
        %v2214 = vsel %vm2206, 65537, 0
        %v2216 = vshll.u32 %v2207, 16
        %v2218 = vrot.slane %v2216, 5
        %v2219 = vshrl.u32 %v2207, 16
        %v2221 = vrot.slane %v2219, 4
        %v2222 = vor.u32 %v2221, %v2218
        %v2223 = vrot.slane %v2222, 4
        %v2225 = vshll.u32 %v2208, 16
        %v2227 = vrot.slane %v2225, 5
        %v2228 = vsel %vm647, %v2223, %v2227
        %v2229 = vshrl.u32 %v2208, 16
        %v2231 = vrot.slane %v2229, 4
        %v2232 = vor.u32 %v2231, %v2227
        %v2233 = vrot.slane %v2232, 4
        %v2235 = vshll.u32 %v2209, 16
        %v2237 = vrot.slane %v2235, 5
        %v2238 = vsel %vm647, %v2233, %v2237
        %v2239 = vshrl.u32 %v2209, 16
        %v2241 = vrot.slane %v2239, 4
        %v2242 = vor.u32 %v2241, %v2237
        %v2243 = vrot.slane %v2242, 4
        %v2245 = vshll.u32 %v2210, 16
        %v2247 = vrot.slane %v2245, 5
        %v2248 = vsel %vm647, %v2243, %v2247
        %v2249 = vshrl.u32 %v2210, 16
        %v2251 = vrot.slane %v2249, 4
        %v2252 = vor.u32 %v2251, %v2247
        %v2253 = vrot.slane %v2252, 4
        %v2255 = vshll.u32 %v2211, 16
        %v2257 = vrot.slane %v2255, 5
        %v2258 = vsel %vm647, %v2253, %v2257
        %v2259 = vshrl.u32 %v2211, 16
        %v2261 = vrot.slane %v2259, 4
        %v2262 = vor.u32 %v2261, %v2257
        %v2263 = vrot.slane %v2262, 4
        %v2265 = vshll.u32 %v2212, 16
        %v2267 = vrot.slane %v2265, 5
        %v2268 = vsel %vm647, %v2263, %v2267
        %v2269 = vshrl.u32 %v2212, 16
        %v2271 = vrot.slane %v2269, 4
        %v2272 = vor.u32 %v2271, %v2267
        %v2273 = vrot.slane %v2272, 4
        %v2275 = vshll.u32 %v2213, 16
        %v2277 = vrot.slane %v2275, 5
        %v2278 = vsel %vm647, %v2273, %v2277
        %v2279 = vshrl.u32 %v2213, 16
        %v2281 = vrot.slane %v2279, 4
        %v2282 = vor.u32 %v2281, %v2277
        %v2283 = vrot.slane %v2282, 4
        %v2285 = vshll.u32 %v2214, 16
        %v2287 = vrot.slane %v2285, 5
        %v2288 = vsel %vm647, %v2283, %v2287
        %v2289 = vshrl.u32 %v2214, 16
        %v2291 = vrot.slane %v2289, 4
        %v2292 = vor.u32 %v2291, %v2287
        %v2293 = vrot.slane %v2292, 4
        %v2294 = vunpack.c.l.b16 %v2218
        %v2295 = vunpack.c.h.b16 %v2218
        %v2296 = vunpack.c.l.b16 0
        %v2297 = vunpack.c.h.b16 0
        %vm2298 = vcmp.ne.s32.totalorder %v2294, %v2296
        %vm2299 = vcmp.ne.s32.totalorder %v2295, %v2297
        %vm2300 = vmpackc.low %vm2299, %vm2298
        %v2301 = vunpack.c.l.b16 %v2228
        %v2302 = vunpack.c.h.b16 %v2228
        %v2303 = vunpack.c.l.b16 0
        %v2304 = vunpack.c.h.b16 0
        %vm2305 = vcmp.ne.s32.totalorder %v2301, %v2303
        %vm2306 = vcmp.ne.s32.totalorder %v2302, %v2304
        %vm2307 = vmpackc.low %vm2306, %vm2305
        %v2308 = vunpack.c.l.b16 %v2238
        %v2309 = vunpack.c.h.b16 %v2238
        %v2310 = vunpack.c.l.b16 0
        %v2311 = vunpack.c.h.b16 0
        %vm2312 = vcmp.ne.s32.totalorder %v2308, %v2310
        %vm2313 = vcmp.ne.s32.totalorder %v2309, %v2311
        %vm2314 = vmpackc.low %vm2313, %vm2312
        %v2315 = vunpack.c.l.b16 %v2248
        %v2316 = vunpack.c.h.b16 %v2248
        %v2317 = vunpack.c.l.b16 0
        %v2318 = vunpack.c.h.b16 0
        %vm2319 = vcmp.ne.s32.totalorder %v2315, %v2317
        %vm2320 = vcmp.ne.s32.totalorder %v2316, %v2318
        %vm2321 = vmpackc.low %vm2320, %vm2319
        %v2322 = vunpack.c.l.b16 %v2258
        %v2323 = vunpack.c.h.b16 %v2258
        %v2324 = vunpack.c.l.b16 0
        %v2325 = vunpack.c.h.b16 0
        %vm2326 = vcmp.ne.s32.totalorder %v2322, %v2324
        %vm2327 = vcmp.ne.s32.totalorder %v2323, %v2325
        %vm2328 = vmpackc.low %vm2327, %vm2326
        %v2329 = vunpack.c.l.b16 %v2268
        %v2330 = vunpack.c.h.b16 %v2268
        %v2331 = vunpack.c.l.b16 0
        %v2332 = vunpack.c.h.b16 0
        %vm2333 = vcmp.ne.s32.totalorder %v2329, %v2331
        %vm2334 = vcmp.ne.s32.totalorder %v2330, %v2332
        %vm2335 = vmpackc.low %vm2334, %vm2333
        %v2336 = vunpack.c.l.b16 %v2278
        %v2337 = vunpack.c.h.b16 %v2278
        %v2338 = vunpack.c.l.b16 0
        %v2339 = vunpack.c.h.b16 0
        %vm2340 = vcmp.ne.s32.totalorder %v2336, %v2338
        %vm2341 = vcmp.ne.s32.totalorder %v2337, %v2339
        %vm2342 = vmpackc.low %vm2341, %vm2340
        %v2343 = vunpack.c.l.b16 %v2288
        %v2344 = vunpack.c.h.b16 %v2288
        %v2345 = vunpack.c.l.b16 0
        %v2346 = vunpack.c.h.b16 0
        %vm2347 = vcmp.ne.s32.totalorder %v2343, %v2345
        %vm2348 = vcmp.ne.s32.totalorder %v2344, %v2346
        %vm2349 = vmpackc.low %vm2348, %vm2347
        %v2350 = vunpack.c.l.b16 %v2293
        %v2351 = vunpack.c.h.b16 %v2293
        %v2352 = vunpack.c.l.b16 0
        %v2353 = vunpack.c.h.b16 0
        %vm2354 = vcmp.ne.s32.totalorder %v2350, %v2352
        %vm2355 = vcmp.ne.s32.totalorder %v2351, %v2353
        %vm2356 = vmpackc.low %vm2355, %vm2354
        %v2357 = vsel %vm2300, %v2157, 0
        %v2358 = vsel %vm2307, %v1825, 0
        %v2359 = vsel %vm2314, %v1826, 0
        %v2360 = vsel %vm2321, %v1827, 0
        %v2361 = vsel %vm2328, %v1828, 0
        %v2362 = vsel %vm2335, %v1829, 0
        %v2363 = vsel %vm2342, %v1830, 0
        %v2364 = vsel %vm2349, %v1831, 0
        %v2365 = vsel %vm2356, %v2158, 0
        %s2366 = scalar_lea.vmem [#allocation3], 96
        %v2367 = vld [vmem:[%s2366] sm:$0xf]
        %v2368 = vld [vmem:[%s2366 + $0x4] sm:$0xf]
        %v2369 = vld [vmem:[%s2366 + $0x8] sm:$0xf]
        %v2370 = vld [vmem:[%s2366 + $0xc] sm:$0xf]
        %v2380 = vunpack.c.l.b16 %v2357
        %v2381 = vunpack.c.l.b16 %v2358
        %v2382 = vunpack.c.l.b16 %v2359
        %v2383 = vunpack.c.l.b16 %v2360
        %v2384 = vunpack.c.l.b16 %v2361
        %v2385 = vunpack.c.l.b16 %v2362
        %v2386 = vunpack.c.l.b16 %v2363
        %v2387 = vunpack.c.l.b16 %v2364
        %v2388 = vunpack.c.l.b16 %v2365
        %v2389 = vpack.c.b16 %v2381, %v2380
        %v2390 = vpack.c.b16 %v2383, %v2382
        %v2391 = vpack.c.b16 %v2385, %v2384
        %v2392 = vpack.c.b16 %v2387, %v2386
        %v2393 = vpack.c.b16 %v2388, %v2388
        %v2395 = vshrl.u32 %v2389, 16
        %v2397 = vrot.slane %v2395, 3
        %v2398 = vshll.u32 %v2389, 16
        %v2400 = vrot.slane %v2398, 4
        %v2401 = vor.u32 %v2397, %v2400
        %v2403 = vshrl.u32 %v2390, 16
        %v2405 = vrot.slane %v2403, 3
        %v2406 = vshll.u32 %v2390, 16
        %v2408 = vrot.slane %v2406, 4
        %v2409 = vor.u32 %v2405, %v2408
        %v2410 = vsel %vm961, %v2401, %v2409
        %v2412 = vshrl.u32 %v2391, 16
        %v2414 = vrot.slane %v2412, 3
        %v2415 = vshll.u32 %v2391, 16
        %v2417 = vrot.slane %v2415, 4
        %v2418 = vor.u32 %v2414, %v2417
        %v2419 = vsel %vm961, %v2409, %v2418
        %v2421 = vshrl.u32 %v2392, 16
        %v2423 = vrot.slane %v2421, 3
        %v2424 = vshll.u32 %v2392, 16
        %v2426 = vrot.slane %v2424, 4
        %v2427 = vor.u32 %v2423, %v2426
        %v2428 = vsel %vm961, %v2418, %v2427
        %v2430 = vshrl.u32 %v2393, 16
        %v2432 = vrot.slane %v2430, 3
        %v2433 = vshll.u32 %v2393, 16
        %v2435 = vrot.slane %v2433, 4
        %v2436 = vor.u32 %v2432, %v2435
        %v2437 = vsel %vm961, %v2427, %v2436
        %v2442 = vunpack.c.l.b16 %v2367
        %v2443 = vunpack.c.l.b16 %v2368
        %v2444 = vunpack.c.l.b16 %v2369
        %v2445 = vunpack.c.l.b16 %v2370
        %v2446 = vpack.c.b16 %v2443, %v2442
        %v2447 = vpack.c.b16 %v2445, %v2444
        %v2451 = vsel %vm896, %v2410, 0
        %v2454 = vsel %vm896, %v2419, 0
        %v2457 = vsel %vm896, %v2428, 0
        %v2460 = vsel %vm896, %v2437, 0
        %2462 = vmatpush.bf16.msra.mxu0 0
        %2463 = vmatpush.bf16.msra.mxu0 0
        %2464 = vmatpush.bf16.msra.mxu0 0
        %2465 = vmatpush.bf16.msra.mxu0 0
        %2466 = vmatpush.bf16.msra.mxu0 0
        %2467 = vmatpush.bf16.msra.mxu0 0
        %2468 = vmatpush.bf16.msra.mxu0 %v2447
        %2469 = vmatpush.bf16.msra.mxu0 %v2446
        %2470 = vmatmul.bf16.gmra.mxu0 %v2451
        %v2471 = vpop.f32.mrf.mxu0
        %v2472 = vadd.f32 0.0, %v2471
        %v2473 = vpop.f32.mrf.mxu0
        %v2474 = vadd.f32 0.0, %v2473
        %2475 = vmatmul.bf16.gmra.mxu0 %v2454
        %v2476 = vpop.f32.mrf.mxu0
        %v2477 = vadd.f32 0.0, %v2476
        %v2478 = vpop.f32.mrf.mxu0
        %v2479 = vadd.f32 0.0, %v2478
        %2480 = vmatmul.bf16.gmra.mxu0 %v2457
        %v2481 = vpop.f32.mrf.mxu0
        %v2482 = vadd.f32 0.0, %v2481
        %v2483 = vpop.f32.mrf.mxu0
        %v2484 = vadd.f32 0.0, %v2483
        %2485 = vmatmul.bf16.gmra.mxu0 %v2460
        %v2486 = vpop.f32.mrf.mxu0
        %v2487 = vadd.f32 0.0, %v2486
        %v2488 = vpop.f32.mrf.mxu0
        %v2489 = vadd.f32 0.0, %v2488
        %2490 = vdwg.mxu0
        %v2491 = vadd.f32 %v2149, %v2472
        %v2492 = vadd.f32 %v2150, %v2474
        %v2493 = vadd.f32 %v2151, %v2477
        %v2494 = vadd.f32 %v2152, %v2479
        %v2495 = vadd.f32 %v2153, %v2482
        %v2496 = vadd.f32 %v2154, %v2484
        %v2497 = vadd.f32 %v2155, %v2487
        %v2498 = vadd.f32 %v2156, %v2489
        %v2499 = vsel %vm507, 1, 0
        %v2500 = vsel %vm508, 1, 0
        %v2501 = vsel %vm509, 1, 0
        %v2502 = vsel %vm510, 1, 0
        %v2503 = vsel %vm511, 1, 0
        %v2504 = vsel %vm512, 1, 0
        %v2505 = vsel %vm513, 1, 0
        %v2506 = vsel %vm514, 1, 0
        %2507 = vset.pattern.permute.xlu0 0
        %2508 = vperm.xlu0 %2507, %v2499
        %v2509 = vpop.permute.xlu0 %2508
        %2510 = vset.pattern.permute.xlu0 0
        %2511 = vperm.xlu0 %2510, %v2500
        %v2512 = vpop.permute.xlu0 %2511
        %2513 = vset.pattern.permute.xlu0 0
        %2514 = vperm.xlu0 %2513, %v2501
        %v2515 = vpop.permute.xlu0 %2514
        %2516 = vset.pattern.permute.xlu0 0
        %2517 = vperm.xlu0 %2516, %v2502
        %v2518 = vpop.permute.xlu0 %2517
        %2519 = vset.pattern.permute.xlu0 0
        %2520 = vperm.xlu0 %2519, %v2503
        %v2521 = vpop.permute.xlu0 %2520
        %2522 = vset.pattern.permute.xlu0 0
        %2523 = vperm.xlu0 %2522, %v2504
        %v2524 = vpop.permute.xlu0 %2523
        %2525 = vset.pattern.permute.xlu0 0
        %2526 = vperm.xlu0 %2525, %v2505
        %v2527 = vpop.permute.xlu0 %2526
        %2528 = vset.pattern.permute.xlu0 0
        %2529 = vperm.xlu0 %2528, %v2506
        %v2530 = vpop.permute.xlu0 %2529
        %vm2531 = vcmp.eq.s32.totalorder %v2509, 1
        %vm2532 = vcmp.eq.s32.totalorder %v2512, 1
        %vm2533 = vcmp.eq.s32.totalorder %v2515, 1
        %vm2534 = vcmp.eq.s32.totalorder %v2518, 1
        %vm2535 = vcmp.eq.s32.totalorder %v2521, 1
        %vm2536 = vcmp.eq.s32.totalorder %v2524, 1
        %vm2537 = vcmp.eq.s32.totalorder %v2527, 1
        %vm2538 = vcmp.eq.s32.totalorder %v2530, 1
        %vm2539 = vmpackc.low %vm2531, %vm2531
        %vm2540 = vmpackc.low %vm2532, %vm2532
        %vm2541 = vmpackc.low %vm2533, %vm2533
        %vm2542 = vmpackc.low %vm2534, %vm2534
        %vm2543 = vmpackc.low %vm2535, %vm2535
        %vm2544 = vmpackc.low %vm2536, %vm2536
        %vm2545 = vmpackc.low %vm2537, %vm2537
        %vm2546 = vmpackc.low %vm2538, %vm2538
        %v2547 = vsel %vm2539, %v1825, 0
        %v2548 = vsel %vm2540, %v1826, 0
        %v2549 = vsel %vm2541, %v1827, 0
        %v2550 = vsel %vm2542, %v1828, 0
        %v2551 = vsel %vm2543, %v1829, 0
        %v2552 = vsel %vm2544, %v1830, 0
        %v2553 = vsel %vm2545, %v1831, 0
        %v2554 = vsel %vm2546, %v2158, 0
        %s2555 = scalar_lea.vmem [#allocation3], 112
        %v2556 = vld [vmem:[%s2555] sm:$0xf]
        %v2557 = vld [vmem:[%s2555 + $0x4] sm:$0xf]
        %v2558 = vld [vmem:[%s2555 + $0x8] sm:$0xf]
        %v2559 = vld [vmem:[%s2555 + $0xc] sm:$0xf]
        %v2568 = vunpack.c.l.b16 %v2547
        %v2569 = vunpack.c.l.b16 %v2548
        %v2570 = vunpack.c.l.b16 %v2549
        %v2571 = vunpack.c.l.b16 %v2550
        %v2572 = vunpack.c.l.b16 %v2551
        %v2573 = vunpack.c.l.b16 %v2552
        %v2574 = vunpack.c.l.b16 %v2553
        %v2575 = vunpack.c.l.b16 %v2554
        %v2576 = vpack.c.b16 %v2569, %v2568
        %v2577 = vpack.c.b16 %v2571, %v2570
        %v2578 = vpack.c.b16 %v2573, %v2572
        %v2579 = vpack.c.b16 %v2575, %v2574
        %v2584 = vunpack.c.l.b16 %v2556
        %v2585 = vunpack.c.l.b16 %v2557
        %v2586 = vunpack.c.l.b16 %v2558
        %v2587 = vunpack.c.l.b16 %v2559
        %v2588 = vpack.c.b16 %v2585, %v2584
        %v2589 = vpack.c.b16 %v2587, %v2586
        %v2593 = vsel %vm896, %v2576, 0
        %v2596 = vsel %vm896, %v2577, 0
        %v2599 = vsel %vm896, %v2578, 0
        %v2602 = vsel %vm896, %v2579, 0
        %2604 = vmatpush.bf16.msra.mxu0 0
        %2605 = vmatpush.bf16.msra.mxu0 0
        %2606 = vmatpush.bf16.msra.mxu0 0
        %2607 = vmatpush.bf16.msra.mxu0 0
        %2608 = vmatpush.bf16.msra.mxu0 0
        %2609 = vmatpush.bf16.msra.mxu0 0
        %2610 = vmatpush.bf16.msra.mxu0 %v2589
        %2611 = vmatpush.bf16.msra.mxu0 %v2588
        %2612 = vmatmul.bf16.gmra.mxu0 %v2593
        %v2613 = vpop.f32.mrf.mxu0
        %v2614 = vadd.f32 0.0, %v2613
        %v2615 = vpop.f32.mrf.mxu0
        %v2616 = vadd.f32 0.0, %v2615
        %2617 = vmatmul.bf16.gmra.mxu0 %v2596
        %v2618 = vpop.f32.mrf.mxu0
        %v2619 = vadd.f32 0.0, %v2618
        %v2620 = vpop.f32.mrf.mxu0
        %v2621 = vadd.f32 0.0, %v2620
        %2622 = vmatmul.bf16.gmra.mxu0 %v2599
        %v2623 = vpop.f32.mrf.mxu0
        %v2624 = vadd.f32 0.0, %v2623
        %v2625 = vpop.f32.mrf.mxu0
        %v2626 = vadd.f32 0.0, %v2625
        %2627 = vmatmul.bf16.gmra.mxu0 %v2602
        %v2628 = vpop.f32.mrf.mxu0
        %v2629 = vadd.f32 0.0, %v2628
        %v2630 = vpop.f32.mrf.mxu0
        %v2631 = vadd.f32 0.0, %v2630
        %2632 = vdwg.mxu0
        %v2633 = vadd.f32 %v2491, %v2614
        %v2634 = vadd.f32 %v2492, %v2616
        %v2635 = vadd.f32 %v2493, %v2619
        %v2636 = vadd.f32 %v2494, %v2621
        %v2637 = vadd.f32 %v2495, %v2624
        %v2638 = vadd.f32 %v2496, %v2626
        %v2639 = vadd.f32 %v2497, %v2629
        %v2640 = vadd.f32 %v2498, %v2631
        %v2641 = vld [vmem:[#allocation2 + $0xc] sm:$0xf]
        %v2642 = vld [vmem:[#allocation2 + $0x10] sm:$0xf]
        %v2643 = vld [vmem:[#allocation2 + $0x14] sm:$0xf]
        %v2644 = vld [vmem:[#allocation2 + $0x18] sm:$0xf]
        %v2645 = vld [vmem:[#allocation2 + $0x1c] sm:$0xf]
        %v2646 = vld [vmem:[#allocation2 + $0x20] sm:$0xf]
        %v2647 = vld [vmem:[#allocation2 + $0x24] sm:$0xf]
        %v2648 = vld [vmem:[#allocation2 + $0x28] sm:$0xf]
        %v2649 = vld [vmem:[#allocation2 + $0x2c] sm:$0x1]
        %v2650 = vsel %vm555, 1, 0
        %v2651 = vsel %vm556, 1, 0
        %v2652 = vsel %vm557, 1, 0
        %v2653 = vsel %vm558, 1, 0
        %v2654 = vsel %vm559, 1, 0
        %v2655 = vsel %vm560, 1, 0
        %v2656 = vsel %vm561, 1, 0
        %v2657 = vsel %vm562, 1, 0
        %2658 = vset.pattern.permute.xlu0 0
        %2659 = vperm.xlu0 %2658, %v2650
        %v2660 = vpop.permute.xlu0 %2659
        %2661 = vset.pattern.permute.xlu0 0
        %2662 = vperm.xlu0 %2661, %v2651
        %v2663 = vpop.permute.xlu0 %2662
        %2664 = vset.pattern.permute.xlu0 0
        %2665 = vperm.xlu0 %2664, %v2652
        %v2666 = vpop.permute.xlu0 %2665
        %2667 = vset.pattern.permute.xlu0 0
        %2668 = vperm.xlu0 %2667, %v2653
        %v2669 = vpop.permute.xlu0 %2668
        %2670 = vset.pattern.permute.xlu0 0
        %2671 = vperm.xlu0 %2670, %v2654
        %v2672 = vpop.permute.xlu0 %2671
        %2673 = vset.pattern.permute.xlu0 0
        %2674 = vperm.xlu0 %2673, %v2655
        %v2675 = vpop.permute.xlu0 %2674
        %2676 = vset.pattern.permute.xlu0 0
        %2677 = vperm.xlu0 %2676, %v2656
        %v2678 = vpop.permute.xlu0 %2677
        %2679 = vset.pattern.permute.xlu0 0
        %2680 = vperm.xlu0 %2679, %v2657
        %v2681 = vpop.permute.xlu0 %2680
        %vm2682 = vcmp.eq.s32.totalorder %v2660, 1
        %vm2683 = vcmp.eq.s32.totalorder %v2663, 1
        %vm2684 = vcmp.eq.s32.totalorder %v2666, 1
        %vm2685 = vcmp.eq.s32.totalorder %v2669, 1
        %vm2686 = vcmp.eq.s32.totalorder %v2672, 1
        %vm2687 = vcmp.eq.s32.totalorder %v2675, 1
        %vm2688 = vcmp.eq.s32.totalorder %v2678, 1
        %vm2689 = vcmp.eq.s32.totalorder %v2681, 1
        %vm2690 = vmpackc.low %vm2682, %vm2682
        %vm2691 = vmpackc.low %vm2683, %vm2683
        %vm2692 = vmpackc.low %vm2684, %vm2684
        %vm2693 = vmpackc.low %vm2685, %vm2685
        %vm2694 = vmpackc.low %vm2686, %vm2686
        %vm2695 = vmpackc.low %vm2687, %vm2687
        %vm2696 = vmpackc.low %vm2688, %vm2688
        %vm2697 = vmpackc.low %vm2689, %vm2689
        %v2698 = vsel %vm2690, 65537, 0
        %v2699 = vsel %vm2691, 65537, 0
        %v2700 = vsel %vm2692, 65537, 0
        %v2701 = vsel %vm2693, 65537, 0
        %v2702 = vsel %vm2694, 65537, 0
        %v2703 = vsel %vm2695, 65537, 0
        %v2704 = vsel %vm2696, 65537, 0
        %v2705 = vsel %vm2697, 65537, 0
        %v2707 = vshrl.u32 %v2698, 16
        %v2709 = vrot.slane %v2707, 7
        %v2710 = vshll.u32 %v2698, 16
        %v2712 = vor.u32 %v2709, %v2710
        %v2713 = vrot.slane %v2709, 4
        %v2715 = vshrl.u32 %v2699, 16
        %v2717 = vrot.slane %v2715, 7
        %v2718 = vshll.u32 %v2699, 16
        %v2720 = vor.u32 %v2717, %v2718
        %v2721 = vsel %vm1126, %v2713, %v2720
        %v2722 = vrot.slane %v2717, 4
        %v2724 = vshrl.u32 %v2700, 16
        %v2726 = vrot.slane %v2724, 7
        %v2727 = vshll.u32 %v2700, 16
        %v2729 = vor.u32 %v2726, %v2727
        %v2730 = vsel %vm1126, %v2722, %v2729
        %v2731 = vrot.slane %v2726, 4
        %v2733 = vshrl.u32 %v2701, 16
        %v2735 = vrot.slane %v2733, 7
        %v2736 = vshll.u32 %v2701, 16
        %v2738 = vor.u32 %v2735, %v2736
        %v2739 = vsel %vm1126, %v2731, %v2738
        %v2740 = vrot.slane %v2735, 4
        %v2742 = vshrl.u32 %v2702, 16
        %v2744 = vrot.slane %v2742, 7
        %v2745 = vshll.u32 %v2702, 16
        %v2747 = vor.u32 %v2744, %v2745
        %v2748 = vsel %vm1126, %v2740, %v2747
        %v2749 = vrot.slane %v2744, 4
        %v2751 = vshrl.u32 %v2703, 16
        %v2753 = vrot.slane %v2751, 7
        %v2754 = vshll.u32 %v2703, 16
        %v2756 = vor.u32 %v2753, %v2754
        %v2757 = vsel %vm1126, %v2749, %v2756
        %v2758 = vrot.slane %v2753, 4
        %v2760 = vshrl.u32 %v2704, 16
        %v2762 = vrot.slane %v2760, 7
        %v2763 = vshll.u32 %v2704, 16
        %v2765 = vor.u32 %v2762, %v2763
        %v2766 = vsel %vm1126, %v2758, %v2765
        %v2767 = vrot.slane %v2762, 4
        %v2769 = vshrl.u32 %v2705, 16
        %v2771 = vrot.slane %v2769, 7
        %v2772 = vshll.u32 %v2705, 16
        %v2774 = vor.u32 %v2771, %v2772
        %v2775 = vsel %vm1126, %v2767, %v2774
        %v2776 = vrot.slane %v2771, 4
        %v2777 = vunpack.c.l.b16 %v2712
        %v2778 = vunpack.c.h.b16 %v2712
        %v2779 = vunpack.c.l.b16 0
        %v2780 = vunpack.c.h.b16 0
        %vm2781 = vcmp.ne.s32.totalorder %v2777, %v2779
        %vm2782 = vcmp.ne.s32.totalorder %v2778, %v2780
        %vm2783 = vmpackc.low %vm2782, %vm2781
        %v2784 = vunpack.c.l.b16 %v2721
        %v2785 = vunpack.c.h.b16 %v2721
        %v2786 = vunpack.c.l.b16 0
        %v2787 = vunpack.c.h.b16 0
        %vm2788 = vcmp.ne.s32.totalorder %v2784, %v2786
        %vm2789 = vcmp.ne.s32.totalorder %v2785, %v2787
        %vm2790 = vmpackc.low %vm2789, %vm2788
        %v2791 = vunpack.c.l.b16 %v2730
        %v2792 = vunpack.c.h.b16 %v2730
        %v2793 = vunpack.c.l.b16 0
        %v2794 = vunpack.c.h.b16 0
        %vm2795 = vcmp.ne.s32.totalorder %v2791, %v2793
        %vm2796 = vcmp.ne.s32.totalorder %v2792, %v2794
        %vm2797 = vmpackc.low %vm2796, %vm2795
        %v2798 = vunpack.c.l.b16 %v2739
        %v2799 = vunpack.c.h.b16 %v2739
        %v2800 = vunpack.c.l.b16 0
        %v2801 = vunpack.c.h.b16 0
        %vm2802 = vcmp.ne.s32.totalorder %v2798, %v2800
        %vm2803 = vcmp.ne.s32.totalorder %v2799, %v2801
        %vm2804 = vmpackc.low %vm2803, %vm2802
        %v2805 = vunpack.c.l.b16 %v2748
        %v2806 = vunpack.c.h.b16 %v2748
        %v2807 = vunpack.c.l.b16 0
        %v2808 = vunpack.c.h.b16 0
        %vm2809 = vcmp.ne.s32.totalorder %v2805, %v2807
        %vm2810 = vcmp.ne.s32.totalorder %v2806, %v2808
        %vm2811 = vmpackc.low %vm2810, %vm2809
        %v2812 = vunpack.c.l.b16 %v2757
        %v2813 = vunpack.c.h.b16 %v2757
        %v2814 = vunpack.c.l.b16 0
        %v2815 = vunpack.c.h.b16 0
        %vm2816 = vcmp.ne.s32.totalorder %v2812, %v2814
        %vm2817 = vcmp.ne.s32.totalorder %v2813, %v2815
        %vm2818 = vmpackc.low %vm2817, %vm2816
        %v2819 = vunpack.c.l.b16 %v2766
        %v2820 = vunpack.c.h.b16 %v2766
        %v2821 = vunpack.c.l.b16 0
        %v2822 = vunpack.c.h.b16 0
        %vm2823 = vcmp.ne.s32.totalorder %v2819, %v2821
        %vm2824 = vcmp.ne.s32.totalorder %v2820, %v2822
        %vm2825 = vmpackc.low %vm2824, %vm2823
        %v2826 = vunpack.c.l.b16 %v2775
        %v2827 = vunpack.c.h.b16 %v2775
        %v2828 = vunpack.c.l.b16 0
        %v2829 = vunpack.c.h.b16 0
        %vm2830 = vcmp.ne.s32.totalorder %v2826, %v2828
        %vm2831 = vcmp.ne.s32.totalorder %v2827, %v2829
        %vm2832 = vmpackc.low %vm2831, %vm2830
        %v2833 = vunpack.c.l.b16 %v2776
        %v2834 = vunpack.c.h.b16 %v2776
        %v2835 = vunpack.c.l.b16 0
        %v2836 = vunpack.c.h.b16 0
        %vm2837 = vcmp.ne.s32.totalorder %v2833, %v2835
        %vm2838 = vcmp.ne.s32.totalorder %v2834, %v2836
        %vm2839 = vmpackc.low %vm2838, %vm2837
        %v2840 = vsel %vm2783, %v2641, 0
        %v2841 = vsel %vm2790, %v2642, 0
        %v2842 = vsel %vm2797, %v2643, 0
        %v2843 = vsel %vm2804, %v2644, 0
        %v2844 = vsel %vm2811, %v2645, 0
        %v2845 = vsel %vm2818, %v2646, 0
        %v2846 = vsel %vm2825, %v2647, 0
        %v2847 = vsel %vm2832, %v2648, 0
        %v2848 = vsel %vm2839, %v2649, 0
        %s2849 = scalar_lea.vmem [#allocation3], 128
        %v2850 = vld [vmem:[%s2849] sm:$0xf]
        %v2851 = vld [vmem:[%s2849 + $0x4] sm:$0xf]
        %v2852 = vld [vmem:[%s2849 + $0x8] sm:$0xf]
        %v2853 = vld [vmem:[%s2849 + $0xc] sm:$0xf]
        %v2863 = vunpack.c.l.b16 %v2840
        %v2864 = vunpack.c.l.b16 %v2841
        %v2865 = vunpack.c.l.b16 %v2842
        %v2866 = vunpack.c.l.b16 %v2843
        %v2867 = vunpack.c.l.b16 %v2844
        %v2868 = vunpack.c.l.b16 %v2845
        %v2869 = vunpack.c.l.b16 %v2846
        %v2870 = vunpack.c.l.b16 %v2847
        %v2871 = vunpack.c.l.b16 %v2848
        %v2872 = vpack.c.b16 %v2864, %v2863
        %v2873 = vpack.c.b16 %v2866, %v2865
        %v2874 = vpack.c.b16 %v2868, %v2867
        %v2875 = vpack.c.b16 %v2870, %v2869
        %v2876 = vpack.c.b16 %v2871, %v2871
        %v2878 = vshrl.u32 %v2872, 16
        %v2880 = vshll.u32 %v2872, 16
        %v2882 = vrot.slane %v2880, 1
        %v2883 = vor.u32 %v2878, %v2882
        %v2885 = vshll.u32 %v2873, 16
        %v2887 = vrot.slane %v2885, 1
        %v2888 = vsel %vm1298, %v2883, %v2887
        %v2889 = vshrl.u32 %v2873, 16
        %v2891 = vor.u32 %v2889, %v2887
        %v2893 = vshll.u32 %v2874, 16
        %v2895 = vrot.slane %v2893, 1
        %v2896 = vsel %vm1298, %v2891, %v2895
        %v2897 = vshrl.u32 %v2874, 16
        %v2899 = vor.u32 %v2897, %v2895
        %v2901 = vshll.u32 %v2875, 16
        %v2903 = vrot.slane %v2901, 1
        %v2904 = vsel %vm1298, %v2899, %v2903
        %v2905 = vshrl.u32 %v2875, 16
        %v2907 = vor.u32 %v2905, %v2903
        %v2909 = vshll.u32 %v2876, 16
        %v2911 = vrot.slane %v2909, 1
        %v2912 = vsel %vm1298, %v2907, %v2911
        %v2917 = vunpack.c.l.b16 %v2850
        %v2918 = vunpack.c.l.b16 %v2851
        %v2919 = vunpack.c.l.b16 %v2852
        %v2920 = vunpack.c.l.b16 %v2853
        %v2921 = vpack.c.b16 %v2918, %v2917
        %v2922 = vpack.c.b16 %v2920, %v2919
        %v2926 = vsel %vm896, %v2888, 0
        %v2929 = vsel %vm896, %v2896, 0
        %v2932 = vsel %vm896, %v2904, 0
        %v2935 = vsel %vm896, %v2912, 0
        %2937 = vmatpush.bf16.msra.mxu0 0
        %2938 = vmatpush.bf16.msra.mxu0 0
        %2939 = vmatpush.bf16.msra.mxu0 0
        %2940 = vmatpush.bf16.msra.mxu0 0
        %2941 = vmatpush.bf16.msra.mxu0 0
        %2942 = vmatpush.bf16.msra.mxu0 0
        %2943 = vmatpush.bf16.msra.mxu0 %v2922
        %2944 = vmatpush.bf16.msra.mxu0 %v2921
        %2945 = vmatmul.bf16.gmra.mxu0 %v2926
        %v2946 = vpop.f32.mrf.mxu0
        %v2947 = vadd.f32 0.0, %v2946
        %v2948 = vpop.f32.mrf.mxu0
        %v2949 = vadd.f32 0.0, %v2948
        %2950 = vmatmul.bf16.gmra.mxu0 %v2929
        %v2951 = vpop.f32.mrf.mxu0
        %v2952 = vadd.f32 0.0, %v2951
        %v2953 = vpop.f32.mrf.mxu0
        %v2954 = vadd.f32 0.0, %v2953
        %2955 = vmatmul.bf16.gmra.mxu0 %v2932
        %v2956 = vpop.f32.mrf.mxu0
        %v2957 = vadd.f32 0.0, %v2956
        %v2958 = vpop.f32.mrf.mxu0
        %v2959 = vadd.f32 0.0, %v2958
        %2960 = vmatmul.bf16.gmra.mxu0 %v2935
        %v2961 = vpop.f32.mrf.mxu0
        %v2962 = vadd.f32 0.0, %v2961
        %v2963 = vpop.f32.mrf.mxu0
        %v2964 = vadd.f32 0.0, %v2963
        %2965 = vdwg.mxu0
        %v2966 = vadd.f32 %v2633, %v2947
        %v2967 = vadd.f32 %v2634, %v2949
        %v2968 = vadd.f32 %v2635, %v2952
        %v2969 = vadd.f32 %v2636, %v2954
        %v2970 = vadd.f32 %v2637, %v2957
        %v2971 = vadd.f32 %v2638, %v2959
        %v2972 = vadd.f32 %v2639, %v2962
        %v2973 = vadd.f32 %v2640, %v2964
        %v2974 = vld [vmem:[%s8] sm:$0x1]
        %v2976 = vperm.slane %v2974, 0
        %v2978 = vadd.f32 %v2966, %v2976
        %v2979 = vadd.f32 %v2967, %v2976
        %v2980 = vadd.f32 %v2968, %v2976
        %v2981 = vadd.f32 %v2969, %v2976
        %v2982 = vadd.f32 %v2970, %v2976
        %v2983 = vadd.f32 %v2971, %v2976
        %v2984 = vadd.f32 %v2972, %v2976
        %v2985 = vadd.f32 %v2973, %v2976
        %v2986 = vmax.f32 %v2978, 0.0
        %v2987 = vmax.f32 %v2979, 0.0
        %v2988 = vmax.f32 %v2980, 0.0
        %v2989 = vmax.f32 %v2981, 0.0
        %v2990 = vmax.f32 %v2982, 0.0
        %v2991 = vmax.f32 %v2983, 0.0
        %v2992 = vmax.f32 %v2984, 0.0
        %v2993 = vmax.f32 %v2985, 0.0
        %v2994 = vpack.c.bf16 %v2986, %v2986
        %v2995 = vpack.c.bf16 %v2987, %v2987
        %v2996 = vpack.c.bf16 %v2988, %v2988
        %v2997 = vpack.c.bf16 %v2989, %v2989
        %v2998 = vpack.c.bf16 %v2990, %v2990
        %v2999 = vpack.c.bf16 %v2991, %v2991
        %v3000 = vpack.c.bf16 %v2992, %v2992
        %v3001 = vpack.c.bf16 %v2993, %v2993
        %3002 = vst.msk [vmem:[#allocation2 + $0x8] sm:$0xf] %vm478, %v2994
        %3003 = vst.msk [vmem:[#allocation2 + $0xc] sm:$0xf] %vm478, %v2995
        %3004 = vst.msk [vmem:[#allocation2 + $0x10] sm:$0xf] %vm478, %v2996
        %3005 = vst.msk [vmem:[#allocation2 + $0x14] sm:$0xf] %vm478, %v2997
        %3006 = vst.msk [vmem:[#allocation2 + $0x18] sm:$0xf] %vm478, %v2998
        %3007 = vst.msk [vmem:[#allocation2 + $0x1c] sm:$0xf] %vm478, %v2999
        %3008 = vst.msk [vmem:[#allocation2 + $0x20] sm:$0xf] %vm478, %v3000
        %3009 = vst.msk [vmem:[#allocation2 + $0x24] sm:$0xf] %vm478, %v3001
        %v3010 = vld [vmem:[#allocation2] sm:$0x8]
        %v3011 = vld [vmem:[#allocation2 + $0x4] sm:$0xf]
        %v3012 = vld [vmem:[#allocation2 + $0x8] sm:$0xf]
        %v3013 = vld [vmem:[#allocation2 + $0xc] sm:$0xf]
        %v3014 = vld [vmem:[#allocation2 + $0x10] sm:$0xf]
        %v3015 = vld [vmem:[#allocation2 + $0x14] sm:$0xf]
        %v3016 = vld [vmem:[#allocation2 + $0x18] sm:$0xf]
        %v3017 = vld [vmem:[#allocation2 + $0x1c] sm:$0xf]
        %v3018 = vld [vmem:[#allocation2 + $0x20] sm:$0xf]
        %v3019 = vsel %vm733, %v3010, 0
        %v3020 = vsel %vm740, %v3011, 0
        %v3021 = vsel %vm747, %v3012, 0
        %v3022 = vsel %vm754, %v3013, 0
        %v3023 = vsel %vm761, %v3014, 0
        %v3024 = vsel %vm768, %v3015, 0
        %v3025 = vsel %vm775, %v3016, 0
        %v3026 = vsel %vm782, %v3017, 0
        %v3027 = vsel %vm789, %v3018, 0
        %v3028 = vld [vmem:[%s4] sm:$0xf]
        %v3029 = vld [vmem:[%s4 + $0x4] sm:$0xf]
        %v3030 = vld [vmem:[%s4 + $0x8] sm:$0xf]
        %v3031 = vld [vmem:[%s4 + $0xc] sm:$0xf]
        %v3032 = vld [vmem:[%s4 + $0x10] sm:$0xf]
        %v3033 = vld [vmem:[%s4 + $0x14] sm:$0xf]
        %v3034 = vld [vmem:[%s4 + $0x18] sm:$0xf]
        %v3035 = vld [vmem:[%s4 + $0x1c] sm:$0xf]
        %v3036 = vsel %vm843, %v3011, 0
        %v3037 = vsel %vm844, %v3012, 0
        %v3038 = vsel %vm845, %v3013, 0
        %v3039 = vsel %vm846, %v3014, 0
        %v3040 = vsel %vm847, %v3015, 0
        %v3041 = vsel %vm848, %v3016, 0
        %v3042 = vsel %vm849, %v3017, 0
        %v3043 = vsel %vm850, %v3018, 0
        %s3044 = scalar_lea.vmem %s4, 32
        %v3045 = vld [vmem:[%s3044] sm:$0xf]
        %v3046 = vld [vmem:[%s3044 + $0x4] sm:$0xf]
        %v3047 = vld [vmem:[%s3044 + $0x8] sm:$0xf]
        %v3048 = vld [vmem:[%s3044 + $0xc] sm:$0xf]
        %v3049 = vld [vmem:[%s3044 + $0x10] sm:$0xf]
        %v3050 = vld [vmem:[%s3044 + $0x14] sm:$0xf]
        %v3051 = vld [vmem:[%s3044 + $0x18] sm:$0xf]
        %v3052 = vld [vmem:[%s3044 + $0x1c] sm:$0xf]
        %v3061 = vunpack.c.l.b16 %v3036
        %v3062 = vunpack.c.l.b16 %v3037
        %v3063 = vunpack.c.l.b16 %v3038
        %v3064 = vunpack.c.l.b16 %v3039
        %v3065 = vunpack.c.l.b16 %v3040
        %v3066 = vunpack.c.l.b16 %v3041
        %v3067 = vunpack.c.l.b16 %v3042
        %v3068 = vunpack.c.l.b16 %v3043
        %v3069 = vpack.c.b16 %v3062, %v3061
        %v3070 = vpack.c.b16 %v3064, %v3063
        %v3071 = vpack.c.b16 %v3066, %v3065
        %v3072 = vpack.c.b16 %v3068, %v3067
        %v3081 = vunpack.c.l.b16 %v3045
        %v3082 = vunpack.c.l.b16 %v3046
        %v3083 = vunpack.c.l.b16 %v3047
        %v3084 = vunpack.c.l.b16 %v3048
        %v3085 = vunpack.c.l.b16 %v3049
        %v3086 = vunpack.c.l.b16 %v3050
        %v3087 = vunpack.c.l.b16 %v3051
        %v3088 = vunpack.c.l.b16 %v3052
        %v3089 = vpack.c.b16 %v3082, %v3081
        %v3090 = vpack.c.b16 %v3084, %v3083
        %v3091 = vpack.c.b16 %v3086, %v3085
        %v3092 = vpack.c.b16 %v3088, %v3087
        %vm3097 = vcmask 523264
        %v3099 = vsel %vm3097, %v3069, 0
        %v3102 = vsel %vm3097, %v3070, 0
        %v3105 = vsel %vm3097, %v3071, 0
        %v3108 = vsel %vm3097, %v3072, 0
        %3110 = vmatpush.bf16.msra.mxu0 0
        %3111 = vmatpush.bf16.msra.mxu0 0
        %3112 = vmatpush.bf16.msra.mxu0 0
        %3113 = vmatpush.bf16.msra.mxu0 0
        %3114 = vmatpush.bf16.msra.mxu0 %v3092
        %3115 = vmatpush.bf16.msra.mxu0 %v3091
        %3116 = vmatpush.bf16.msra.mxu0 %v3090
        %3117 = vmatpush.bf16.msra.mxu0 %v3089
        %3118 = vmatmul.bf16.gmra.mxu0 %v3099
        %v3119 = vpop.f32.mrf.mxu0
        %v3120 = vadd.f32 0.0, %v3119
        %v3121 = vpop.f32.mrf.mxu0
        %v3122 = vadd.f32 0.0, %v3121
        %3123 = vmatmul.bf16.gmra.mxu0 %v3102
        %v3124 = vpop.f32.mrf.mxu0
        %v3125 = vadd.f32 0.0, %v3124
        %v3126 = vpop.f32.mrf.mxu0
        %v3127 = vadd.f32 0.0, %v3126
        %3128 = vmatmul.bf16.gmra.mxu0 %v3105
        %v3129 = vpop.f32.mrf.mxu0
        %v3130 = vadd.f32 0.0, %v3129
        %v3131 = vpop.f32.mrf.mxu0
        %v3132 = vadd.f32 0.0, %v3131
        %3133 = vmatmul.bf16.gmra.mxu0 %v3108
        %v3134 = vpop.f32.mrf.mxu0
        %v3135 = vadd.f32 0.0, %v3134
        %v3136 = vpop.f32.mrf.mxu0
        %v3137 = vadd.f32 0.0, %v3136
        %3138 = vdwg.mxu0
        %v3148 = vunpack.c.l.b16 %v3019
        %v3149 = vunpack.c.l.b16 %v3020
        %v3150 = vunpack.c.l.b16 %v3021
        %v3151 = vunpack.c.l.b16 %v3022
        %v3152 = vunpack.c.l.b16 %v3023
        %v3153 = vunpack.c.l.b16 %v3024
        %v3154 = vunpack.c.l.b16 %v3025
        %v3155 = vunpack.c.l.b16 %v3026
        %v3156 = vunpack.c.l.b16 %v3027
        %v3157 = vpack.c.b16 %v3149, %v3148
        %v3158 = vpack.c.b16 %v3151, %v3150
        %v3159 = vpack.c.b16 %v3153, %v3152
        %v3160 = vpack.c.b16 %v3155, %v3154
        %v3161 = vpack.c.b16 %v3156, %v3156
        %v3163 = vshrl.u32 %v3157, 16
        %v3165 = vrot.slane %v3163, 3
        %v3166 = vshll.u32 %v3157, 16
        %v3168 = vrot.slane %v3166, 4
        %v3169 = vor.u32 %v3165, %v3168
        %v3171 = vshrl.u32 %v3158, 16
        %v3173 = vrot.slane %v3171, 3
        %v3174 = vshll.u32 %v3158, 16
        %v3176 = vrot.slane %v3174, 4
        %v3177 = vor.u32 %v3173, %v3176
        %v3178 = vsel %vm961, %v3169, %v3177
        %v3180 = vshrl.u32 %v3159, 16
        %v3182 = vrot.slane %v3180, 3
        %v3183 = vshll.u32 %v3159, 16
        %v3185 = vrot.slane %v3183, 4
        %v3186 = vor.u32 %v3182, %v3185
        %v3187 = vsel %vm961, %v3177, %v3186
        %v3189 = vshrl.u32 %v3160, 16
        %v3191 = vrot.slane %v3189, 3
        %v3192 = vshll.u32 %v3160, 16
        %v3194 = vrot.slane %v3192, 4
        %v3195 = vor.u32 %v3191, %v3194
        %v3196 = vsel %vm961, %v3186, %v3195
        %v3198 = vshrl.u32 %v3161, 16
        %v3200 = vrot.slane %v3198, 3
        %v3201 = vshll.u32 %v3161, 16
        %v3203 = vrot.slane %v3201, 4
        %v3204 = vor.u32 %v3200, %v3203
        %v3205 = vsel %vm961, %v3195, %v3204
        %v3214 = vunpack.c.l.b16 %v3028
        %v3215 = vunpack.c.l.b16 %v3029
        %v3216 = vunpack.c.l.b16 %v3030
        %v3217 = vunpack.c.l.b16 %v3031
        %v3218 = vunpack.c.l.b16 %v3032
        %v3219 = vunpack.c.l.b16 %v3033
        %v3220 = vunpack.c.l.b16 %v3034
        %v3221 = vunpack.c.l.b16 %v3035
        %v3222 = vpack.c.b16 %v3215, %v3214
        %v3223 = vpack.c.b16 %v3217, %v3216
        %v3224 = vpack.c.b16 %v3219, %v3218
        %v3225 = vpack.c.b16 %v3221, %v3220
        %v3231 = vsel %vm3097, %v3178, 0
        %v3234 = vsel %vm3097, %v3187, 0
        %v3237 = vsel %vm3097, %v3196, 0
        %v3240 = vsel %vm3097, %v3205, 0
        %3242 = vmatpush.bf16.msra.mxu0 0
        %3243 = vmatpush.bf16.msra.mxu0 0
        %3244 = vmatpush.bf16.msra.mxu0 0
        %3245 = vmatpush.bf16.msra.mxu0 0
        %3246 = vmatpush.bf16.msra.mxu0 %v3225
        %3247 = vmatpush.bf16.msra.mxu0 %v3224
        %3248 = vmatpush.bf16.msra.mxu0 %v3223
        %3249 = vmatpush.bf16.msra.mxu0 %v3222
        %3250 = vmatmul.bf16.gmra.mxu0 %v3231
        %v3251 = vpop.f32.mrf.mxu0
        %v3252 = vadd.f32 %v3120, %v3251
        %v3253 = vpop.f32.mrf.mxu0
        %v3254 = vadd.f32 %v3122, %v3253
        %3255 = vmatmul.bf16.gmra.mxu0 %v3234
        %v3256 = vpop.f32.mrf.mxu0
        %v3257 = vadd.f32 %v3125, %v3256
        %v3258 = vpop.f32.mrf.mxu0
        %v3259 = vadd.f32 %v3127, %v3258
        %3260 = vmatmul.bf16.gmra.mxu0 %v3237
        %v3261 = vpop.f32.mrf.mxu0
        %v3262 = vadd.f32 %v3130, %v3261
        %v3263 = vpop.f32.mrf.mxu0
        %v3264 = vadd.f32 %v3132, %v3263
        %3265 = vmatmul.bf16.gmra.mxu0 %v3240
        %v3266 = vpop.f32.mrf.mxu0
        %v3267 = vadd.f32 %v3135, %v3266
        %v3268 = vpop.f32.mrf.mxu0
        %v3269 = vadd.f32 %v3137, %v3268
        %3270 = vdwg.mxu0
        %v3271 = vld [vmem:[#allocation2 + $0x4] sm:$0xf]
        %v3272 = vld [vmem:[#allocation2 + $0x8] sm:$0xf]
        %v3273 = vld [vmem:[#allocation2 + $0xc] sm:$0xf]
        %v3274 = vld [vmem:[#allocation2 + $0x10] sm:$0xf]
        %v3275 = vld [vmem:[#allocation2 + $0x14] sm:$0xf]
        %v3276 = vld [vmem:[#allocation2 + $0x18] sm:$0xf]
        %v3277 = vld [vmem:[#allocation2 + $0x1c] sm:$0xf]
        %v3278 = vld [vmem:[#allocation2 + $0x20] sm:$0xf]
        %v3279 = vld [vmem:[#allocation2 + $0x24] sm:$0x1]
        %v3280 = vsel %vm1204, %v3271, 0
        %v3281 = vsel %vm1211, %v3272, 0
        %v3282 = vsel %vm1218, %v3273, 0
        %v3283 = vsel %vm1225, %v3274, 0
        %v3284 = vsel %vm1232, %v3275, 0
        %v3285 = vsel %vm1239, %v3276, 0
        %v3286 = vsel %vm1246, %v3277, 0
        %v3287 = vsel %vm1253, %v3278, 0
        %v3288 = vsel %vm1260, %v3279, 0
        %s3289 = scalar_lea.vmem %s4, 64
        %v3290 = vld [vmem:[%s3289] sm:$0xf]
        %v3291 = vld [vmem:[%s3289 + $0x4] sm:$0xf]
        %v3292 = vld [vmem:[%s3289 + $0x8] sm:$0xf]
        %v3293 = vld [vmem:[%s3289 + $0xc] sm:$0xf]
        %v3294 = vld [vmem:[%s3289 + $0x10] sm:$0xf]
        %v3295 = vld [vmem:[%s3289 + $0x14] sm:$0xf]
        %v3296 = vld [vmem:[%s3289 + $0x18] sm:$0xf]
        %v3297 = vld [vmem:[%s3289 + $0x1c] sm:$0xf]
        %v3307 = vunpack.c.l.b16 %v3280
        %v3308 = vunpack.c.l.b16 %v3281
        %v3309 = vunpack.c.l.b16 %v3282
        %v3310 = vunpack.c.l.b16 %v3283
        %v3311 = vunpack.c.l.b16 %v3284
        %v3312 = vunpack.c.l.b16 %v3285
        %v3313 = vunpack.c.l.b16 %v3286
        %v3314 = vunpack.c.l.b16 %v3287
        %v3315 = vunpack.c.l.b16 %v3288
        %v3316 = vpack.c.b16 %v3308, %v3307
        %v3317 = vpack.c.b16 %v3310, %v3309
        %v3318 = vpack.c.b16 %v3312, %v3311
        %v3319 = vpack.c.b16 %v3314, %v3313
        %v3320 = vpack.c.b16 %v3315, %v3315
        %v3322 = vshrl.u32 %v3316, 16
        %v3324 = vshll.u32 %v3316, 16
        %v3326 = vrot.slane %v3324, 1
        %v3327 = vor.u32 %v3322, %v3326
        %v3329 = vshll.u32 %v3317, 16
        %v3331 = vrot.slane %v3329, 1
        %v3332 = vsel %vm1298, %v3327, %v3331
        %v3333 = vshrl.u32 %v3317, 16
        %v3335 = vor.u32 %v3333, %v3331
        %v3337 = vshll.u32 %v3318, 16
        %v3339 = vrot.slane %v3337, 1
        %v3340 = vsel %vm1298, %v3335, %v3339
        %v3341 = vshrl.u32 %v3318, 16
        %v3343 = vor.u32 %v3341, %v3339
        %v3345 = vshll.u32 %v3319, 16
        %v3347 = vrot.slane %v3345, 1
        %v3348 = vsel %vm1298, %v3343, %v3347
        %v3349 = vshrl.u32 %v3319, 16
        %v3351 = vor.u32 %v3349, %v3347
        %v3353 = vshll.u32 %v3320, 16
        %v3355 = vrot.slane %v3353, 1
        %v3356 = vsel %vm1298, %v3351, %v3355
        %v3365 = vunpack.c.l.b16 %v3290
        %v3366 = vunpack.c.l.b16 %v3291
        %v3367 = vunpack.c.l.b16 %v3292
        %v3368 = vunpack.c.l.b16 %v3293
        %v3369 = vunpack.c.l.b16 %v3294
        %v3370 = vunpack.c.l.b16 %v3295
        %v3371 = vunpack.c.l.b16 %v3296
        %v3372 = vunpack.c.l.b16 %v3297
        %v3373 = vpack.c.b16 %v3366, %v3365
        %v3374 = vpack.c.b16 %v3368, %v3367
        %v3375 = vpack.c.b16 %v3370, %v3369
        %v3376 = vpack.c.b16 %v3372, %v3371
        %v3382 = vsel %vm3097, %v3332, 0
        %v3385 = vsel %vm3097, %v3340, 0
        %v3388 = vsel %vm3097, %v3348, 0
        %v3391 = vsel %vm3097, %v3356, 0
        %3393 = vmatpush.bf16.msra.mxu0 0
        %3394 = vmatpush.bf16.msra.mxu0 0
        %3395 = vmatpush.bf16.msra.mxu0 0
        %3396 = vmatpush.bf16.msra.mxu0 0
        %3397 = vmatpush.bf16.msra.mxu0 %v3376
        %3398 = vmatpush.bf16.msra.mxu0 %v3375
        %3399 = vmatpush.bf16.msra.mxu0 %v3374
        %3400 = vmatpush.bf16.msra.mxu0 %v3373
        %3401 = vmatmul.bf16.gmra.mxu0 %v3382
        %v3402 = vpop.f32.mrf.mxu0
        %v3403 = vadd.f32 0.0, %v3402
        %v3404 = vpop.f32.mrf.mxu0
        %v3405 = vadd.f32 0.0, %v3404
        %3406 = vmatmul.bf16.gmra.mxu0 %v3385
        %v3407 = vpop.f32.mrf.mxu0
        %v3408 = vadd.f32 0.0, %v3407
        %v3409 = vpop.f32.mrf.mxu0
        %v3410 = vadd.f32 0.0, %v3409
        %3411 = vmatmul.bf16.gmra.mxu0 %v3388
        %v3412 = vpop.f32.mrf.mxu0
        %v3413 = vadd.f32 0.0, %v3412
        %v3414 = vpop.f32.mrf.mxu0
        %v3415 = vadd.f32 0.0, %v3414
        %3416 = vmatmul.bf16.gmra.mxu0 %v3391
        %v3417 = vpop.f32.mrf.mxu0
        %v3418 = vadd.f32 0.0, %v3417
        %v3419 = vpop.f32.mrf.mxu0
        %v3420 = vadd.f32 0.0, %v3419
        %3421 = vdwg.mxu0
        %v3422 = vadd.f32 %v3252, %v3403
        %v3423 = vadd.f32 %v3254, %v3405
        %v3424 = vadd.f32 %v3257, %v3408
        %v3425 = vadd.f32 %v3259, %v3410
        %v3426 = vadd.f32 %v3262, %v3413
        %v3427 = vadd.f32 %v3264, %v3415
        %v3428 = vadd.f32 %v3267, %v3418
        %v3429 = vadd.f32 %v3269, %v3420
        %v3430 = vld [vmem:[#allocation2 + $0x4] sm:$0x8]
        %v3431 = vld [vmem:[#allocation2 + $0x24] sm:$0xf]
        %v3432 = vsel %vm1539, %v3430, 0
        %v3433 = vsel %vm1546, %v3272, 0
        %v3434 = vsel %vm1553, %v3273, 0
        %v3435 = vsel %vm1560, %v3274, 0
        %v3436 = vsel %vm1567, %v3275, 0
        %v3437 = vsel %vm1574, %v3276, 0
        %v3438 = vsel %vm1581, %v3277, 0
        %v3439 = vsel %vm1588, %v3278, 0
        %v3440 = vsel %vm1595, %v3431, 0
        %s3441 = scalar_lea.vmem %s4, 96
        %v3442 = vld [vmem:[%s3441] sm:$0xf]
        %v3443 = vld [vmem:[%s3441 + $0x4] sm:$0xf]
        %v3444 = vld [vmem:[%s3441 + $0x8] sm:$0xf]
        %v3445 = vld [vmem:[%s3441 + $0xc] sm:$0xf]
        %v3446 = vld [vmem:[%s3441 + $0x10] sm:$0xf]
        %v3447 = vld [vmem:[%s3441 + $0x14] sm:$0xf]
        %v3448 = vld [vmem:[%s3441 + $0x18] sm:$0xf]
        %v3449 = vld [vmem:[%s3441 + $0x1c] sm:$0xf]
        %v3459 = vunpack.c.l.b16 %v3432
        %v3460 = vunpack.c.l.b16 %v3433
        %v3461 = vunpack.c.l.b16 %v3434
        %v3462 = vunpack.c.l.b16 %v3435
        %v3463 = vunpack.c.l.b16 %v3436
        %v3464 = vunpack.c.l.b16 %v3437
        %v3465 = vunpack.c.l.b16 %v3438
        %v3466 = vunpack.c.l.b16 %v3439
        %v3467 = vunpack.c.l.b16 %v3440
        %v3468 = vpack.c.b16 %v3460, %v3459
        %v3469 = vpack.c.b16 %v3462, %v3461
        %v3470 = vpack.c.b16 %v3464, %v3463
        %v3471 = vpack.c.b16 %v3466, %v3465
        %v3472 = vpack.c.b16 %v3467, %v3467
        %v3474 = vshrl.u32 %v3468, 16
        %v3476 = vrot.slane %v3474, 3
        %v3477 = vshll.u32 %v3468, 16
        %v3479 = vrot.slane %v3477, 4
        %v3480 = vor.u32 %v3476, %v3479
        %v3482 = vshrl.u32 %v3469, 16
        %v3484 = vrot.slane %v3482, 3
        %v3485 = vshll.u32 %v3469, 16
        %v3487 = vrot.slane %v3485, 4
        %v3488 = vor.u32 %v3484, %v3487
        %v3489 = vsel %vm961, %v3480, %v3488
        %v3491 = vshrl.u32 %v3470, 16
        %v3493 = vrot.slane %v3491, 3
        %v3494 = vshll.u32 %v3470, 16
        %v3496 = vrot.slane %v3494, 4
        %v3497 = vor.u32 %v3493, %v3496
        %v3498 = vsel %vm961, %v3488, %v3497
        %v3500 = vshrl.u32 %v3471, 16
        %v3502 = vrot.slane %v3500, 3
        %v3503 = vshll.u32 %v3471, 16
        %v3505 = vrot.slane %v3503, 4
        %v3506 = vor.u32 %v3502, %v3505
        %v3507 = vsel %vm961, %v3497, %v3506
        %v3509 = vshrl.u32 %v3472, 16
        %v3511 = vrot.slane %v3509, 3
        %v3512 = vshll.u32 %v3472, 16
        %v3514 = vrot.slane %v3512, 4
        %v3515 = vor.u32 %v3511, %v3514
        %v3516 = vsel %vm961, %v3506, %v3515
        %v3525 = vunpack.c.l.b16 %v3442
        %v3526 = vunpack.c.l.b16 %v3443
        %v3527 = vunpack.c.l.b16 %v3444
        %v3528 = vunpack.c.l.b16 %v3445
        %v3529 = vunpack.c.l.b16 %v3446
        %v3530 = vunpack.c.l.b16 %v3447
        %v3531 = vunpack.c.l.b16 %v3448
        %v3532 = vunpack.c.l.b16 %v3449
        %v3533 = vpack.c.b16 %v3526, %v3525
        %v3534 = vpack.c.b16 %v3528, %v3527
        %v3535 = vpack.c.b16 %v3530, %v3529
        %v3536 = vpack.c.b16 %v3532, %v3531
        %v3542 = vsel %vm3097, %v3489, 0
        %v3545 = vsel %vm3097, %v3498, 0
        %v3548 = vsel %vm3097, %v3507, 0
        %v3551 = vsel %vm3097, %v3516, 0
        %3553 = vmatpush.bf16.msra.mxu0 0
        %3554 = vmatpush.bf16.msra.mxu0 0
        %3555 = vmatpush.bf16.msra.mxu0 0
        %3556 = vmatpush.bf16.msra.mxu0 0
        %3557 = vmatpush.bf16.msra.mxu0 %v3536
        %3558 = vmatpush.bf16.msra.mxu0 %v3535
        %3559 = vmatpush.bf16.msra.mxu0 %v3534
        %3560 = vmatpush.bf16.msra.mxu0 %v3533
        %3561 = vmatmul.bf16.gmra.mxu0 %v3542
        %v3562 = vpop.f32.mrf.mxu0
        %v3563 = vadd.f32 0.0, %v3562
        %v3564 = vpop.f32.mrf.mxu0
        %v3565 = vadd.f32 0.0, %v3564
        %3566 = vmatmul.bf16.gmra.mxu0 %v3545
        %v3567 = vpop.f32.mrf.mxu0
        %v3568 = vadd.f32 0.0, %v3567
        %v3569 = vpop.f32.mrf.mxu0
        %v3570 = vadd.f32 0.0, %v3569
        %3571 = vmatmul.bf16.gmra.mxu0 %v3548
        %v3572 = vpop.f32.mrf.mxu0
        %v3573 = vadd.f32 0.0, %v3572
        %v3574 = vpop.f32.mrf.mxu0
        %v3575 = vadd.f32 0.0, %v3574
        %3576 = vmatmul.bf16.gmra.mxu0 %v3551
        %v3577 = vpop.f32.mrf.mxu0
        %v3578 = vadd.f32 0.0, %v3577
        %v3579 = vpop.f32.mrf.mxu0
        %v3580 = vadd.f32 0.0, %v3579
        %3581 = vdwg.mxu0
        %v3582 = vadd.f32 %v3422, %v3563
        %v3583 = vadd.f32 %v3423, %v3565
        %v3584 = vadd.f32 %v3424, %v3568
        %v3585 = vadd.f32 %v3425, %v3570
        %v3586 = vadd.f32 %v3426, %v3573
        %v3587 = vadd.f32 %v3427, %v3575
        %v3588 = vadd.f32 %v3428, %v3578
        %v3589 = vadd.f32 %v3429, %v3580
        %s3590 = scalar_lea.vmem %s4, 128
        %v3591 = vld [vmem:[%s3590] sm:$0xf]
        %v3592 = vld [vmem:[%s3590 + $0x4] sm:$0xf]
        %v3593 = vld [vmem:[%s3590 + $0x8] sm:$0xf]
        %v3594 = vld [vmem:[%s3590 + $0xc] sm:$0xf]
        %v3595 = vld [vmem:[%s3590 + $0x10] sm:$0xf]
        %v3596 = vld [vmem:[%s3590 + $0x14] sm:$0xf]
        %v3597 = vld [vmem:[%s3590 + $0x18] sm:$0xf]
        %v3598 = vld [vmem:[%s3590 + $0x1c] sm:$0xf]
        %v3607 = vunpack.c.l.b16 %v2994
        %v3608 = vunpack.c.l.b16 %v2995
        %v3609 = vunpack.c.l.b16 %v2996
        %v3610 = vunpack.c.l.b16 %v2997
        %v3611 = vunpack.c.l.b16 %v2998
        %v3612 = vunpack.c.l.b16 %v2999
        %v3613 = vunpack.c.l.b16 %v3000
        %v3614 = vunpack.c.l.b16 %v3001
        %v3615 = vpack.c.b16 %v3608, %v3607
        %v3616 = vpack.c.b16 %v3610, %v3609
        %v3617 = vpack.c.b16 %v3612, %v3611
        %v3618 = vpack.c.b16 %v3614, %v3613
        %v3627 = vunpack.c.l.b16 %v3591
        %v3628 = vunpack.c.l.b16 %v3592
        %v3629 = vunpack.c.l.b16 %v3593
        %v3630 = vunpack.c.l.b16 %v3594
        %v3631 = vunpack.c.l.b16 %v3595
        %v3632 = vunpack.c.l.b16 %v3596
        %v3633 = vunpack.c.l.b16 %v3597
        %v3634 = vunpack.c.l.b16 %v3598
        %v3635 = vpack.c.b16 %v3628, %v3627
        %v3636 = vpack.c.b16 %v3630, %v3629
        %v3637 = vpack.c.b16 %v3632, %v3631
        %v3638 = vpack.c.b16 %v3634, %v3633
        %v3644 = vsel %vm3097, %v3615, 0
        %v3647 = vsel %vm3097, %v3616, 0
        %v3650 = vsel %vm3097, %v3617, 0
        %v3653 = vsel %vm3097, %v3618, 0
        %3655 = vmatpush.bf16.msra.mxu0 0
        %3656 = vmatpush.bf16.msra.mxu0 0
        %3657 = vmatpush.bf16.msra.mxu0 0
        %3658 = vmatpush.bf16.msra.mxu0 0
        %3659 = vmatpush.bf16.msra.mxu0 %v3638
        %3660 = vmatpush.bf16.msra.mxu0 %v3637
        %3661 = vmatpush.bf16.msra.mxu0 %v3636
        %3662 = vmatpush.bf16.msra.mxu0 %v3635
        %3663 = vmatmul.bf16.gmra.mxu0 %v3644
        %v3664 = vpop.f32.mrf.mxu0
        %v3665 = vadd.f32 0.0, %v3664
        %v3666 = vpop.f32.mrf.mxu0
        %v3667 = vadd.f32 0.0, %v3666
        %3668 = vmatmul.bf16.gmra.mxu0 %v3647
        %v3669 = vpop.f32.mrf.mxu0
        %v3670 = vadd.f32 0.0, %v3669
        %v3671 = vpop.f32.mrf.mxu0
        %v3672 = vadd.f32 0.0, %v3671
        %3673 = vmatmul.bf16.gmra.mxu0 %v3650
        %v3674 = vpop.f32.mrf.mxu0
        %v3675 = vadd.f32 0.0, %v3674
        %v3676 = vpop.f32.mrf.mxu0
        %v3677 = vadd.f32 0.0, %v3676
        %3678 = vmatmul.bf16.gmra.mxu0 %v3653
        %v3679 = vpop.f32.mrf.mxu0
        %v3680 = vadd.f32 0.0, %v3679
        %v3681 = vpop.f32.mrf.mxu0
        %v3682 = vadd.f32 0.0, %v3681
        %3683 = vdwg.mxu0
        %v3684 = vadd.f32 %v3582, %v3665
        %v3685 = vadd.f32 %v3583, %v3667
        %v3686 = vadd.f32 %v3584, %v3670
        %v3687 = vadd.f32 %v3585, %v3672
        %v3688 = vadd.f32 %v3586, %v3675
        %v3689 = vadd.f32 %v3587, %v3677
        %v3690 = vadd.f32 %v3588, %v3680
        %v3691 = vadd.f32 %v3589, %v3682
        %v3692 = vld [vmem:[#allocation2 + $0x8] sm:$0xf]
        %v3693 = vld [vmem:[#allocation2 + $0xc] sm:$0xf]
        %v3694 = vld [vmem:[#allocation2 + $0x10] sm:$0xf]
        %v3695 = vld [vmem:[#allocation2 + $0x14] sm:$0xf]
        %v3696 = vld [vmem:[#allocation2 + $0x18] sm:$0xf]
        %v3697 = vld [vmem:[#allocation2 + $0x1c] sm:$0xf]
        %v3698 = vld [vmem:[#allocation2 + $0x20] sm:$0xf]
        %v3699 = vld [vmem:[#allocation2 + $0x24] sm:$0xf]
        %v3700 = vld [vmem:[#allocation2 + $0x28] sm:$0x1]
        %v3701 = vsel %vm1966, %v3692, 0
        %v3702 = vsel %vm1973, %v3693, 0
        %v3703 = vsel %vm1980, %v3694, 0
        %v3704 = vsel %vm1987, %v3695, 0
        %v3705 = vsel %vm1994, %v3696, 0
        %v3706 = vsel %vm2001, %v3697, 0
        %v3707 = vsel %vm2008, %v3698, 0
        %v3708 = vsel %vm2015, %v3699, 0
        %v3709 = vsel %vm2022, %v3700, 0
        %s3710 = scalar_lea.vmem %s4, 160
        %v3711 = vld [vmem:[%s3710] sm:$0xf]
        %v3712 = vld [vmem:[%s3710 + $0x4] sm:$0xf]
        %v3713 = vld [vmem:[%s3710 + $0x8] sm:$0xf]
        %v3714 = vld [vmem:[%s3710 + $0xc] sm:$0xf]
        %v3715 = vld [vmem:[%s3710 + $0x10] sm:$0xf]
        %v3716 = vld [vmem:[%s3710 + $0x14] sm:$0xf]
        %v3717 = vld [vmem:[%s3710 + $0x18] sm:$0xf]
        %v3718 = vld [vmem:[%s3710 + $0x1c] sm:$0xf]
        %v3728 = vunpack.c.l.b16 %v3701
        %v3729 = vunpack.c.l.b16 %v3702
        %v3730 = vunpack.c.l.b16 %v3703
        %v3731 = vunpack.c.l.b16 %v3704
        %v3732 = vunpack.c.l.b16 %v3705
        %v3733 = vunpack.c.l.b16 %v3706
        %v3734 = vunpack.c.l.b16 %v3707
        %v3735 = vunpack.c.l.b16 %v3708
        %v3736 = vunpack.c.l.b16 %v3709
        %v3737 = vpack.c.b16 %v3729, %v3728
        %v3738 = vpack.c.b16 %v3731, %v3730
        %v3739 = vpack.c.b16 %v3733, %v3732
        %v3740 = vpack.c.b16 %v3735, %v3734
        %v3741 = vpack.c.b16 %v3736, %v3736
        %v3743 = vshrl.u32 %v3737, 16
        %v3745 = vshll.u32 %v3737, 16
        %v3747 = vrot.slane %v3745, 1
        %v3748 = vor.u32 %v3743, %v3747
        %v3750 = vshll.u32 %v3738, 16
        %v3752 = vrot.slane %v3750, 1
        %v3753 = vsel %vm1298, %v3748, %v3752
        %v3754 = vshrl.u32 %v3738, 16
        %v3756 = vor.u32 %v3754, %v3752
        %v3758 = vshll.u32 %v3739, 16
        %v3760 = vrot.slane %v3758, 1
        %v3761 = vsel %vm1298, %v3756, %v3760
        %v3762 = vshrl.u32 %v3739, 16
        %v3764 = vor.u32 %v3762, %v3760
        %v3766 = vshll.u32 %v3740, 16
        %v3768 = vrot.slane %v3766, 1
        %v3769 = vsel %vm1298, %v3764, %v3768
        %v3770 = vshrl.u32 %v3740, 16
        %v3772 = vor.u32 %v3770, %v3768
        %v3774 = vshll.u32 %v3741, 16
        %v3776 = vrot.slane %v3774, 1
        %v3777 = vsel %vm1298, %v3772, %v3776
        %v3786 = vunpack.c.l.b16 %v3711
        %v3787 = vunpack.c.l.b16 %v3712
        %v3788 = vunpack.c.l.b16 %v3713
        %v3789 = vunpack.c.l.b16 %v3714
        %v3790 = vunpack.c.l.b16 %v3715
        %v3791 = vunpack.c.l.b16 %v3716
        %v3792 = vunpack.c.l.b16 %v3717
        %v3793 = vunpack.c.l.b16 %v3718
        %v3794 = vpack.c.b16 %v3787, %v3786
        %v3795 = vpack.c.b16 %v3789, %v3788
        %v3796 = vpack.c.b16 %v3791, %v3790
        %v3797 = vpack.c.b16 %v3793, %v3792
        %v3803 = vsel %vm3097, %v3753, 0
        %v3806 = vsel %vm3097, %v3761, 0
        %v3809 = vsel %vm3097, %v3769, 0
        %v3812 = vsel %vm3097, %v3777, 0
        %3814 = vmatpush.bf16.msra.mxu0 0
        %3815 = vmatpush.bf16.msra.mxu0 0
        %3816 = vmatpush.bf16.msra.mxu0 0
        %3817 = vmatpush.bf16.msra.mxu0 0
        %3818 = vmatpush.bf16.msra.mxu0 %v3797
        %3819 = vmatpush.bf16.msra.mxu0 %v3796
        %3820 = vmatpush.bf16.msra.mxu0 %v3795
        %3821 = vmatpush.bf16.msra.mxu0 %v3794
        %3822 = vmatmul.bf16.gmra.mxu0 %v3803
        %v3823 = vpop.f32.mrf.mxu0
        %v3824 = vadd.f32 0.0, %v3823
        %v3825 = vpop.f32.mrf.mxu0
        %v3826 = vadd.f32 0.0, %v3825
        %3827 = vmatmul.bf16.gmra.mxu0 %v3806
        %v3828 = vpop.f32.mrf.mxu0
        %v3829 = vadd.f32 0.0, %v3828
        %v3830 = vpop.f32.mrf.mxu0
        %v3831 = vadd.f32 0.0, %v3830
        %3832 = vmatmul.bf16.gmra.mxu0 %v3809
        %v3833 = vpop.f32.mrf.mxu0
        %v3834 = vadd.f32 0.0, %v3833
        %v3835 = vpop.f32.mrf.mxu0
        %v3836 = vadd.f32 0.0, %v3835
        %3837 = vmatmul.bf16.gmra.mxu0 %v3812
        %v3838 = vpop.f32.mrf.mxu0
        %v3839 = vadd.f32 0.0, %v3838
        %v3840 = vpop.f32.mrf.mxu0
        %v3841 = vadd.f32 0.0, %v3840
        %3842 = vdwg.mxu0
        %v3843 = vadd.f32 %v3684, %v3824
        %v3844 = vadd.f32 %v3685, %v3826
        %v3845 = vadd.f32 %v3686, %v3829
        %v3846 = vadd.f32 %v3687, %v3831
        %v3847 = vadd.f32 %v3688, %v3834
        %v3848 = vadd.f32 %v3689, %v3836
        %v3849 = vadd.f32 %v3690, %v3839
        %v3850 = vadd.f32 %v3691, %v3841
        %v3851 = vld [vmem:[#allocation2 + $0x8] sm:$0x8]
        %v3852 = vld [vmem:[#allocation2 + $0x28] sm:$0xf]
        %v3853 = vsel %vm2300, %v3851, 0
        %v3854 = vsel %vm2307, %v3693, 0
        %v3855 = vsel %vm2314, %v3694, 0
        %v3856 = vsel %vm2321, %v3695, 0
        %v3857 = vsel %vm2328, %v3696, 0
        %v3858 = vsel %vm2335, %v3697, 0
        %v3859 = vsel %vm2342, %v3698, 0
        %v3860 = vsel %vm2349, %v3699, 0
        %v3861 = vsel %vm2356, %v3852, 0
        %s3862 = scalar_lea.vmem %s4, 192
        %v3863 = vld [vmem:[%s3862] sm:$0xf]
        %v3864 = vld [vmem:[%s3862 + $0x4] sm:$0xf]
        %v3865 = vld [vmem:[%s3862 + $0x8] sm:$0xf]
        %v3866 = vld [vmem:[%s3862 + $0xc] sm:$0xf]
        %v3867 = vld [vmem:[%s3862 + $0x10] sm:$0xf]
        %v3868 = vld [vmem:[%s3862 + $0x14] sm:$0xf]
        %v3869 = vld [vmem:[%s3862 + $0x18] sm:$0xf]
        %v3870 = vld [vmem:[%s3862 + $0x1c] sm:$0xf]
        %v3880 = vunpack.c.l.b16 %v3853
        %v3881 = vunpack.c.l.b16 %v3854
        %v3882 = vunpack.c.l.b16 %v3855
        %v3883 = vunpack.c.l.b16 %v3856
        %v3884 = vunpack.c.l.b16 %v3857
        %v3885 = vunpack.c.l.b16 %v3858
        %v3886 = vunpack.c.l.b16 %v3859
        %v3887 = vunpack.c.l.b16 %v3860
        %v3888 = vunpack.c.l.b16 %v3861
        %v3889 = vpack.c.b16 %v3881, %v3880
        %v3890 = vpack.c.b16 %v3883, %v3882
        %v3891 = vpack.c.b16 %v3885, %v3884
        %v3892 = vpack.c.b16 %v3887, %v3886
        %v3893 = vpack.c.b16 %v3888, %v3888
        %v3895 = vshrl.u32 %v3889, 16
        %v3897 = vrot.slane %v3895, 3
        %v3898 = vshll.u32 %v3889, 16
        %v3900 = vrot.slane %v3898, 4
        %v3901 = vor.u32 %v3897, %v3900
        %v3903 = vshrl.u32 %v3890, 16
        %v3905 = vrot.slane %v3903, 3
        %v3906 = vshll.u32 %v3890, 16
        %v3908 = vrot.slane %v3906, 4
        %v3909 = vor.u32 %v3905, %v3908
        %v3910 = vsel %vm961, %v3901, %v3909
        %v3912 = vshrl.u32 %v3891, 16
        %v3914 = vrot.slane %v3912, 3
        %v3915 = vshll.u32 %v3891, 16
        %v3917 = vrot.slane %v3915, 4
        %v3918 = vor.u32 %v3914, %v3917
        %v3919 = vsel %vm961, %v3909, %v3918
        %v3921 = vshrl.u32 %v3892, 16
        %v3923 = vrot.slane %v3921, 3
        %v3924 = vshll.u32 %v3892, 16
        %v3926 = vrot.slane %v3924, 4
        %v3927 = vor.u32 %v3923, %v3926
        %v3928 = vsel %vm961, %v3918, %v3927
        %v3930 = vshrl.u32 %v3893, 16
        %v3932 = vrot.slane %v3930, 3
        %v3933 = vshll.u32 %v3893, 16
        %v3935 = vrot.slane %v3933, 4
        %v3936 = vor.u32 %v3932, %v3935
        %v3937 = vsel %vm961, %v3927, %v3936
        %v3946 = vunpack.c.l.b16 %v3863
        %v3947 = vunpack.c.l.b16 %v3864
        %v3948 = vunpack.c.l.b16 %v3865
        %v3949 = vunpack.c.l.b16 %v3866
        %v3950 = vunpack.c.l.b16 %v3867
        %v3951 = vunpack.c.l.b16 %v3868
        %v3952 = vunpack.c.l.b16 %v3869
        %v3953 = vunpack.c.l.b16 %v3870
        %v3954 = vpack.c.b16 %v3947, %v3946
        %v3955 = vpack.c.b16 %v3949, %v3948
        %v3956 = vpack.c.b16 %v3951, %v3950
        %v3957 = vpack.c.b16 %v3953, %v3952
        %v3963 = vsel %vm3097, %v3910, 0
        %v3966 = vsel %vm3097, %v3919, 0
        %v3969 = vsel %vm3097, %v3928, 0
        %v3972 = vsel %vm3097, %v3937, 0
        %3974 = vmatpush.bf16.msra.mxu0 0
        %3975 = vmatpush.bf16.msra.mxu0 0
        %3976 = vmatpush.bf16.msra.mxu0 0
        %3977 = vmatpush.bf16.msra.mxu0 0
        %3978 = vmatpush.bf16.msra.mxu0 %v3957
        %3979 = vmatpush.bf16.msra.mxu0 %v3956
        %3980 = vmatpush.bf16.msra.mxu0 %v3955
        %3981 = vmatpush.bf16.msra.mxu0 %v3954
        %3982 = vmatmul.bf16.gmra.mxu0 %v3963
        %v3983 = vpop.f32.mrf.mxu0
        %v3984 = vadd.f32 0.0, %v3983
        %v3985 = vpop.f32.mrf.mxu0
        %v3986 = vadd.f32 0.0, %v3985
        %3987 = vmatmul.bf16.gmra.mxu0 %v3966
        %v3988 = vpop.f32.mrf.mxu0
        %v3989 = vadd.f32 0.0, %v3988
        %v3990 = vpop.f32.mrf.mxu0
        %v3991 = vadd.f32 0.0, %v3990
        %3992 = vmatmul.bf16.gmra.mxu0 %v3969
        %v3993 = vpop.f32.mrf.mxu0
        %v3994 = vadd.f32 0.0, %v3993
        %v3995 = vpop.f32.mrf.mxu0
        %v3996 = vadd.f32 0.0, %v3995
        %3997 = vmatmul.bf16.gmra.mxu0 %v3972
        %v3998 = vpop.f32.mrf.mxu0
        %v3999 = vadd.f32 0.0, %v3998
        %v4000 = vpop.f32.mrf.mxu0
        %v4001 = vadd.f32 0.0, %v4000
        %4002 = vdwg.mxu0
        %v4003 = vadd.f32 %v3843, %v3984
        %v4004 = vadd.f32 %v3844, %v3986
        %v4005 = vadd.f32 %v3845, %v3989
        %v4006 = vadd.f32 %v3846, %v3991
        %v4007 = vadd.f32 %v3847, %v3994
        %v4008 = vadd.f32 %v3848, %v3996
        %v4009 = vadd.f32 %v3849, %v3999
        %v4010 = vadd.f32 %v3850, %v4001
        %v4011 = vsel %vm2539, %v3693, 0
        %v4012 = vsel %vm2540, %v3694, 0
        %v4013 = vsel %vm2541, %v3695, 0
        %v4014 = vsel %vm2542, %v3696, 0
        %v4015 = vsel %vm2543, %v3697, 0
        %v4016 = vsel %vm2544, %v3698, 0
        %v4017 = vsel %vm2545, %v3699, 0
        %v4018 = vsel %vm2546, %v3852, 0
        %s4019 = scalar_lea.vmem %s4, 224
        %v4020 = vld [vmem:[%s4019] sm:$0xf]
        %v4021 = vld [vmem:[%s4019 + $0x4] sm:$0xf]
        %v4022 = vld [vmem:[%s4019 + $0x8] sm:$0xf]
        %v4023 = vld [vmem:[%s4019 + $0xc] sm:$0xf]
        %v4024 = vld [vmem:[%s4019 + $0x10] sm:$0xf]
        %v4025 = vld [vmem:[%s4019 + $0x14] sm:$0xf]
        %v4026 = vld [vmem:[%s4019 + $0x18] sm:$0xf]
        %v4027 = vld [vmem:[%s4019 + $0x1c] sm:$0xf]
        %v4036 = vunpack.c.l.b16 %v4011
        %v4037 = vunpack.c.l.b16 %v4012
        %v4038 = vunpack.c.l.b16 %v4013
        %v4039 = vunpack.c.l.b16 %v4014
        %v4040 = vunpack.c.l.b16 %v4015
        %v4041 = vunpack.c.l.b16 %v4016
        %v4042 = vunpack.c.l.b16 %v4017
        %v4043 = vunpack.c.l.b16 %v4018
        %v4044 = vpack.c.b16 %v4037, %v4036
        %v4045 = vpack.c.b16 %v4039, %v4038
        %v4046 = vpack.c.b16 %v4041, %v4040
        %v4047 = vpack.c.b16 %v4043, %v4042
        %v4056 = vunpack.c.l.b16 %v4020
        %v4057 = vunpack.c.l.b16 %v4021
        %v4058 = vunpack.c.l.b16 %v4022
        %v4059 = vunpack.c.l.b16 %v4023
        %v4060 = vunpack.c.l.b16 %v4024
        %v4061 = vunpack.c.l.b16 %v4025
        %v4062 = vunpack.c.l.b16 %v4026
        %v4063 = vunpack.c.l.b16 %v4027
        %v4064 = vpack.c.b16 %v4057, %v4056
        %v4065 = vpack.c.b16 %v4059, %v4058
        %v4066 = vpack.c.b16 %v4061, %v4060
        %v4067 = vpack.c.b16 %v4063, %v4062
        %v4073 = vsel %vm3097, %v4044, 0
        %v4076 = vsel %vm3097, %v4045, 0
        %v4079 = vsel %vm3097, %v4046, 0
        %v4082 = vsel %vm3097, %v4047, 0
        %4084 = vmatpush.bf16.msra.mxu0 0
        %4085 = vmatpush.bf16.msra.mxu0 0
        %4086 = vmatpush.bf16.msra.mxu0 0
        %4087 = vmatpush.bf16.msra.mxu0 0
        %4088 = vmatpush.bf16.msra.mxu0 %v4067
        %4089 = vmatpush.bf16.msra.mxu0 %v4066
        %4090 = vmatpush.bf16.msra.mxu0 %v4065
        %4091 = vmatpush.bf16.msra.mxu0 %v4064
        %4092 = vmatmul.bf16.gmra.mxu0 %v4073
        %v4093 = vpop.f32.mrf.mxu0
        %v4094 = vadd.f32 0.0, %v4093
        %v4095 = vpop.f32.mrf.mxu0
        %v4096 = vadd.f32 0.0, %v4095
        %4097 = vmatmul.bf16.gmra.mxu0 %v4076
        %v4098 = vpop.f32.mrf.mxu0
        %v4099 = vadd.f32 0.0, %v4098
        %v4100 = vpop.f32.mrf.mxu0
        %v4101 = vadd.f32 0.0, %v4100
        %4102 = vmatmul.bf16.gmra.mxu0 %v4079
        %v4103 = vpop.f32.mrf.mxu0
        %v4104 = vadd.f32 0.0, %v4103
        %v4105 = vpop.f32.mrf.mxu0
        %v4106 = vadd.f32 0.0, %v4105
        %4107 = vmatmul.bf16.gmra.mxu0 %v4082
        %v4108 = vpop.f32.mrf.mxu0
        %v4109 = vadd.f32 0.0, %v4108
        %v4110 = vpop.f32.mrf.mxu0
        %v4111 = vadd.f32 0.0, %v4110
        %4112 = vdwg.mxu0
        %v4113 = vadd.f32 %v4003, %v4094
        %v4114 = vadd.f32 %v4004, %v4096
        %v4115 = vadd.f32 %v4005, %v4099
        %v4116 = vadd.f32 %v4006, %v4101
        %v4117 = vadd.f32 %v4007, %v4104
        %v4118 = vadd.f32 %v4008, %v4106
        %v4119 = vadd.f32 %v4009, %v4109
        %v4120 = vadd.f32 %v4010, %v4111
        %v4121 = vld [vmem:[#allocation2 + $0xc] sm:$0xf]
        %v4122 = vld [vmem:[#allocation2 + $0x10] sm:$0xf]
        %v4123 = vld [vmem:[#allocation2 + $0x14] sm:$0xf]
        %v4124 = vld [vmem:[#allocation2 + $0x18] sm:$0xf]
        %v4125 = vld [vmem:[#allocation2 + $0x1c] sm:$0xf]
        %v4126 = vld [vmem:[#allocation2 + $0x20] sm:$0xf]
        %v4127 = vld [vmem:[#allocation2 + $0x24] sm:$0xf]
        %v4128 = vld [vmem:[#allocation2 + $0x28] sm:$0xf]
        %v4129 = vld [vmem:[#allocation2 + $0x2c] sm:$0x1]
        %v4130 = vsel %vm2783, %v4121, 0
        %v4131 = vsel %vm2790, %v4122, 0
        %v4132 = vsel %vm2797, %v4123, 0
        %v4133 = vsel %vm2804, %v4124, 0
        %v4134 = vsel %vm2811, %v4125, 0
        %v4135 = vsel %vm2818, %v4126, 0
        %v4136 = vsel %vm2825, %v4127, 0
        %v4137 = vsel %vm2832, %v4128, 0
        %v4138 = vsel %vm2839, %v4129, 0
        %s4139 = scalar_lea.vmem %s4, 256
        %v4140 = vld [vmem:[%s4139] sm:$0xf]
        %v4141 = vld [vmem:[%s4139 + $0x4] sm:$0xf]
        %v4142 = vld [vmem:[%s4139 + $0x8] sm:$0xf]
        %v4143 = vld [vmem:[%s4139 + $0xc] sm:$0xf]
        %v4144 = vld [vmem:[%s4139 + $0x10] sm:$0xf]
        %v4145 = vld [vmem:[%s4139 + $0x14] sm:$0xf]
        %v4146 = vld [vmem:[%s4139 + $0x18] sm:$0xf]
        %v4147 = vld [vmem:[%s4139 + $0x1c] sm:$0xf]
        %v4157 = vunpack.c.l.b16 %v4130
        %v4158 = vunpack.c.l.b16 %v4131
        %v4159 = vunpack.c.l.b16 %v4132
        %v4160 = vunpack.c.l.b16 %v4133
        %v4161 = vunpack.c.l.b16 %v4134
        %v4162 = vunpack.c.l.b16 %v4135
        %v4163 = vunpack.c.l.b16 %v4136
        %v4164 = vunpack.c.l.b16 %v4137
        %v4165 = vunpack.c.l.b16 %v4138
        %v4166 = vpack.c.b16 %v4158, %v4157
        %v4167 = vpack.c.b16 %v4160, %v4159
        %v4168 = vpack.c.b16 %v4162, %v4161
        %v4169 = vpack.c.b16 %v4164, %v4163
        %v4170 = vpack.c.b16 %v4165, %v4165
        %v4172 = vshrl.u32 %v4166, 16
        %v4174 = vshll.u32 %v4166, 16
        %v4176 = vrot.slane %v4174, 1
        %v4177 = vor.u32 %v4172, %v4176
        %v4179 = vshll.u32 %v4167, 16
        %v4181 = vrot.slane %v4179, 1
        %v4182 = vsel %vm1298, %v4177, %v4181
        %v4183 = vshrl.u32 %v4167, 16
        %v4185 = vor.u32 %v4183, %v4181
        %v4187 = vshll.u32 %v4168, 16
        %v4189 = vrot.slane %v4187, 1
        %v4190 = vsel %vm1298, %v4185, %v4189
        %v4191 = vshrl.u32 %v4168, 16
        %v4193 = vor.u32 %v4191, %v4189
        %v4195 = vshll.u32 %v4169, 16
        %v4197 = vrot.slane %v4195, 1
        %v4198 = vsel %vm1298, %v4193, %v4197
        %v4199 = vshrl.u32 %v4169, 16
        %v4201 = vor.u32 %v4199, %v4197
        %v4203 = vshll.u32 %v4170, 16
        %v4205 = vrot.slane %v4203, 1
        %v4206 = vsel %vm1298, %v4201, %v4205
        %v4215 = vunpack.c.l.b16 %v4140
        %v4216 = vunpack.c.l.b16 %v4141
        %v4217 = vunpack.c.l.b16 %v4142
        %v4218 = vunpack.c.l.b16 %v4143
        %v4219 = vunpack.c.l.b16 %v4144
        %v4220 = vunpack.c.l.b16 %v4145
        %v4221 = vunpack.c.l.b16 %v4146
        %v4222 = vunpack.c.l.b16 %v4147
        %v4223 = vpack.c.b16 %v4216, %v4215
        %v4224 = vpack.c.b16 %v4218, %v4217
        %v4225 = vpack.c.b16 %v4220, %v4219
        %v4226 = vpack.c.b16 %v4222, %v4221
        %v4232 = vsel %vm3097, %v4182, 0
        %v4235 = vsel %vm3097, %v4190, 0
        %v4238 = vsel %vm3097, %v4198, 0
        %v4241 = vsel %vm3097, %v4206, 0
        %4243 = vmatpush.bf16.msra.mxu0 0
        %4244 = vmatpush.bf16.msra.mxu0 0
        %4245 = vmatpush.bf16.msra.mxu0 0
        %4246 = vmatpush.bf16.msra.mxu0 0
        %4247 = vmatpush.bf16.msra.mxu0 %v4226
        %4248 = vmatpush.bf16.msra.mxu0 %v4225
        %4249 = vmatpush.bf16.msra.mxu0 %v4224
        %4250 = vmatpush.bf16.msra.mxu0 %v4223
        %4251 = vmatmul.bf16.gmra.mxu0 %v4232
        %v4252 = vpop.f32.mrf.mxu0
        %v4253 = vadd.f32 0.0, %v4252
        %v4254 = vpop.f32.mrf.mxu0
        %v4255 = vadd.f32 0.0, %v4254
        %4256 = vmatmul.bf16.gmra.mxu0 %v4235
        %v4257 = vpop.f32.mrf.mxu0
        %v4258 = vadd.f32 0.0, %v4257
        %v4259 = vpop.f32.mrf.mxu0
        %v4260 = vadd.f32 0.0, %v4259
        %4261 = vmatmul.bf16.gmra.mxu0 %v4238
        %v4262 = vpop.f32.mrf.mxu0
        %v4263 = vadd.f32 0.0, %v4262
        %v4264 = vpop.f32.mrf.mxu0
        %v4265 = vadd.f32 0.0, %v4264
        %4266 = vmatmul.bf16.gmra.mxu0 %v4241
        %v4267 = vpop.f32.mrf.mxu0
        %v4268 = vadd.f32 0.0, %v4267
        %v4269 = vpop.f32.mrf.mxu0
        %v4270 = vadd.f32 0.0, %v4269
        %4271 = vdwg.mxu0
        %v4272 = vadd.f32 %v4113, %v4253
        %v4273 = vadd.f32 %v4114, %v4255
        %v4274 = vadd.f32 %v4115, %v4258
        %v4275 = vadd.f32 %v4116, %v4260
        %v4276 = vadd.f32 %v4117, %v4263
        %v4277 = vadd.f32 %v4118, %v4265
        %v4278 = vadd.f32 %v4119, %v4268
        %v4279 = vadd.f32 %v4120, %v4270
        %v4280 = vld [vmem:[%s9] sm:$0x1]
        %v4282 = vperm.slane %v4280, 0
        %v4284 = vadd.f32 %v4272, %v4282
        %v4285 = vadd.f32 %v4273, %v4282
        %v4286 = vadd.f32 %v4274, %v4282
        %v4287 = vadd.f32 %v4275, %v4282
        %v4288 = vadd.f32 %v4276, %v4282
        %v4289 = vadd.f32 %v4277, %v4282
        %v4290 = vadd.f32 %v4278, %v4282
        %v4291 = vadd.f32 %v4279, %v4282
        %v4292 = vmax.f32 %v4284, 0.0
        %v4293 = vmax.f32 %v4285, 0.0
        %v4294 = vmax.f32 %v4286, 0.0
        %v4295 = vmax.f32 %v4287, 0.0
        %v4296 = vmax.f32 %v4288, 0.0
        %v4297 = vmax.f32 %v4289, 0.0
        %v4298 = vmax.f32 %v4290, 0.0
        %v4299 = vmax.f32 %v4291, 0.0
        %v4300 = vpack.c.bf16 %v4292, %v4292
        %v4301 = vpack.c.bf16 %v4293, %v4293
        %v4302 = vpack.c.bf16 %v4294, %v4294
        %v4303 = vpack.c.bf16 %v4295, %v4295
        %v4304 = vpack.c.bf16 %v4296, %v4296
        %v4305 = vpack.c.bf16 %v4297, %v4297
        %v4306 = vpack.c.bf16 %v4298, %v4298
        %v4307 = vpack.c.bf16 %v4299, %v4299
        %4308 = vst.msk [vmem:[#allocation2 + $0x8] sm:$0xf] %vm478, %v4300
        %4309 = vst.msk [vmem:[#allocation2 + $0xc] sm:$0xf] %vm478, %v4301
        %4310 = vst.msk [vmem:[#allocation2 + $0x10] sm:$0xf] %vm478, %v4302
        %4311 = vst.msk [vmem:[#allocation2 + $0x14] sm:$0xf] %vm478, %v4303
        %4312 = vst.msk [vmem:[#allocation2 + $0x18] sm:$0xf] %vm478, %v4304
        %4313 = vst.msk [vmem:[#allocation2 + $0x1c] sm:$0xf] %vm478, %v4305
        %4314 = vst.msk [vmem:[#allocation2 + $0x20] sm:$0xf] %vm478, %v4306
        %4315 = vst.msk [vmem:[#allocation2 + $0x24] sm:$0xf] %vm478, %v4307
        %v4316 = vld [vmem:[#allocation2] sm:$0x8]
        %v4317 = vld [vmem:[#allocation2 + $0x4] sm:$0xf]
        %v4318 = vld [vmem:[#allocation2 + $0x8] sm:$0xf]
        %v4319 = vld [vmem:[#allocation2 + $0xc] sm:$0xf]
        %v4320 = vld [vmem:[#allocation2 + $0x10] sm:$0xf]
        %v4321 = vld [vmem:[#allocation2 + $0x14] sm:$0xf]
        %v4322 = vld [vmem:[#allocation2 + $0x18] sm:$0xf]
        %v4323 = vld [vmem:[#allocation2 + $0x1c] sm:$0xf]
        %v4324 = vld [vmem:[#allocation2 + $0x20] sm:$0xf]
        %v4325 = vsel %vm733, %v4316, 0
        %v4326 = vsel %vm740, %v4317, 0
        %v4327 = vsel %vm747, %v4318, 0
        %v4328 = vsel %vm754, %v4319, 0
        %v4329 = vsel %vm761, %v4320, 0
        %v4330 = vsel %vm768, %v4321, 0
        %v4331 = vsel %vm775, %v4322, 0
        %v4332 = vsel %vm782, %v4323, 0
        %v4333 = vsel %vm789, %v4324, 0
        %v4334 = vld [vmem:[%s5] sm:$0xf]
        %v4335 = vld [vmem:[%s5 + $0x4] sm:$0xf]
        %v4336 = vld [vmem:[%s5 + $0x8] sm:$0xf]
        %v4337 = vld [vmem:[%s5 + $0xc] sm:$0xf]
        %v4338 = vld [vmem:[%s5 + $0x10] sm:$0xf]
        %v4339 = vld [vmem:[%s5 + $0x14] sm:$0xf]
        %v4340 = vld [vmem:[%s5 + $0x18] sm:$0xf]
        %v4341 = vld [vmem:[%s5 + $0x1c] sm:$0xf]
        %v4342 = vsel %vm843, %v4317, 0
        %v4343 = vsel %vm844, %v4318, 0
        %v4344 = vsel %vm845, %v4319, 0
        %v4345 = vsel %vm846, %v4320, 0
        %v4346 = vsel %vm847, %v4321, 0
        %v4347 = vsel %vm848, %v4322, 0
        %v4348 = vsel %vm849, %v4323, 0
        %v4349 = vsel %vm850, %v4324, 0
        %s4350 = scalar_lea.vmem %s5, 32
        %v4351 = vld [vmem:[%s4350] sm:$0xf]
        %v4352 = vld [vmem:[%s4350 + $0x4] sm:$0xf]
        %v4353 = vld [vmem:[%s4350 + $0x8] sm:$0xf]
        %v4354 = vld [vmem:[%s4350 + $0xc] sm:$0xf]
        %v4355 = vld [vmem:[%s4350 + $0x10] sm:$0xf]
        %v4356 = vld [vmem:[%s4350 + $0x14] sm:$0xf]
        %v4357 = vld [vmem:[%s4350 + $0x18] sm:$0xf]
        %v4358 = vld [vmem:[%s4350 + $0x1c] sm:$0xf]
        %v4367 = vunpack.c.l.b16 %v4342
        %v4368 = vunpack.c.l.b16 %v4343
        %v4369 = vunpack.c.l.b16 %v4344
        %v4370 = vunpack.c.l.b16 %v4345
        %v4371 = vunpack.c.l.b16 %v4346
        %v4372 = vunpack.c.l.b16 %v4347
        %v4373 = vunpack.c.l.b16 %v4348
        %v4374 = vunpack.c.l.b16 %v4349
        %v4375 = vpack.c.b16 %v4368, %v4367
        %v4376 = vpack.c.b16 %v4370, %v4369
        %v4377 = vpack.c.b16 %v4372, %v4371
        %v4378 = vpack.c.b16 %v4374, %v4373
        %v4387 = vunpack.c.l.b16 %v4351
        %v4388 = vunpack.c.l.b16 %v4352
        %v4389 = vunpack.c.l.b16 %v4353
        %v4390 = vunpack.c.l.b16 %v4354
        %v4391 = vunpack.c.l.b16 %v4355
        %v4392 = vunpack.c.l.b16 %v4356
        %v4393 = vunpack.c.l.b16 %v4357
        %v4394 = vunpack.c.l.b16 %v4358
        %v4395 = vpack.c.b16 %v4388, %v4387
        %v4396 = vpack.c.b16 %v4390, %v4389
        %v4397 = vpack.c.b16 %v4392, %v4391
        %v4398 = vpack.c.b16 %v4394, %v4393
        %v4404 = vsel %vm3097, %v4375, 0
        %v4407 = vsel %vm3097, %v4376, 0
        %v4410 = vsel %vm3097, %v4377, 0
        %v4413 = vsel %vm3097, %v4378, 0
        %4415 = vmatpush.bf16.msra.mxu0 0
        %4416 = vmatpush.bf16.msra.mxu0 0
        %4417 = vmatpush.bf16.msra.mxu0 0
        %4418 = vmatpush.bf16.msra.mxu0 0
        %4419 = vmatpush.bf16.msra.mxu0 %v4398
        %4420 = vmatpush.bf16.msra.mxu0 %v4397
        %4421 = vmatpush.bf16.msra.mxu0 %v4396
        %4422 = vmatpush.bf16.msra.mxu0 %v4395
        %4423 = vmatmul.bf16.gmra.mxu0 %v4404
        %v4424 = vpop.f32.mrf.mxu0
        %v4425 = vadd.f32 0.0, %v4424
        %v4426 = vpop.f32.mrf.mxu0
        %v4427 = vadd.f32 0.0, %v4426
        %4428 = vmatmul.bf16.gmra.mxu0 %v4407
        %v4429 = vpop.f32.mrf.mxu0
        %v4430 = vadd.f32 0.0, %v4429
        %v4431 = vpop.f32.mrf.mxu0
        %v4432 = vadd.f32 0.0, %v4431
        %4433 = vmatmul.bf16.gmra.mxu0 %v4410
        %v4434 = vpop.f32.mrf.mxu0
        %v4435 = vadd.f32 0.0, %v4434
        %v4436 = vpop.f32.mrf.mxu0
        %v4437 = vadd.f32 0.0, %v4436
        %4438 = vmatmul.bf16.gmra.mxu0 %v4413
        %v4439 = vpop.f32.mrf.mxu0
        %v4440 = vadd.f32 0.0, %v4439
        %v4441 = vpop.f32.mrf.mxu0
        %v4442 = vadd.f32 0.0, %v4441
        %4443 = vdwg.mxu0
        %v4453 = vunpack.c.l.b16 %v4325
        %v4454 = vunpack.c.l.b16 %v4326
        %v4455 = vunpack.c.l.b16 %v4327
        %v4456 = vunpack.c.l.b16 %v4328
        %v4457 = vunpack.c.l.b16 %v4329
        %v4458 = vunpack.c.l.b16 %v4330
        %v4459 = vunpack.c.l.b16 %v4331
        %v4460 = vunpack.c.l.b16 %v4332
        %v4461 = vunpack.c.l.b16 %v4333
        %v4462 = vpack.c.b16 %v4454, %v4453
        %v4463 = vpack.c.b16 %v4456, %v4455
        %v4464 = vpack.c.b16 %v4458, %v4457
        %v4465 = vpack.c.b16 %v4460, %v4459
        %v4466 = vpack.c.b16 %v4461, %v4461
        %v4468 = vshrl.u32 %v4462, 16
        %v4470 = vrot.slane %v4468, 3
        %v4471 = vshll.u32 %v4462, 16
        %v4473 = vrot.slane %v4471, 4
        %v4474 = vor.u32 %v4470, %v4473
        %v4476 = vshrl.u32 %v4463, 16
        %v4478 = vrot.slane %v4476, 3
        %v4479 = vshll.u32 %v4463, 16
        %v4481 = vrot.slane %v4479, 4
        %v4482 = vor.u32 %v4478, %v4481
        %v4483 = vsel %vm961, %v4474, %v4482
        %v4485 = vshrl.u32 %v4464, 16
        %v4487 = vrot.slane %v4485, 3
        %v4488 = vshll.u32 %v4464, 16
        %v4490 = vrot.slane %v4488, 4
        %v4491 = vor.u32 %v4487, %v4490
        %v4492 = vsel %vm961, %v4482, %v4491
        %v4494 = vshrl.u32 %v4465, 16
        %v4496 = vrot.slane %v4494, 3
        %v4497 = vshll.u32 %v4465, 16
        %v4499 = vrot.slane %v4497, 4
        %v4500 = vor.u32 %v4496, %v4499
        %v4501 = vsel %vm961, %v4491, %v4500
        %v4503 = vshrl.u32 %v4466, 16
        %v4505 = vrot.slane %v4503, 3
        %v4506 = vshll.u32 %v4466, 16
        %v4508 = vrot.slane %v4506, 4
        %v4509 = vor.u32 %v4505, %v4508
        %v4510 = vsel %vm961, %v4500, %v4509
        %v4519 = vunpack.c.l.b16 %v4334
        %v4520 = vunpack.c.l.b16 %v4335
        %v4521 = vunpack.c.l.b16 %v4336
        %v4522 = vunpack.c.l.b16 %v4337
        %v4523 = vunpack.c.l.b16 %v4338
        %v4524 = vunpack.c.l.b16 %v4339
        %v4525 = vunpack.c.l.b16 %v4340
        %v4526 = vunpack.c.l.b16 %v4341
        %v4527 = vpack.c.b16 %v4520, %v4519
        %v4528 = vpack.c.b16 %v4522, %v4521
        %v4529 = vpack.c.b16 %v4524, %v4523
        %v4530 = vpack.c.b16 %v4526, %v4525
        %v4536 = vsel %vm3097, %v4483, 0
        %v4539 = vsel %vm3097, %v4492, 0
        %v4542 = vsel %vm3097, %v4501, 0
        %v4545 = vsel %vm3097, %v4510, 0
        %4547 = vmatpush.bf16.msra.mxu0 0
        %4548 = vmatpush.bf16.msra.mxu0 0
        %4549 = vmatpush.bf16.msra.mxu0 0
        %4550 = vmatpush.bf16.msra.mxu0 0
        %4551 = vmatpush.bf16.msra.mxu0 %v4530
        %4552 = vmatpush.bf16.msra.mxu0 %v4529
        %4553 = vmatpush.bf16.msra.mxu0 %v4528
        %4554 = vmatpush.bf16.msra.mxu0 %v4527
        %4555 = vmatmul.bf16.gmra.mxu0 %v4536
        %v4556 = vpop.f32.mrf.mxu0
        %v4557 = vadd.f32 %v4425, %v4556
        %v4558 = vpop.f32.mrf.mxu0
        %v4559 = vadd.f32 %v4427, %v4558
        %4560 = vmatmul.bf16.gmra.mxu0 %v4539
        %v4561 = vpop.f32.mrf.mxu0
        %v4562 = vadd.f32 %v4430, %v4561
        %v4563 = vpop.f32.mrf.mxu0
        %v4564 = vadd.f32 %v4432, %v4563
        %4565 = vmatmul.bf16.gmra.mxu0 %v4542
        %v4566 = vpop.f32.mrf.mxu0
        %v4567 = vadd.f32 %v4435, %v4566
        %v4568 = vpop.f32.mrf.mxu0
        %v4569 = vadd.f32 %v4437, %v4568
        %4570 = vmatmul.bf16.gmra.mxu0 %v4545
        %v4571 = vpop.f32.mrf.mxu0
        %v4572 = vadd.f32 %v4440, %v4571
        %v4573 = vpop.f32.mrf.mxu0
        %v4574 = vadd.f32 %v4442, %v4573
        %4575 = vdwg.mxu0
        %v4576 = vld [vmem:[#allocation2 + $0x4] sm:$0xf]
        %v4577 = vld [vmem:[#allocation2 + $0x8] sm:$0xf]
        %v4578 = vld [vmem:[#allocation2 + $0xc] sm:$0xf]
        %v4579 = vld [vmem:[#allocation2 + $0x10] sm:$0xf]
        %v4580 = vld [vmem:[#allocation2 + $0x14] sm:$0xf]
        %v4581 = vld [vmem:[#allocation2 + $0x18] sm:$0xf]
        %v4582 = vld [vmem:[#allocation2 + $0x1c] sm:$0xf]
        %v4583 = vld [vmem:[#allocation2 + $0x20] sm:$0xf]
        %v4584 = vld [vmem:[#allocation2 + $0x24] sm:$0x1]
        %v4585 = vsel %vm1204, %v4576, 0
        %v4586 = vsel %vm1211, %v4577, 0
        %v4587 = vsel %vm1218, %v4578, 0
        %v4588 = vsel %vm1225, %v4579, 0
        %v4589 = vsel %vm1232, %v4580, 0
        %v4590 = vsel %vm1239, %v4581, 0
        %v4591 = vsel %vm1246, %v4582, 0
        %v4592 = vsel %vm1253, %v4583, 0
        %v4593 = vsel %vm1260, %v4584, 0
        %s4594 = scalar_lea.vmem %s5, 64
        %v4595 = vld [vmem:[%s4594] sm:$0xf]
        %v4596 = vld [vmem:[%s4594 + $0x4] sm:$0xf]
        %v4597 = vld [vmem:[%s4594 + $0x8] sm:$0xf]
        %v4598 = vld [vmem:[%s4594 + $0xc] sm:$0xf]
        %v4599 = vld [vmem:[%s4594 + $0x10] sm:$0xf]
        %v4600 = vld [vmem:[%s4594 + $0x14] sm:$0xf]
        %v4601 = vld [vmem:[%s4594 + $0x18] sm:$0xf]
        %v4602 = vld [vmem:[%s4594 + $0x1c] sm:$0xf]
        %v4612 = vunpack.c.l.b16 %v4585
        %v4613 = vunpack.c.l.b16 %v4586
        %v4614 = vunpack.c.l.b16 %v4587
        %v4615 = vunpack.c.l.b16 %v4588
        %v4616 = vunpack.c.l.b16 %v4589
        %v4617 = vunpack.c.l.b16 %v4590
        %v4618 = vunpack.c.l.b16 %v4591
        %v4619 = vunpack.c.l.b16 %v4592
        %v4620 = vunpack.c.l.b16 %v4593
        %v4621 = vpack.c.b16 %v4613, %v4612
        %v4622 = vpack.c.b16 %v4615, %v4614
        %v4623 = vpack.c.b16 %v4617, %v4616
        %v4624 = vpack.c.b16 %v4619, %v4618
        %v4625 = vpack.c.b16 %v4620, %v4620
        %v4627 = vshrl.u32 %v4621, 16
        %v4629 = vshll.u32 %v4621, 16
        %v4631 = vrot.slane %v4629, 1
        %v4632 = vor.u32 %v4627, %v4631
        %v4634 = vshll.u32 %v4622, 16
        %v4636 = vrot.slane %v4634, 1
        %v4637 = vsel %vm1298, %v4632, %v4636
        %v4638 = vshrl.u32 %v4622, 16
        %v4640 = vor.u32 %v4638, %v4636
        %v4642 = vshll.u32 %v4623, 16
        %v4644 = vrot.slane %v4642, 1
        %v4645 = vsel %vm1298, %v4640, %v4644
        %v4646 = vshrl.u32 %v4623, 16
        %v4648 = vor.u32 %v4646, %v4644
        %v4650 = vshll.u32 %v4624, 16
        %v4652 = vrot.slane %v4650, 1
        %v4653 = vsel %vm1298, %v4648, %v4652
        %v4654 = vshrl.u32 %v4624, 16
        %v4656 = vor.u32 %v4654, %v4652
        %v4658 = vshll.u32 %v4625, 16
        %v4660 = vrot.slane %v4658, 1
        %v4661 = vsel %vm1298, %v4656, %v4660
        %v4670 = vunpack.c.l.b16 %v4595
        %v4671 = vunpack.c.l.b16 %v4596
        %v4672 = vunpack.c.l.b16 %v4597
        %v4673 = vunpack.c.l.b16 %v4598
        %v4674 = vunpack.c.l.b16 %v4599
        %v4675 = vunpack.c.l.b16 %v4600
        %v4676 = vunpack.c.l.b16 %v4601
        %v4677 = vunpack.c.l.b16 %v4602
        %v4678 = vpack.c.b16 %v4671, %v4670
        %v4679 = vpack.c.b16 %v4673, %v4672
        %v4680 = vpack.c.b16 %v4675, %v4674
        %v4681 = vpack.c.b16 %v4677, %v4676
        %v4687 = vsel %vm3097, %v4637, 0
        %v4690 = vsel %vm3097, %v4645, 0
        %v4693 = vsel %vm3097, %v4653, 0
        %v4696 = vsel %vm3097, %v4661, 0
        %4698 = vmatpush.bf16.msra.mxu0 0
        %4699 = vmatpush.bf16.msra.mxu0 0
        %4700 = vmatpush.bf16.msra.mxu0 0
        %4701 = vmatpush.bf16.msra.mxu0 0
        %4702 = vmatpush.bf16.msra.mxu0 %v4681
        %4703 = vmatpush.bf16.msra.mxu0 %v4680
        %4704 = vmatpush.bf16.msra.mxu0 %v4679
        %4705 = vmatpush.bf16.msra.mxu0 %v4678
        %4706 = vmatmul.bf16.gmra.mxu0 %v4687
        %v4707 = vpop.f32.mrf.mxu0
        %v4708 = vadd.f32 0.0, %v4707
        %v4709 = vpop.f32.mrf.mxu0
        %v4710 = vadd.f32 0.0, %v4709
        %4711 = vmatmul.bf16.gmra.mxu0 %v4690
        %v4712 = vpop.f32.mrf.mxu0
        %v4713 = vadd.f32 0.0, %v4712
        %v4714 = vpop.f32.mrf.mxu0
        %v4715 = vadd.f32 0.0, %v4714
        %4716 = vmatmul.bf16.gmra.mxu0 %v4693
        %v4717 = vpop.f32.mrf.mxu0
        %v4718 = vadd.f32 0.0, %v4717
        %v4719 = vpop.f32.mrf.mxu0
        %v4720 = vadd.f32 0.0, %v4719
        %4721 = vmatmul.bf16.gmra.mxu0 %v4696
        %v4722 = vpop.f32.mrf.mxu0
        %v4723 = vadd.f32 0.0, %v4722
        %v4724 = vpop.f32.mrf.mxu0
        %v4725 = vadd.f32 0.0, %v4724
        %4726 = vdwg.mxu0
        %v4727 = vadd.f32 %v4557, %v4708
        %v4728 = vadd.f32 %v4559, %v4710
        %v4729 = vadd.f32 %v4562, %v4713
        %v4730 = vadd.f32 %v4564, %v4715
        %v4731 = vadd.f32 %v4567, %v4718
        %v4732 = vadd.f32 %v4569, %v4720
        %v4733 = vadd.f32 %v4572, %v4723
        %v4734 = vadd.f32 %v4574, %v4725
        %v4735 = vld [vmem:[#allocation2 + $0x4] sm:$0x8]
        %v4736 = vld [vmem:[#allocation2 + $0x24] sm:$0xf]
        %v4737 = vsel %vm1539, %v4735, 0
        %v4738 = vsel %vm1546, %v4577, 0
        %v4739 = vsel %vm1553, %v4578, 0
        %v4740 = vsel %vm1560, %v4579, 0
        %v4741 = vsel %vm1567, %v4580, 0
        %v4742 = vsel %vm1574, %v4581, 0
        %v4743 = vsel %vm1581, %v4582, 0
        %v4744 = vsel %vm1588, %v4583, 0
        %v4745 = vsel %vm1595, %v4736, 0
        %s4746 = scalar_lea.vmem %s5, 96
        %v4747 = vld [vmem:[%s4746] sm:$0xf]
        %v4748 = vld [vmem:[%s4746 + $0x4] sm:$0xf]
        %v4749 = vld [vmem:[%s4746 + $0x8] sm:$0xf]
        %v4750 = vld [vmem:[%s4746 + $0xc] sm:$0xf]
        %v4751 = vld [vmem:[%s4746 + $0x10] sm:$0xf]
        %v4752 = vld [vmem:[%s4746 + $0x14] sm:$0xf]
        %v4753 = vld [vmem:[%s4746 + $0x18] sm:$0xf]
        %v4754 = vld [vmem:[%s4746 + $0x1c] sm:$0xf]
        %v4764 = vunpack.c.l.b16 %v4737
        %v4765 = vunpack.c.l.b16 %v4738
        %v4766 = vunpack.c.l.b16 %v4739
        %v4767 = vunpack.c.l.b16 %v4740
        %v4768 = vunpack.c.l.b16 %v4741
        %v4769 = vunpack.c.l.b16 %v4742
        %v4770 = vunpack.c.l.b16 %v4743
        %v4771 = vunpack.c.l.b16 %v4744
        %v4772 = vunpack.c.l.b16 %v4745
        %v4773 = vpack.c.b16 %v4765, %v4764
        %v4774 = vpack.c.b16 %v4767, %v4766
        %v4775 = vpack.c.b16 %v4769, %v4768
        %v4776 = vpack.c.b16 %v4771, %v4770
        %v4777 = vpack.c.b16 %v4772, %v4772
        %v4779 = vshrl.u32 %v4773, 16
        %v4781 = vrot.slane %v4779, 3
        %v4782 = vshll.u32 %v4773, 16
        %v4784 = vrot.slane %v4782, 4
        %v4785 = vor.u32 %v4781, %v4784
        %v4787 = vshrl.u32 %v4774, 16
        %v4789 = vrot.slane %v4787, 3
        %v4790 = vshll.u32 %v4774, 16
        %v4792 = vrot.slane %v4790, 4
        %v4793 = vor.u32 %v4789, %v4792
        %v4794 = vsel %vm961, %v4785, %v4793
        %v4796 = vshrl.u32 %v4775, 16
        %v4798 = vrot.slane %v4796, 3
        %v4799 = vshll.u32 %v4775, 16
        %v4801 = vrot.slane %v4799, 4
        %v4802 = vor.u32 %v4798, %v4801
        %v4803 = vsel %vm961, %v4793, %v4802
        %v4805 = vshrl.u32 %v4776, 16
        %v4807 = vrot.slane %v4805, 3
        %v4808 = vshll.u32 %v4776, 16
        %v4810 = vrot.slane %v4808, 4
        %v4811 = vor.u32 %v4807, %v4810
        %v4812 = vsel %vm961, %v4802, %v4811
        %v4814 = vshrl.u32 %v4777, 16
        %v4816 = vrot.slane %v4814, 3
        %v4817 = vshll.u32 %v4777, 16
        %v4819 = vrot.slane %v4817, 4
        %v4820 = vor.u32 %v4816, %v4819
        %v4821 = vsel %vm961, %v4811, %v4820
        %v4830 = vunpack.c.l.b16 %v4747
        %v4831 = vunpack.c.l.b16 %v4748
        %v4832 = vunpack.c.l.b16 %v4749
        %v4833 = vunpack.c.l.b16 %v4750
        %v4834 = vunpack.c.l.b16 %v4751
        %v4835 = vunpack.c.l.b16 %v4752
        %v4836 = vunpack.c.l.b16 %v4753
        %v4837 = vunpack.c.l.b16 %v4754
        %v4838 = vpack.c.b16 %v4831, %v4830
        %v4839 = vpack.c.b16 %v4833, %v4832
        %v4840 = vpack.c.b16 %v4835, %v4834
        %v4841 = vpack.c.b16 %v4837, %v4836
        %v4847 = vsel %vm3097, %v4794, 0
        %v4850 = vsel %vm3097, %v4803, 0
        %v4853 = vsel %vm3097, %v4812, 0
        %v4856 = vsel %vm3097, %v4821, 0
        %4858 = vmatpush.bf16.msra.mxu0 0
        %4859 = vmatpush.bf16.msra.mxu0 0
        %4860 = vmatpush.bf16.msra.mxu0 0
        %4861 = vmatpush.bf16.msra.mxu0 0
        %4862 = vmatpush.bf16.msra.mxu0 %v4841
        %4863 = vmatpush.bf16.msra.mxu0 %v4840
        %4864 = vmatpush.bf16.msra.mxu0 %v4839
        %4865 = vmatpush.bf16.msra.mxu0 %v4838
        %4866 = vmatmul.bf16.gmra.mxu0 %v4847
        %v4867 = vpop.f32.mrf.mxu0
        %v4868 = vadd.f32 0.0, %v4867
        %v4869 = vpop.f32.mrf.mxu0
        %v4870 = vadd.f32 0.0, %v4869
        %4871 = vmatmul.bf16.gmra.mxu0 %v4850
        %v4872 = vpop.f32.mrf.mxu0
        %v4873 = vadd.f32 0.0, %v4872
        %v4874 = vpop.f32.mrf.mxu0
        %v4875 = vadd.f32 0.0, %v4874
        %4876 = vmatmul.bf16.gmra.mxu0 %v4853
        %v4877 = vpop.f32.mrf.mxu0
        %v4878 = vadd.f32 0.0, %v4877
        %v4879 = vpop.f32.mrf.mxu0
        %v4880 = vadd.f32 0.0, %v4879
        %4881 = vmatmul.bf16.gmra.mxu0 %v4856
        %v4882 = vpop.f32.mrf.mxu0
        %v4883 = vadd.f32 0.0, %v4882
        %v4884 = vpop.f32.mrf.mxu0
        %v4885 = vadd.f32 0.0, %v4884
        %4886 = vdwg.mxu0
        %v4887 = vadd.f32 %v4727, %v4868
        %v4888 = vadd.f32 %v4728, %v4870
        %v4889 = vadd.f32 %v4729, %v4873
        %v4890 = vadd.f32 %v4730, %v4875
        %v4891 = vadd.f32 %v4731, %v4878
        %v4892 = vadd.f32 %v4732, %v4880
        %v4893 = vadd.f32 %v4733, %v4883
        %v4894 = vadd.f32 %v4734, %v4885
        %s4895 = scalar_lea.vmem %s5, 128
        %v4896 = vld [vmem:[%s4895] sm:$0xf]
        %v4897 = vld [vmem:[%s4895 + $0x4] sm:$0xf]
        %v4898 = vld [vmem:[%s4895 + $0x8] sm:$0xf]
        %v4899 = vld [vmem:[%s4895 + $0xc] sm:$0xf]
        %v4900 = vld [vmem:[%s4895 + $0x10] sm:$0xf]
        %v4901 = vld [vmem:[%s4895 + $0x14] sm:$0xf]
        %v4902 = vld [vmem:[%s4895 + $0x18] sm:$0xf]
        %v4903 = vld [vmem:[%s4895 + $0x1c] sm:$0xf]
        %v4912 = vunpack.c.l.b16 %v4300
        %v4913 = vunpack.c.l.b16 %v4301
        %v4914 = vunpack.c.l.b16 %v4302
        %v4915 = vunpack.c.l.b16 %v4303
        %v4916 = vunpack.c.l.b16 %v4304
        %v4917 = vunpack.c.l.b16 %v4305
        %v4918 = vunpack.c.l.b16 %v4306
        %v4919 = vunpack.c.l.b16 %v4307
        %v4920 = vpack.c.b16 %v4913, %v4912
        %v4921 = vpack.c.b16 %v4915, %v4914
        %v4922 = vpack.c.b16 %v4917, %v4916
        %v4923 = vpack.c.b16 %v4919, %v4918
        %v4932 = vunpack.c.l.b16 %v4896
        %v4933 = vunpack.c.l.b16 %v4897
        %v4934 = vunpack.c.l.b16 %v4898
        %v4935 = vunpack.c.l.b16 %v4899
        %v4936 = vunpack.c.l.b16 %v4900
        %v4937 = vunpack.c.l.b16 %v4901
        %v4938 = vunpack.c.l.b16 %v4902
        %v4939 = vunpack.c.l.b16 %v4903
        %v4940 = vpack.c.b16 %v4933, %v4932
        %v4941 = vpack.c.b16 %v4935, %v4934
        %v4942 = vpack.c.b16 %v4937, %v4936
        %v4943 = vpack.c.b16 %v4939, %v4938
        %v4949 = vsel %vm3097, %v4920, 0
        %v4952 = vsel %vm3097, %v4921, 0
        %v4955 = vsel %vm3097, %v4922, 0
        %v4958 = vsel %vm3097, %v4923, 0
        %4960 = vmatpush.bf16.msra.mxu0 0
        %4961 = vmatpush.bf16.msra.mxu0 0
        %4962 = vmatpush.bf16.msra.mxu0 0
        %4963 = vmatpush.bf16.msra.mxu0 0
        %4964 = vmatpush.bf16.msra.mxu0 %v4943
        %4965 = vmatpush.bf16.msra.mxu0 %v4942
        %4966 = vmatpush.bf16.msra.mxu0 %v4941
        %4967 = vmatpush.bf16.msra.mxu0 %v4940
        %4968 = vmatmul.bf16.gmra.mxu0 %v4949
        %v4969 = vpop.f32.mrf.mxu0
        %v4970 = vadd.f32 0.0, %v4969
        %v4971 = vpop.f32.mrf.mxu0
        %v4972 = vadd.f32 0.0, %v4971
        %4973 = vmatmul.bf16.gmra.mxu0 %v4952
        %v4974 = vpop.f32.mrf.mxu0
        %v4975 = vadd.f32 0.0, %v4974
        %v4976 = vpop.f32.mrf.mxu0
        %v4977 = vadd.f32 0.0, %v4976
        %4978 = vmatmul.bf16.gmra.mxu0 %v4955
        %v4979 = vpop.f32.mrf.mxu0
        %v4980 = vadd.f32 0.0, %v4979
        %v4981 = vpop.f32.mrf.mxu0
        %v4982 = vadd.f32 0.0, %v4981
        %4983 = vmatmul.bf16.gmra.mxu0 %v4958
        %v4984 = vpop.f32.mrf.mxu0
        %v4985 = vadd.f32 0.0, %v4984
        %v4986 = vpop.f32.mrf.mxu0
        %v4987 = vadd.f32 0.0, %v4986
        %4988 = vdwg.mxu0
        %v4989 = vadd.f32 %v4887, %v4970
        %v4990 = vadd.f32 %v4888, %v4972
        %v4991 = vadd.f32 %v4889, %v4975
        %v4992 = vadd.f32 %v4890, %v4977
        %v4993 = vadd.f32 %v4891, %v4980
        %v4994 = vadd.f32 %v4892, %v4982
        %v4995 = vadd.f32 %v4893, %v4985
        %v4996 = vadd.f32 %v4894, %v4987
        %v4997 = vld [vmem:[#allocation2 + $0x8] sm:$0xf]
        %v4998 = vld [vmem:[#allocation2 + $0xc] sm:$0xf]
        %v4999 = vld [vmem:[#allocation2 + $0x10] sm:$0xf]
        %v5000 = vld [vmem:[#allocation2 + $0x14] sm:$0xf]
        %v5001 = vld [vmem:[#allocation2 + $0x18] sm:$0xf]
        %v5002 = vld [vmem:[#allocation2 + $0x1c] sm:$0xf]
        %v5003 = vld [vmem:[#allocation2 + $0x20] sm:$0xf]
        %v5004 = vld [vmem:[#allocation2 + $0x24] sm:$0xf]
        %v5005 = vld [vmem:[#allocation2 + $0x28] sm:$0x1]
        %v5006 = vsel %vm1966, %v4997, 0
        %v5007 = vsel %vm1973, %v4998, 0
        %v5008 = vsel %vm1980, %v4999, 0
        %v5009 = vsel %vm1987, %v5000, 0
        %v5010 = vsel %vm1994, %v5001, 0
        %v5011 = vsel %vm2001, %v5002, 0
        %v5012 = vsel %vm2008, %v5003, 0
        %v5013 = vsel %vm2015, %v5004, 0
        %v5014 = vsel %vm2022, %v5005, 0
        %s5015 = scalar_lea.vmem %s5, 160
        %v5016 = vld [vmem:[%s5015] sm:$0xf]
        %v5017 = vld [vmem:[%s5015 + $0x4] sm:$0xf]
        %v5018 = vld [vmem:[%s5015 + $0x8] sm:$0xf]
        %v5019 = vld [vmem:[%s5015 + $0xc] sm:$0xf]
        %v5020 = vld [vmem:[%s5015 + $0x10] sm:$0xf]
        %v5021 = vld [vmem:[%s5015 + $0x14] sm:$0xf]
        %v5022 = vld [vmem:[%s5015 + $0x18] sm:$0xf]
        %v5023 = vld [vmem:[%s5015 + $0x1c] sm:$0xf]
        %v5033 = vunpack.c.l.b16 %v5006
        %v5034 = vunpack.c.l.b16 %v5007
        %v5035 = vunpack.c.l.b16 %v5008
        %v5036 = vunpack.c.l.b16 %v5009
        %v5037 = vunpack.c.l.b16 %v5010
        %v5038 = vunpack.c.l.b16 %v5011
        %v5039 = vunpack.c.l.b16 %v5012
        %v5040 = vunpack.c.l.b16 %v5013
        %v5041 = vunpack.c.l.b16 %v5014
        %v5042 = vpack.c.b16 %v5034, %v5033
        %v5043 = vpack.c.b16 %v5036, %v5035
        %v5044 = vpack.c.b16 %v5038, %v5037
        %v5045 = vpack.c.b16 %v5040, %v5039
        %v5046 = vpack.c.b16 %v5041, %v5041
        %v5048 = vshrl.u32 %v5042, 16
        %v5050 = vshll.u32 %v5042, 16
        %v5052 = vrot.slane %v5050, 1
        %v5053 = vor.u32 %v5048, %v5052
        %v5055 = vshll.u32 %v5043, 16
        %v5057 = vrot.slane %v5055, 1
        %v5058 = vsel %vm1298, %v5053, %v5057
        %v5059 = vshrl.u32 %v5043, 16
        %v5061 = vor.u32 %v5059, %v5057
        %v5063 = vshll.u32 %v5044, 16
        %v5065 = vrot.slane %v5063, 1
        %v5066 = vsel %vm1298, %v5061, %v5065
        %v5067 = vshrl.u32 %v5044, 16
        %v5069 = vor.u32 %v5067, %v5065
        %v5071 = vshll.u32 %v5045, 16
        %v5073 = vrot.slane %v5071, 1
        %v5074 = vsel %vm1298, %v5069, %v5073
        %v5075 = vshrl.u32 %v5045, 16
        %v5077 = vor.u32 %v5075, %v5073
        %v5079 = vshll.u32 %v5046, 16
        %v5081 = vrot.slane %v5079, 1
        %v5082 = vsel %vm1298, %v5077, %v5081
        %v5091 = vunpack.c.l.b16 %v5016
        %v5092 = vunpack.c.l.b16 %v5017
        %v5093 = vunpack.c.l.b16 %v5018
        %v5094 = vunpack.c.l.b16 %v5019
        %v5095 = vunpack.c.l.b16 %v5020
        %v5096 = vunpack.c.l.b16 %v5021
        %v5097 = vunpack.c.l.b16 %v5022
        %v5098 = vunpack.c.l.b16 %v5023
        %v5099 = vpack.c.b16 %v5092, %v5091
        %v5100 = vpack.c.b16 %v5094, %v5093
        %v5101 = vpack.c.b16 %v5096, %v5095
        %v5102 = vpack.c.b16 %v5098, %v5097
        %v5108 = vsel %vm3097, %v5058, 0
        %v5111 = vsel %vm3097, %v5066, 0
        %v5114 = vsel %vm3097, %v5074, 0
        %v5117 = vsel %vm3097, %v5082, 0
        %5119 = vmatpush.bf16.msra.mxu0 0
        %5120 = vmatpush.bf16.msra.mxu0 0
        %5121 = vmatpush.bf16.msra.mxu0 0
        %5122 = vmatpush.bf16.msra.mxu0 0
        %5123 = vmatpush.bf16.msra.mxu0 %v5102
        %5124 = vmatpush.bf16.msra.mxu0 %v5101
        %5125 = vmatpush.bf16.msra.mxu0 %v5100
        %5126 = vmatpush.bf16.msra.mxu0 %v5099
        %5127 = vmatmul.bf16.gmra.mxu0 %v5108
        %v5128 = vpop.f32.mrf.mxu0
        %v5129 = vadd.f32 0.0, %v5128
        %v5130 = vpop.f32.mrf.mxu0
        %v5131 = vadd.f32 0.0, %v5130
        %5132 = vmatmul.bf16.gmra.mxu0 %v5111
        %v5133 = vpop.f32.mrf.mxu0
        %v5134 = vadd.f32 0.0, %v5133
        %v5135 = vpop.f32.mrf.mxu0
        %v5136 = vadd.f32 0.0, %v5135
        %5137 = vmatmul.bf16.gmra.mxu0 %v5114
        %v5138 = vpop.f32.mrf.mxu0
        %v5139 = vadd.f32 0.0, %v5138
        %v5140 = vpop.f32.mrf.mxu0
        %v5141 = vadd.f32 0.0, %v5140
        %5142 = vmatmul.bf16.gmra.mxu0 %v5117
        %v5143 = vpop.f32.mrf.mxu0
        %v5144 = vadd.f32 0.0, %v5143
        %v5145 = vpop.f32.mrf.mxu0
        %v5146 = vadd.f32 0.0, %v5145
        %5147 = vdwg.mxu0
        %v5148 = vadd.f32 %v4989, %v5129
        %v5149 = vadd.f32 %v4990, %v5131
        %v5150 = vadd.f32 %v4991, %v5134
        %v5151 = vadd.f32 %v4992, %v5136
        %v5152 = vadd.f32 %v4993, %v5139
        %v5153 = vadd.f32 %v4994, %v5141
        %v5154 = vadd.f32 %v4995, %v5144
        %v5155 = vadd.f32 %v4996, %v5146
        %v5156 = vld [vmem:[#allocation2 + $0x8] sm:$0x8]
        %v5157 = vld [vmem:[#allocation2 + $0x28] sm:$0xf]
        %v5158 = vsel %vm2300, %v5156, 0
        %v5159 = vsel %vm2307, %v4998, 0
        %v5160 = vsel %vm2314, %v4999, 0
        %v5161 = vsel %vm2321, %v5000, 0
        %v5162 = vsel %vm2328, %v5001, 0
        %v5163 = vsel %vm2335, %v5002, 0
        %v5164 = vsel %vm2342, %v5003, 0
        %v5165 = vsel %vm2349, %v5004, 0
        %v5166 = vsel %vm2356, %v5157, 0
        %s5167 = scalar_lea.vmem %s5, 192
        %v5168 = vld [vmem:[%s5167] sm:$0xf]
        %v5169 = vld [vmem:[%s5167 + $0x4] sm:$0xf]
        %v5170 = vld [vmem:[%s5167 + $0x8] sm:$0xf]
        %v5171 = vld [vmem:[%s5167 + $0xc] sm:$0xf]
        %v5172 = vld [vmem:[%s5167 + $0x10] sm:$0xf]
        %v5173 = vld [vmem:[%s5167 + $0x14] sm:$0xf]
        %v5174 = vld [vmem:[%s5167 + $0x18] sm:$0xf]
        %v5175 = vld [vmem:[%s5167 + $0x1c] sm:$0xf]
        %v5185 = vunpack.c.l.b16 %v5158
        %v5186 = vunpack.c.l.b16 %v5159
        %v5187 = vunpack.c.l.b16 %v5160
        %v5188 = vunpack.c.l.b16 %v5161
        %v5189 = vunpack.c.l.b16 %v5162
        %v5190 = vunpack.c.l.b16 %v5163
        %v5191 = vunpack.c.l.b16 %v5164
        %v5192 = vunpack.c.l.b16 %v5165
        %v5193 = vunpack.c.l.b16 %v5166
        %v5194 = vpack.c.b16 %v5186, %v5185
        %v5195 = vpack.c.b16 %v5188, %v5187
        %v5196 = vpack.c.b16 %v5190, %v5189
        %v5197 = vpack.c.b16 %v5192, %v5191
        %v5198 = vpack.c.b16 %v5193, %v5193
        %v5200 = vshrl.u32 %v5194, 16
        %v5202 = vrot.slane %v5200, 3
        %v5203 = vshll.u32 %v5194, 16
        %v5205 = vrot.slane %v5203, 4
        %v5206 = vor.u32 %v5202, %v5205
        %v5208 = vshrl.u32 %v5195, 16
        %v5210 = vrot.slane %v5208, 3
        %v5211 = vshll.u32 %v5195, 16
        %v5213 = vrot.slane %v5211, 4
        %v5214 = vor.u32 %v5210, %v5213
        %v5215 = vsel %vm961, %v5206, %v5214
        %v5217 = vshrl.u32 %v5196, 16
        %v5219 = vrot.slane %v5217, 3
        %v5220 = vshll.u32 %v5196, 16
        %v5222 = vrot.slane %v5220, 4
        %v5223 = vor.u32 %v5219, %v5222
        %v5224 = vsel %vm961, %v5214, %v5223
        %v5226 = vshrl.u32 %v5197, 16
        %v5228 = vrot.slane %v5226, 3
        %v5229 = vshll.u32 %v5197, 16
        %v5231 = vrot.slane %v5229, 4
        %v5232 = vor.u32 %v5228, %v5231
        %v5233 = vsel %vm961, %v5223, %v5232
        %v5235 = vshrl.u32 %v5198, 16
        %v5237 = vrot.slane %v5235, 3
        %v5238 = vshll.u32 %v5198, 16
        %v5240 = vrot.slane %v5238, 4
        %v5241 = vor.u32 %v5237, %v5240
        %v5242 = vsel %vm961, %v5232, %v5241
        %v5251 = vunpack.c.l.b16 %v5168
        %v5252 = vunpack.c.l.b16 %v5169
        %v5253 = vunpack.c.l.b16 %v5170
        %v5254 = vunpack.c.l.b16 %v5171
        %v5255 = vunpack.c.l.b16 %v5172
        %v5256 = vunpack.c.l.b16 %v5173
        %v5257 = vunpack.c.l.b16 %v5174
        %v5258 = vunpack.c.l.b16 %v5175
        %v5259 = vpack.c.b16 %v5252, %v5251
        %v5260 = vpack.c.b16 %v5254, %v5253
        %v5261 = vpack.c.b16 %v5256, %v5255
        %v5262 = vpack.c.b16 %v5258, %v5257
        %v5268 = vsel %vm3097, %v5215, 0
        %v5271 = vsel %vm3097, %v5224, 0
        %v5274 = vsel %vm3097, %v5233, 0
        %v5277 = vsel %vm3097, %v5242, 0
        %5279 = vmatpush.bf16.msra.mxu0 0
        %5280 = vmatpush.bf16.msra.mxu0 0
        %5281 = vmatpush.bf16.msra.mxu0 0
        %5282 = vmatpush.bf16.msra.mxu0 0
        %5283 = vmatpush.bf16.msra.mxu0 %v5262
        %5284 = vmatpush.bf16.msra.mxu0 %v5261
        %5285 = vmatpush.bf16.msra.mxu0 %v5260
        %5286 = vmatpush.bf16.msra.mxu0 %v5259
        %5287 = vmatmul.bf16.gmra.mxu0 %v5268
        %v5288 = vpop.f32.mrf.mxu0
        %v5289 = vadd.f32 0.0, %v5288
        %v5290 = vpop.f32.mrf.mxu0
        %v5291 = vadd.f32 0.0, %v5290
        %5292 = vmatmul.bf16.gmra.mxu0 %v5271
        %v5293 = vpop.f32.mrf.mxu0
        %v5294 = vadd.f32 0.0, %v5293
        %v5295 = vpop.f32.mrf.mxu0
        %v5296 = vadd.f32 0.0, %v5295
        %5297 = vmatmul.bf16.gmra.mxu0 %v5274
        %v5298 = vpop.f32.mrf.mxu0
        %v5299 = vadd.f32 0.0, %v5298
        %v5300 = vpop.f32.mrf.mxu0
        %v5301 = vadd.f32 0.0, %v5300
        %5302 = vmatmul.bf16.gmra.mxu0 %v5277
        %v5303 = vpop.f32.mrf.mxu0
        %v5304 = vadd.f32 0.0, %v5303
        %v5305 = vpop.f32.mrf.mxu0
        %v5306 = vadd.f32 0.0, %v5305
        %5307 = vdwg.mxu0
        %v5308 = vadd.f32 %v5148, %v5289
        %v5309 = vadd.f32 %v5149, %v5291
        %v5310 = vadd.f32 %v5150, %v5294
        %v5311 = vadd.f32 %v5151, %v5296
        %v5312 = vadd.f32 %v5152, %v5299
        %v5313 = vadd.f32 %v5153, %v5301
        %v5314 = vadd.f32 %v5154, %v5304
        %v5315 = vadd.f32 %v5155, %v5306
        %v5316 = vsel %vm2539, %v4998, 0
        %v5317 = vsel %vm2540, %v4999, 0
        %v5318 = vsel %vm2541, %v5000, 0
        %v5319 = vsel %vm2542, %v5001, 0
        %v5320 = vsel %vm2543, %v5002, 0
        %v5321 = vsel %vm2544, %v5003, 0
        %v5322 = vsel %vm2545, %v5004, 0
        %v5323 = vsel %vm2546, %v5157, 0
        %s5324 = scalar_lea.vmem %s5, 224
        %v5325 = vld [vmem:[%s5324] sm:$0xf]
        %v5326 = vld [vmem:[%s5324 + $0x4] sm:$0xf]
        %v5327 = vld [vmem:[%s5324 + $0x8] sm:$0xf]
        %v5328 = vld [vmem:[%s5324 + $0xc] sm:$0xf]
        %v5329 = vld [vmem:[%s5324 + $0x10] sm:$0xf]
        %v5330 = vld [vmem:[%s5324 + $0x14] sm:$0xf]
        %v5331 = vld [vmem:[%s5324 + $0x18] sm:$0xf]
        %v5332 = vld [vmem:[%s5324 + $0x1c] sm:$0xf]
        %v5341 = vunpack.c.l.b16 %v5316
        %v5342 = vunpack.c.l.b16 %v5317
        %v5343 = vunpack.c.l.b16 %v5318
        %v5344 = vunpack.c.l.b16 %v5319
        %v5345 = vunpack.c.l.b16 %v5320
        %v5346 = vunpack.c.l.b16 %v5321
        %v5347 = vunpack.c.l.b16 %v5322
        %v5348 = vunpack.c.l.b16 %v5323
        %v5349 = vpack.c.b16 %v5342, %v5341
        %v5350 = vpack.c.b16 %v5344, %v5343
        %v5351 = vpack.c.b16 %v5346, %v5345
        %v5352 = vpack.c.b16 %v5348, %v5347
        %v5361 = vunpack.c.l.b16 %v5325
        %v5362 = vunpack.c.l.b16 %v5326
        %v5363 = vunpack.c.l.b16 %v5327
        %v5364 = vunpack.c.l.b16 %v5328
        %v5365 = vunpack.c.l.b16 %v5329
        %v5366 = vunpack.c.l.b16 %v5330
        %v5367 = vunpack.c.l.b16 %v5331
        %v5368 = vunpack.c.l.b16 %v5332
        %v5369 = vpack.c.b16 %v5362, %v5361
        %v5370 = vpack.c.b16 %v5364, %v5363
        %v5371 = vpack.c.b16 %v5366, %v5365
        %v5372 = vpack.c.b16 %v5368, %v5367
        %v5378 = vsel %vm3097, %v5349, 0
        %v5381 = vsel %vm3097, %v5350, 0
        %v5384 = vsel %vm3097, %v5351, 0
        %v5387 = vsel %vm3097, %v5352, 0
        %5389 = vmatpush.bf16.msra.mxu0 0
        %5390 = vmatpush.bf16.msra.mxu0 0
        %5391 = vmatpush.bf16.msra.mxu0 0
        %5392 = vmatpush.bf16.msra.mxu0 0
        %5393 = vmatpush.bf16.msra.mxu0 %v5372
        %5394 = vmatpush.bf16.msra.mxu0 %v5371
        %5395 = vmatpush.bf16.msra.mxu0 %v5370
        %5396 = vmatpush.bf16.msra.mxu0 %v5369
        %5397 = vmatmul.bf16.gmra.mxu0 %v5378
        %v5398 = vpop.f32.mrf.mxu0
        %v5399 = vadd.f32 0.0, %v5398
        %v5400 = vpop.f32.mrf.mxu0
        %v5401 = vadd.f32 0.0, %v5400
        %5402 = vmatmul.bf16.gmra.mxu0 %v5381
        %v5403 = vpop.f32.mrf.mxu0
        %v5404 = vadd.f32 0.0, %v5403
        %v5405 = vpop.f32.mrf.mxu0
        %v5406 = vadd.f32 0.0, %v5405
        %5407 = vmatmul.bf16.gmra.mxu0 %v5384
        %v5408 = vpop.f32.mrf.mxu0
        %v5409 = vadd.f32 0.0, %v5408
        %v5410 = vpop.f32.mrf.mxu0
        %v5411 = vadd.f32 0.0, %v5410
        %5412 = vmatmul.bf16.gmra.mxu0 %v5387
        %v5413 = vpop.f32.mrf.mxu0
        %v5414 = vadd.f32 0.0, %v5413
        %v5415 = vpop.f32.mrf.mxu0
        %v5416 = vadd.f32 0.0, %v5415
        %5417 = vdwg.mxu0
        %v5418 = vadd.f32 %v5308, %v5399
        %v5419 = vadd.f32 %v5309, %v5401
        %v5420 = vadd.f32 %v5310, %v5404
        %v5421 = vadd.f32 %v5311, %v5406
        %v5422 = vadd.f32 %v5312, %v5409
        %v5423 = vadd.f32 %v5313, %v5411
        %v5424 = vadd.f32 %v5314, %v5414
        %v5425 = vadd.f32 %v5315, %v5416
        %v5426 = vld [vmem:[#allocation2 + $0xc] sm:$0xf]
        %v5427 = vld [vmem:[#allocation2 + $0x10] sm:$0xf]
        %v5428 = vld [vmem:[#allocation2 + $0x14] sm:$0xf]
        %v5429 = vld [vmem:[#allocation2 + $0x18] sm:$0xf]
        %v5430 = vld [vmem:[#allocation2 + $0x1c] sm:$0xf]
        %v5431 = vld [vmem:[#allocation2 + $0x20] sm:$0xf]
        %v5432 = vld [vmem:[#allocation2 + $0x24] sm:$0xf]
        %v5433 = vld [vmem:[#allocation2 + $0x28] sm:$0xf]
        %v5434 = vld [vmem:[#allocation2 + $0x2c] sm:$0x1]
        %v5435 = vsel %vm2783, %v5426, 0
        %v5436 = vsel %vm2790, %v5427, 0
        %v5437 = vsel %vm2797, %v5428, 0
        %v5438 = vsel %vm2804, %v5429, 0
        %v5439 = vsel %vm2811, %v5430, 0
        %v5440 = vsel %vm2818, %v5431, 0
        %v5441 = vsel %vm2825, %v5432, 0
        %v5442 = vsel %vm2832, %v5433, 0
        %v5443 = vsel %vm2839, %v5434, 0
        %s5444 = scalar_lea.vmem %s5, 256
        %v5445 = vld [vmem:[%s5444] sm:$0xf]
        %v5446 = vld [vmem:[%s5444 + $0x4] sm:$0xf]
        %v5447 = vld [vmem:[%s5444 + $0x8] sm:$0xf]
        %v5448 = vld [vmem:[%s5444 + $0xc] sm:$0xf]
        %v5449 = vld [vmem:[%s5444 + $0x10] sm:$0xf]
        %v5450 = vld [vmem:[%s5444 + $0x14] sm:$0xf]
        %v5451 = vld [vmem:[%s5444 + $0x18] sm:$0xf]
        %v5452 = vld [vmem:[%s5444 + $0x1c] sm:$0xf]
        %v5462 = vunpack.c.l.b16 %v5435
        %v5463 = vunpack.c.l.b16 %v5436
        %v5464 = vunpack.c.l.b16 %v5437
        %v5465 = vunpack.c.l.b16 %v5438
        %v5466 = vunpack.c.l.b16 %v5439
        %v5467 = vunpack.c.l.b16 %v5440
        %v5468 = vunpack.c.l.b16 %v5441
        %v5469 = vunpack.c.l.b16 %v5442
        %v5470 = vunpack.c.l.b16 %v5443
        %v5471 = vpack.c.b16 %v5463, %v5462
        %v5472 = vpack.c.b16 %v5465, %v5464
        %v5473 = vpack.c.b16 %v5467, %v5466
        %v5474 = vpack.c.b16 %v5469, %v5468
        %v5475 = vpack.c.b16 %v5470, %v5470
        %v5477 = vshrl.u32 %v5471, 16
        %v5479 = vshll.u32 %v5471, 16
        %v5481 = vrot.slane %v5479, 1
        %v5482 = vor.u32 %v5477, %v5481
        %v5484 = vshll.u32 %v5472, 16
        %v5486 = vrot.slane %v5484, 1
        %v5487 = vsel %vm1298, %v5482, %v5486
        %v5488 = vshrl.u32 %v5472, 16
        %v5490 = vor.u32 %v5488, %v5486
        %v5492 = vshll.u32 %v5473, 16
        %v5494 = vrot.slane %v5492, 1
        %v5495 = vsel %vm1298, %v5490, %v5494
        %v5496 = vshrl.u32 %v5473, 16
        %v5498 = vor.u32 %v5496, %v5494
        %v5500 = vshll.u32 %v5474, 16
        %v5502 = vrot.slane %v5500, 1
        %v5503 = vsel %vm1298, %v5498, %v5502
        %v5504 = vshrl.u32 %v5474, 16
        %v5506 = vor.u32 %v5504, %v5502
        %v5508 = vshll.u32 %v5475, 16
        %v5510 = vrot.slane %v5508, 1
        %v5511 = vsel %vm1298, %v5506, %v5510
        %v5520 = vunpack.c.l.b16 %v5445
        %v5521 = vunpack.c.l.b16 %v5446
        %v5522 = vunpack.c.l.b16 %v5447
        %v5523 = vunpack.c.l.b16 %v5448
        %v5524 = vunpack.c.l.b16 %v5449
        %v5525 = vunpack.c.l.b16 %v5450
        %v5526 = vunpack.c.l.b16 %v5451
        %v5527 = vunpack.c.l.b16 %v5452
        %v5528 = vpack.c.b16 %v5521, %v5520
        %v5529 = vpack.c.b16 %v5523, %v5522
        %v5530 = vpack.c.b16 %v5525, %v5524
        %v5531 = vpack.c.b16 %v5527, %v5526
        %v5537 = vsel %vm3097, %v5487, 0
        %v5540 = vsel %vm3097, %v5495, 0
        %v5543 = vsel %vm3097, %v5503, 0
        %v5546 = vsel %vm3097, %v5511, 0
        %5548 = vmatpush.bf16.msra.mxu0 0
        %5549 = vmatpush.bf16.msra.mxu0 0
        %5550 = vmatpush.bf16.msra.mxu0 0
        %5551 = vmatpush.bf16.msra.mxu0 0
        %5552 = vmatpush.bf16.msra.mxu0 %v5531
        %5553 = vmatpush.bf16.msra.mxu0 %v5530
        %5554 = vmatpush.bf16.msra.mxu0 %v5529
        %5555 = vmatpush.bf16.msra.mxu0 %v5528
        %5556 = vmatmul.bf16.gmra.mxu0 %v5537
        %v5557 = vpop.f32.mrf.mxu0
        %v5558 = vadd.f32 0.0, %v5557
        %v5559 = vpop.f32.mrf.mxu0
        %v5560 = vadd.f32 0.0, %v5559
        %5561 = vmatmul.bf16.gmra.mxu0 %v5540
        %v5562 = vpop.f32.mrf.mxu0
        %v5563 = vadd.f32 0.0, %v5562
        %v5564 = vpop.f32.mrf.mxu0
        %v5565 = vadd.f32 0.0, %v5564
        %5566 = vmatmul.bf16.gmra.mxu0 %v5543
        %v5567 = vpop.f32.mrf.mxu0
        %v5568 = vadd.f32 0.0, %v5567
        %v5569 = vpop.f32.mrf.mxu0
        %v5570 = vadd.f32 0.0, %v5569
        %5571 = vmatmul.bf16.gmra.mxu0 %v5546
        %v5572 = vpop.f32.mrf.mxu0
        %v5573 = vadd.f32 0.0, %v5572
        %v5574 = vpop.f32.mrf.mxu0
        %v5575 = vadd.f32 0.0, %v5574
        %5576 = vdwg.mxu0
        %v5577 = vadd.f32 %v5418, %v5558
        %v5578 = vadd.f32 %v5419, %v5560
        %v5579 = vadd.f32 %v5420, %v5563
        %v5580 = vadd.f32 %v5421, %v5565
        %v5581 = vadd.f32 %v5422, %v5568
        %v5582 = vadd.f32 %v5423, %v5570
        %v5583 = vadd.f32 %v5424, %v5573
        %v5584 = vadd.f32 %v5425, %v5575
        %v5585 = vld [vmem:[%s10] sm:$0x1]
        %v5587 = vperm.slane %v5585, 0
        %v5589 = vadd.f32 %v5577, %v5587
        %v5590 = vadd.f32 %v5578, %v5587
        %v5591 = vadd.f32 %v5579, %v5587
        %v5592 = vadd.f32 %v5580, %v5587
        %v5593 = vadd.f32 %v5581, %v5587
        %v5594 = vadd.f32 %v5582, %v5587
        %v5595 = vadd.f32 %v5583, %v5587
        %v5596 = vadd.f32 %v5584, %v5587
        %v5597 = vmax.f32 %v5589, 0.0
        %v5598 = vmax.f32 %v5590, 0.0
        %v5599 = vmax.f32 %v5591, 0.0
        %v5600 = vmax.f32 %v5592, 0.0
        %v5601 = vmax.f32 %v5593, 0.0
        %v5602 = vmax.f32 %v5594, 0.0
        %v5603 = vmax.f32 %v5595, 0.0
        %v5604 = vmax.f32 %v5596, 0.0
        %v5605 = vpack.c.bf16 %v5597, %v5597
        %v5606 = vpack.c.bf16 %v5598, %v5598
        %v5607 = vpack.c.bf16 %v5599, %v5599
        %v5608 = vpack.c.bf16 %v5600, %v5600
        %v5609 = vpack.c.bf16 %v5601, %v5601
        %v5610 = vpack.c.bf16 %v5602, %v5602
        %v5611 = vpack.c.bf16 %v5603, %v5603
        %v5612 = vpack.c.bf16 %v5604, %v5604
        %5613 = vst.msk [vmem:[#allocation2 + $0x8] sm:$0xf] %vm478, %v5605
        %5614 = vst.msk [vmem:[#allocation2 + $0xc] sm:$0xf] %vm478, %v5606
        %5615 = vst.msk [vmem:[#allocation2 + $0x10] sm:$0xf] %vm478, %v5607
        %5616 = vst.msk [vmem:[#allocation2 + $0x14] sm:$0xf] %vm478, %v5608
        %5617 = vst.msk [vmem:[#allocation2 + $0x18] sm:$0xf] %vm478, %v5609
        %5618 = vst.msk [vmem:[#allocation2 + $0x1c] sm:$0xf] %vm478, %v5610
        %5619 = vst.msk [vmem:[#allocation2 + $0x20] sm:$0xf] %vm478, %v5611
        %5620 = vst.msk [vmem:[#allocation2 + $0x24] sm:$0xf] %vm478, %v5612
        %v5621 = vld [vmem:[#allocation2] sm:$0x8]
        %v5622 = vld [vmem:[#allocation2 + $0x4] sm:$0xf]
        %v5623 = vld [vmem:[#allocation2 + $0x8] sm:$0xf]
        %v5624 = vld [vmem:[#allocation2 + $0xc] sm:$0xf]
        %v5625 = vld [vmem:[#allocation2 + $0x10] sm:$0xf]
        %v5626 = vld [vmem:[#allocation2 + $0x14] sm:$0xf]
        %v5627 = vld [vmem:[#allocation2 + $0x18] sm:$0xf]
        %v5628 = vld [vmem:[#allocation2 + $0x1c] sm:$0xf]
        %v5629 = vld [vmem:[#allocation2 + $0x20] sm:$0xf]
        %v5630 = vsel %vm733, %v5621, 0
        %v5631 = vsel %vm740, %v5622, 0
        %v5632 = vsel %vm747, %v5623, 0
        %v5633 = vsel %vm754, %v5624, 0
        %v5634 = vsel %vm761, %v5625, 0
        %v5635 = vsel %vm768, %v5626, 0
        %v5636 = vsel %vm775, %v5627, 0
        %v5637 = vsel %vm782, %v5628, 0
        %v5638 = vsel %vm789, %v5629, 0
        %v5639 = vld [vmem:[#allocation5] sm:$0xf]
        %v5640 = vld [vmem:[#allocation5 + $0x4] sm:$0xf]
        %v5641 = vld [vmem:[#allocation5 + $0x8] sm:$0xf]
        %v5642 = vld [vmem:[#allocation5 + $0xc] sm:$0xf]
        %v5643 = vld [vmem:[#allocation5 + $0x10] sm:$0xf]
        %v5644 = vld [vmem:[#allocation5 + $0x14] sm:$0xf]
        %v5645 = vld [vmem:[#allocation5 + $0x18] sm:$0xf]
        %v5646 = vld [vmem:[#allocation5 + $0x1c] sm:$0xf]
        %v5647 = vsel %vm843, %v5622, 0
        %v5648 = vsel %vm844, %v5623, 0
        %v5649 = vsel %vm845, %v5624, 0
        %v5650 = vsel %vm846, %v5625, 0
        %v5651 = vsel %vm847, %v5626, 0
        %v5652 = vsel %vm848, %v5627, 0
        %v5653 = vsel %vm849, %v5628, 0
        %v5654 = vsel %vm850, %v5629, 0
        %s5655 = scalar_lea.vmem [#allocation5], 32
        %v5656 = vld [vmem:[%s5655] sm:$0xf]
        %v5657 = vld [vmem:[%s5655 + $0x4] sm:$0xf]
        %v5658 = vld [vmem:[%s5655 + $0x8] sm:$0xf]
        %v5659 = vld [vmem:[%s5655 + $0xc] sm:$0xf]
        %v5660 = vld [vmem:[%s5655 + $0x10] sm:$0xf]
        %v5661 = vld [vmem:[%s5655 + $0x14] sm:$0xf]
        %v5662 = vld [vmem:[%s5655 + $0x18] sm:$0xf]
        %v5663 = vld [vmem:[%s5655 + $0x1c] sm:$0xf]
        %v5672 = vunpack.c.l.b16 %v5647
        %v5673 = vunpack.c.l.b16 %v5648
        %v5674 = vunpack.c.l.b16 %v5649
        %v5675 = vunpack.c.l.b16 %v5650
        %v5676 = vunpack.c.l.b16 %v5651
        %v5677 = vunpack.c.l.b16 %v5652
        %v5678 = vunpack.c.l.b16 %v5653
        %v5679 = vunpack.c.l.b16 %v5654
        %v5680 = vpack.c.b16 %v5673, %v5672
        %v5681 = vpack.c.b16 %v5675, %v5674
        %v5682 = vpack.c.b16 %v5677, %v5676
        %v5683 = vpack.c.b16 %v5679, %v5678
        %v5692 = vunpack.c.l.b16 %v5656
        %v5693 = vunpack.c.l.b16 %v5657
        %v5694 = vunpack.c.l.b16 %v5658
        %v5695 = vunpack.c.l.b16 %v5659
        %v5696 = vunpack.c.l.b16 %v5660
        %v5697 = vunpack.c.l.b16 %v5661
        %v5698 = vunpack.c.l.b16 %v5662
        %v5699 = vunpack.c.l.b16 %v5663
        %v5700 = vpack.c.b16 %v5693, %v5692
        %v5701 = vpack.c.b16 %v5695, %v5694
        %v5702 = vpack.c.b16 %v5697, %v5696
        %v5703 = vpack.c.b16 %v5699, %v5698
        %v5709 = vsel %vm3097, %v5680, 0
        %v5712 = vsel %vm3097, %v5681, 0
        %v5715 = vsel %vm3097, %v5682, 0
        %v5718 = vsel %vm3097, %v5683, 0
        %5720 = vmatpush.bf16.msra.mxu0 0
        %5721 = vmatpush.bf16.msra.mxu0 0
        %5722 = vmatpush.bf16.msra.mxu0 0
        %5723 = vmatpush.bf16.msra.mxu0 0
        %5724 = vmatpush.bf16.msra.mxu0 %v5703
        %5725 = vmatpush.bf16.msra.mxu0 %v5702
        %5726 = vmatpush.bf16.msra.mxu0 %v5701
        %5727 = vmatpush.bf16.msra.mxu0 %v5700
        %5728 = vmatmul.bf16.gmra.mxu0 %v5709
        %v5729 = vpop.f32.mrf.mxu0
        %v5730 = vadd.f32 0.0, %v5729
        %v5731 = vpop.f32.mrf.mxu0
        %v5732 = vadd.f32 0.0, %v5731
        %5733 = vmatmul.bf16.gmra.mxu0 %v5712
        %v5734 = vpop.f32.mrf.mxu0
        %v5735 = vadd.f32 0.0, %v5734
        %v5736 = vpop.f32.mrf.mxu0
        %v5737 = vadd.f32 0.0, %v5736
        %5738 = vmatmul.bf16.gmra.mxu0 %v5715
        %v5739 = vpop.f32.mrf.mxu0
        %v5740 = vadd.f32 0.0, %v5739
        %v5741 = vpop.f32.mrf.mxu0
        %v5742 = vadd.f32 0.0, %v5741
        %5743 = vmatmul.bf16.gmra.mxu0 %v5718
        %v5744 = vpop.f32.mrf.mxu0
        %v5745 = vadd.f32 0.0, %v5744
        %v5746 = vpop.f32.mrf.mxu0
        %v5747 = vadd.f32 0.0, %v5746
        %5748 = vdwg.mxu0
        %v5758 = vunpack.c.l.b16 %v5630
        %v5759 = vunpack.c.l.b16 %v5631
        %v5760 = vunpack.c.l.b16 %v5632
        %v5761 = vunpack.c.l.b16 %v5633
        %v5762 = vunpack.c.l.b16 %v5634
        %v5763 = vunpack.c.l.b16 %v5635
        %v5764 = vunpack.c.l.b16 %v5636
        %v5765 = vunpack.c.l.b16 %v5637
        %v5766 = vunpack.c.l.b16 %v5638
        %v5767 = vpack.c.b16 %v5759, %v5758
        %v5768 = vpack.c.b16 %v5761, %v5760
        %v5769 = vpack.c.b16 %v5763, %v5762
        %v5770 = vpack.c.b16 %v5765, %v5764
        %v5771 = vpack.c.b16 %v5766, %v5766
        %v5773 = vshrl.u32 %v5767, 16
        %v5775 = vrot.slane %v5773, 3
        %v5776 = vshll.u32 %v5767, 16
        %v5778 = vrot.slane %v5776, 4
        %v5779 = vor.u32 %v5775, %v5778
        %v5781 = vshrl.u32 %v5768, 16
        %v5783 = vrot.slane %v5781, 3
        %v5784 = vshll.u32 %v5768, 16
        %v5786 = vrot.slane %v5784, 4
        %v5787 = vor.u32 %v5783, %v5786
        %v5788 = vsel %vm961, %v5779, %v5787
        %v5790 = vshrl.u32 %v5769, 16
        %v5792 = vrot.slane %v5790, 3
        %v5793 = vshll.u32 %v5769, 16
        %v5795 = vrot.slane %v5793, 4
        %v5796 = vor.u32 %v5792, %v5795
        %v5797 = vsel %vm961, %v5787, %v5796
        %v5799 = vshrl.u32 %v5770, 16
        %v5801 = vrot.slane %v5799, 3
        %v5802 = vshll.u32 %v5770, 16
        %v5804 = vrot.slane %v5802, 4
        %v5805 = vor.u32 %v5801, %v5804
        %v5806 = vsel %vm961, %v5796, %v5805
        %v5808 = vshrl.u32 %v5771, 16
        %v5810 = vrot.slane %v5808, 3
        %v5811 = vshll.u32 %v5771, 16
        %v5813 = vrot.slane %v5811, 4
        %v5814 = vor.u32 %v5810, %v5813
        %v5815 = vsel %vm961, %v5805, %v5814
        %v5824 = vunpack.c.l.b16 %v5639
        %v5825 = vunpack.c.l.b16 %v5640
        %v5826 = vunpack.c.l.b16 %v5641
        %v5827 = vunpack.c.l.b16 %v5642
        %v5828 = vunpack.c.l.b16 %v5643
        %v5829 = vunpack.c.l.b16 %v5644
        %v5830 = vunpack.c.l.b16 %v5645
        %v5831 = vunpack.c.l.b16 %v5646
        %v5832 = vpack.c.b16 %v5825, %v5824
        %v5833 = vpack.c.b16 %v5827, %v5826
        %v5834 = vpack.c.b16 %v5829, %v5828
        %v5835 = vpack.c.b16 %v5831, %v5830
        %v5841 = vsel %vm3097, %v5788, 0
        %v5844 = vsel %vm3097, %v5797, 0
        %v5847 = vsel %vm3097, %v5806, 0
        %v5850 = vsel %vm3097, %v5815, 0
        %5852 = vmatpush.bf16.msra.mxu0 0
        %5853 = vmatpush.bf16.msra.mxu0 0
        %5854 = vmatpush.bf16.msra.mxu0 0
        %5855 = vmatpush.bf16.msra.mxu0 0
        %5856 = vmatpush.bf16.msra.mxu0 %v5835
        %5857 = vmatpush.bf16.msra.mxu0 %v5834
        %5858 = vmatpush.bf16.msra.mxu0 %v5833
        %5859 = vmatpush.bf16.msra.mxu0 %v5832
        %5860 = vmatmul.bf16.gmra.mxu0 %v5841
        %v5861 = vpop.f32.mrf.mxu0
        %v5862 = vadd.f32 %v5730, %v5861
        %v5863 = vpop.f32.mrf.mxu0
        %v5864 = vadd.f32 %v5732, %v5863
        %5865 = vmatmul.bf16.gmra.mxu0 %v5844
        %v5866 = vpop.f32.mrf.mxu0
        %v5867 = vadd.f32 %v5735, %v5866
        %v5868 = vpop.f32.mrf.mxu0
        %v5869 = vadd.f32 %v5737, %v5868
        %5870 = vmatmul.bf16.gmra.mxu0 %v5847
        %v5871 = vpop.f32.mrf.mxu0
        %v5872 = vadd.f32 %v5740, %v5871
        %v5873 = vpop.f32.mrf.mxu0
        %v5874 = vadd.f32 %v5742, %v5873
        %5875 = vmatmul.bf16.gmra.mxu0 %v5850
        %v5876 = vpop.f32.mrf.mxu0
        %v5877 = vadd.f32 %v5745, %v5876
        %v5878 = vpop.f32.mrf.mxu0
        %v5879 = vadd.f32 %v5747, %v5878
        %5880 = vdwg.mxu0
        %v5881 = vld [vmem:[#allocation2 + $0x4] sm:$0xf]
        %v5882 = vld [vmem:[#allocation2 + $0x8] sm:$0xf]
        %v5883 = vld [vmem:[#allocation2 + $0xc] sm:$0xf]
        %v5884 = vld [vmem:[#allocation2 + $0x10] sm:$0xf]
        %v5885 = vld [vmem:[#allocation2 + $0x14] sm:$0xf]
        %v5886 = vld [vmem:[#allocation2 + $0x18] sm:$0xf]
        %v5887 = vld [vmem:[#allocation2 + $0x1c] sm:$0xf]
        %v5888 = vld [vmem:[#allocation2 + $0x20] sm:$0xf]
        %v5889 = vld [vmem:[#allocation2 + $0x24] sm:$0x1]
        %v5890 = vsel %vm1204, %v5881, 0
        %v5891 = vsel %vm1211, %v5882, 0
        %v5892 = vsel %vm1218, %v5883, 0
        %v5893 = vsel %vm1225, %v5884, 0
        %v5894 = vsel %vm1232, %v5885, 0
        %v5895 = vsel %vm1239, %v5886, 0
        %v5896 = vsel %vm1246, %v5887, 0
        %v5897 = vsel %vm1253, %v5888, 0
        %v5898 = vsel %vm1260, %v5889, 0
        %s5899 = scalar_lea.vmem [#allocation5], 64
        %v5900 = vld [vmem:[%s5899] sm:$0xf]
        %v5901 = vld [vmem:[%s5899 + $0x4] sm:$0xf]
        %v5902 = vld [vmem:[%s5899 + $0x8] sm:$0xf]
        %v5903 = vld [vmem:[%s5899 + $0xc] sm:$0xf]
        %v5904 = vld [vmem:[%s5899 + $0x10] sm:$0xf]
        %v5905 = vld [vmem:[%s5899 + $0x14] sm:$0xf]
        %v5906 = vld [vmem:[%s5899 + $0x18] sm:$0xf]
        %v5907 = vld [vmem:[%s5899 + $0x1c] sm:$0xf]
        %v5917 = vunpack.c.l.b16 %v5890
        %v5918 = vunpack.c.l.b16 %v5891
        %v5919 = vunpack.c.l.b16 %v5892
        %v5920 = vunpack.c.l.b16 %v5893
        %v5921 = vunpack.c.l.b16 %v5894
        %v5922 = vunpack.c.l.b16 %v5895
        %v5923 = vunpack.c.l.b16 %v5896
        %v5924 = vunpack.c.l.b16 %v5897
        %v5925 = vunpack.c.l.b16 %v5898
        %v5926 = vpack.c.b16 %v5918, %v5917
        %v5927 = vpack.c.b16 %v5920, %v5919
        %v5928 = vpack.c.b16 %v5922, %v5921
        %v5929 = vpack.c.b16 %v5924, %v5923
        %v5930 = vpack.c.b16 %v5925, %v5925
        %v5932 = vshrl.u32 %v5926, 16
        %v5934 = vshll.u32 %v5926, 16
        %v5936 = vrot.slane %v5934, 1
        %v5937 = vor.u32 %v5932, %v5936
        %v5939 = vshll.u32 %v5927, 16
        %v5941 = vrot.slane %v5939, 1
        %v5942 = vsel %vm1298, %v5937, %v5941
        %v5943 = vshrl.u32 %v5927, 16
        %v5945 = vor.u32 %v5943, %v5941
        %v5947 = vshll.u32 %v5928, 16
        %v5949 = vrot.slane %v5947, 1
        %v5950 = vsel %vm1298, %v5945, %v5949
        %v5951 = vshrl.u32 %v5928, 16
        %v5953 = vor.u32 %v5951, %v5949
        %v5955 = vshll.u32 %v5929, 16
        %v5957 = vrot.slane %v5955, 1
        %v5958 = vsel %vm1298, %v5953, %v5957
        %v5959 = vshrl.u32 %v5929, 16
        %v5961 = vor.u32 %v5959, %v5957
        %v5963 = vshll.u32 %v5930, 16
        %v5965 = vrot.slane %v5963, 1
        %v5966 = vsel %vm1298, %v5961, %v5965
        %v5975 = vunpack.c.l.b16 %v5900
        %v5976 = vunpack.c.l.b16 %v5901
        %v5977 = vunpack.c.l.b16 %v5902
        %v5978 = vunpack.c.l.b16 %v5903
        %v5979 = vunpack.c.l.b16 %v5904
        %v5980 = vunpack.c.l.b16 %v5905
        %v5981 = vunpack.c.l.b16 %v5906
        %v5982 = vunpack.c.l.b16 %v5907
        %v5983 = vpack.c.b16 %v5976, %v5975
        %v5984 = vpack.c.b16 %v5978, %v5977
        %v5985 = vpack.c.b16 %v5980, %v5979
        %v5986 = vpack.c.b16 %v5982, %v5981
        %v5992 = vsel %vm3097, %v5942, 0
        %v5995 = vsel %vm3097, %v5950, 0
        %v5998 = vsel %vm3097, %v5958, 0
        %v6001 = vsel %vm3097, %v5966, 0
        %6003 = vmatpush.bf16.msra.mxu0 0
        %6004 = vmatpush.bf16.msra.mxu0 0
        %6005 = vmatpush.bf16.msra.mxu0 0
        %6006 = vmatpush.bf16.msra.mxu0 0
        %6007 = vmatpush.bf16.msra.mxu0 %v5986
        %6008 = vmatpush.bf16.msra.mxu0 %v5985
        %6009 = vmatpush.bf16.msra.mxu0 %v5984
        %6010 = vmatpush.bf16.msra.mxu0 %v5983
        %6011 = vmatmul.bf16.gmra.mxu0 %v5992
        %v6012 = vpop.f32.mrf.mxu0
        %v6013 = vadd.f32 0.0, %v6012
        %v6014 = vpop.f32.mrf.mxu0
        %v6015 = vadd.f32 0.0, %v6014
        %6016 = vmatmul.bf16.gmra.mxu0 %v5995
        %v6017 = vpop.f32.mrf.mxu0
        %v6018 = vadd.f32 0.0, %v6017
        %v6019 = vpop.f32.mrf.mxu0
        %v6020 = vadd.f32 0.0, %v6019
        %6021 = vmatmul.bf16.gmra.mxu0 %v5998
        %v6022 = vpop.f32.mrf.mxu0
        %v6023 = vadd.f32 0.0, %v6022
        %v6024 = vpop.f32.mrf.mxu0
        %v6025 = vadd.f32 0.0, %v6024
        %6026 = vmatmul.bf16.gmra.mxu0 %v6001
        %v6027 = vpop.f32.mrf.mxu0
        %v6028 = vadd.f32 0.0, %v6027
        %v6029 = vpop.f32.mrf.mxu0
        %v6030 = vadd.f32 0.0, %v6029
        %6031 = vdwg.mxu0
        %v6032 = vadd.f32 %v5862, %v6013
        %v6033 = vadd.f32 %v5864, %v6015
        %v6034 = vadd.f32 %v5867, %v6018
        %v6035 = vadd.f32 %v5869, %v6020
        %v6036 = vadd.f32 %v5872, %v6023
        %v6037 = vadd.f32 %v5874, %v6025
        %v6038 = vadd.f32 %v5877, %v6028
        %v6039 = vadd.f32 %v5879, %v6030
        %v6040 = vld [vmem:[#allocation2 + $0x4] sm:$0x8]
        %v6041 = vld [vmem:[#allocation2 + $0x24] sm:$0xf]
        %v6042 = vsel %vm1539, %v6040, 0
        %v6043 = vsel %vm1546, %v5882, 0
        %v6044 = vsel %vm1553, %v5883, 0
        %v6045 = vsel %vm1560, %v5884, 0
        %v6046 = vsel %vm1567, %v5885, 0
        %v6047 = vsel %vm1574, %v5886, 0
        %v6048 = vsel %vm1581, %v5887, 0
        %v6049 = vsel %vm1588, %v5888, 0
        %v6050 = vsel %vm1595, %v6041, 0
        %s6051 = scalar_lea.vmem [#allocation5], 96
        %v6052 = vld [vmem:[%s6051] sm:$0xf]
        %v6053 = vld [vmem:[%s6051 + $0x4] sm:$0xf]
        %v6054 = vld [vmem:[%s6051 + $0x8] sm:$0xf]
        %v6055 = vld [vmem:[%s6051 + $0xc] sm:$0xf]
        %v6056 = vld [vmem:[%s6051 + $0x10] sm:$0xf]
        %v6057 = vld [vmem:[%s6051 + $0x14] sm:$0xf]
        %v6058 = vld [vmem:[%s6051 + $0x18] sm:$0xf]
        %v6059 = vld [vmem:[%s6051 + $0x1c] sm:$0xf]
        %v6069 = vunpack.c.l.b16 %v6042
        %v6070 = vunpack.c.l.b16 %v6043
        %v6071 = vunpack.c.l.b16 %v6044
        %v6072 = vunpack.c.l.b16 %v6045
        %v6073 = vunpack.c.l.b16 %v6046
        %v6074 = vunpack.c.l.b16 %v6047
        %v6075 = vunpack.c.l.b16 %v6048
        %v6076 = vunpack.c.l.b16 %v6049
        %v6077 = vunpack.c.l.b16 %v6050
        %v6078 = vpack.c.b16 %v6070, %v6069
        %v6079 = vpack.c.b16 %v6072, %v6071
        %v6080 = vpack.c.b16 %v6074, %v6073
        %v6081 = vpack.c.b16 %v6076, %v6075
        %v6082 = vpack.c.b16 %v6077, %v6077
        %v6084 = vshrl.u32 %v6078, 16
        %v6086 = vrot.slane %v6084, 3
        %v6087 = vshll.u32 %v6078, 16
        %v6089 = vrot.slane %v6087, 4
        %v6090 = vor.u32 %v6086, %v6089
        %v6092 = vshrl.u32 %v6079, 16
        %v6094 = vrot.slane %v6092, 3
        %v6095 = vshll.u32 %v6079, 16
        %v6097 = vrot.slane %v6095, 4
        %v6098 = vor.u32 %v6094, %v6097
        %v6099 = vsel %vm961, %v6090, %v6098
        %v6101 = vshrl.u32 %v6080, 16
        %v6103 = vrot.slane %v6101, 3
        %v6104 = vshll.u32 %v6080, 16
        %v6106 = vrot.slane %v6104, 4
        %v6107 = vor.u32 %v6103, %v6106
        %v6108 = vsel %vm961, %v6098, %v6107
        %v6110 = vshrl.u32 %v6081, 16
        %v6112 = vrot.slane %v6110, 3
        %v6113 = vshll.u32 %v6081, 16
        %v6115 = vrot.slane %v6113, 4
        %v6116 = vor.u32 %v6112, %v6115
        %v6117 = vsel %vm961, %v6107, %v6116
        %v6119 = vshrl.u32 %v6082, 16
        %v6121 = vrot.slane %v6119, 3
        %v6122 = vshll.u32 %v6082, 16
        %v6124 = vrot.slane %v6122, 4
        %v6125 = vor.u32 %v6121, %v6124
        %v6126 = vsel %vm961, %v6116, %v6125
        %v6135 = vunpack.c.l.b16 %v6052
        %v6136 = vunpack.c.l.b16 %v6053
        %v6137 = vunpack.c.l.b16 %v6054
        %v6138 = vunpack.c.l.b16 %v6055
        %v6139 = vunpack.c.l.b16 %v6056
        %v6140 = vunpack.c.l.b16 %v6057
        %v6141 = vunpack.c.l.b16 %v6058
        %v6142 = vunpack.c.l.b16 %v6059
        %v6143 = vpack.c.b16 %v6136, %v6135
        %v6144 = vpack.c.b16 %v6138, %v6137
        %v6145 = vpack.c.b16 %v6140, %v6139
        %v6146 = vpack.c.b16 %v6142, %v6141
        %v6152 = vsel %vm3097, %v6099, 0
        %v6155 = vsel %vm3097, %v6108, 0
        %v6158 = vsel %vm3097, %v6117, 0
        %v6161 = vsel %vm3097, %v6126, 0
        %6163 = vmatpush.bf16.msra.mxu0 0
        %6164 = vmatpush.bf16.msra.mxu0 0
        %6165 = vmatpush.bf16.msra.mxu0 0
        %6166 = vmatpush.bf16.msra.mxu0 0
        %6167 = vmatpush.bf16.msra.mxu0 %v6146
        %6168 = vmatpush.bf16.msra.mxu0 %v6145
        %6169 = vmatpush.bf16.msra.mxu0 %v6144
        %6170 = vmatpush.bf16.msra.mxu0 %v6143
        %6171 = vmatmul.bf16.gmra.mxu0 %v6152
        %v6172 = vpop.f32.mrf.mxu0
        %v6173 = vadd.f32 0.0, %v6172
        %v6174 = vpop.f32.mrf.mxu0
        %v6175 = vadd.f32 0.0, %v6174
        %6176 = vmatmul.bf16.gmra.mxu0 %v6155
        %v6177 = vpop.f32.mrf.mxu0
        %v6178 = vadd.f32 0.0, %v6177
        %v6179 = vpop.f32.mrf.mxu0
        %v6180 = vadd.f32 0.0, %v6179
        %6181 = vmatmul.bf16.gmra.mxu0 %v6158
        %v6182 = vpop.f32.mrf.mxu0
        %v6183 = vadd.f32 0.0, %v6182
        %v6184 = vpop.f32.mrf.mxu0
        %v6185 = vadd.f32 0.0, %v6184
        %6186 = vmatmul.bf16.gmra.mxu0 %v6161
        %v6187 = vpop.f32.mrf.mxu0
        %v6188 = vadd.f32 0.0, %v6187
        %v6189 = vpop.f32.mrf.mxu0
        %v6190 = vadd.f32 0.0, %v6189
        %6191 = vdwg.mxu0
        %v6192 = vadd.f32 %v6032, %v6173
        %v6193 = vadd.f32 %v6033, %v6175
        %v6194 = vadd.f32 %v6034, %v6178
        %v6195 = vadd.f32 %v6035, %v6180
        %v6196 = vadd.f32 %v6036, %v6183
        %v6197 = vadd.f32 %v6037, %v6185
        %v6198 = vadd.f32 %v6038, %v6188
        %v6199 = vadd.f32 %v6039, %v6190
        %s6200 = scalar_lea.vmem [#allocation5], 128
        %v6201 = vld [vmem:[%s6200] sm:$0xf]
        %v6202 = vld [vmem:[%s6200 + $0x4] sm:$0xf]
        %v6203 = vld [vmem:[%s6200 + $0x8] sm:$0xf]
        %v6204 = vld [vmem:[%s6200 + $0xc] sm:$0xf]
        %v6205 = vld [vmem:[%s6200 + $0x10] sm:$0xf]
        %v6206 = vld [vmem:[%s6200 + $0x14] sm:$0xf]
        %v6207 = vld [vmem:[%s6200 + $0x18] sm:$0xf]
        %v6208 = vld [vmem:[%s6200 + $0x1c] sm:$0xf]
        %v6217 = vunpack.c.l.b16 %v5605
        %v6218 = vunpack.c.l.b16 %v5606
        %v6219 = vunpack.c.l.b16 %v5607
        %v6220 = vunpack.c.l.b16 %v5608
        %v6221 = vunpack.c.l.b16 %v5609
        %v6222 = vunpack.c.l.b16 %v5610
        %v6223 = vunpack.c.l.b16 %v5611
        %v6224 = vunpack.c.l.b16 %v5612
        %v6225 = vpack.c.b16 %v6218, %v6217
        %v6226 = vpack.c.b16 %v6220, %v6219
        %v6227 = vpack.c.b16 %v6222, %v6221
        %v6228 = vpack.c.b16 %v6224, %v6223
        %v6237 = vunpack.c.l.b16 %v6201
        %v6238 = vunpack.c.l.b16 %v6202
        %v6239 = vunpack.c.l.b16 %v6203
        %v6240 = vunpack.c.l.b16 %v6204
        %v6241 = vunpack.c.l.b16 %v6205
        %v6242 = vunpack.c.l.b16 %v6206
        %v6243 = vunpack.c.l.b16 %v6207
        %v6244 = vunpack.c.l.b16 %v6208
        %v6245 = vpack.c.b16 %v6238, %v6237
        %v6246 = vpack.c.b16 %v6240, %v6239
        %v6247 = vpack.c.b16 %v6242, %v6241
        %v6248 = vpack.c.b16 %v6244, %v6243
        %v6254 = vsel %vm3097, %v6225, 0
        %v6257 = vsel %vm3097, %v6226, 0
        %v6260 = vsel %vm3097, %v6227, 0
        %v6263 = vsel %vm3097, %v6228, 0
        %6265 = vmatpush.bf16.msra.mxu0 0
        %6266 = vmatpush.bf16.msra.mxu0 0
        %6267 = vmatpush.bf16.msra.mxu0 0
        %6268 = vmatpush.bf16.msra.mxu0 0
        %6269 = vmatpush.bf16.msra.mxu0 %v6248
        %6270 = vmatpush.bf16.msra.mxu0 %v6247
        %6271 = vmatpush.bf16.msra.mxu0 %v6246
        %6272 = vmatpush.bf16.msra.mxu0 %v6245
        %6273 = vmatmul.bf16.gmra.mxu0 %v6254
        %v6274 = vpop.f32.mrf.mxu0
        %v6275 = vadd.f32 0.0, %v6274
        %v6276 = vpop.f32.mrf.mxu0
        %v6277 = vadd.f32 0.0, %v6276
        %6278 = vmatmul.bf16.gmra.mxu0 %v6257
        %v6279 = vpop.f32.mrf.mxu0
        %v6280 = vadd.f32 0.0, %v6279
        %v6281 = vpop.f32.mrf.mxu0
        %v6282 = vadd.f32 0.0, %v6281
        %6283 = vmatmul.bf16.gmra.mxu0 %v6260
        %v6284 = vpop.f32.mrf.mxu0
        %v6285 = vadd.f32 0.0, %v6284
        %v6286 = vpop.f32.mrf.mxu0
        %v6287 = vadd.f32 0.0, %v6286
        %6288 = vmatmul.bf16.gmra.mxu0 %v6263
        %v6289 = vpop.f32.mrf.mxu0
        %v6290 = vadd.f32 0.0, %v6289
        %v6291 = vpop.f32.mrf.mxu0
        %v6292 = vadd.f32 0.0, %v6291
        %6293 = vdwg.mxu0
        %v6294 = vadd.f32 %v6192, %v6275
        %v6295 = vadd.f32 %v6193, %v6277
        %v6296 = vadd.f32 %v6194, %v6280
        %v6297 = vadd.f32 %v6195, %v6282
        %v6298 = vadd.f32 %v6196, %v6285
        %v6299 = vadd.f32 %v6197, %v6287
        %v6300 = vadd.f32 %v6198, %v6290
        %v6301 = vadd.f32 %v6199, %v6292
        %v6302 = vld [vmem:[#allocation2 + $0x8] sm:$0xf]
        %v6303 = vld [vmem:[#allocation2 + $0xc] sm:$0xf]
        %v6304 = vld [vmem:[#allocation2 + $0x10] sm:$0xf]
        %v6305 = vld [vmem:[#allocation2 + $0x14] sm:$0xf]
        %v6306 = vld [vmem:[#allocation2 + $0x18] sm:$0xf]
        %v6307 = vld [vmem:[#allocation2 + $0x1c] sm:$0xf]
        %v6308 = vld [vmem:[#allocation2 + $0x20] sm:$0xf]
        %v6309 = vld [vmem:[#allocation2 + $0x24] sm:$0xf]
        %v6310 = vld [vmem:[#allocation2 + $0x28] sm:$0x1]
        %v6311 = vsel %vm1966, %v6302, 0
        %v6312 = vsel %vm1973, %v6303, 0
        %v6313 = vsel %vm1980, %v6304, 0
        %v6314 = vsel %vm1987, %v6305, 0
        %v6315 = vsel %vm1994, %v6306, 0
        %v6316 = vsel %vm2001, %v6307, 0
        %v6317 = vsel %vm2008, %v6308, 0
        %v6318 = vsel %vm2015, %v6309, 0
        %v6319 = vsel %vm2022, %v6310, 0
        %s6320 = scalar_lea.vmem [#allocation5], 160
        %v6321 = vld [vmem:[%s6320] sm:$0xf]
        %v6322 = vld [vmem:[%s6320 + $0x4] sm:$0xf]
        %v6323 = vld [vmem:[%s6320 + $0x8] sm:$0xf]
        %v6324 = vld [vmem:[%s6320 + $0xc] sm:$0xf]
        %v6325 = vld [vmem:[%s6320 + $0x10] sm:$0xf]
        %v6326 = vld [vmem:[%s6320 + $0x14] sm:$0xf]
        %v6327 = vld [vmem:[%s6320 + $0x18] sm:$0xf]
        %v6328 = vld [vmem:[%s6320 + $0x1c] sm:$0xf]
        %v6338 = vunpack.c.l.b16 %v6311
        %v6339 = vunpack.c.l.b16 %v6312
        %v6340 = vunpack.c.l.b16 %v6313
        %v6341 = vunpack.c.l.b16 %v6314
        %v6342 = vunpack.c.l.b16 %v6315
        %v6343 = vunpack.c.l.b16 %v6316
        %v6344 = vunpack.c.l.b16 %v6317
        %v6345 = vunpack.c.l.b16 %v6318
        %v6346 = vunpack.c.l.b16 %v6319
        %v6347 = vpack.c.b16 %v6339, %v6338
        %v6348 = vpack.c.b16 %v6341, %v6340
        %v6349 = vpack.c.b16 %v6343, %v6342
        %v6350 = vpack.c.b16 %v6345, %v6344
        %v6351 = vpack.c.b16 %v6346, %v6346
        %v6353 = vshrl.u32 %v6347, 16
        %v6355 = vshll.u32 %v6347, 16
        %v6357 = vrot.slane %v6355, 1
        %v6358 = vor.u32 %v6353, %v6357
        %v6360 = vshll.u32 %v6348, 16
        %v6362 = vrot.slane %v6360, 1
        %v6363 = vsel %vm1298, %v6358, %v6362
        %v6364 = vshrl.u32 %v6348, 16
        %v6366 = vor.u32 %v6364, %v6362
        %v6368 = vshll.u32 %v6349, 16
        %v6370 = vrot.slane %v6368, 1
        %v6371 = vsel %vm1298, %v6366, %v6370
        %v6372 = vshrl.u32 %v6349, 16
        %v6374 = vor.u32 %v6372, %v6370
        %v6376 = vshll.u32 %v6350, 16
        %v6378 = vrot.slane %v6376, 1
        %v6379 = vsel %vm1298, %v6374, %v6378
        %v6380 = vshrl.u32 %v6350, 16
        %v6382 = vor.u32 %v6380, %v6378
        %v6384 = vshll.u32 %v6351, 16
        %v6386 = vrot.slane %v6384, 1
        %v6387 = vsel %vm1298, %v6382, %v6386
        %v6396 = vunpack.c.l.b16 %v6321
        %v6397 = vunpack.c.l.b16 %v6322
        %v6398 = vunpack.c.l.b16 %v6323
        %v6399 = vunpack.c.l.b16 %v6324
        %v6400 = vunpack.c.l.b16 %v6325
        %v6401 = vunpack.c.l.b16 %v6326
        %v6402 = vunpack.c.l.b16 %v6327
        %v6403 = vunpack.c.l.b16 %v6328
        %v6404 = vpack.c.b16 %v6397, %v6396
        %v6405 = vpack.c.b16 %v6399, %v6398
        %v6406 = vpack.c.b16 %v6401, %v6400
        %v6407 = vpack.c.b16 %v6403, %v6402
        %v6413 = vsel %vm3097, %v6363, 0
        %v6416 = vsel %vm3097, %v6371, 0
        %v6419 = vsel %vm3097, %v6379, 0
        %v6422 = vsel %vm3097, %v6387, 0
        %6424 = vmatpush.bf16.msra.mxu0 0
        %6425 = vmatpush.bf16.msra.mxu0 0
        %6426 = vmatpush.bf16.msra.mxu0 0
        %6427 = vmatpush.bf16.msra.mxu0 0
        %6428 = vmatpush.bf16.msra.mxu0 %v6407
        %6429 = vmatpush.bf16.msra.mxu0 %v6406
        %6430 = vmatpush.bf16.msra.mxu0 %v6405
        %6431 = vmatpush.bf16.msra.mxu0 %v6404
        %6432 = vmatmul.bf16.gmra.mxu0 %v6413
        %v6433 = vpop.f32.mrf.mxu0
        %v6434 = vadd.f32 0.0, %v6433
        %v6435 = vpop.f32.mrf.mxu0
        %v6436 = vadd.f32 0.0, %v6435
        %6437 = vmatmul.bf16.gmra.mxu0 %v6416
        %v6438 = vpop.f32.mrf.mxu0
        %v6439 = vadd.f32 0.0, %v6438
        %v6440 = vpop.f32.mrf.mxu0
        %v6441 = vadd.f32 0.0, %v6440
        %6442 = vmatmul.bf16.gmra.mxu0 %v6419
        %v6443 = vpop.f32.mrf.mxu0
        %v6444 = vadd.f32 0.0, %v6443
        %v6445 = vpop.f32.mrf.mxu0
        %v6446 = vadd.f32 0.0, %v6445
        %6447 = vmatmul.bf16.gmra.mxu0 %v6422
        %v6448 = vpop.f32.mrf.mxu0
        %v6449 = vadd.f32 0.0, %v6448
        %v6450 = vpop.f32.mrf.mxu0
        %v6451 = vadd.f32 0.0, %v6450
        %6452 = vdwg.mxu0
        %v6453 = vadd.f32 %v6294, %v6434
        %v6454 = vadd.f32 %v6295, %v6436
        %v6455 = vadd.f32 %v6296, %v6439
        %v6456 = vadd.f32 %v6297, %v6441
        %v6457 = vadd.f32 %v6298, %v6444
        %v6458 = vadd.f32 %v6299, %v6446
        %v6459 = vadd.f32 %v6300, %v6449
        %v6460 = vadd.f32 %v6301, %v6451
        %v6461 = vld [vmem:[#allocation2 + $0x8] sm:$0x8]
        %v6462 = vld [vmem:[#allocation2 + $0x28] sm:$0xf]
        %v6463 = vsel %vm2300, %v6461, 0
        %v6464 = vsel %vm2307, %v6303, 0
        %v6465 = vsel %vm2314, %v6304, 0
        %v6466 = vsel %vm2321, %v6305, 0
        %v6467 = vsel %vm2328, %v6306, 0
        %v6468 = vsel %vm2335, %v6307, 0
        %v6469 = vsel %vm2342, %v6308, 0
        %v6470 = vsel %vm2349, %v6309, 0
        %v6471 = vsel %vm2356, %v6462, 0
        %s6472 = scalar_lea.vmem [#allocation5], 192
        %v6473 = vld [vmem:[%s6472] sm:$0xf]
        %v6474 = vld [vmem:[%s6472 + $0x4] sm:$0xf]
        %v6475 = vld [vmem:[%s6472 + $0x8] sm:$0xf]
        %v6476 = vld [vmem:[%s6472 + $0xc] sm:$0xf]
        %v6477 = vld [vmem:[%s6472 + $0x10] sm:$0xf]
        %v6478 = vld [vmem:[%s6472 + $0x14] sm:$0xf]
        %v6479 = vld [vmem:[%s6472 + $0x18] sm:$0xf]
        %v6480 = vld [vmem:[%s6472 + $0x1c] sm:$0xf]
        %v6490 = vunpack.c.l.b16 %v6463
        %v6491 = vunpack.c.l.b16 %v6464
        %v6492 = vunpack.c.l.b16 %v6465
        %v6493 = vunpack.c.l.b16 %v6466
        %v6494 = vunpack.c.l.b16 %v6467
        %v6495 = vunpack.c.l.b16 %v6468
        %v6496 = vunpack.c.l.b16 %v6469
        %v6497 = vunpack.c.l.b16 %v6470
        %v6498 = vunpack.c.l.b16 %v6471
        %v6499 = vpack.c.b16 %v6491, %v6490
        %v6500 = vpack.c.b16 %v6493, %v6492
        %v6501 = vpack.c.b16 %v6495, %v6494
        %v6502 = vpack.c.b16 %v6497, %v6496
        %v6503 = vpack.c.b16 %v6498, %v6498
        %v6505 = vshrl.u32 %v6499, 16
        %v6507 = vrot.slane %v6505, 3
        %v6508 = vshll.u32 %v6499, 16
        %v6510 = vrot.slane %v6508, 4
        %v6511 = vor.u32 %v6507, %v6510
        %v6513 = vshrl.u32 %v6500, 16
        %v6515 = vrot.slane %v6513, 3
        %v6516 = vshll.u32 %v6500, 16
        %v6518 = vrot.slane %v6516, 4
        %v6519 = vor.u32 %v6515, %v6518
        %v6520 = vsel %vm961, %v6511, %v6519
        %v6522 = vshrl.u32 %v6501, 16
        %v6524 = vrot.slane %v6522, 3
        %v6525 = vshll.u32 %v6501, 16
        %v6527 = vrot.slane %v6525, 4
        %v6528 = vor.u32 %v6524, %v6527
        %v6529 = vsel %vm961, %v6519, %v6528
        %v6531 = vshrl.u32 %v6502, 16
        %v6533 = vrot.slane %v6531, 3
        %v6534 = vshll.u32 %v6502, 16
        %v6536 = vrot.slane %v6534, 4
        %v6537 = vor.u32 %v6533, %v6536
        %v6538 = vsel %vm961, %v6528, %v6537
        %v6540 = vshrl.u32 %v6503, 16
        %v6542 = vrot.slane %v6540, 3
        %v6543 = vshll.u32 %v6503, 16
        %v6545 = vrot.slane %v6543, 4
        %v6546 = vor.u32 %v6542, %v6545
        %v6547 = vsel %vm961, %v6537, %v6546
        %v6556 = vunpack.c.l.b16 %v6473
        %v6557 = vunpack.c.l.b16 %v6474
        %v6558 = vunpack.c.l.b16 %v6475
        %v6559 = vunpack.c.l.b16 %v6476
        %v6560 = vunpack.c.l.b16 %v6477
        %v6561 = vunpack.c.l.b16 %v6478
        %v6562 = vunpack.c.l.b16 %v6479
        %v6563 = vunpack.c.l.b16 %v6480
        %v6564 = vpack.c.b16 %v6557, %v6556
        %v6565 = vpack.c.b16 %v6559, %v6558
        %v6566 = vpack.c.b16 %v6561, %v6560
        %v6567 = vpack.c.b16 %v6563, %v6562
        %v6573 = vsel %vm3097, %v6520, 0
        %v6576 = vsel %vm3097, %v6529, 0
        %v6579 = vsel %vm3097, %v6538, 0
        %v6582 = vsel %vm3097, %v6547, 0
        %6584 = vmatpush.bf16.msra.mxu0 0
        %6585 = vmatpush.bf16.msra.mxu0 0
        %6586 = vmatpush.bf16.msra.mxu0 0
        %6587 = vmatpush.bf16.msra.mxu0 0
        %6588 = vmatpush.bf16.msra.mxu0 %v6567
        %6589 = vmatpush.bf16.msra.mxu0 %v6566
        %6590 = vmatpush.bf16.msra.mxu0 %v6565
        %6591 = vmatpush.bf16.msra.mxu0 %v6564
        %6592 = vmatmul.bf16.gmra.mxu0 %v6573
        %v6593 = vpop.f32.mrf.mxu0
        %v6594 = vadd.f32 0.0, %v6593
        %v6595 = vpop.f32.mrf.mxu0
        %v6596 = vadd.f32 0.0, %v6595
        %6597 = vmatmul.bf16.gmra.mxu0 %v6576
        %v6598 = vpop.f32.mrf.mxu0
        %v6599 = vadd.f32 0.0, %v6598
        %v6600 = vpop.f32.mrf.mxu0
        %v6601 = vadd.f32 0.0, %v6600
        %6602 = vmatmul.bf16.gmra.mxu0 %v6579
        %v6603 = vpop.f32.mrf.mxu0
        %v6604 = vadd.f32 0.0, %v6603
        %v6605 = vpop.f32.mrf.mxu0
        %v6606 = vadd.f32 0.0, %v6605
        %6607 = vmatmul.bf16.gmra.mxu0 %v6582
        %v6608 = vpop.f32.mrf.mxu0
        %v6609 = vadd.f32 0.0, %v6608
        %v6610 = vpop.f32.mrf.mxu0
        %v6611 = vadd.f32 0.0, %v6610
        %6612 = vdwg.mxu0
        %v6613 = vadd.f32 %v6453, %v6594
        %v6614 = vadd.f32 %v6454, %v6596
        %v6615 = vadd.f32 %v6455, %v6599
        %v6616 = vadd.f32 %v6456, %v6601
        %v6617 = vadd.f32 %v6457, %v6604
        %v6618 = vadd.f32 %v6458, %v6606
        %v6619 = vadd.f32 %v6459, %v6609
        %v6620 = vadd.f32 %v6460, %v6611
        %v6621 = vsel %vm2539, %v6303, 0
        %v6622 = vsel %vm2540, %v6304, 0
        %v6623 = vsel %vm2541, %v6305, 0
        %v6624 = vsel %vm2542, %v6306, 0
        %v6625 = vsel %vm2543, %v6307, 0
        %v6626 = vsel %vm2544, %v6308, 0
        %v6627 = vsel %vm2545, %v6309, 0
        %v6628 = vsel %vm2546, %v6462, 0
        %s6629 = scalar_lea.vmem [#allocation5], 224
        %v6630 = vld [vmem:[%s6629] sm:$0xf]
        %v6631 = vld [vmem:[%s6629 + $0x4] sm:$0xf]
        %v6632 = vld [vmem:[%s6629 + $0x8] sm:$0xf]
        %v6633 = vld [vmem:[%s6629 + $0xc] sm:$0xf]
        %v6634 = vld [vmem:[%s6629 + $0x10] sm:$0xf]
        %v6635 = vld [vmem:[%s6629 + $0x14] sm:$0xf]
        %v6636 = vld [vmem:[%s6629 + $0x18] sm:$0xf]
        %v6637 = vld [vmem:[%s6629 + $0x1c] sm:$0xf]
        %v6646 = vunpack.c.l.b16 %v6621
        %v6647 = vunpack.c.l.b16 %v6622
        %v6648 = vunpack.c.l.b16 %v6623
        %v6649 = vunpack.c.l.b16 %v6624
        %v6650 = vunpack.c.l.b16 %v6625
        %v6651 = vunpack.c.l.b16 %v6626
        %v6652 = vunpack.c.l.b16 %v6627
        %v6653 = vunpack.c.l.b16 %v6628
        %v6654 = vpack.c.b16 %v6647, %v6646
        %v6655 = vpack.c.b16 %v6649, %v6648
        %v6656 = vpack.c.b16 %v6651, %v6650
        %v6657 = vpack.c.b16 %v6653, %v6652
        %v6666 = vunpack.c.l.b16 %v6630
        %v6667 = vunpack.c.l.b16 %v6631
        %v6668 = vunpack.c.l.b16 %v6632
        %v6669 = vunpack.c.l.b16 %v6633
        %v6670 = vunpack.c.l.b16 %v6634
        %v6671 = vunpack.c.l.b16 %v6635
        %v6672 = vunpack.c.l.b16 %v6636
        %v6673 = vunpack.c.l.b16 %v6637
        %v6674 = vpack.c.b16 %v6667, %v6666
        %v6675 = vpack.c.b16 %v6669, %v6668
        %v6676 = vpack.c.b16 %v6671, %v6670
        %v6677 = vpack.c.b16 %v6673, %v6672
        %v6683 = vsel %vm3097, %v6654, 0
        %v6686 = vsel %vm3097, %v6655, 0
        %v6689 = vsel %vm3097, %v6656, 0
        %v6692 = vsel %vm3097, %v6657, 0
        %6694 = vmatpush.bf16.msra.mxu0 0
        %6695 = vmatpush.bf16.msra.mxu0 0
        %6696 = vmatpush.bf16.msra.mxu0 0
        %6697 = vmatpush.bf16.msra.mxu0 0
        %6698 = vmatpush.bf16.msra.mxu0 %v6677
        %6699 = vmatpush.bf16.msra.mxu0 %v6676
        %6700 = vmatpush.bf16.msra.mxu0 %v6675
        %6701 = vmatpush.bf16.msra.mxu0 %v6674
        %6702 = vmatmul.bf16.gmra.mxu0 %v6683
        %v6703 = vpop.f32.mrf.mxu0
        %v6704 = vadd.f32 0.0, %v6703
        %v6705 = vpop.f32.mrf.mxu0
        %v6706 = vadd.f32 0.0, %v6705
        %6707 = vmatmul.bf16.gmra.mxu0 %v6686
        %v6708 = vpop.f32.mrf.mxu0
        %v6709 = vadd.f32 0.0, %v6708
        %v6710 = vpop.f32.mrf.mxu0
        %v6711 = vadd.f32 0.0, %v6710
        %6712 = vmatmul.bf16.gmra.mxu0 %v6689
        %v6713 = vpop.f32.mrf.mxu0
        %v6714 = vadd.f32 0.0, %v6713
        %v6715 = vpop.f32.mrf.mxu0
        %v6716 = vadd.f32 0.0, %v6715
        %6717 = vmatmul.bf16.gmra.mxu0 %v6692
        %v6718 = vpop.f32.mrf.mxu0
        %v6719 = vadd.f32 0.0, %v6718
        %v6720 = vpop.f32.mrf.mxu0
        %v6721 = vadd.f32 0.0, %v6720
        %6722 = vdwg.mxu0
        %v6723 = vadd.f32 %v6613, %v6704
        %v6724 = vadd.f32 %v6614, %v6706
        %v6725 = vadd.f32 %v6615, %v6709
        %v6726 = vadd.f32 %v6616, %v6711
        %v6727 = vadd.f32 %v6617, %v6714
        %v6728 = vadd.f32 %v6618, %v6716
        %v6729 = vadd.f32 %v6619, %v6719
        %v6730 = vadd.f32 %v6620, %v6721
        %v6731 = vld [vmem:[#allocation2 + $0xc] sm:$0xf]
        %v6732 = vld [vmem:[#allocation2 + $0x10] sm:$0xf]
        %v6733 = vld [vmem:[#allocation2 + $0x14] sm:$0xf]
        %v6734 = vld [vmem:[#allocation2 + $0x18] sm:$0xf]
        %v6735 = vld [vmem:[#allocation2 + $0x1c] sm:$0xf]
        %v6736 = vld [vmem:[#allocation2 + $0x20] sm:$0xf]
        %v6737 = vld [vmem:[#allocation2 + $0x24] sm:$0xf]
        %v6738 = vld [vmem:[#allocation2 + $0x28] sm:$0xf]
        %v6739 = vld [vmem:[#allocation2 + $0x2c] sm:$0x1]
        %v6740 = vsel %vm2783, %v6731, 0
        %v6741 = vsel %vm2790, %v6732, 0
        %v6742 = vsel %vm2797, %v6733, 0
        %v6743 = vsel %vm2804, %v6734, 0
        %v6744 = vsel %vm2811, %v6735, 0
        %v6745 = vsel %vm2818, %v6736, 0
        %v6746 = vsel %vm2825, %v6737, 0
        %v6747 = vsel %vm2832, %v6738, 0
        %v6748 = vsel %vm2839, %v6739, 0
        %s6749 = scalar_lea.vmem [#allocation5], 256
        %v6750 = vld [vmem:[%s6749] sm:$0xf]
        %v6751 = vld [vmem:[%s6749 + $0x4] sm:$0xf]
        %v6752 = vld [vmem:[%s6749 + $0x8] sm:$0xf]
        %v6753 = vld [vmem:[%s6749 + $0xc] sm:$0xf]
        %v6754 = vld [vmem:[%s6749 + $0x10] sm:$0xf]
        %v6755 = vld [vmem:[%s6749 + $0x14] sm:$0xf]
        %v6756 = vld [vmem:[%s6749 + $0x18] sm:$0xf]
        %v6757 = vld [vmem:[%s6749 + $0x1c] sm:$0xf]
        %v6767 = vunpack.c.l.b16 %v6740
        %v6768 = vunpack.c.l.b16 %v6741
        %v6769 = vunpack.c.l.b16 %v6742
        %v6770 = vunpack.c.l.b16 %v6743
        %v6771 = vunpack.c.l.b16 %v6744
        %v6772 = vunpack.c.l.b16 %v6745
        %v6773 = vunpack.c.l.b16 %v6746
        %v6774 = vunpack.c.l.b16 %v6747
        %v6775 = vunpack.c.l.b16 %v6748
        %v6776 = vpack.c.b16 %v6768, %v6767
        %v6777 = vpack.c.b16 %v6770, %v6769
        %v6778 = vpack.c.b16 %v6772, %v6771
        %v6779 = vpack.c.b16 %v6774, %v6773
        %v6780 = vpack.c.b16 %v6775, %v6775
        %v6782 = vshrl.u32 %v6776, 16
        %v6784 = vshll.u32 %v6776, 16
        %v6786 = vrot.slane %v6784, 1
        %v6787 = vor.u32 %v6782, %v6786
        %v6789 = vshll.u32 %v6777, 16
        %v6791 = vrot.slane %v6789, 1
        %v6792 = vsel %vm1298, %v6787, %v6791
        %v6793 = vshrl.u32 %v6777, 16
        %v6795 = vor.u32 %v6793, %v6791
        %v6797 = vshll.u32 %v6778, 16
        %v6799 = vrot.slane %v6797, 1
        %v6800 = vsel %vm1298, %v6795, %v6799
        %v6801 = vshrl.u32 %v6778, 16
        %v6803 = vor.u32 %v6801, %v6799
        %v6805 = vshll.u32 %v6779, 16
        %v6807 = vrot.slane %v6805, 1
        %v6808 = vsel %vm1298, %v6803, %v6807
        %v6809 = vshrl.u32 %v6779, 16
        %v6811 = vor.u32 %v6809, %v6807
        %v6813 = vshll.u32 %v6780, 16
        %v6815 = vrot.slane %v6813, 1
        %v6816 = vsel %vm1298, %v6811, %v6815
        %v6825 = vunpack.c.l.b16 %v6750
        %v6826 = vunpack.c.l.b16 %v6751
        %v6827 = vunpack.c.l.b16 %v6752
        %v6828 = vunpack.c.l.b16 %v6753
        %v6829 = vunpack.c.l.b16 %v6754
        %v6830 = vunpack.c.l.b16 %v6755
        %v6831 = vunpack.c.l.b16 %v6756
        %v6832 = vunpack.c.l.b16 %v6757
        %v6833 = vpack.c.b16 %v6826, %v6825
        %v6834 = vpack.c.b16 %v6828, %v6827
        %v6835 = vpack.c.b16 %v6830, %v6829
        %v6836 = vpack.c.b16 %v6832, %v6831
        %v6842 = vsel %vm3097, %v6792, 0
        %v6845 = vsel %vm3097, %v6800, 0
        %v6848 = vsel %vm3097, %v6808, 0
        %v6851 = vsel %vm3097, %v6816, 0
        %6853 = vmatpush.bf16.msra.mxu0 0
        %6854 = vmatpush.bf16.msra.mxu0 0
        %6855 = vmatpush.bf16.msra.mxu0 0
        %6856 = vmatpush.bf16.msra.mxu0 0
        %6857 = vmatpush.bf16.msra.mxu0 %v6836
        %6858 = vmatpush.bf16.msra.mxu0 %v6835
        %6859 = vmatpush.bf16.msra.mxu0 %v6834
        %6860 = vmatpush.bf16.msra.mxu0 %v6833
        %6861 = vmatmul.bf16.gmra.mxu0 %v6842
        %v6862 = vpop.f32.mrf.mxu0
        %v6863 = vadd.f32 0.0, %v6862
        %v6864 = vpop.f32.mrf.mxu0
        %v6865 = vadd.f32 0.0, %v6864
        %6866 = vmatmul.bf16.gmra.mxu0 %v6845
        %v6867 = vpop.f32.mrf.mxu0
        %v6868 = vadd.f32 0.0, %v6867
        %v6869 = vpop.f32.mrf.mxu0
        %v6870 = vadd.f32 0.0, %v6869
        %6871 = vmatmul.bf16.gmra.mxu0 %v6848
        %v6872 = vpop.f32.mrf.mxu0
        %v6873 = vadd.f32 0.0, %v6872
        %v6874 = vpop.f32.mrf.mxu0
        %v6875 = vadd.f32 0.0, %v6874
        %6876 = vmatmul.bf16.gmra.mxu0 %v6851
        %v6877 = vpop.f32.mrf.mxu0
        %v6878 = vadd.f32 0.0, %v6877
        %v6879 = vpop.f32.mrf.mxu0
        %v6880 = vadd.f32 0.0, %v6879
        %6881 = vdwg.mxu0
        %v6882 = vadd.f32 %v6723, %v6863
        %v6883 = vadd.f32 %v6724, %v6865
        %v6884 = vadd.f32 %v6725, %v6868
        %v6885 = vadd.f32 %v6726, %v6870
        %v6886 = vadd.f32 %v6727, %v6873
        %v6887 = vadd.f32 %v6728, %v6875
        %v6888 = vadd.f32 %v6729, %v6878
        %v6889 = vadd.f32 %v6730, %v6880
        %v6890 = vld [vmem:[%s11] sm:$0x1]
        %v6892 = vperm.slane %v6890, 0
        %v6894 = vadd.f32 %v6882, %v6892
        %v6895 = vadd.f32 %v6883, %v6892
        %v6896 = vadd.f32 %v6884, %v6892
        %v6897 = vadd.f32 %v6885, %v6892
        %v6898 = vadd.f32 %v6886, %v6892
        %v6899 = vadd.f32 %v6887, %v6892
        %v6900 = vadd.f32 %v6888, %v6892
        %v6901 = vadd.f32 %v6889, %v6892
        %v6902 = vmax.f32 %v6894, 0.0
        %v6903 = vmax.f32 %v6895, 0.0
        %v6904 = vmax.f32 %v6896, 0.0
        %v6905 = vmax.f32 %v6897, 0.0
        %v6906 = vmax.f32 %v6898, 0.0
        %v6907 = vmax.f32 %v6899, 0.0
        %v6908 = vmax.f32 %v6900, 0.0
        %v6909 = vmax.f32 %v6901, 0.0
        %v6910 = vpack.c.bf16 %v6902, %v6902
        %v6911 = vpack.c.bf16 %v6903, %v6903
        %v6912 = vpack.c.bf16 %v6904, %v6904
        %v6913 = vpack.c.bf16 %v6905, %v6905
        %v6914 = vpack.c.bf16 %v6906, %v6906
        %v6915 = vpack.c.bf16 %v6907, %v6907
        %v6916 = vpack.c.bf16 %v6908, %v6908
        %v6917 = vpack.c.bf16 %v6909, %v6909
        %6918 = vst.msk [vmem:[#allocation2 + $0x8] sm:$0xf] %vm478, %v6910
        %6919 = vst.msk [vmem:[#allocation2 + $0xc] sm:$0xf] %vm478, %v6911
        %6920 = vst.msk [vmem:[#allocation2 + $0x10] sm:$0xf] %vm478, %v6912
        %6921 = vst.msk [vmem:[#allocation2 + $0x14] sm:$0xf] %vm478, %v6913
        %6922 = vst.msk [vmem:[#allocation2 + $0x18] sm:$0xf] %vm478, %v6914
        %6923 = vst.msk [vmem:[#allocation2 + $0x1c] sm:$0xf] %vm478, %v6915
        %6924 = vst.msk [vmem:[#allocation2 + $0x20] sm:$0xf] %vm478, %v6916
        %6925 = vst.msk [vmem:[#allocation2 + $0x24] sm:$0xf] %vm478, %v6917
        %v6926 = vld [vmem:[#allocation2] sm:$0x8]
        %v6927 = vld [vmem:[#allocation2 + $0x4] sm:$0xf]
        %v6928 = vld [vmem:[#allocation2 + $0x8] sm:$0xf]
        %v6929 = vld [vmem:[#allocation2 + $0xc] sm:$0xf]
        %v6930 = vld [vmem:[#allocation2 + $0x10] sm:$0xf]
        %v6931 = vld [vmem:[#allocation2 + $0x14] sm:$0xf]
        %v6932 = vld [vmem:[#allocation2 + $0x18] sm:$0xf]
        %v6933 = vld [vmem:[#allocation2 + $0x1c] sm:$0xf]
        %v6934 = vld [vmem:[#allocation2 + $0x20] sm:$0xf]
        %v6935 = vsel %vm733, %v6926, 0
        %v6936 = vsel %vm740, %v6927, 0
        %v6937 = vsel %vm747, %v6928, 0
        %v6938 = vsel %vm754, %v6929, 0
        %v6939 = vsel %vm761, %v6930, 0
        %v6940 = vsel %vm768, %v6931, 0
        %v6941 = vsel %vm775, %v6932, 0
        %v6942 = vsel %vm782, %v6933, 0
        %v6943 = vsel %vm789, %v6934, 0
        %v6944 = vld [vmem:[%s7] sm:$0xf]
        %v6945 = vld [vmem:[%s7 + $0x4] sm:$0xf]
        %v6946 = vld [vmem:[%s7 + $0x8] sm:$0xf]
        %v6947 = vld [vmem:[%s7 + $0xc] sm:$0xf]
        %v6948 = vld [vmem:[%s7 + $0x10] sm:$0xf]
        %v6949 = vld [vmem:[%s7 + $0x14] sm:$0xf]
        %v6950 = vld [vmem:[%s7 + $0x18] sm:$0xf]
        %v6951 = vld [vmem:[%s7 + $0x1c] sm:$0xf]
        %v6952 = vsel %vm843, %v6927, 0
        %v6953 = vsel %vm844, %v6928, 0
        %v6954 = vsel %vm845, %v6929, 0
        %v6955 = vsel %vm846, %v6930, 0
        %v6956 = vsel %vm847, %v6931, 0
        %v6957 = vsel %vm848, %v6932, 0
        %v6958 = vsel %vm849, %v6933, 0
        %v6959 = vsel %vm850, %v6934, 0
        %s6960 = scalar_lea.vmem %s7, 32
        %v6961 = vld [vmem:[%s6960] sm:$0xf]
        %v6962 = vld [vmem:[%s6960 + $0x4] sm:$0xf]
        %v6963 = vld [vmem:[%s6960 + $0x8] sm:$0xf]
        %v6964 = vld [vmem:[%s6960 + $0xc] sm:$0xf]
        %v6965 = vld [vmem:[%s6960 + $0x10] sm:$0xf]
        %v6966 = vld [vmem:[%s6960 + $0x14] sm:$0xf]
        %v6967 = vld [vmem:[%s6960 + $0x18] sm:$0xf]
        %v6968 = vld [vmem:[%s6960 + $0x1c] sm:$0xf]
        %v6977 = vunpack.c.l.b16 %v6952
        %v6978 = vunpack.c.l.b16 %v6953
        %v6979 = vunpack.c.l.b16 %v6954
        %v6980 = vunpack.c.l.b16 %v6955
        %v6981 = vunpack.c.l.b16 %v6956
        %v6982 = vunpack.c.l.b16 %v6957
        %v6983 = vunpack.c.l.b16 %v6958
        %v6984 = vunpack.c.l.b16 %v6959
        %v6985 = vpack.c.b16 %v6978, %v6977
        %v6986 = vpack.c.b16 %v6980, %v6979
        %v6987 = vpack.c.b16 %v6982, %v6981
        %v6988 = vpack.c.b16 %v6984, %v6983
        %v6997 = vunpack.c.l.b16 %v6961
        %v6998 = vunpack.c.l.b16 %v6962
        %v6999 = vunpack.c.l.b16 %v6963
        %v7000 = vunpack.c.l.b16 %v6964
        %v7001 = vunpack.c.l.b16 %v6965
        %v7002 = vunpack.c.l.b16 %v6966
        %v7003 = vunpack.c.l.b16 %v6967
        %v7004 = vunpack.c.l.b16 %v6968
        %v7005 = vpack.c.b16 %v6998, %v6997
        %v7006 = vpack.c.b16 %v7000, %v6999
        %v7007 = vpack.c.b16 %v7002, %v7001
        %v7008 = vpack.c.b16 %v7004, %v7003
        %v7014 = vsel %vm3097, %v6985, 0
        %v7017 = vsel %vm3097, %v6986, 0
        %v7020 = vsel %vm3097, %v6987, 0
        %v7023 = vsel %vm3097, %v6988, 0
        %7025 = vmatpush.bf16.msra.mxu0 0
        %7026 = vmatpush.bf16.msra.mxu0 0
        %7027 = vmatpush.bf16.msra.mxu0 0
        %7028 = vmatpush.bf16.msra.mxu0 0
        %7029 = vmatpush.bf16.msra.mxu0 %v7008
        %7030 = vmatpush.bf16.msra.mxu0 %v7007
        %7031 = vmatpush.bf16.msra.mxu0 %v7006
        %7032 = vmatpush.bf16.msra.mxu0 %v7005
        %7033 = vmatmul.bf16.gmra.mxu0 %v7014
        %v7034 = vpop.f32.mrf.mxu0
        %v7035 = vadd.f32 0.0, %v7034
        %v7036 = vpop.f32.mrf.mxu0
        %v7037 = vadd.f32 0.0, %v7036
        %7038 = vmatmul.bf16.gmra.mxu0 %v7017
        %v7039 = vpop.f32.mrf.mxu0
        %v7040 = vadd.f32 0.0, %v7039
        %v7041 = vpop.f32.mrf.mxu0
        %v7042 = vadd.f32 0.0, %v7041
        %7043 = vmatmul.bf16.gmra.mxu0 %v7020
        %v7044 = vpop.f32.mrf.mxu0
        %v7045 = vadd.f32 0.0, %v7044
        %v7046 = vpop.f32.mrf.mxu0
        %v7047 = vadd.f32 0.0, %v7046
        %7048 = vmatmul.bf16.gmra.mxu0 %v7023
        %v7049 = vpop.f32.mrf.mxu0
        %v7050 = vadd.f32 0.0, %v7049
        %v7051 = vpop.f32.mrf.mxu0
        %v7052 = vadd.f32 0.0, %v7051
        %7053 = vdwg.mxu0
        %v7063 = vunpack.c.l.b16 %v6935
        %v7064 = vunpack.c.l.b16 %v6936
        %v7065 = vunpack.c.l.b16 %v6937
        %v7066 = vunpack.c.l.b16 %v6938
        %v7067 = vunpack.c.l.b16 %v6939
        %v7068 = vunpack.c.l.b16 %v6940
        %v7069 = vunpack.c.l.b16 %v6941
        %v7070 = vunpack.c.l.b16 %v6942
        %v7071 = vunpack.c.l.b16 %v6943
        %v7072 = vpack.c.b16 %v7064, %v7063
        %v7073 = vpack.c.b16 %v7066, %v7065
        %v7074 = vpack.c.b16 %v7068, %v7067
        %v7075 = vpack.c.b16 %v7070, %v7069
        %v7076 = vpack.c.b16 %v7071, %v7071
        %v7078 = vshrl.u32 %v7072, 16
        %v7080 = vrot.slane %v7078, 3
        %v7081 = vshll.u32 %v7072, 16
        %v7083 = vrot.slane %v7081, 4
        %v7084 = vor.u32 %v7080, %v7083
        %v7086 = vshrl.u32 %v7073, 16
        %v7088 = vrot.slane %v7086, 3
        %v7089 = vshll.u32 %v7073, 16
        %v7091 = vrot.slane %v7089, 4
        %v7092 = vor.u32 %v7088, %v7091
        %v7093 = vsel %vm961, %v7084, %v7092
        %v7095 = vshrl.u32 %v7074, 16
        %v7097 = vrot.slane %v7095, 3
        %v7098 = vshll.u32 %v7074, 16
        %v7100 = vrot.slane %v7098, 4
        %v7101 = vor.u32 %v7097, %v7100
        %v7102 = vsel %vm961, %v7092, %v7101
        %v7104 = vshrl.u32 %v7075, 16
        %v7106 = vrot.slane %v7104, 3
        %v7107 = vshll.u32 %v7075, 16
        %v7109 = vrot.slane %v7107, 4
        %v7110 = vor.u32 %v7106, %v7109
        %v7111 = vsel %vm961, %v7101, %v7110
        %v7113 = vshrl.u32 %v7076, 16
        %v7115 = vrot.slane %v7113, 3
        %v7116 = vshll.u32 %v7076, 16
        %v7118 = vrot.slane %v7116, 4
        %v7119 = vor.u32 %v7115, %v7118
        %v7120 = vsel %vm961, %v7110, %v7119
        %v7129 = vunpack.c.l.b16 %v6944
        %v7130 = vunpack.c.l.b16 %v6945
        %v7131 = vunpack.c.l.b16 %v6946
        %v7132 = vunpack.c.l.b16 %v6947
        %v7133 = vunpack.c.l.b16 %v6948
        %v7134 = vunpack.c.l.b16 %v6949
        %v7135 = vunpack.c.l.b16 %v6950
        %v7136 = vunpack.c.l.b16 %v6951
        %v7137 = vpack.c.b16 %v7130, %v7129
        %v7138 = vpack.c.b16 %v7132, %v7131
        %v7139 = vpack.c.b16 %v7134, %v7133
        %v7140 = vpack.c.b16 %v7136, %v7135
        %v7146 = vsel %vm3097, %v7093, 0
        %v7149 = vsel %vm3097, %v7102, 0
        %v7152 = vsel %vm3097, %v7111, 0
        %v7155 = vsel %vm3097, %v7120, 0
        %7157 = vmatpush.bf16.msra.mxu0 0
        %7158 = vmatpush.bf16.msra.mxu0 0
        %7159 = vmatpush.bf16.msra.mxu0 0
        %7160 = vmatpush.bf16.msra.mxu0 0
        %7161 = vmatpush.bf16.msra.mxu0 %v7140
        %7162 = vmatpush.bf16.msra.mxu0 %v7139
        %7163 = vmatpush.bf16.msra.mxu0 %v7138
        %7164 = vmatpush.bf16.msra.mxu0 %v7137
        %7165 = vmatmul.bf16.gmra.mxu0 %v7146
        %v7166 = vpop.f32.mrf.mxu0
        %v7167 = vadd.f32 %v7035, %v7166
        %v7168 = vpop.f32.mrf.mxu0
        %v7169 = vadd.f32 %v7037, %v7168
        %7170 = vmatmul.bf16.gmra.mxu0 %v7149
        %v7171 = vpop.f32.mrf.mxu0
        %v7172 = vadd.f32 %v7040, %v7171
        %v7173 = vpop.f32.mrf.mxu0
        %v7174 = vadd.f32 %v7042, %v7173
        %7175 = vmatmul.bf16.gmra.mxu0 %v7152
        %v7176 = vpop.f32.mrf.mxu0
        %v7177 = vadd.f32 %v7045, %v7176
        %v7178 = vpop.f32.mrf.mxu0
        %v7179 = vadd.f32 %v7047, %v7178
        %7180 = vmatmul.bf16.gmra.mxu0 %v7155
        %v7181 = vpop.f32.mrf.mxu0
        %v7182 = vadd.f32 %v7050, %v7181
        %v7183 = vpop.f32.mrf.mxu0
        %v7184 = vadd.f32 %v7052, %v7183
        %7185 = vdwg.mxu0
        %v7186 = vld [vmem:[#allocation2 + $0x4] sm:$0xf]
        %v7187 = vld [vmem:[#allocation2 + $0x8] sm:$0xf]
        %v7188 = vld [vmem:[#allocation2 + $0xc] sm:$0xf]
        %v7189 = vld [vmem:[#allocation2 + $0x10] sm:$0xf]
        %v7190 = vld [vmem:[#allocation2 + $0x14] sm:$0xf]
        %v7191 = vld [vmem:[#allocation2 + $0x18] sm:$0xf]
        %v7192 = vld [vmem:[#allocation2 + $0x1c] sm:$0xf]
        %v7193 = vld [vmem:[#allocation2 + $0x20] sm:$0xf]
        %v7194 = vld [vmem:[#allocation2 + $0x24] sm:$0x1]
        %v7195 = vsel %vm1204, %v7186, 0
        %v7196 = vsel %vm1211, %v7187, 0
        %v7197 = vsel %vm1218, %v7188, 0
        %v7198 = vsel %vm1225, %v7189, 0
        %v7199 = vsel %vm1232, %v7190, 0
        %v7200 = vsel %vm1239, %v7191, 0
        %v7201 = vsel %vm1246, %v7192, 0
        %v7202 = vsel %vm1253, %v7193, 0
        %v7203 = vsel %vm1260, %v7194, 0
        %s7204 = scalar_lea.vmem %s7, 64
        %v7205 = vld [vmem:[%s7204] sm:$0xf]
        %v7206 = vld [vmem:[%s7204 + $0x4] sm:$0xf]
        %v7207 = vld [vmem:[%s7204 + $0x8] sm:$0xf]
        %v7208 = vld [vmem:[%s7204 + $0xc] sm:$0xf]
        %v7209 = vld [vmem:[%s7204 + $0x10] sm:$0xf]
        %v7210 = vld [vmem:[%s7204 + $0x14] sm:$0xf]
        %v7211 = vld [vmem:[%s7204 + $0x18] sm:$0xf]
        %v7212 = vld [vmem:[%s7204 + $0x1c] sm:$0xf]
        %v7222 = vunpack.c.l.b16 %v7195
        %v7223 = vunpack.c.l.b16 %v7196
        %v7224 = vunpack.c.l.b16 %v7197
        %v7225 = vunpack.c.l.b16 %v7198
        %v7226 = vunpack.c.l.b16 %v7199
        %v7227 = vunpack.c.l.b16 %v7200
        %v7228 = vunpack.c.l.b16 %v7201
        %v7229 = vunpack.c.l.b16 %v7202
        %v7230 = vunpack.c.l.b16 %v7203
        %v7231 = vpack.c.b16 %v7223, %v7222
        %v7232 = vpack.c.b16 %v7225, %v7224
        %v7233 = vpack.c.b16 %v7227, %v7226
        %v7234 = vpack.c.b16 %v7229, %v7228
        %v7235 = vpack.c.b16 %v7230, %v7230
        %v7237 = vshrl.u32 %v7231, 16
        %v7239 = vshll.u32 %v7231, 16
        %v7241 = vrot.slane %v7239, 1
        %v7242 = vor.u32 %v7237, %v7241
        %v7244 = vshll.u32 %v7232, 16
        %v7246 = vrot.slane %v7244, 1
        %v7247 = vsel %vm1298, %v7242, %v7246
        %v7248 = vshrl.u32 %v7232, 16
        %v7250 = vor.u32 %v7248, %v7246
        %v7252 = vshll.u32 %v7233, 16
        %v7254 = vrot.slane %v7252, 1
        %v7255 = vsel %vm1298, %v7250, %v7254
        %v7256 = vshrl.u32 %v7233, 16
        %v7258 = vor.u32 %v7256, %v7254
        %v7260 = vshll.u32 %v7234, 16
        %v7262 = vrot.slane %v7260, 1
        %v7263 = vsel %vm1298, %v7258, %v7262
        %v7264 = vshrl.u32 %v7234, 16
        %v7266 = vor.u32 %v7264, %v7262
        %v7268 = vshll.u32 %v7235, 16
        %v7270 = vrot.slane %v7268, 1
        %v7271 = vsel %vm1298, %v7266, %v7270
        %v7280 = vunpack.c.l.b16 %v7205
        %v7281 = vunpack.c.l.b16 %v7206
        %v7282 = vunpack.c.l.b16 %v7207
        %v7283 = vunpack.c.l.b16 %v7208
        %v7284 = vunpack.c.l.b16 %v7209
        %v7285 = vunpack.c.l.b16 %v7210
        %v7286 = vunpack.c.l.b16 %v7211
        %v7287 = vunpack.c.l.b16 %v7212
        %v7288 = vpack.c.b16 %v7281, %v7280
        %v7289 = vpack.c.b16 %v7283, %v7282
        %v7290 = vpack.c.b16 %v7285, %v7284
        %v7291 = vpack.c.b16 %v7287, %v7286
        %v7297 = vsel %vm3097, %v7247, 0
        %v7300 = vsel %vm3097, %v7255, 0
        %v7303 = vsel %vm3097, %v7263, 0
        %v7306 = vsel %vm3097, %v7271, 0
        %7308 = vmatpush.bf16.msra.mxu0 0
        %7309 = vmatpush.bf16.msra.mxu0 0
        %7310 = vmatpush.bf16.msra.mxu0 0
        %7311 = vmatpush.bf16.msra.mxu0 0
        %7312 = vmatpush.bf16.msra.mxu0 %v7291
        %7313 = vmatpush.bf16.msra.mxu0 %v7290
        %7314 = vmatpush.bf16.msra.mxu0 %v7289
        %7315 = vmatpush.bf16.msra.mxu0 %v7288
        %7316 = vmatmul.bf16.gmra.mxu0 %v7297
        %v7317 = vpop.f32.mrf.mxu0
        %v7318 = vadd.f32 0.0, %v7317
        %v7319 = vpop.f32.mrf.mxu0
        %v7320 = vadd.f32 0.0, %v7319
        %7321 = vmatmul.bf16.gmra.mxu0 %v7300
        %v7322 = vpop.f32.mrf.mxu0
        %v7323 = vadd.f32 0.0, %v7322
        %v7324 = vpop.f32.mrf.mxu0
        %v7325 = vadd.f32 0.0, %v7324
        %7326 = vmatmul.bf16.gmra.mxu0 %v7303
        %v7327 = vpop.f32.mrf.mxu0
        %v7328 = vadd.f32 0.0, %v7327
        %v7329 = vpop.f32.mrf.mxu0
        %v7330 = vadd.f32 0.0, %v7329
        %7331 = vmatmul.bf16.gmra.mxu0 %v7306
        %v7332 = vpop.f32.mrf.mxu0
        %v7333 = vadd.f32 0.0, %v7332
        %v7334 = vpop.f32.mrf.mxu0
        %v7335 = vadd.f32 0.0, %v7334
        %7336 = vdwg.mxu0
        %v7337 = vadd.f32 %v7167, %v7318
        %v7338 = vadd.f32 %v7169, %v7320
        %v7339 = vadd.f32 %v7172, %v7323
        %v7340 = vadd.f32 %v7174, %v7325
        %v7341 = vadd.f32 %v7177, %v7328
        %v7342 = vadd.f32 %v7179, %v7330
        %v7343 = vadd.f32 %v7182, %v7333
        %v7344 = vadd.f32 %v7184, %v7335
        %v7345 = vld [vmem:[#allocation2 + $0x4] sm:$0x8]
        %v7346 = vld [vmem:[#allocation2 + $0x24] sm:$0xf]
        %v7347 = vsel %vm1539, %v7345, 0
        %v7348 = vsel %vm1546, %v7187, 0
        %v7349 = vsel %vm1553, %v7188, 0
        %v7350 = vsel %vm1560, %v7189, 0
        %v7351 = vsel %vm1567, %v7190, 0
        %v7352 = vsel %vm1574, %v7191, 0
        %v7353 = vsel %vm1581, %v7192, 0
        %v7354 = vsel %vm1588, %v7193, 0
        %v7355 = vsel %vm1595, %v7346, 0
        %s7356 = scalar_lea.vmem %s7, 96
        %v7357 = vld [vmem:[%s7356] sm:$0xf]
        %v7358 = vld [vmem:[%s7356 + $0x4] sm:$0xf]
        %v7359 = vld [vmem:[%s7356 + $0x8] sm:$0xf]
        %v7360 = vld [vmem:[%s7356 + $0xc] sm:$0xf]
        %v7361 = vld [vmem:[%s7356 + $0x10] sm:$0xf]
        %v7362 = vld [vmem:[%s7356 + $0x14] sm:$0xf]
        %v7363 = vld [vmem:[%s7356 + $0x18] sm:$0xf]
        %v7364 = vld [vmem:[%s7356 + $0x1c] sm:$0xf]
        %v7374 = vunpack.c.l.b16 %v7347
        %v7375 = vunpack.c.l.b16 %v7348
        %v7376 = vunpack.c.l.b16 %v7349
        %v7377 = vunpack.c.l.b16 %v7350
        %v7378 = vunpack.c.l.b16 %v7351
        %v7379 = vunpack.c.l.b16 %v7352
        %v7380 = vunpack.c.l.b16 %v7353
        %v7381 = vunpack.c.l.b16 %v7354
        %v7382 = vunpack.c.l.b16 %v7355
        %v7383 = vpack.c.b16 %v7375, %v7374
        %v7384 = vpack.c.b16 %v7377, %v7376
        %v7385 = vpack.c.b16 %v7379, %v7378
        %v7386 = vpack.c.b16 %v7381, %v7380
        %v7387 = vpack.c.b16 %v7382, %v7382
        %v7389 = vshrl.u32 %v7383, 16
        %v7391 = vrot.slane %v7389, 3
        %v7392 = vshll.u32 %v7383, 16
        %v7394 = vrot.slane %v7392, 4
        %v7395 = vor.u32 %v7391, %v7394
        %v7397 = vshrl.u32 %v7384, 16
        %v7399 = vrot.slane %v7397, 3
        %v7400 = vshll.u32 %v7384, 16
        %v7402 = vrot.slane %v7400, 4
        %v7403 = vor.u32 %v7399, %v7402
        %v7404 = vsel %vm961, %v7395, %v7403
        %v7406 = vshrl.u32 %v7385, 16
        %v7408 = vrot.slane %v7406, 3
        %v7409 = vshll.u32 %v7385, 16
        %v7411 = vrot.slane %v7409, 4
        %v7412 = vor.u32 %v7408, %v7411
        %v7413 = vsel %vm961, %v7403, %v7412
        %v7415 = vshrl.u32 %v7386, 16
        %v7417 = vrot.slane %v7415, 3
        %v7418 = vshll.u32 %v7386, 16
        %v7420 = vrot.slane %v7418, 4
        %v7421 = vor.u32 %v7417, %v7420
        %v7422 = vsel %vm961, %v7412, %v7421
        %v7424 = vshrl.u32 %v7387, 16
        %v7426 = vrot.slane %v7424, 3
        %v7427 = vshll.u32 %v7387, 16
        %v7429 = vrot.slane %v7427, 4
        %v7430 = vor.u32 %v7426, %v7429
        %v7431 = vsel %vm961, %v7421, %v7430
        %v7440 = vunpack.c.l.b16 %v7357
        %v7441 = vunpack.c.l.b16 %v7358
        %v7442 = vunpack.c.l.b16 %v7359
        %v7443 = vunpack.c.l.b16 %v7360
        %v7444 = vunpack.c.l.b16 %v7361
        %v7445 = vunpack.c.l.b16 %v7362
        %v7446 = vunpack.c.l.b16 %v7363
        %v7447 = vunpack.c.l.b16 %v7364
        %v7448 = vpack.c.b16 %v7441, %v7440
        %v7449 = vpack.c.b16 %v7443, %v7442
        %v7450 = vpack.c.b16 %v7445, %v7444
        %v7451 = vpack.c.b16 %v7447, %v7446
        %v7457 = vsel %vm3097, %v7404, 0
        %v7460 = vsel %vm3097, %v7413, 0
        %v7463 = vsel %vm3097, %v7422, 0
        %v7466 = vsel %vm3097, %v7431, 0
        %7468 = vmatpush.bf16.msra.mxu0 0
        %7469 = vmatpush.bf16.msra.mxu0 0
        %7470 = vmatpush.bf16.msra.mxu0 0
        %7471 = vmatpush.bf16.msra.mxu0 0
        %7472 = vmatpush.bf16.msra.mxu0 %v7451
        %7473 = vmatpush.bf16.msra.mxu0 %v7450
        %7474 = vmatpush.bf16.msra.mxu0 %v7449
        %7475 = vmatpush.bf16.msra.mxu0 %v7448
        %7476 = vmatmul.bf16.gmra.mxu0 %v7457
        %v7477 = vpop.f32.mrf.mxu0
        %v7478 = vadd.f32 0.0, %v7477
        %v7479 = vpop.f32.mrf.mxu0
        %v7480 = vadd.f32 0.0, %v7479
        %7481 = vmatmul.bf16.gmra.mxu0 %v7460
        %v7482 = vpop.f32.mrf.mxu0
        %v7483 = vadd.f32 0.0, %v7482
        %v7484 = vpop.f32.mrf.mxu0
        %v7485 = vadd.f32 0.0, %v7484
        %7486 = vmatmul.bf16.gmra.mxu0 %v7463
        %v7487 = vpop.f32.mrf.mxu0
        %v7488 = vadd.f32 0.0, %v7487
        %v7489 = vpop.f32.mrf.mxu0
        %v7490 = vadd.f32 0.0, %v7489
        %7491 = vmatmul.bf16.gmra.mxu0 %v7466
        %v7492 = vpop.f32.mrf.mxu0
        %v7493 = vadd.f32 0.0, %v7492
        %v7494 = vpop.f32.mrf.mxu0
        %v7495 = vadd.f32 0.0, %v7494
        %7496 = vdwg.mxu0
        %v7497 = vadd.f32 %v7337, %v7478
        %v7498 = vadd.f32 %v7338, %v7480
        %v7499 = vadd.f32 %v7339, %v7483
        %v7500 = vadd.f32 %v7340, %v7485
        %v7501 = vadd.f32 %v7341, %v7488
        %v7502 = vadd.f32 %v7342, %v7490
        %v7503 = vadd.f32 %v7343, %v7493
        %v7504 = vadd.f32 %v7344, %v7495
        %s7505 = scalar_lea.vmem %s7, 128
        %v7506 = vld [vmem:[%s7505] sm:$0xf]
        %v7507 = vld [vmem:[%s7505 + $0x4] sm:$0xf]
        %v7508 = vld [vmem:[%s7505 + $0x8] sm:$0xf]
        %v7509 = vld [vmem:[%s7505 + $0xc] sm:$0xf]
        %v7510 = vld [vmem:[%s7505 + $0x10] sm:$0xf]
        %v7511 = vld [vmem:[%s7505 + $0x14] sm:$0xf]
        %v7512 = vld [vmem:[%s7505 + $0x18] sm:$0xf]
        %v7513 = vld [vmem:[%s7505 + $0x1c] sm:$0xf]
        %v7522 = vunpack.c.l.b16 %v6910
        %v7523 = vunpack.c.l.b16 %v6911
        %v7524 = vunpack.c.l.b16 %v6912
        %v7525 = vunpack.c.l.b16 %v6913
        %v7526 = vunpack.c.l.b16 %v6914
        %v7527 = vunpack.c.l.b16 %v6915
        %v7528 = vunpack.c.l.b16 %v6916
        %v7529 = vunpack.c.l.b16 %v6917
        %v7530 = vpack.c.b16 %v7523, %v7522
        %v7531 = vpack.c.b16 %v7525, %v7524
        %v7532 = vpack.c.b16 %v7527, %v7526
        %v7533 = vpack.c.b16 %v7529, %v7528
        %v7542 = vunpack.c.l.b16 %v7506
        %v7543 = vunpack.c.l.b16 %v7507
        %v7544 = vunpack.c.l.b16 %v7508
        %v7545 = vunpack.c.l.b16 %v7509
        %v7546 = vunpack.c.l.b16 %v7510
        %v7547 = vunpack.c.l.b16 %v7511
        %v7548 = vunpack.c.l.b16 %v7512
        %v7549 = vunpack.c.l.b16 %v7513
        %v7550 = vpack.c.b16 %v7543, %v7542
        %v7551 = vpack.c.b16 %v7545, %v7544
        %v7552 = vpack.c.b16 %v7547, %v7546
        %v7553 = vpack.c.b16 %v7549, %v7548
        %v7559 = vsel %vm3097, %v7530, 0
        %v7562 = vsel %vm3097, %v7531, 0
        %v7565 = vsel %vm3097, %v7532, 0
        %v7568 = vsel %vm3097, %v7533, 0
        %7570 = vmatpush.bf16.msra.mxu0 0
        %7571 = vmatpush.bf16.msra.mxu0 0
        %7572 = vmatpush.bf16.msra.mxu0 0
        %7573 = vmatpush.bf16.msra.mxu0 0
        %7574 = vmatpush.bf16.msra.mxu0 %v7553
        %7575 = vmatpush.bf16.msra.mxu0 %v7552
        %7576 = vmatpush.bf16.msra.mxu0 %v7551
        %7577 = vmatpush.bf16.msra.mxu0 %v7550
        %7578 = vmatmul.bf16.gmra.mxu0 %v7559
        %v7579 = vpop.f32.mrf.mxu0
        %v7580 = vadd.f32 0.0, %v7579
        %v7581 = vpop.f32.mrf.mxu0
        %v7582 = vadd.f32 0.0, %v7581
        %7583 = vmatmul.bf16.gmra.mxu0 %v7562
        %v7584 = vpop.f32.mrf.mxu0
        %v7585 = vadd.f32 0.0, %v7584
        %v7586 = vpop.f32.mrf.mxu0
        %v7587 = vadd.f32 0.0, %v7586
        %7588 = vmatmul.bf16.gmra.mxu0 %v7565
        %v7589 = vpop.f32.mrf.mxu0
        %v7590 = vadd.f32 0.0, %v7589
        %v7591 = vpop.f32.mrf.mxu0
        %v7592 = vadd.f32 0.0, %v7591
        %7593 = vmatmul.bf16.gmra.mxu0 %v7568
        %v7594 = vpop.f32.mrf.mxu0
        %v7595 = vadd.f32 0.0, %v7594
        %v7596 = vpop.f32.mrf.mxu0
        %v7597 = vadd.f32 0.0, %v7596
        %7598 = vdwg.mxu0
        %v7599 = vadd.f32 %v7497, %v7580
        %v7600 = vadd.f32 %v7498, %v7582
        %v7601 = vadd.f32 %v7499, %v7585
        %v7602 = vadd.f32 %v7500, %v7587
        %v7603 = vadd.f32 %v7501, %v7590
        %v7604 = vadd.f32 %v7502, %v7592
        %v7605 = vadd.f32 %v7503, %v7595
        %v7606 = vadd.f32 %v7504, %v7597
        %v7607 = vld [vmem:[#allocation2 + $0x8] sm:$0xf]
        %v7608 = vld [vmem:[#allocation2 + $0xc] sm:$0xf]
        %v7609 = vld [vmem:[#allocation2 + $0x10] sm:$0xf]
        %v7610 = vld [vmem:[#allocation2 + $0x14] sm:$0xf]
        %v7611 = vld [vmem:[#allocation2 + $0x18] sm:$0xf]
        %v7612 = vld [vmem:[#allocation2 + $0x1c] sm:$0xf]
        %v7613 = vld [vmem:[#allocation2 + $0x20] sm:$0xf]
        %v7614 = vld [vmem:[#allocation2 + $0x24] sm:$0xf]
        %v7615 = vld [vmem:[#allocation2 + $0x28] sm:$0x1]
        %v7616 = vsel %vm1966, %v7607, 0
        %v7617 = vsel %vm1973, %v7608, 0
        %v7618 = vsel %vm1980, %v7609, 0
        %v7619 = vsel %vm1987, %v7610, 0
        %v7620 = vsel %vm1994, %v7611, 0
        %v7621 = vsel %vm2001, %v7612, 0
        %v7622 = vsel %vm2008, %v7613, 0
        %v7623 = vsel %vm2015, %v7614, 0
        %v7624 = vsel %vm2022, %v7615, 0
        %s7625 = scalar_lea.vmem %s7, 160
        %v7626 = vld [vmem:[%s7625] sm:$0xf]
        %v7627 = vld [vmem:[%s7625 + $0x4] sm:$0xf]
        %v7628 = vld [vmem:[%s7625 + $0x8] sm:$0xf]
        %v7629 = vld [vmem:[%s7625 + $0xc] sm:$0xf]
        %v7630 = vld [vmem:[%s7625 + $0x10] sm:$0xf]
        %v7631 = vld [vmem:[%s7625 + $0x14] sm:$0xf]
        %v7632 = vld [vmem:[%s7625 + $0x18] sm:$0xf]
        %v7633 = vld [vmem:[%s7625 + $0x1c] sm:$0xf]
        %v7643 = vunpack.c.l.b16 %v7616
        %v7644 = vunpack.c.l.b16 %v7617
        %v7645 = vunpack.c.l.b16 %v7618
        %v7646 = vunpack.c.l.b16 %v7619
        %v7647 = vunpack.c.l.b16 %v7620
        %v7648 = vunpack.c.l.b16 %v7621
        %v7649 = vunpack.c.l.b16 %v7622
        %v7650 = vunpack.c.l.b16 %v7623
        %v7651 = vunpack.c.l.b16 %v7624
        %v7652 = vpack.c.b16 %v7644, %v7643
        %v7653 = vpack.c.b16 %v7646, %v7645
        %v7654 = vpack.c.b16 %v7648, %v7647
        %v7655 = vpack.c.b16 %v7650, %v7649
        %v7656 = vpack.c.b16 %v7651, %v7651
        %v7658 = vshrl.u32 %v7652, 16
        %v7660 = vshll.u32 %v7652, 16
        %v7662 = vrot.slane %v7660, 1
        %v7663 = vor.u32 %v7658, %v7662
        %v7665 = vshll.u32 %v7653, 16
        %v7667 = vrot.slane %v7665, 1
        %v7668 = vsel %vm1298, %v7663, %v7667
        %v7669 = vshrl.u32 %v7653, 16
        %v7671 = vor.u32 %v7669, %v7667
        %v7673 = vshll.u32 %v7654, 16
        %v7675 = vrot.slane %v7673, 1
        %v7676 = vsel %vm1298, %v7671, %v7675
        %v7677 = vshrl.u32 %v7654, 16
        %v7679 = vor.u32 %v7677, %v7675
        %v7681 = vshll.u32 %v7655, 16
        %v7683 = vrot.slane %v7681, 1
        %v7684 = vsel %vm1298, %v7679, %v7683
        %v7685 = vshrl.u32 %v7655, 16
        %v7687 = vor.u32 %v7685, %v7683
        %v7689 = vshll.u32 %v7656, 16
        %v7691 = vrot.slane %v7689, 1
        %v7692 = vsel %vm1298, %v7687, %v7691
        %v7701 = vunpack.c.l.b16 %v7626
        %v7702 = vunpack.c.l.b16 %v7627
        %v7703 = vunpack.c.l.b16 %v7628
        %v7704 = vunpack.c.l.b16 %v7629
        %v7705 = vunpack.c.l.b16 %v7630
        %v7706 = vunpack.c.l.b16 %v7631
        %v7707 = vunpack.c.l.b16 %v7632
        %v7708 = vunpack.c.l.b16 %v7633
        %v7709 = vpack.c.b16 %v7702, %v7701
        %v7710 = vpack.c.b16 %v7704, %v7703
        %v7711 = vpack.c.b16 %v7706, %v7705
        %v7712 = vpack.c.b16 %v7708, %v7707
        %v7718 = vsel %vm3097, %v7668, 0
        %v7721 = vsel %vm3097, %v7676, 0
        %v7724 = vsel %vm3097, %v7684, 0
        %v7727 = vsel %vm3097, %v7692, 0
        %7729 = vmatpush.bf16.msra.mxu0 0
        %7730 = vmatpush.bf16.msra.mxu0 0
        %7731 = vmatpush.bf16.msra.mxu0 0
        %7732 = vmatpush.bf16.msra.mxu0 0
        %7733 = vmatpush.bf16.msra.mxu0 %v7712
        %7734 = vmatpush.bf16.msra.mxu0 %v7711
        %7735 = vmatpush.bf16.msra.mxu0 %v7710
        %7736 = vmatpush.bf16.msra.mxu0 %v7709
        %7737 = vmatmul.bf16.gmra.mxu0 %v7718
        %v7738 = vpop.f32.mrf.mxu0
        %v7739 = vadd.f32 0.0, %v7738
        %v7740 = vpop.f32.mrf.mxu0
        %v7741 = vadd.f32 0.0, %v7740
        %7742 = vmatmul.bf16.gmra.mxu0 %v7721
        %v7743 = vpop.f32.mrf.mxu0
        %v7744 = vadd.f32 0.0, %v7743
        %v7745 = vpop.f32.mrf.mxu0
        %v7746 = vadd.f32 0.0, %v7745
        %7747 = vmatmul.bf16.gmra.mxu0 %v7724
        %v7748 = vpop.f32.mrf.mxu0
        %v7749 = vadd.f32 0.0, %v7748
        %v7750 = vpop.f32.mrf.mxu0
        %v7751 = vadd.f32 0.0, %v7750
        %7752 = vmatmul.bf16.gmra.mxu0 %v7727
        %v7753 = vpop.f32.mrf.mxu0
        %v7754 = vadd.f32 0.0, %v7753
        %v7755 = vpop.f32.mrf.mxu0
        %v7756 = vadd.f32 0.0, %v7755
        %7757 = vdwg.mxu0
        %v7758 = vadd.f32 %v7599, %v7739
        %v7759 = vadd.f32 %v7600, %v7741
        %v7760 = vadd.f32 %v7601, %v7744
        %v7761 = vadd.f32 %v7602, %v7746
        %v7762 = vadd.f32 %v7603, %v7749
        %v7763 = vadd.f32 %v7604, %v7751
        %v7764 = vadd.f32 %v7605, %v7754
        %v7765 = vadd.f32 %v7606, %v7756
        %v7766 = vld [vmem:[#allocation2 + $0x8] sm:$0x8]
        %v7767 = vld [vmem:[#allocation2 + $0x28] sm:$0xf]
        %v7768 = vsel %vm2300, %v7766, 0
        %v7769 = vsel %vm2307, %v7608, 0
        %v7770 = vsel %vm2314, %v7609, 0
        %v7771 = vsel %vm2321, %v7610, 0
        %v7772 = vsel %vm2328, %v7611, 0
        %v7773 = vsel %vm2335, %v7612, 0
        %v7774 = vsel %vm2342, %v7613, 0
        %v7775 = vsel %vm2349, %v7614, 0
        %v7776 = vsel %vm2356, %v7767, 0
        %s7777 = scalar_lea.vmem %s7, 192
        %v7778 = vld [vmem:[%s7777] sm:$0xf]
        %v7779 = vld [vmem:[%s7777 + $0x4] sm:$0xf]
        %v7780 = vld [vmem:[%s7777 + $0x8] sm:$0xf]
        %v7781 = vld [vmem:[%s7777 + $0xc] sm:$0xf]
        %v7782 = vld [vmem:[%s7777 + $0x10] sm:$0xf]
        %v7783 = vld [vmem:[%s7777 + $0x14] sm:$0xf]
        %v7784 = vld [vmem:[%s7777 + $0x18] sm:$0xf]
        %v7785 = vld [vmem:[%s7777 + $0x1c] sm:$0xf]
        %v7795 = vunpack.c.l.b16 %v7768
        %v7796 = vunpack.c.l.b16 %v7769
        %v7797 = vunpack.c.l.b16 %v7770
        %v7798 = vunpack.c.l.b16 %v7771
        %v7799 = vunpack.c.l.b16 %v7772
        %v7800 = vunpack.c.l.b16 %v7773
        %v7801 = vunpack.c.l.b16 %v7774
        %v7802 = vunpack.c.l.b16 %v7775
        %v7803 = vunpack.c.l.b16 %v7776
        %v7804 = vpack.c.b16 %v7796, %v7795
        %v7805 = vpack.c.b16 %v7798, %v7797
        %v7806 = vpack.c.b16 %v7800, %v7799
        %v7807 = vpack.c.b16 %v7802, %v7801
        %v7808 = vpack.c.b16 %v7803, %v7803
        %v7810 = vshrl.u32 %v7804, 16
        %v7812 = vrot.slane %v7810, 3
        %v7813 = vshll.u32 %v7804, 16
        %v7815 = vrot.slane %v7813, 4
        %v7816 = vor.u32 %v7812, %v7815
        %v7818 = vshrl.u32 %v7805, 16
        %v7820 = vrot.slane %v7818, 3
        %v7821 = vshll.u32 %v7805, 16
        %v7823 = vrot.slane %v7821, 4
        %v7824 = vor.u32 %v7820, %v7823
        %v7825 = vsel %vm961, %v7816, %v7824
        %v7827 = vshrl.u32 %v7806, 16
        %v7829 = vrot.slane %v7827, 3
        %v7830 = vshll.u32 %v7806, 16
        %v7832 = vrot.slane %v7830, 4
        %v7833 = vor.u32 %v7829, %v7832
        %v7834 = vsel %vm961, %v7824, %v7833
        %v7836 = vshrl.u32 %v7807, 16
        %v7838 = vrot.slane %v7836, 3
        %v7839 = vshll.u32 %v7807, 16
        %v7841 = vrot.slane %v7839, 4
        %v7842 = vor.u32 %v7838, %v7841
        %v7843 = vsel %vm961, %v7833, %v7842
        %v7845 = vshrl.u32 %v7808, 16
        %v7847 = vrot.slane %v7845, 3
        %v7848 = vshll.u32 %v7808, 16
        %v7850 = vrot.slane %v7848, 4
        %v7851 = vor.u32 %v7847, %v7850
        %v7852 = vsel %vm961, %v7842, %v7851
        %v7861 = vunpack.c.l.b16 %v7778
        %v7862 = vunpack.c.l.b16 %v7779
        %v7863 = vunpack.c.l.b16 %v7780
        %v7864 = vunpack.c.l.b16 %v7781
        %v7865 = vunpack.c.l.b16 %v7782
        %v7866 = vunpack.c.l.b16 %v7783
        %v7867 = vunpack.c.l.b16 %v7784
        %v7868 = vunpack.c.l.b16 %v7785
        %v7869 = vpack.c.b16 %v7862, %v7861
        %v7870 = vpack.c.b16 %v7864, %v7863
        %v7871 = vpack.c.b16 %v7866, %v7865
        %v7872 = vpack.c.b16 %v7868, %v7867
        %v7878 = vsel %vm3097, %v7825, 0
        %v7881 = vsel %vm3097, %v7834, 0
        %v7884 = vsel %vm3097, %v7843, 0
        %v7887 = vsel %vm3097, %v7852, 0
        %7889 = vmatpush.bf16.msra.mxu0 0
        %7890 = vmatpush.bf16.msra.mxu0 0
        %7891 = vmatpush.bf16.msra.mxu0 0
        %7892 = vmatpush.bf16.msra.mxu0 0
        %7893 = vmatpush.bf16.msra.mxu0 %v7872
        %7894 = vmatpush.bf16.msra.mxu0 %v7871
        %7895 = vmatpush.bf16.msra.mxu0 %v7870
        %7896 = vmatpush.bf16.msra.mxu0 %v7869
        %7897 = vmatmul.bf16.gmra.mxu0 %v7878
        %v7898 = vpop.f32.mrf.mxu0
        %v7899 = vadd.f32 0.0, %v7898
        %v7900 = vpop.f32.mrf.mxu0
        %v7901 = vadd.f32 0.0, %v7900
        %7902 = vmatmul.bf16.gmra.mxu0 %v7881
        %v7903 = vpop.f32.mrf.mxu0
        %v7904 = vadd.f32 0.0, %v7903
        %v7905 = vpop.f32.mrf.mxu0
        %v7906 = vadd.f32 0.0, %v7905
        %7907 = vmatmul.bf16.gmra.mxu0 %v7884
        %v7908 = vpop.f32.mrf.mxu0
        %v7909 = vadd.f32 0.0, %v7908
        %v7910 = vpop.f32.mrf.mxu0
        %v7911 = vadd.f32 0.0, %v7910
        %7912 = vmatmul.bf16.gmra.mxu0 %v7887
        %v7913 = vpop.f32.mrf.mxu0
        %v7914 = vadd.f32 0.0, %v7913
        %v7915 = vpop.f32.mrf.mxu0
        %v7916 = vadd.f32 0.0, %v7915
        %7917 = vdwg.mxu0
        %v7918 = vadd.f32 %v7758, %v7899
        %v7919 = vadd.f32 %v7759, %v7901
        %v7920 = vadd.f32 %v7760, %v7904
        %v7921 = vadd.f32 %v7761, %v7906
        %v7922 = vadd.f32 %v7762, %v7909
        %v7923 = vadd.f32 %v7763, %v7911
        %v7924 = vadd.f32 %v7764, %v7914
        %v7925 = vadd.f32 %v7765, %v7916
        %v7926 = vsel %vm2539, %v7608, 0
        %v7927 = vsel %vm2540, %v7609, 0
        %v7928 = vsel %vm2541, %v7610, 0
        %v7929 = vsel %vm2542, %v7611, 0
        %v7930 = vsel %vm2543, %v7612, 0
        %v7931 = vsel %vm2544, %v7613, 0
        %v7932 = vsel %vm2545, %v7614, 0
        %v7933 = vsel %vm2546, %v7767, 0
        %s7934 = scalar_lea.vmem %s7, 224
        %v7935 = vld [vmem:[%s7934] sm:$0xf]
        %v7936 = vld [vmem:[%s7934 + $0x4] sm:$0xf]
        %v7937 = vld [vmem:[%s7934 + $0x8] sm:$0xf]
        %v7938 = vld [vmem:[%s7934 + $0xc] sm:$0xf]
        %v7939 = vld [vmem:[%s7934 + $0x10] sm:$0xf]
        %v7940 = vld [vmem:[%s7934 + $0x14] sm:$0xf]
        %v7941 = vld [vmem:[%s7934 + $0x18] sm:$0xf]
        %v7942 = vld [vmem:[%s7934 + $0x1c] sm:$0xf]
        %v7951 = vunpack.c.l.b16 %v7926
        %v7952 = vunpack.c.l.b16 %v7927
        %v7953 = vunpack.c.l.b16 %v7928
        %v7954 = vunpack.c.l.b16 %v7929
        %v7955 = vunpack.c.l.b16 %v7930
        %v7956 = vunpack.c.l.b16 %v7931
        %v7957 = vunpack.c.l.b16 %v7932
        %v7958 = vunpack.c.l.b16 %v7933
        %v7959 = vpack.c.b16 %v7952, %v7951
        %v7960 = vpack.c.b16 %v7954, %v7953
        %v7961 = vpack.c.b16 %v7956, %v7955
        %v7962 = vpack.c.b16 %v7958, %v7957
        %v7971 = vunpack.c.l.b16 %v7935
        %v7972 = vunpack.c.l.b16 %v7936
        %v7973 = vunpack.c.l.b16 %v7937
        %v7974 = vunpack.c.l.b16 %v7938
        %v7975 = vunpack.c.l.b16 %v7939
        %v7976 = vunpack.c.l.b16 %v7940
        %v7977 = vunpack.c.l.b16 %v7941
        %v7978 = vunpack.c.l.b16 %v7942
        %v7979 = vpack.c.b16 %v7972, %v7971
        %v7980 = vpack.c.b16 %v7974, %v7973
        %v7981 = vpack.c.b16 %v7976, %v7975
        %v7982 = vpack.c.b16 %v7978, %v7977
        %v7988 = vsel %vm3097, %v7959, 0
        %v7991 = vsel %vm3097, %v7960, 0
        %v7994 = vsel %vm3097, %v7961, 0
        %v7997 = vsel %vm3097, %v7962, 0
        %7999 = vmatpush.bf16.msra.mxu0 0
        %8000 = vmatpush.bf16.msra.mxu0 0
        %8001 = vmatpush.bf16.msra.mxu0 0
        %8002 = vmatpush.bf16.msra.mxu0 0
        %8003 = vmatpush.bf16.msra.mxu0 %v7982
        %8004 = vmatpush.bf16.msra.mxu0 %v7981
        %8005 = vmatpush.bf16.msra.mxu0 %v7980
        %8006 = vmatpush.bf16.msra.mxu0 %v7979
        %8007 = vmatmul.bf16.gmra.mxu0 %v7988
        %v8008 = vpop.f32.mrf.mxu0
        %v8009 = vadd.f32 0.0, %v8008
        %v8010 = vpop.f32.mrf.mxu0
        %v8011 = vadd.f32 0.0, %v8010
        %8012 = vmatmul.bf16.gmra.mxu0 %v7991
        %v8013 = vpop.f32.mrf.mxu0
        %v8014 = vadd.f32 0.0, %v8013
        %v8015 = vpop.f32.mrf.mxu0
        %v8016 = vadd.f32 0.0, %v8015
        %8017 = vmatmul.bf16.gmra.mxu0 %v7994
        %v8018 = vpop.f32.mrf.mxu0
        %v8019 = vadd.f32 0.0, %v8018
        %v8020 = vpop.f32.mrf.mxu0
        %v8021 = vadd.f32 0.0, %v8020
        %8022 = vmatmul.bf16.gmra.mxu0 %v7997
        %v8023 = vpop.f32.mrf.mxu0
        %v8024 = vadd.f32 0.0, %v8023
        %v8025 = vpop.f32.mrf.mxu0
        %v8026 = vadd.f32 0.0, %v8025
        %8027 = vdwg.mxu0
        %v8028 = vadd.f32 %v7918, %v8009
        %v8029 = vadd.f32 %v7919, %v8011
        %v8030 = vadd.f32 %v7920, %v8014
        %v8031 = vadd.f32 %v7921, %v8016
        %v8032 = vadd.f32 %v7922, %v8019
        %v8033 = vadd.f32 %v7923, %v8021
        %v8034 = vadd.f32 %v7924, %v8024
        %v8035 = vadd.f32 %v7925, %v8026
        %v8036 = vld [vmem:[#allocation2 + $0xc] sm:$0xf]
        %v8037 = vld [vmem:[#allocation2 + $0x10] sm:$0xf]
        %v8038 = vld [vmem:[#allocation2 + $0x14] sm:$0xf]
        %v8039 = vld [vmem:[#allocation2 + $0x18] sm:$0xf]
        %v8040 = vld [vmem:[#allocation2 + $0x1c] sm:$0xf]
        %v8041 = vld [vmem:[#allocation2 + $0x20] sm:$0xf]
        %v8042 = vld [vmem:[#allocation2 + $0x24] sm:$0xf]
        %v8043 = vld [vmem:[#allocation2 + $0x28] sm:$0xf]
        %v8044 = vld [vmem:[#allocation2 + $0x2c] sm:$0x1]
        %v8045 = vsel %vm2783, %v8036, 0
        %v8046 = vsel %vm2790, %v8037, 0
        %v8047 = vsel %vm2797, %v8038, 0
        %v8048 = vsel %vm2804, %v8039, 0
        %v8049 = vsel %vm2811, %v8040, 0
        %v8050 = vsel %vm2818, %v8041, 0
        %v8051 = vsel %vm2825, %v8042, 0
        %v8052 = vsel %vm2832, %v8043, 0
        %v8053 = vsel %vm2839, %v8044, 0
        %s8054 = scalar_lea.vmem %s7, 256
        %v8055 = vld [vmem:[%s8054] sm:$0xf]
        %v8056 = vld [vmem:[%s8054 + $0x4] sm:$0xf]
        %v8057 = vld [vmem:[%s8054 + $0x8] sm:$0xf]
        %v8058 = vld [vmem:[%s8054 + $0xc] sm:$0xf]
        %v8059 = vld [vmem:[%s8054 + $0x10] sm:$0xf]
        %v8060 = vld [vmem:[%s8054 + $0x14] sm:$0xf]
        %v8061 = vld [vmem:[%s8054 + $0x18] sm:$0xf]
        %v8062 = vld [vmem:[%s8054 + $0x1c] sm:$0xf]
        %v8072 = vunpack.c.l.b16 %v8045
        %v8073 = vunpack.c.l.b16 %v8046
        %v8074 = vunpack.c.l.b16 %v8047
        %v8075 = vunpack.c.l.b16 %v8048
        %v8076 = vunpack.c.l.b16 %v8049
        %v8077 = vunpack.c.l.b16 %v8050
        %v8078 = vunpack.c.l.b16 %v8051
        %v8079 = vunpack.c.l.b16 %v8052
        %v8080 = vunpack.c.l.b16 %v8053
        %v8081 = vpack.c.b16 %v8073, %v8072
        %v8082 = vpack.c.b16 %v8075, %v8074
        %v8083 = vpack.c.b16 %v8077, %v8076
        %v8084 = vpack.c.b16 %v8079, %v8078
        %v8085 = vpack.c.b16 %v8080, %v8080
        %v8087 = vshrl.u32 %v8081, 16
        %v8089 = vshll.u32 %v8081, 16
        %v8091 = vrot.slane %v8089, 1
        %v8092 = vor.u32 %v8087, %v8091
        %v8094 = vshll.u32 %v8082, 16
        %v8096 = vrot.slane %v8094, 1
        %v8097 = vsel %vm1298, %v8092, %v8096
        %v8098 = vshrl.u32 %v8082, 16
        %v8100 = vor.u32 %v8098, %v8096
        %v8102 = vshll.u32 %v8083, 16
        %v8104 = vrot.slane %v8102, 1
        %v8105 = vsel %vm1298, %v8100, %v8104
        %v8106 = vshrl.u32 %v8083, 16
        %v8108 = vor.u32 %v8106, %v8104
        %v8110 = vshll.u32 %v8084, 16
        %v8112 = vrot.slane %v8110, 1
        %v8113 = vsel %vm1298, %v8108, %v8112
        %v8114 = vshrl.u32 %v8084, 16
        %v8116 = vor.u32 %v8114, %v8112
        %v8118 = vshll.u32 %v8085, 16
        %v8120 = vrot.slane %v8118, 1
        %v8121 = vsel %vm1298, %v8116, %v8120
        %v8130 = vunpack.c.l.b16 %v8055
        %v8131 = vunpack.c.l.b16 %v8056
        %v8132 = vunpack.c.l.b16 %v8057
        %v8133 = vunpack.c.l.b16 %v8058
        %v8134 = vunpack.c.l.b16 %v8059
        %v8135 = vunpack.c.l.b16 %v8060
        %v8136 = vunpack.c.l.b16 %v8061
        %v8137 = vunpack.c.l.b16 %v8062
        %v8138 = vpack.c.b16 %v8131, %v8130
        %v8139 = vpack.c.b16 %v8133, %v8132
        %v8140 = vpack.c.b16 %v8135, %v8134
        %v8141 = vpack.c.b16 %v8137, %v8136
        %v8147 = vsel %vm3097, %v8097, 0
        %v8150 = vsel %vm3097, %v8105, 0
        %v8153 = vsel %vm3097, %v8113, 0
        %v8156 = vsel %vm3097, %v8121, 0
        %8158 = vmatpush.bf16.msra.mxu0 0
        %8159 = vmatpush.bf16.msra.mxu0 0
        %8160 = vmatpush.bf16.msra.mxu0 0
        %8161 = vmatpush.bf16.msra.mxu0 0
        %8162 = vmatpush.bf16.msra.mxu0 %v8141
        %8163 = vmatpush.bf16.msra.mxu0 %v8140
        %8164 = vmatpush.bf16.msra.mxu0 %v8139
        %8165 = vmatpush.bf16.msra.mxu0 %v8138
        %8166 = vmatmul.bf16.gmra.mxu0 %v8147
        %v8167 = vpop.f32.mrf.mxu0
        %v8168 = vadd.f32 0.0, %v8167
        %v8169 = vpop.f32.mrf.mxu0
        %v8170 = vadd.f32 0.0, %v8169
        %8171 = vmatmul.bf16.gmra.mxu0 %v8150
        %v8172 = vpop.f32.mrf.mxu0
        %v8173 = vadd.f32 0.0, %v8172
        %v8174 = vpop.f32.mrf.mxu0
        %v8175 = vadd.f32 0.0, %v8174
        %8176 = vmatmul.bf16.gmra.mxu0 %v8153
        %v8177 = vpop.f32.mrf.mxu0
        %v8178 = vadd.f32 0.0, %v8177
        %v8179 = vpop.f32.mrf.mxu0
        %v8180 = vadd.f32 0.0, %v8179
        %8181 = vmatmul.bf16.gmra.mxu0 %v8156
        %v8182 = vpop.f32.mrf.mxu0
        %v8183 = vadd.f32 0.0, %v8182
        %v8184 = vpop.f32.mrf.mxu0
        %v8185 = vadd.f32 0.0, %v8184
        %8186 = vdwg.mxu0
        %v8187 = vadd.f32 %v8028, %v8168
        %v8188 = vadd.f32 %v8029, %v8170
        %v8189 = vadd.f32 %v8030, %v8173
        %v8190 = vadd.f32 %v8031, %v8175
        %v8191 = vadd.f32 %v8032, %v8178
        %v8192 = vadd.f32 %v8033, %v8180
        %v8193 = vadd.f32 %v8034, %v8183
        %v8194 = vadd.f32 %v8035, %v8185
        %v8195 = vld [vmem:[%s12] sm:$0x1]
        %v8197 = vperm.slane %v8195, 0
        %v8199 = vadd.f32 %v8187, %v8197
        %v8200 = vadd.f32 %v8188, %v8197
        %v8201 = vadd.f32 %v8189, %v8197
        %v8202 = vadd.f32 %v8190, %v8197
        %v8203 = vadd.f32 %v8191, %v8197
        %v8204 = vadd.f32 %v8192, %v8197
        %v8205 = vadd.f32 %v8193, %v8197
        %v8206 = vadd.f32 %v8194, %v8197
        %vm8207 = vcmask 293888
        %8208 = vst.msk [vmem:[%s474] sm:$0xff] %vm8207, %v8199
        %8209 = vst.msk [vmem:[%s474 + $0x8] sm:$0xff] %vm8207, %v8200
        %8210 = vst.msk [vmem:[%s474 + $0x10] sm:$0xff] %vm8207, %v8201
        %8211 = vst.msk [vmem:[%s474 + $0x18] sm:$0xff] %vm8207, %v8202
        %8212 = vst.msk [vmem:[%s474 + $0x20] sm:$0xff] %vm8207, %v8203
        %8213 = vst.msk [vmem:[%s474 + $0x28] sm:$0xff] %vm8207, %v8204
        %8214 = vst.msk [vmem:[%s474 + $0x30] sm:$0xff] %vm8207, %v8205
        %8215 = vst.msk [vmem:[%s474 + $0x38] sm:$0xff] %vm8207, %v8206
        %p8216 = scmp.lt.s32.totalorder %s26, 1
        %s8217 = scalar_select %p8216, %s26, 1
        %s8218 = smul.addr %s8217, 8
        %s8219 = smul.addr %s8218, 8
        %s8220 = scalar_lea.vmem %s13, %s8219
        // Predicated region
        $region81: #{tpu_custom_call.1} parent=71 // pred_check
          %p8221 = pneg %p322
        $region82: #{tpu_custom_call.1} parent=71 // pred_check_branch
          %8223 = sbr.rel (%p8221) target = $region84
        $region83: #{tpu_custom_call.1} parent=71 // pred_region
          _
        $region84: #{tpu_custom_call.1} parent=71 // pred_fallthru
          _
      $region72: #{tpu_custom_call.1} parent=5 // pred_fallthru
        _
      %p8224 = scmp.le.s32.totalorder 2, %s21
      // Predicated region
      $region85: #{tpu_custom_call.1} parent=5 // pred_check
        %p8225 = pneg %p8224
      $region86: #{tpu_custom_call.1} parent=5 // pred_check_branch
        %8227 = sbr.rel (%p8225) target = $region88
      $region87: #{tpu_custom_call.1} parent=5 // pred_region
        %s8228 = ssub.s32 %s21, 2
        // Predicated region
        $region89: #{tpu_custom_call.1} parent=87 // pred_check
          %p8229 = pneg %p328
        $region90: #{tpu_custom_call.1} parent=87 // pred_check_branch
          %8231 = sbr.rel (%p8229) target = $region92
        $region91: #{tpu_custom_call.1} parent=87 // pred_region
          %p8232 = scmp.lt.s32.totalorder %s27, 1
          %s8233 = scalar_select %p8232, %s27, 1
          %s8234 = smul.addr %s8233, 8
          %s8235 = smul.addr %s8234, 8
          %s8236 = scalar_lea.vmem %s13, %s8235
        $region92: #{tpu_custom_call.1} parent=87 // pred_fallthru
          _
      $region88: #{tpu_custom_call.1} parent=5 // pred_fallthru
        _
    $region6: #{tpu_custom_call.1} parent=1 // loop_footer
      %s25 = sadd.s32 1, %s21
    $region7: #{tpu_custom_call.1} parent=1 // loop_footer_branch
      %20 = sbr.rel target = $region3
    $region8: #{tpu_custom_call.1} parent=1 // loop_exit
      _
    %8237 = vsyncpa [#allocation4], 1
    %s8238 = scalar_lea.sflag [#allocation4], 1
    %8239 = vsyncpa %s8238, 1
    %8240 = vsyncpa [#allocation6], 1

</llo_original>
